<compile_context>
chip_gen: v7x
topology: tpu7x:2x2x1
jax: 0.10.0
libtpu: 0.0.40
codegen_flags: <defaults>
</compile_context>

<pallas_src>
import functools

import numpy as np
import jax
import jax.numpy as jnp
from jax.experimental import pallas as pl
from jax.experimental.pallas import tpu as pltpu

LANE = 128


def _round_up(x, m):
    return ((x + m - 1) // m) * m


# ----------------------------------------------------------------------------
# Pallas kernels
# ----------------------------------------------------------------------------
def _conv_kernel(*refs, taps, Ho, Wo, leaky, has_res):
    """Fused conv: in-kernel im2col (k*k shifted windows) -> MXU matmuls ->
    folded-BN scale/bias -> LeakyReLU -> optional residual add.

    refs: x:(1,Hx,Wx,Cin) bf16, w:(k*k,Cin,Cout) bf16, sb:(2,Cout) f32,
          [res:(Ho*Wo,Cout) bf16], out:(Ho*Wo,Cout) bf16/f32
    """
    if has_res:
        x_ref, w_ref, sb_ref, r_ref, o_ref = refs
    else:
        x_ref, w_ref, sb_ref, o_ref = refs
        r_ref = None
    cin = w_ref.shape[1]
    m = x_ref.shape[0] * Ho * Wo
    acc = None
    for t, (r0, c0) in enumerate(taps):
        a = x_ref[:, r0:r0 + Ho, c0:c0 + Wo, :].reshape(m, cin)    # bf16 window
        d = jnp.dot(a, w_ref[t], preferred_element_type=jnp.float32)
        acc = d if acc is None else acc + d
    y = acc * sb_ref[0:1, :] + sb_ref[1:2, :]          # folded BN (or conv bias), f32
    if leaky:
        y = jnp.where(y > 0, y, 0.1 * y)               # LeakyReLU(0.1)
    if r_ref is not None:
        y = y + r_ref[...].astype(jnp.float32)         # fused shortcut residual
    o_ref[...] = y.astype(o_ref.dtype)


def _maxpool2_s1_kernel(x_ref, o_ref):
    # x: (1, H+1, W+1, C) replicate-padded NHWC (C == lane axis); 2x2 window, stride 1.
    x = x_ref[...]
    H, W = o_ref.shape[1], o_ref.shape[2]
    o_ref[...] = jnp.maximum(
        jnp.maximum(x[:, :H, :W, :], x[:, :H, 1:W + 1, :]),
        jnp.maximum(x[:, 1:H + 1, :W, :], x[:, 1:H + 1, 1:W + 1, :]))


def _yolo_kernel(p_ref, cst_ref, o_ref, *, stride):
    # p:   (1, G, G, 128) f32 padded head-conv output (real attrs in lanes < A*bbox)
    # cst: (2, 128) f32 -- row 0: lane attr code (0=x, 1=y, 2=w/h, 3=sigmoid-only)
    #                      row 1: anchor size (input-image pixels) on w/h lanes, 1 else
    p = p_ref[...]
    code = cst_ref[0:1, :]
    anc = cst_ref[1:2, :]
    gy = jax.lax.broadcasted_iota(jnp.int32, p.shape, 1).astype(jnp.float32)
    gx = jax.lax.broadcasted_iota(jnp.int32, p.shape, 2).astype(jnp.float32)
    sig = jax.nn.sigmoid(p)
    off = jnp.where(code == 0.0, gx, 0.0) + jnp.where(code == 1.0, gy, 0.0)
    xy = (sig + off) * stride
    is_wh = code == 2.0
    wh = jnp.exp(jnp.where(is_wh, p, 0.0)) * anc       # exp only on w/h lanes
    o_ref[...] = jnp.where(code <= 1.0, xy, jnp.where(is_wh, wh, sig))


# ----------------------------------------------------------------------------
# Pallas wrappers
# ----------------------------------------------------------------------------
def conv_layer(x, p, residual=None):
    """x: (N, H, W, Cin_padded) channel-padded NHWC -> (N, Ho, Wo, 128) NHWC."""
    x = x.astype(jnp.bfloat16)
    k, stride, pad = p["k"], p["stride"], p["pad"]
    if pad:
        x = jnp.pad(x, ((0, 0), (pad, pad), (pad, pad), (0, 0)))
    N, Hp, Wp, cin_p = x.shape
    assert cin_p == p["w"].shape[1]
    Ho = (Hp - k) // stride + 1
    Wo = (Wp - k) // stride + 1
    if stride == 1:
        xin = x
        taps = tuple((di, dj) for di in range(k) for dj in range(k))
    else:
        assert stride == 2, "only stride 1 / 2 exercised by this config"
        # Parity split so the kernel only takes contiguous slices (no strided loads):
        # even/odd rows x even/odd cols, concatenated along H.
        if Hp % 2:
            x = jnp.pad(x, ((0, 0), (0, 1), (0, 0), (0, 0)))
            Hp += 1
        if Wp % 2:
            x = jnp.pad(x, ((0, 0), (0, 0), (0, 1), (0, 0)))
            Wp += 1
        Hh = Hp // 2
        xin = jnp.concatenate(
            [x[:, ph::2, pw::2, :] for ph in (0, 1) for pw in (0, 1)], axis=1)
        taps = tuple((((di % 2) * 2 + (dj % 2)) * Hh + di // 2, dj // 2)
                     for di in range(k) for dj in range(k))
    _, Hx, Wx, _ = xin.shape
    kk, _, cout_p = p["w"].shape
    mb = Ho * Wo                                 # output rows per batch image

    args = [xin, p["w"], p["sb"]]
    in_specs = [
        pl.BlockSpec((1, Hx, Wx, cin_p), lambda n: (n, 0, 0, 0)),
        pl.BlockSpec((kk, cin_p, cout_p), lambda n: (0, 0, 0)),
        pl.BlockSpec((2, cout_p), lambda n: (0, 0)),
    ]
    has_res = residual is not None
    if has_res:
        args.append(residual.astype(jnp.bfloat16).reshape(N * mb, cout_p))
        in_specs.append(pl.BlockSpec((mb, cout_p), lambda n: (n, 0)))

    out = pl.pallas_call(
        functools.partial(_conv_kernel, taps=taps, Ho=Ho, Wo=Wo,
                          leaky=p["leaky"], has_res=has_res),
        out_shape=jax.ShapeDtypeStruct((N * mb, cout_p), p["out_dtype"]),
        grid=(N,),                               # one image per step; both TCs on v7x
        in_specs=in_specs,
        out_specs=pl.BlockSpec((mb, cout_p), lambda n: (n, 0)),
        compiler_params=pltpu.CompilerParams(
            dimension_semantics=("parallel",)),
    )(*args)
    return out.reshape(N, Ho, Wo, cout_p)


def maxpool_stride1(x, size):
    # Mirrors MaxPoolStride1: replicate-pad right/bottom by (size-1), pool kxk stride 1.
    assert size == 2, "synthetic config only exercises size=2"
    pad = size - 1
    xp = jnp.pad(x, ((0, 0), (0, pad), (0, pad), (0, 0)), mode="edge")
    N, Hp, Wp, C = xp.shape
    H, W = Hp - pad, Wp - pad
    return pl.pallas_call(
        _maxpool2_s1_kernel,
        out_shape=jax.ShapeDtypeStruct((N, H, W, C), x.dtype),
        grid=(N,),
        in_specs=[pl.BlockSpec((1, Hp, Wp, C), lambda n: (n, 0, 0, 0))],
        out_specs=pl.BlockSpec((1, H, W, C), lambda n: (n, 0, 0, 0)),
        compiler_params=pltpu.CompilerParams(
            dimension_semantics=("parallel",)),
    )(xp)


def predict_transform(x_pad, inp_dim, anchors, num_classes):
    """x_pad: (B, G, G, 128) f32 head-conv output (real attrs in lanes [0, A*bbox)).
    -> (B, G*G*A, bbox) detections (standard YOLOv3 transform)."""
    B, G, _, C = x_pad.shape
    stride = inp_dim // G
    bbox = 5 + num_classes
    A = len(anchors)
    nreal = A * bbox
    # Single packed per-lane constant: row 0 = attr code, row 1 = anchor size.
    code = np.full((C,), 3.0, np.float32)
    anc = np.ones((C,), np.float32)
    for b in range(A):
        base = b * bbox
        code[base + 0] = 0.0
        code[base + 1] = 1.0
        code[base + 2] = 2.0
        code[base + 3] = 2.0
        anc[base + 2] = anchors[b][0]
        anc[base + 3] = anchors[b][1]
    cst = jnp.asarray(np.stack([code, anc]))     # (2, 128) f32

    out = pl.pallas_call(
        functools.partial(_yolo_kernel, stride=float(stride)),
        out_shape=jax.ShapeDtypeStruct((B, G, G, C), jnp.float32),
        grid=(B,),
        in_specs=[pl.BlockSpec((1, G, G, C), lambda n: (n, 0, 0, 0)),
                  pl.BlockSpec((2, C), lambda n: (0, 0))],
        out_specs=pl.BlockSpec((1, G, G, C), lambda n: (n, 0, 0, 0)),
        compiler_params=pltpu.CompilerParams(
            dimension_semantics=("parallel",)),
    )(x_pad, cst)
    # Lane compaction happens once here and fuses with the final concat in XLA.
    return out[:, :, :, :nreal].reshape(B, G * G * A, bbox)


# ----------------------------------------------------------------------------
# Synthetic "cfg" (same dict structure parse_cfg would produce) + Darknet model
# ----------------------------------------------------------------------------
BLOCKS = [
    {"type": "net", "height": "16", "width": "16", "channels": "3"},
    {"type": "convolutional", "batch_normalize": "1", "filters": "8", "size": "3",
     "stride": "1", "pad": "1", "activation": "leaky"},
    {"type": "convolutional", "batch_normalize": "1", "filters": "16", "size": "3",
     "stride": "2", "pad": "1", "activation": "leaky"},
    {"type": "convolutional", "batch_normalize": "1", "filters": "16", "size": "1",
     "stride": "1", "pad": "1", "activation": "leaky"},
    {"type": "shortcut", "from": "-2", "activation": "linear"},
    {"type": "maxpool", "size": "2", "stride": "1"},
    {"type": "convolutional", "filters": "21", "size": "1", "stride": "1",
     "pad": "0", "activation": "linear"},
    {"type": "yolo", "mask": "0,1,2",
     "anchors": "10,13, 16,30, 33,23, 30,61, 62,45, 59,119", "classes": "2", "num": "6"},
    {"type": "route", "layers": "-4"},
    {"type": "upsample", "stride": "2"},
    {"type": "route", "layers": "-1,-9"},
    {"type": "convolutional", "filters": "21", "size": "1", "stride": "1",
     "pad": "0", "activation": "linear"},
    {"type": "yolo", "mask": "3,4,5",
     "anchors": "10,13, 16,30, 33,23, 30,61, 62,45, 59,119", "classes": "2", "num": "6"},
]


class DarknetPallas:
    def __init__(self, blocks, key):
        self.blocks = blocks
        self.net_info = blocks[0]
        self.params = []
        mods = blocks[1:]

        in_ch = int(self.net_info.get("channels", 3))
        prev_layout, prev_width = [(0, in_ch)], LANE   # where real channels sit in the padded lanes
        output_filters = []
        layouts = []
        filters = in_ch
        for index, b in enumerate(mods):
            p = None
            bt = b["type"]
            if bt == "convolutional":
                bn = int(b.get("batch_normalize", 0))
                filters = int(b["filters"])
                k = int(b["size"])
                stride = int(b["stride"])
                pad = (k - 1) // 2 if int(b["pad"]) else 0
                cin = sum(cnt for _, cnt in prev_layout)
                key, k1, k2, k3, k4, k5, k6 = jax.random.split(key, 7)
                w = 0.1 * jax.random.normal(k1, (filters, cin, k, k), jnp.float32)
                if bn:
                    gamma = 1.0 + 0.1 * jax.random.normal(k2, (filters,), jnp.float32)
                    beta = 0.1 * jax.random.normal(k3, (filters,), jnp.float32)
                    mean = 0.1 * jax.random.normal(k4, (filters,), jnp.float32)
                    var = jnp.abs(jax.random.normal(k5, (filters,), jnp.float32)) * 0.1 + 1.0
                    scale = gamma / jnp.sqrt(var + 1e-5)   # eval-mode BN folded into conv
                    bias = beta - mean * scale
                else:
                    scale = jnp.ones((filters,), jnp.float32)
                    bias = 0.1 * jax.random.normal(k6, (filters,), jnp.float32)
                cout_p = _round_up(filters, LANE)
                # Weights reordered ONCE at init to (k*k taps, Cin_padded, Cout_padded)
                # bf16, honoring the padded lane layout of the (possibly concatenated)
                # input activation.  Pad lanes get zero weight / zero scale+bias.
                w_np = np.asarray(w)
                wmat = np.zeros((k * k, prev_width, cout_p), np.float32)
                cur = 0
                for off, cnt in prev_layout:
                    for di in range(k):
                        for dj in range(k):
                            wmat[di * k + dj, off:off + cnt, :filters] = \
                                w_np[:, cur:cur + cnt, di, dj].T
                    cur += cnt
                sb = np.zeros((2, cout_p), np.float32)
                sb[0, :filters] = np.asarray(scale)
                sb[1, :filters] = np.asarray(bias)
                is_head = index + 1 < len(mods) and mods[index + 1]["type"] == "yolo"
                p = dict(w=jnp.asarray(wmat, jnp.bfloat16), sb=jnp.asarray(sb),
                         k=k, stride=stride, pad=pad, cout=filters,
                         leaky=(b["activation"] == "leaky"),
                         out_dtype=jnp.float32 if is_head else jnp.bfloat16)
                out_layout, out_width = [(0, filters)], cout_p
            elif bt == "route":
                ls = [int(a) for a in b["layers"].split(",")]
                start = ls[0] - index if ls[0] > 0 else ls[0]
                end = (ls[1] - index if ls[1] > 0 else ls[1]) if len(ls) > 1 else 0
                if end < 0:
                    la, wa = layouts[index + start]
                    lb, wb = layouts[index + end]
                    out_layout = list(la) + [(wa + off, cnt) for off, cnt in lb]
                    out_width = wa + wb
                    filters = output_filters[index + start] + output_filters[index + end]
                else:
                    out_layout, out_width = layouts[index + start]
                    filters = output_filters[index + start]
            elif bt == "yolo":
                mask = [int(m) for m in b["mask"].split(",")]
                anc = [int(a) for a in b["anchors"].split(",")]
                anc = [(anc[i], anc[i + 1]) for i in range(0, len(anc), 2)]
                p = dict(anchors=[anc[m] for m in mask])
                out_layout, out_width = prev_layout, prev_width
            else:  # shortcut / maxpool / upsample keep the previous layer's layout
                out_layout, out_width = prev_layout, prev_width
                filters = output_filters[-1] if output_filters else in_ch
            self.params.append(p)
            layouts.append((out_layout, out_width))
            output_filters.append(filters)
            prev_layout, prev_width = out_layout, out_width

        # Shortcut adds are fused into the preceding conv's epilogue when legal:
        # the conv's raw output must not be referenced anywhere else and both
        # operands must share the same padded channel layout.
        referenced = set()
        for idx, b in enumerate(mods):
            if b["type"] == "route":
                for l in [int(a) for a in b["layers"].split(",")]:
                    referenced.add(l if l > 0 else idx + l)
            elif b["type"] == "shortcut":
                referenced.add(idx + int(b["from"]))
        self.fuse_residual = {}          # conv idx -> residual layer idx
        self.fused_shortcut_idx = set()  # shortcut idx handled by the fused conv
        for idx, b in enumerate(mods):
            if (b["type"] == "convolutional" and idx + 1 < len(mods)
                    and mods[idx + 1]["type"] == "shortcut"
                    and int(mods[idx + 1]["from"]) != -1
                    and idx not in referenced):
                src = (idx + 1) + int(mods[idx + 1]["from"])
                if layouts[src] == layouts[idx]:
                    self.fuse_residual[idx] = src
                    self.fused_shortcut_idx.add(idx + 1)

        self._jit_forward = jax.jit(self._forward)

    def _forward(self, x_nchw):
        x = jnp.transpose(x_nchw, (0, 2, 3, 1))                    # NCHW -> NHWC once
        cin = x.shape[-1]
        x = jnp.pad(x, ((0, 0), (0, 0), (0, 0), (0, LANE - cin)))  # pad channels to 128
        x = x.astype(jnp.bfloat16)                                 # bf16 everywhere downstream
        outputs = {}
        detections = None
        for i, module in enumerate(self.blocks[1:]):
            mt = module["type"]
            if mt == "convolutional":
                res = outputs[self.fuse_residual[i]] if i in self.fuse_residual else None
                x = conv_layer(x, self.params[i], residual=res)
            elif mt == "upsample":
                # nn.Upsample(scale_factor=2, mode='bilinear'), align_corners=False.
                N, H, W, C = x.shape
                x = jax.image.resize(x.astype(jnp.float32), (N, 2 * H, 2 * W, C),
                                     method="bilinear").astype(jnp.bfloat16)
            elif mt == "maxpool":
                assert int(module["stride"]) == 1
                x = maxpool_stride1(x, int(module["size"]))
            elif mt == "route":
                layers = [int(a) for a in module["layers"].split(",")]
                if layers[0] > 0:
                    layers[0] -= i
                if len(layers) == 1:
                    x = outputs[i + layers[0]]
                else:
                    if layers[1] > 0:
                        layers[1] -= i
                    # Padded-lane concat; the consumer conv's weight matrix was built
                    # against exactly this concatenated lane layout at __init__.
                    x = jnp.concatenate(
                        [outputs[i + layers[0]], outputs[i + layers[1]]], axis=-1)
            elif mt == "shortcut":
                if i in self.fused_shortcut_idx:
                    pass                              # already added in the conv epilogue
                else:
                    frm = int(module["from"])
                    x = outputs[i - 1] + outputs[i + frm]
            elif mt == "yolo":
                anchors = self.params[i]["anchors"]
                inp_dim = int(self.net_info["height"])
                num_classes = int(module["classes"])
                x = predict_transform(x, inp_dim, anchors, num_classes)
                detections = x if detections is None else jnp.concatenate(
                    [detections, x], axis=1)
            outputs[i] = x
        return detections

    def forward(self, x):
        return self._jit_forward(x)


# ----------------------------------------------------------------------------
if __name__ == "__main__":
    key = jax.random.PRNGKey(0)
    k_model, k_input = jax.random.split(key)
    model = DarknetPallas(BLOCKS, k_model)
    x = jax.random.normal(k_input, (2, 3, 16, 16), jnp.float32)    # NCHW input
    dets = jax.block_until_ready(model.forward(x))
    # two YOLO heads: 8*8*3 + 16*16*3 = 960 boxes, 5 + 2 classes = 7 attrs
    assert dets.shape == (2, 960, 7), dets.shape
    assert bool(jnp.all(jnp.isfinite(dets)))
    print("KERNEL_OK")
</pallas_src>

<mosaic_0001>
module attributes {stable_mosaic.version = 11 : i64} {
  func.func @_conv_kernel(%arg0: i32, %arg1: memref<1x18x18x128xbf16, #tpu.memory_space<vmem>>, %arg2: memref<9x128x128xbf16, #tpu.memory_space<vmem>>, %arg3: memref<2x128xf32, #tpu.memory_space<vmem>>, %arg4: memref<256x128xbf16, #tpu.memory_space<vmem>>) attributes {dimension_semantics = [#tpu.dimension_semantics<parallel>], iteration_bounds = array<i64: 2>, scalar_prefetch = 0 : i64, scratch_operands = 0 : i64, tpu.core_type = #tpu.core_type<tc>, window_params = [{transform_indices = @transform_0, window_bounds = array<i64: 1, 18, 18, 128>}, {pipeline_mode = #tpu.pipeline_mode<synchronous>, transform_indices = @transform_1, window_bounds = array<i64: 9, 128, 128>}, {pipeline_mode = #tpu.pipeline_mode<synchronous>, transform_indices = @transform_2, window_bounds = array<i64: 2, 128>}, {transform_indices = @transform_3, window_bounds = array<i64: 256, 128>}]} {
    %c0 = arith.constant 0 : index
    %c0_0 = arith.constant 0 : index
    %c0_1 = arith.constant 0 : index
    %c0_2 = arith.constant 0 : index
    %0 = vector.load %arg1[%c0, %c0_0, %c0_1, %c0_2] : memref<1x18x18x128xbf16, #tpu.memory_space<vmem>>, vector<1x16x16x128xbf16>
    %1 = vector.shape_cast %0 : vector<1x16x16x128xbf16> to vector<256x128xbf16>
    %c0_3 = arith.constant 0 : index
    %c0_4 = arith.constant 0 : index
    %c0_5 = arith.constant 0 : index
    %2 = vector.load %arg2[%c0_3, %c0_4, %c0_5] : memref<9x128x128xbf16, #tpu.memory_space<vmem>>, vector<1x128x128xbf16>
    %3 = vector.shape_cast %2 : vector<1x128x128xbf16> to vector<128x128xbf16>
    %cst = arith.constant dense<0.000000e+00> : vector<256x128xf32>
    %4 = tpu.matmul %1, %3, %cst {dimension_numbers = #tpu.dot_dimension_numbers<[1], [0], [0], [1], [0, 0, 1, 1], [], []>} : vector<256x128xbf16>, vector<128x128xbf16>, vector<256x128xf32> -> vector<256x128xf32>
    %c0_6 = arith.constant 0 : index
    %c0_7 = arith.constant 0 : index
    %c1 = arith.constant 1 : index
    %c0_8 = arith.constant 0 : index
    %5 = vector.load %arg1[%c0_6, %c0_7, %c1, %c0_8] : memref<1x18x18x128xbf16, #tpu.memory_space<vmem>>, vector<1x16x16x128xbf16>
    %6 = vector.shape_cast %5 : vector<1x16x16x128xbf16> to vector<256x128xbf16>
    %c1_9 = arith.constant 1 : index
    %c0_10 = arith.constant 0 : index
    %c0_11 = arith.constant 0 : index
    %7 = vector.load %arg2[%c1_9, %c0_10, %c0_11] : memref<9x128x128xbf16, #tpu.memory_space<vmem>>, vector<1x128x128xbf16>
    %8 = vector.shape_cast %7 : vector<1x128x128xbf16> to vector<128x128xbf16>
    %cst_12 = arith.constant dense<0.000000e+00> : vector<256x128xf32>
    %9 = tpu.matmul %6, %8, %cst_12 {dimension_numbers = #tpu.dot_dimension_numbers<[1], [0], [0], [1], [0, 0, 1, 1], [], []>} : vector<256x128xbf16>, vector<128x128xbf16>, vector<256x128xf32> -> vector<256x128xf32>
    %10 = arith.addf %4, %9 : vector<256x128xf32>
    %c0_13 = arith.constant 0 : index
    %c0_14 = arith.constant 0 : index
    %c2 = arith.constant 2 : index
    %c0_15 = arith.constant 0 : index
    %11 = vector.load %arg1[%c0_13, %c0_14, %c2, %c0_15] : memref<1x18x18x128xbf16, #tpu.memory_space<vmem>>, vector<1x16x16x128xbf16>
    %12 = vector.shape_cast %11 : vector<1x16x16x128xbf16> to vector<256x128xbf16>
    %c2_16 = arith.constant 2 : index
    %c0_17 = arith.constant 0 : index
    %c0_18 = arith.constant 0 : index
    %13 = vector.load %arg2[%c2_16, %c0_17, %c0_18] : memref<9x128x128xbf16, #tpu.memory_space<vmem>>, vector<1x128x128xbf16>
    %14 = vector.shape_cast %13 : vector<1x128x128xbf16> to vector<128x128xbf16>
    %cst_19 = arith.constant dense<0.000000e+00> : vector<256x128xf32>
    %15 = tpu.matmul %12, %14, %cst_19 {dimension_numbers = #tpu.dot_dimension_numbers<[1], [0], [0], [1], [0, 0, 1, 1], [], []>} : vector<256x128xbf16>, vector<128x128xbf16>, vector<256x128xf32> -> vector<256x128xf32>
    %16 = arith.addf %10, %15 : vector<256x128xf32>
    %c0_20 = arith.constant 0 : index
    %c1_21 = arith.constant 1 : index
    %c0_22 = arith.constant 0 : index
    %c0_23 = arith.constant 0 : index
    %17 = vector.load %arg1[%c0_20, %c1_21, %c0_22, %c0_23] : memref<1x18x18x128xbf16, #tpu.memory_space<vmem>>, vector<1x16x16x128xbf16>
    %18 = vector.shape_cast %17 : vector<1x16x16x128xbf16> to vector<256x128xbf16>
    %c3 = arith.constant 3 : index
    %c0_24 = arith.constant 0 : index
    %c0_25 = arith.constant 0 : index
    %19 = vector.load %arg2[%c3, %c0_24, %c0_25] : memref<9x128x128xbf16, #tpu.memory_space<vmem>>, vector<1x128x128xbf16>
    %20 = vector.shape_cast %19 : vector<1x128x128xbf16> to vector<128x128xbf16>
    %cst_26 = arith.constant dense<0.000000e+00> : vector<256x128xf32>
    %21 = tpu.matmul %18, %20, %cst_26 {dimension_numbers = #tpu.dot_dimension_numbers<[1], [0], [0], [1], [0, 0, 1, 1], [], []>} : vector<256x128xbf16>, vector<128x128xbf16>, vector<256x128xf32> -> vector<256x128xf32>
    %22 = arith.addf %16, %21 : vector<256x128xf32>
    %c0_27 = arith.constant 0 : index
    %c1_28 = arith.constant 1 : index
    %c1_29 = arith.constant 1 : index
    %c0_30 = arith.constant 0 : index
    %23 = vector.load %arg1[%c0_27, %c1_28, %c1_29, %c0_30] : memref<1x18x18x128xbf16, #tpu.memory_space<vmem>>, vector<1x16x16x128xbf16>
    %24 = vector.shape_cast %23 : vector<1x16x16x128xbf16> to vector<256x128xbf16>
    %c4 = arith.constant 4 : index
    %c0_31 = arith.constant 0 : index
    %c0_32 = arith.constant 0 : index
    %25 = vector.load %arg2[%c4, %c0_31, %c0_32] : memref<9x128x128xbf16, #tpu.memory_space<vmem>>, vector<1x128x128xbf16>
    %26 = vector.shape_cast %25 : vector<1x128x128xbf16> to vector<128x128xbf16>
    %cst_33 = arith.constant dense<0.000000e+00> : vector<256x128xf32>
    %27 = tpu.matmul %24, %26, %cst_33 {dimension_numbers = #tpu.dot_dimension_numbers<[1], [0], [0], [1], [0, 0, 1, 1], [], []>} : vector<256x128xbf16>, vector<128x128xbf16>, vector<256x128xf32> -> vector<256x128xf32>
    %28 = arith.addf %22, %27 : vector<256x128xf32>
    %c0_34 = arith.constant 0 : index
    %c1_35 = arith.constant 1 : index
    %c2_36 = arith.constant 2 : index
    %c0_37 = arith.constant 0 : index
    %29 = vector.load %arg1[%c0_34, %c1_35, %c2_36, %c0_37] : memref<1x18x18x128xbf16, #tpu.memory_space<vmem>>, vector<1x16x16x128xbf16>
    %30 = vector.shape_cast %29 : vector<1x16x16x128xbf16> to vector<256x128xbf16>
    %c5 = arith.constant 5 : index
    %c0_38 = arith.constant 0 : index
    %c0_39 = arith.constant 0 : index
    %31 = vector.load %arg2[%c5, %c0_38, %c0_39] : memref<9x128x128xbf16, #tpu.memory_space<vmem>>, vector<1x128x128xbf16>
    %32 = vector.shape_cast %31 : vector<1x128x128xbf16> to vector<128x128xbf16>
    %cst_40 = arith.constant dense<0.000000e+00> : vector<256x128xf32>
    %33 = tpu.matmul %30, %32, %cst_40 {dimension_numbers = #tpu.dot_dimension_numbers<[1], [0], [0], [1], [0, 0, 1, 1], [], []>} : vector<256x128xbf16>, vector<128x128xbf16>, vector<256x128xf32> -> vector<256x128xf32>
    %34 = arith.addf %28, %33 : vector<256x128xf32>
    %c0_41 = arith.constant 0 : index
    %c2_42 = arith.constant 2 : index
    %c0_43 = arith.constant 0 : index
    %c0_44 = arith.constant 0 : index
    %35 = vector.load %arg1[%c0_41, %c2_42, %c0_43, %c0_44] : memref<1x18x18x128xbf16, #tpu.memory_space<vmem>>, vector<1x16x16x128xbf16>
    %36 = vector.shape_cast %35 : vector<1x16x16x128xbf16> to vector<256x128xbf16>
    %c6 = arith.constant 6 : index
    %c0_45 = arith.constant 0 : index
    %c0_46 = arith.constant 0 : index
    %37 = vector.load %arg2[%c6, %c0_45, %c0_46] : memref<9x128x128xbf16, #tpu.memory_space<vmem>>, vector<1x128x128xbf16>
    %38 = vector.shape_cast %37 : vector<1x128x128xbf16> to vector<128x128xbf16>
    %cst_47 = arith.constant dense<0.000000e+00> : vector<256x128xf32>
    %39 = tpu.matmul %36, %38, %cst_47 {dimension_numbers = #tpu.dot_dimension_numbers<[1], [0], [0], [1], [0, 0, 1, 1], [], []>} : vector<256x128xbf16>, vector<128x128xbf16>, vector<256x128xf32> -> vector<256x128xf32>
    %40 = arith.addf %34, %39 : vector<256x128xf32>
    %c0_48 = arith.constant 0 : index
    %c2_49 = arith.constant 2 : index
    %c1_50 = arith.constant 1 : index
    %c0_51 = arith.constant 0 : index
    %41 = vector.load %arg1[%c0_48, %c2_49, %c1_50, %c0_51] : memref<1x18x18x128xbf16, #tpu.memory_space<vmem>>, vector<1x16x16x128xbf16>
    %42 = vector.shape_cast %41 : vector<1x16x16x128xbf16> to vector<256x128xbf16>
    %c7 = arith.constant 7 : index
    %c0_52 = arith.constant 0 : index
    %c0_53 = arith.constant 0 : index
    %43 = vector.load %arg2[%c7, %c0_52, %c0_53] : memref<9x128x128xbf16, #tpu.memory_space<vmem>>, vector<1x128x128xbf16>
    %44 = vector.shape_cast %43 : vector<1x128x128xbf16> to vector<128x128xbf16>
    %cst_54 = arith.constant dense<0.000000e+00> : vector<256x128xf32>
    %45 = tpu.matmul %42, %44, %cst_54 {dimension_numbers = #tpu.dot_dimension_numbers<[1], [0], [0], [1], [0, 0, 1, 1], [], []>} : vector<256x128xbf16>, vector<128x128xbf16>, vector<256x128xf32> -> vector<256x128xf32>
    %46 = arith.addf %40, %45 : vector<256x128xf32>
    %c0_55 = arith.constant 0 : index
    %c2_56 = arith.constant 2 : index
    %c2_57 = arith.constant 2 : index
    %c0_58 = arith.constant 0 : index
    %47 = vector.load %arg1[%c0_55, %c2_56, %c2_57, %c0_58] : memref<1x18x18x128xbf16, #tpu.memory_space<vmem>>, vector<1x16x16x128xbf16>
    %48 = vector.shape_cast %47 : vector<1x16x16x128xbf16> to vector<256x128xbf16>
    %c8 = arith.constant 8 : index
    %c0_59 = arith.constant 0 : index
    %c0_60 = arith.constant 0 : index
    %49 = vector.load %arg2[%c8, %c0_59, %c0_60] : memref<9x128x128xbf16, #tpu.memory_space<vmem>>, vector<1x128x128xbf16>
    %50 = vector.shape_cast %49 : vector<1x128x128xbf16> to vector<128x128xbf16>
    %cst_61 = arith.constant dense<0.000000e+00> : vector<256x128xf32>
    %51 = tpu.matmul %48, %50, %cst_61 {dimension_numbers = #tpu.dot_dimension_numbers<[1], [0], [0], [1], [0, 0, 1, 1], [], []>} : vector<256x128xbf16>, vector<128x128xbf16>, vector<256x128xf32> -> vector<256x128xf32>
    %52 = arith.addf %46, %51 : vector<256x128xf32>
    %c0_62 = arith.constant 0 : index
    %c0_63 = arith.constant 0 : index
    %53 = vector.load %arg3[%c0_62, %c0_63] : memref<2x128xf32, #tpu.memory_space<vmem>>, vector<1x128xf32>
    %54 = vector.broadcast %53 : vector<1x128xf32> to vector<256x128xf32>
    %55 = arith.mulf %52, %54 : vector<256x128xf32>
    %c1_64 = arith.constant 1 : index
    %c0_65 = arith.constant 0 : index
    %56 = vector.load %arg3[%c1_64, %c0_65] : memref<2x128xf32, #tpu.memory_space<vmem>>, vector<1x128xf32>
    %57 = vector.broadcast %56 : vector<1x128xf32> to vector<256x128xf32>
    %58 = arith.addf %55, %57 : vector<256x128xf32>
    %cst_66 = arith.constant 0.000000e+00 : f32
    %59 = vector.broadcast %cst_66 : f32 to vector<256x128xf32>
    %60 = arith.cmpf ogt, %58, %59 : vector<256x128xf32>
    %cst_67 = arith.constant 1.000000e-01 : f32
    %61 = vector.broadcast %cst_67 : f32 to vector<256x128xf32>
    %62 = arith.mulf %61, %58 : vector<256x128xf32>
    %63 = arith.select %60, %58, %62 : vector<256x128xi1>, vector<256x128xf32>
    %64 = arith.truncf %63 : vector<256x128xf32> to vector<256x128xbf16>
    %c0_68 = arith.constant 0 : index
    %c0_69 = arith.constant 0 : index
    %65 = vector.load %arg4[%c0_68, %c0_69] : memref<256x128xbf16, #tpu.memory_space<vmem>>, vector<256x128xbf16>
    tpu.vector_store %arg4[%c0_68, %c0_69], %64 {strides = array<i32>} : memref<256x128xbf16, #tpu.memory_space<vmem>>, vector<256x128xbf16>,
    return
  }
  func.func @transform_0(%arg0: i32) -> (i32, i32, i32, i32) {
    %c0_i32 = arith.constant 0 : i32
    %c0_i32_0 = arith.constant 0 : i32
    %c0_i32_1 = arith.constant 0 : i32
    %c0_i32_2 = arith.constant 0 : i32
    return %arg0, %c0_i32, %c0_i32_0, %c0_i32_1 : i32, i32, i32, i32
  }
  func.func @transform_1(%arg0: i32) -> (i32, i32, i32) {
    %c0_i32 = arith.constant 0 : i32
    %c0_i32_0 = arith.constant 0 : i32
    %c0_i32_1 = arith.constant 0 : i32
    %c0_i32_2 = arith.constant 0 : i32
    return %c0_i32, %c0_i32_0, %c0_i32_1 : i32, i32, i32
  }
  func.func @transform_2(%arg0: i32) -> (i32, i32) {
    %c0_i32 = arith.constant 0 : i32
    %c0_i32_0 = arith.constant 0 : i32
    %c0_i32_1 = arith.constant 0 : i32
    return %c0_i32, %c0_i32_0 : i32, i32
  }
  func.func @transform_3(%arg0: i32) -> (i32, i32) {
    %c0_i32 = arith.constant 0 : i32
    %c0_i32_0 = arith.constant 0 : i32
    return %arg0, %c0_i32 : i32, i32
  }
}

module attributes {stable_mosaic.version = 11 : i64} {
  func.func @_conv_kernel(%arg0: i32, %arg1: memref<1x36x9x128xbf16, #tpu.memory_space<vmem>>, %arg2: memref<9x128x128xbf16, #tpu.memory_space<vmem>>, %arg3: memref<2x128xf32, #tpu.memory_space<vmem>>, %arg4: memref<64x128xbf16, #tpu.memory_space<vmem>>) attributes {dimension_semantics = [#tpu.dimension_semantics<parallel>], iteration_bounds = array<i64: 2>, scalar_prefetch = 0 : i64, scratch_operands = 0 : i64, tpu.core_type = #tpu.core_type<tc>, window_params = [{transform_indices = @transform_0, window_bounds = array<i64: 1, 36, 9, 128>}, {pipeline_mode = #tpu.pipeline_mode<synchronous>, transform_indices = @transform_1, window_bounds = array<i64: 9, 128, 128>}, {pipeline_mode = #tpu.pipeline_mode<synchronous>, transform_indices = @transform_2, window_bounds = array<i64: 2, 128>}, {transform_indices = @transform_3, window_bounds = array<i64: 64, 128>}]} {
    %c0 = arith.constant 0 : index
    %c0_0 = arith.constant 0 : index
    %c0_1 = arith.constant 0 : index
    %c0_2 = arith.constant 0 : index
    %0 = vector.load %arg1[%c0, %c0_0, %c0_1, %c0_2] : memref<1x36x9x128xbf16, #tpu.memory_space<vmem>>, vector<1x8x8x128xbf16>
    %1 = vector.shape_cast %0 : vector<1x8x8x128xbf16> to vector<64x128xbf16>
    %c0_3 = arith.constant 0 : index
    %c0_4 = arith.constant 0 : index
    %c0_5 = arith.constant 0 : index
    %2 = vector.load %arg2[%c0_3, %c0_4, %c0_5] : memref<9x128x128xbf16, #tpu.memory_space<vmem>>, vector<1x128x128xbf16>
    %3 = vector.shape_cast %2 : vector<1x128x128xbf16> to vector<128x128xbf16>
    %cst = arith.constant dense<0.000000e+00> : vector<64x128xf32>
    %4 = tpu.matmul %1, %3, %cst {dimension_numbers = #tpu.dot_dimension_numbers<[1], [0], [0], [1], [0, 0, 1, 1], [], []>} : vector<64x128xbf16>, vector<128x128xbf16>, vector<64x128xf32> -> vector<64x128xf32>
    %c0_6 = arith.constant 0 : index
    %c9 = arith.constant 9 : index
    %c0_7 = arith.constant 0 : index
    %c0_8 = arith.constant 0 : index
    %5 = vector.load %arg1[%c0_6, %c9, %c0_7, %c0_8] : memref<1x36x9x128xbf16, #tpu.memory_space<vmem>>, vector<1x8x8x128xbf16>
    %6 = vector.shape_cast %5 : vector<1x8x8x128xbf16> to vector<64x128xbf16>
    %c1 = arith.constant 1 : index
    %c0_9 = arith.constant 0 : index
    %c0_10 = arith.constant 0 : index
    %7 = vector.load %arg2[%c1, %c0_9, %c0_10] : memref<9x128x128xbf16, #tpu.memory_space<vmem>>, vector<1x128x128xbf16>
    %8 = vector.shape_cast %7 : vector<1x128x128xbf16> to vector<128x128xbf16>
    %cst_11 = arith.constant dense<0.000000e+00> : vector<64x128xf32>
    %9 = tpu.matmul %6, %8, %cst_11 {dimension_numbers = #tpu.dot_dimension_numbers<[1], [0], [0], [1], [0, 0, 1, 1], [], []>} : vector<64x128xbf16>, vector<128x128xbf16>, vector<64x128xf32> -> vector<64x128xf32>
    %10 = arith.addf %4, %9 : vector<64x128xf32>
    %c0_12 = arith.constant 0 : index
    %c0_13 = arith.constant 0 : index
    %c1_14 = arith.constant 1 : index
    %c0_15 = arith.constant 0 : index
    %11 = vector.load %arg1[%c0_12, %c0_13, %c1_14, %c0_15] : memref<1x36x9x128xbf16, #tpu.memory_space<vmem>>, vector<1x8x8x128xbf16>
    %12 = vector.shape_cast %11 : vector<1x8x8x128xbf16> to vector<64x128xbf16>
    %c2 = arith.constant 2 : index
    %c0_16 = arith.constant 0 : index
    %c0_17 = arith.constant 0 : index
    %13 = vector.load %arg2[%c2, %c0_16, %c0_17] : memref<9x128x128xbf16, #tpu.memory_space<vmem>>, vector<1x128x128xbf16>
    %14 = vector.shape_cast %13 : vector<1x128x128xbf16> to vector<128x128xbf16>
    %cst_18 = arith.constant dense<0.000000e+00> : vector<64x128xf32>
    %15 = tpu.matmul %12, %14, %cst_18 {dimension_numbers = #tpu.dot_dimension_numbers<[1], [0], [0], [1], [0, 0, 1, 1], [], []>} : vector<64x128xbf16>, vector<128x128xbf16>, vector<64x128xf32> -> vector<64x128xf32>
    %16 = arith.addf %10, %15 : vector<64x128xf32>
    %c0_19 = arith.constant 0 : index
    %c18 = arith.constant 18 : index
    %c0_20 = arith.constant 0 : index
    %c0_21 = arith.constant 0 : index
    %17 = vector.load %arg1[%c0_19, %c18, %c0_20, %c0_21] : memref<1x36x9x128xbf16, #tpu.memory_space<vmem>>, vector<1x8x8x128xbf16>
    %18 = vector.shape_cast %17 : vector<1x8x8x128xbf16> to vector<64x128xbf16>
    %c3 = arith.constant 3 : index
    %c0_22 = arith.constant 0 : index
    %c0_23 = arith.constant 0 : index
    %19 = vector.load %arg2[%c3, %c0_22, %c0_23] : memref<9x128x128xbf16, #tpu.memory_space<vmem>>, vector<1x128x128xbf16>
    %20 = vector.shape_cast %19 : vector<1x128x128xbf16> to vector<128x128xbf16>
    %cst_24 = arith.constant dense<0.000000e+00> : vector<64x128xf32>
    %21 = tpu.matmul %18, %20, %cst_24 {dimension_numbers = #tpu.dot_dimension_numbers<[1], [0], [0], [1], [0, 0, 1, 1], [], []>} : vector<64x128xbf16>, vector<128x128xbf16>, vector<64x128xf32> -> vector<64x128xf32>
    %22 = arith.addf %16, %21 : vector<64x128xf32>
    %c0_25 = arith.constant 0 : index
    %c27 = arith.constant 27 : index
    %c0_26 = arith.constant 0 : index
    %c0_27 = arith.constant 0 : index
    %23 = vector.load %arg1[%c0_25, %c27, %c0_26, %c0_27] : memref<1x36x9x128xbf16, #tpu.memory_space<vmem>>, vector<1x8x8x128xbf16>
    %24 = vector.shape_cast %23 : vector<1x8x8x128xbf16> to vector<64x128xbf16>
    %c4 = arith.constant 4 : index
    %c0_28 = arith.constant 0 : index
    %c0_29 = arith.constant 0 : index
    %25 = vector.load %arg2[%c4, %c0_28, %c0_29] : memref<9x128x128xbf16, #tpu.memory_space<vmem>>, vector<1x128x128xbf16>
    %26 = vector.shape_cast %25 : vector<1x128x128xbf16> to vector<128x128xbf16>
    %cst_30 = arith.constant dense<0.000000e+00> : vector<64x128xf32>
    %27 = tpu.matmul %24, %26, %cst_30 {dimension_numbers = #tpu.dot_dimension_numbers<[1], [0], [0], [1], [0, 0, 1, 1], [], []>} : vector<64x128xbf16>, vector<128x128xbf16>, vector<64x128xf32> -> vector<64x128xf32>
    %28 = arith.addf %22, %27 : vector<64x128xf32>
    %c0_31 = arith.constant 0 : index
    %c18_32 = arith.constant 18 : index
    %c1_33 = arith.constant 1 : index
    %c0_34 = arith.constant 0 : index
    %29 = vector.load %arg1[%c0_31, %c18_32, %c1_33, %c0_34] : memref<1x36x9x128xbf16, #tpu.memory_space<vmem>>, vector<1x8x8x128xbf16>
    %30 = vector.shape_cast %29 : vector<1x8x8x128xbf16> to vector<64x128xbf16>
    %c5 = arith.constant 5 : index
    %c0_35 = arith.constant 0 : index
    %c0_36 = arith.constant 0 : index
    %31 = vector.load %arg2[%c5, %c0_35, %c0_36] : memref<9x128x128xbf16, #tpu.memory_space<vmem>>, vector<1x128x128xbf16>
    %32 = vector.shape_cast %31 : vector<1x128x128xbf16> to vector<128x128xbf16>
    %cst_37 = arith.constant dense<0.000000e+00> : vector<64x128xf32>
    %33 = tpu.matmul %30, %32, %cst_37 {dimension_numbers = #tpu.dot_dimension_numbers<[1], [0], [0], [1], [0, 0, 1, 1], [], []>} : vector<64x128xbf16>, vector<128x128xbf16>, vector<64x128xf32> -> vector<64x128xf32>
    %34 = arith.addf %28, %33 : vector<64x128xf32>
    %c0_38 = arith.constant 0 : index
    %c1_39 = arith.constant 1 : index
    %c0_40 = arith.constant 0 : index
    %c0_41 = arith.constant 0 : index
    %35 = vector.load %arg1[%c0_38, %c1_39, %c0_40, %c0_41] : memref<1x36x9x128xbf16, #tpu.memory_space<vmem>>, vector<1x8x8x128xbf16>
    %36 = vector.shape_cast %35 : vector<1x8x8x128xbf16> to vector<64x128xbf16>
    %c6 = arith.constant 6 : index
    %c0_42 = arith.constant 0 : index
    %c0_43 = arith.constant 0 : index
    %37 = vector.load %arg2[%c6, %c0_42, %c0_43] : memref<9x128x128xbf16, #tpu.memory_space<vmem>>, vector<1x128x128xbf16>
    %38 = vector.shape_cast %37 : vector<1x128x128xbf16> to vector<128x128xbf16>
    %cst_44 = arith.constant dense<0.000000e+00> : vector<64x128xf32>
    %39 = tpu.matmul %36, %38, %cst_44 {dimension_numbers = #tpu.dot_dimension_numbers<[1], [0], [0], [1], [0, 0, 1, 1], [], []>} : vector<64x128xbf16>, vector<128x128xbf16>, vector<64x128xf32> -> vector<64x128xf32>
    %40 = arith.addf %34, %39 : vector<64x128xf32>
    %c0_45 = arith.constant 0 : index
    %c10 = arith.constant 10 : index
    %c0_46 = arith.constant 0 : index
    %c0_47 = arith.constant 0 : index
    %41 = vector.load %arg1[%c0_45, %c10, %c0_46, %c0_47] : memref<1x36x9x128xbf16, #tpu.memory_space<vmem>>, vector<1x8x8x128xbf16>
    %42 = vector.shape_cast %41 : vector<1x8x8x128xbf16> to vector<64x128xbf16>
    %c7 = arith.constant 7 : index
    %c0_48 = arith.constant 0 : index
    %c0_49 = arith.constant 0 : index
    %43 = vector.load %arg2[%c7, %c0_48, %c0_49] : memref<9x128x128xbf16, #tpu.memory_space<vmem>>, vector<1x128x128xbf16>
    %44 = vector.shape_cast %43 : vector<1x128x128xbf16> to vector<128x128xbf16>
    %cst_50 = arith.constant dense<0.000000e+00> : vector<64x128xf32>
    %45 = tpu.matmul %42, %44, %cst_50 {dimension_numbers = #tpu.dot_dimension_numbers<[1], [0], [0], [1], [0, 0, 1, 1], [], []>} : vector<64x128xbf16>, vector<128x128xbf16>, vector<64x128xf32> -> vector<64x128xf32>
    %46 = arith.addf %40, %45 : vector<64x128xf32>
    %c0_51 = arith.constant 0 : index
    %c1_52 = arith.constant 1 : index
    %c1_53 = arith.constant 1 : index
    %c0_54 = arith.constant 0 : index
    %47 = vector.load %arg1[%c0_51, %c1_52, %c1_53, %c0_54] : memref<1x36x9x128xbf16, #tpu.memory_space<vmem>>, vector<1x8x8x128xbf16>
    %48 = vector.shape_cast %47 : vector<1x8x8x128xbf16> to vector<64x128xbf16>
    %c8 = arith.constant 8 : index
    %c0_55 = arith.constant 0 : index
    %c0_56 = arith.constant 0 : index
    %49 = vector.load %arg2[%c8, %c0_55, %c0_56] : memref<9x128x128xbf16, #tpu.memory_space<vmem>>, vector<1x128x128xbf16>
    %50 = vector.shape_cast %49 : vector<1x128x128xbf16> to vector<128x128xbf16>
    %cst_57 = arith.constant dense<0.000000e+00> : vector<64x128xf32>
    %51 = tpu.matmul %48, %50, %cst_57 {dimension_numbers = #tpu.dot_dimension_numbers<[1], [0], [0], [1], [0, 0, 1, 1], [], []>} : vector<64x128xbf16>, vector<128x128xbf16>, vector<64x128xf32> -> vector<64x128xf32>
    %52 = arith.addf %46, %51 : vector<64x128xf32>
    %c0_58 = arith.constant 0 : index
    %c0_59 = arith.constant 0 : index
    %53 = vector.load %arg3[%c0_58, %c0_59] : memref<2x128xf32, #tpu.memory_space<vmem>>, vector<1x128xf32>
    %54 = vector.broadcast %53 : vector<1x128xf32> to vector<64x128xf32>
    %55 = arith.mulf %52, %54 : vector<64x128xf32>
    %c1_60 = arith.constant 1 : index
    %c0_61 = arith.constant 0 : index
    %56 = vector.load %arg3[%c1_60, %c0_61] : memref<2x128xf32, #tpu.memory_space<vmem>>, vector<1x128xf32>
    %57 = vector.broadcast %56 : vector<1x128xf32> to vector<64x128xf32>
    %58 = arith.addf %55, %57 : vector<64x128xf32>
    %cst_62 = arith.constant 0.000000e+00 : f32
    %59 = vector.broadcast %cst_62 : f32 to vector<64x128xf32>
    %60 = arith.cmpf ogt, %58, %59 : vector<64x128xf32>
    %cst_63 = arith.constant 1.000000e-01 : f32
    %61 = vector.broadcast %cst_63 : f32 to vector<64x128xf32>
    %62 = arith.mulf %61, %58 : vector<64x128xf32>
    %63 = arith.select %60, %58, %62 : vector<64x128xi1>, vector<64x128xf32>
    %64 = arith.truncf %63 : vector<64x128xf32> to vector<64x128xbf16>
    %c0_64 = arith.constant 0 : index
    %c0_65 = arith.constant 0 : index
    %65 = vector.load %arg4[%c0_64, %c0_65] : memref<64x128xbf16, #tpu.memory_space<vmem>>, vector<64x128xbf16>
    tpu.vector_store %arg4[%c0_64, %c0_65], %64 {strides = array<i32>} : memref<64x128xbf16, #tpu.memory_space<vmem>>, vector<64x128xbf16>,
    return
  }
  func.func @transform_0(%arg0: i32) -> (i32, i32, i32, i32) {
    %c0_i32 = arith.constant 0 : i32
    %c0_i32_0 = arith.constant 0 : i32
    %c0_i32_1 = arith.constant 0 : i32
    %c0_i32_2 = arith.constant 0 : i32
    return %arg0, %c0_i32, %c0_i32_0, %c0_i32_1 : i32, i32, i32, i32
  }
  func.func @transform_1(%arg0: i32) -> (i32, i32, i32) {
    %c0_i32 = arith.constant 0 : i32
    %c0_i32_0 = arith.constant 0 : i32
    %c0_i32_1 = arith.constant 0 : i32
    %c0_i32_2 = arith.constant 0 : i32
    return %c0_i32, %c0_i32_0, %c0_i32_1 : i32, i32, i32
  }
  func.func @transform_2(%arg0: i32) -> (i32, i32) {
    %c0_i32 = arith.constant 0 : i32
    %c0_i32_0 = arith.constant 0 : i32
    %c0_i32_1 = arith.constant 0 : i32
    return %c0_i32, %c0_i32_0 : i32, i32
  }
  func.func @transform_3(%arg0: i32) -> (i32, i32) {
    %c0_i32 = arith.constant 0 : i32
    %c0_i32_0 = arith.constant 0 : i32
    return %arg0, %c0_i32 : i32, i32
  }
}

module attributes {stable_mosaic.version = 11 : i64} {
  func.func @_conv_kernel(%arg0: i32, %arg1: memref<1x8x8x128xbf16, #tpu.memory_space<vmem>>, %arg2: memref<1x128x128xbf16, #tpu.memory_space<vmem>>, %arg3: memref<2x128xf32, #tpu.memory_space<vmem>>, %arg4: memref<64x128xbf16, #tpu.memory_space<vmem>>, %arg5: memref<64x128xbf16, #tpu.memory_space<vmem>>) attributes {dimension_semantics = [#tpu.dimension_semantics<parallel>], iteration_bounds = array<i64: 2>, scalar_prefetch = 0 : i64, scratch_operands = 0 : i64, tpu.core_type = #tpu.core_type<tc>, window_params = [{transform_indices = @transform_0, window_bounds = array<i64: 1, 8, 8, 128>}, {pipeline_mode = #tpu.pipeline_mode<synchronous>, transform_indices = @transform_1, window_bounds = array<i64: 1, 128, 128>}, {pipeline_mode = #tpu.pipeline_mode<synchronous>, transform_indices = @transform_2, window_bounds = array<i64: 2, 128>}, {transform_indices = @transform_3, window_bounds = array<i64: 64, 128>}, {transform_indices = @transform_4, window_bounds = array<i64: 64, 128>}]} {
    %c0 = arith.constant 0 : index
    %c0_0 = arith.constant 0 : index
    %c0_1 = arith.constant 0 : index
    %c0_2 = arith.constant 0 : index
    %0 = vector.load %arg1[%c0, %c0_0, %c0_1, %c0_2] : memref<1x8x8x128xbf16, #tpu.memory_space<vmem>>, vector<1x8x8x128xbf16>
    %1 = vector.shape_cast %0 : vector<1x8x8x128xbf16> to vector<64x128xbf16>
    %c0_3 = arith.constant 0 : index
    %c0_4 = arith.constant 0 : index
    %c0_5 = arith.constant 0 : index
    %2 = vector.load %arg2[%c0_3, %c0_4, %c0_5] : memref<1x128x128xbf16, #tpu.memory_space<vmem>>, vector<1x128x128xbf16>
    %3 = vector.shape_cast %2 : vector<1x128x128xbf16> to vector<128x128xbf16>
    %cst = arith.constant dense<0.000000e+00> : vector<64x128xf32>
    %4 = tpu.matmul %1, %3, %cst {dimension_numbers = #tpu.dot_dimension_numbers<[1], [0], [0], [1], [0, 0, 1, 1], [], []>} : vector<64x128xbf16>, vector<128x128xbf16>, vector<64x128xf32> -> vector<64x128xf32>
    %c0_6 = arith.constant 0 : index
    %c0_7 = arith.constant 0 : index
    %5 = vector.load %arg3[%c0_6, %c0_7] : memref<2x128xf32, #tpu.memory_space<vmem>>, vector<1x128xf32>
    %6 = vector.broadcast %5 : vector<1x128xf32> to vector<64x128xf32>
    %7 = arith.mulf %4, %6 : vector<64x128xf32>
    %c1 = arith.constant 1 : index
    %c0_8 = arith.constant 0 : index
    %8 = vector.load %arg3[%c1, %c0_8] : memref<2x128xf32, #tpu.memory_space<vmem>>, vector<1x128xf32>
    %9 = vector.broadcast %8 : vector<1x128xf32> to vector<64x128xf32>
    %10 = arith.addf %7, %9 : vector<64x128xf32>
    %cst_9 = arith.constant 0.000000e+00 : f32
    %11 = vector.broadcast %cst_9 : f32 to vector<64x128xf32>
    %12 = arith.cmpf ogt, %10, %11 : vector<64x128xf32>
    %cst_10 = arith.constant 1.000000e-01 : f32
    %13 = vector.broadcast %cst_10 : f32 to vector<64x128xf32>
    %14 = arith.mulf %13, %10 : vector<64x128xf32>
    %15 = arith.select %12, %10, %14 : vector<64x128xi1>, vector<64x128xf32>
    %c0_11 = arith.constant 0 : index
    %c0_12 = arith.constant 0 : index
    %16 = vector.load %arg4[%c0_11, %c0_12] : memref<64x128xbf16, #tpu.memory_space<vmem>>, vector<64x128xbf16>
    %17 = arith.extf %16 : vector<64x128xbf16> to vector<64x128xf32>
    %18 = arith.addf %15, %17 : vector<64x128xf32>
    %19 = arith.truncf %18 : vector<64x128xf32> to vector<64x128xbf16>
    %c0_13 = arith.constant 0 : index
    %c0_14 = arith.constant 0 : index
    %20 = vector.load %arg5[%c0_13, %c0_14] : memref<64x128xbf16, #tpu.memory_space<vmem>>, vector<64x128xbf16>
    tpu.vector_store %arg5[%c0_13, %c0_14], %19 {strides = array<i32>} : memref<64x128xbf16, #tpu.memory_space<vmem>>, vector<64x128xbf16>,
    return
  }
  func.func @transform_0(%arg0: i32) -> (i32, i32, i32, i32) {
    %c0_i32 = arith.constant 0 : i32
    %c0_i32_0 = arith.constant 0 : i32
    %c0_i32_1 = arith.constant 0 : i32
    %c0_i32_2 = arith.constant 0 : i32
    return %arg0, %c0_i32, %c0_i32_0, %c0_i32_1 : i32, i32, i32, i32
  }
  func.func @transform_1(%arg0: i32) -> (i32, i32, i32) {
    %c0_i32 = arith.constant 0 : i32
    %c0_i32_0 = arith.constant 0 : i32
    %c0_i32_1 = arith.constant 0 : i32
    %c0_i32_2 = arith.constant 0 : i32
    return %c0_i32, %c0_i32_0, %c0_i32_1 : i32, i32, i32
  }
  func.func @transform_2(%arg0: i32) -> (i32, i32) {
    %c0_i32 = arith.constant 0 : i32
    %c0_i32_0 = arith.constant 0 : i32
    %c0_i32_1 = arith.constant 0 : i32
    return %c0_i32, %c0_i32_0 : i32, i32
  }
  func.func @transform_3(%arg0: i32) -> (i32, i32) {
    %c0_i32 = arith.constant 0 : i32
    %c0_i32_0 = arith.constant 0 : i32
    return %arg0, %c0_i32 : i32, i32
  }
  func.func @transform_4(%arg0: i32) -> (i32, i32) {
    %c0_i32 = arith.constant 0 : i32
    %c0_i32_0 = arith.constant 0 : i32
    return %arg0, %c0_i32 : i32, i32
  }
}

module attributes {stable_mosaic.version = 11 : i64} {
  func.func @_maxpool2_s1_kernel(%arg0: i32, %arg1: memref<1x9x9x128xbf16, #tpu.memory_space<vmem>>, %arg2: memref<1x8x8x128xbf16, #tpu.memory_space<vmem>>) attributes {dimension_semantics = [#tpu.dimension_semantics<parallel>], iteration_bounds = array<i64: 2>, scalar_prefetch = 0 : i64, scratch_operands = 0 : i64, tpu.core_type = #tpu.core_type<tc>, window_params = [{transform_indices = @transform_0, window_bounds = array<i64: 1, 9, 9, 128>}, {transform_indices = @transform_1, window_bounds = array<i64: 1, 8, 8, 128>}]} {
    %c0 = arith.constant 0 : index
    %c0_0 = arith.constant 0 : index
    %c0_1 = arith.constant 0 : index
    %c0_2 = arith.constant 0 : index
    %0 = vector.load %arg1[%c0, %c0_0, %c0_1, %c0_2] : memref<1x9x9x128xbf16, #tpu.memory_space<vmem>>, vector<1x9x9x128xbf16>
    %1 = vector.extract_strided_slice %0 {offsets = [0, 0, 0, 0], sizes = [1, 8, 8, 128], strides = [1, 1, 1, 1]} : vector<1x9x9x128xbf16> to vector<1x8x8x128xbf16>
    %2 = vector.extract_strided_slice %0 {offsets = [0, 0, 1, 0], sizes = [1, 8, 8, 128], strides = [1, 1, 1, 1]} : vector<1x9x9x128xbf16> to vector<1x8x8x128xbf16>
    %3 = arith.maximumf %1, %2 : vector<1x8x8x128xbf16>
    %4 = vector.extract_strided_slice %0 {offsets = [0, 1, 0, 0], sizes = [1, 8, 8, 128], strides = [1, 1, 1, 1]} : vector<1x9x9x128xbf16> to vector<1x8x8x128xbf16>
    %5 = vector.extract_strided_slice %0 {offsets = [0, 1, 1, 0], sizes = [1, 8, 8, 128], strides = [1, 1, 1, 1]} : vector<1x9x9x128xbf16> to vector<1x8x8x128xbf16>
    %6 = arith.maximumf %4, %5 : vector<1x8x8x128xbf16>
    %7 = arith.maximumf %3, %6 : vector<1x8x8x128xbf16>
    %c0_3 = arith.constant 0 : index
    %c0_4 = arith.constant 0 : index
    %c0_5 = arith.constant 0 : index
    %c0_6 = arith.constant 0 : index
    %8 = vector.load %arg2[%c0_3, %c0_4, %c0_5, %c0_6] : memref<1x8x8x128xbf16, #tpu.memory_space<vmem>>, vector<1x8x8x128xbf16>
    tpu.vector_store %arg2[%c0_3, %c0_4, %c0_5, %c0_6], %7 {strides = array<i32>} : memref<1x8x8x128xbf16, #tpu.memory_space<vmem>>, vector<1x8x8x128xbf16>,
    return
  }
  func.func @transform_0(%arg0: i32) -> (i32, i32, i32, i32) {
    %c0_i32 = arith.constant 0 : i32
    %c0_i32_0 = arith.constant 0 : i32
    %c0_i32_1 = arith.constant 0 : i32
    %c0_i32_2 = arith.constant 0 : i32
    return %arg0, %c0_i32, %c0_i32_0, %c0_i32_1 : i32, i32, i32, i32
  }
  func.func @transform_1(%arg0: i32) -> (i32, i32, i32, i32) {
    %c0_i32 = arith.constant 0 : i32
    %c0_i32_0 = arith.constant 0 : i32
    %c0_i32_1 = arith.constant 0 : i32
    %c0_i32_2 = arith.constant 0 : i32
    return %arg0, %c0_i32, %c0_i32_0, %c0_i32_1 : i32, i32, i32, i32
  }
}

module attributes {stable_mosaic.version = 11 : i64} {
  func.func @_conv_kernel(%arg0: i32, %arg1: memref<1x8x8x128xbf16, #tpu.memory_space<vmem>>, %arg2: memref<1x128x128xbf16, #tpu.memory_space<vmem>>, %arg3: memref<2x128xf32, #tpu.memory_space<vmem>>, %arg4: memref<64x128xf32, #tpu.memory_space<vmem>>) attributes {dimension_semantics = [#tpu.dimension_semantics<parallel>], iteration_bounds = array<i64: 2>, scalar_prefetch = 0 : i64, scratch_operands = 0 : i64, tpu.core_type = #tpu.core_type<tc>, window_params = [{transform_indices = @transform_0, window_bounds = array<i64: 1, 8, 8, 128>}, {pipeline_mode = #tpu.pipeline_mode<synchronous>, transform_indices = @transform_1, window_bounds = array<i64: 1, 128, 128>}, {pipeline_mode = #tpu.pipeline_mode<synchronous>, transform_indices = @transform_2, window_bounds = array<i64: 2, 128>}, {transform_indices = @transform_3, window_bounds = array<i64: 64, 128>}]} {
    %c0 = arith.constant 0 : index
    %c0_0 = arith.constant 0 : index
    %c0_1 = arith.constant 0 : index
    %c0_2 = arith.constant 0 : index
    %0 = vector.load %arg1[%c0, %c0_0, %c0_1, %c0_2] : memref<1x8x8x128xbf16, #tpu.memory_space<vmem>>, vector<1x8x8x128xbf16>
    %1 = vector.shape_cast %0 : vector<1x8x8x128xbf16> to vector<64x128xbf16>
    %c0_3 = arith.constant 0 : index
    %c0_4 = arith.constant 0 : index
    %c0_5 = arith.constant 0 : index
    %2 = vector.load %arg2[%c0_3, %c0_4, %c0_5] : memref<1x128x128xbf16, #tpu.memory_space<vmem>>, vector<1x128x128xbf16>
    %3 = vector.shape_cast %2 : vector<1x128x128xbf16> to vector<128x128xbf16>
    %cst = arith.constant dense<0.000000e+00> : vector<64x128xf32>
    %4 = tpu.matmul %1, %3, %cst {dimension_numbers = #tpu.dot_dimension_numbers<[1], [0], [0], [1], [0, 0, 1, 1], [], []>} : vector<64x128xbf16>, vector<128x128xbf16>, vector<64x128xf32> -> vector<64x128xf32>
    %c0_6 = arith.constant 0 : index
    %c0_7 = arith.constant 0 : index
    %5 = vector.load %arg3[%c0_6, %c0_7] : memref<2x128xf32, #tpu.memory_space<vmem>>, vector<1x128xf32>
    %6 = vector.broadcast %5 : vector<1x128xf32> to vector<64x128xf32>
    %7 = arith.mulf %4, %6 : vector<64x128xf32>
    %c1 = arith.constant 1 : index
    %c0_8 = arith.constant 0 : index
    %8 = vector.load %arg3[%c1, %c0_8] : memref<2x128xf32, #tpu.memory_space<vmem>>, vector<1x128xf32>
    %9 = vector.broadcast %8 : vector<1x128xf32> to vector<64x128xf32>
    %10 = arith.addf %7, %9 : vector<64x128xf32>
    %c0_9 = arith.constant 0 : index
    %c0_10 = arith.constant 0 : index
    %11 = vector.load %arg4[%c0_9, %c0_10] : memref<64x128xf32, #tpu.memory_space<vmem>>, vector<64x128xf32>
    tpu.vector_store %arg4[%c0_9, %c0_10], %10 {strides = array<i32>} : memref<64x128xf32, #tpu.memory_space<vmem>>, vector<64x128xf32>,
    return
  }
  func.func @transform_0(%arg0: i32) -> (i32, i32, i32, i32) {
    %c0_i32 = arith.constant 0 : i32
    %c0_i32_0 = arith.constant 0 : i32
    %c0_i32_1 = arith.constant 0 : i32
    %c0_i32_2 = arith.constant 0 : i32
    return %arg0, %c0_i32, %c0_i32_0, %c0_i32_1 : i32, i32, i32, i32
  }
  func.func @transform_1(%arg0: i32) -> (i32, i32, i32) {
    %c0_i32 = arith.constant 0 : i32
    %c0_i32_0 = arith.constant 0 : i32
    %c0_i32_1 = arith.constant 0 : i32
    %c0_i32_2 = arith.constant 0 : i32
    return %c0_i32, %c0_i32_0, %c0_i32_1 : i32, i32, i32
  }
  func.func @transform_2(%arg0: i32) -> (i32, i32) {
    %c0_i32 = arith.constant 0 : i32
    %c0_i32_0 = arith.constant 0 : i32
    %c0_i32_1 = arith.constant 0 : i32
    return %c0_i32, %c0_i32_0 : i32, i32
  }
  func.func @transform_3(%arg0: i32) -> (i32, i32) {
    %c0_i32 = arith.constant 0 : i32
    %c0_i32_0 = arith.constant 0 : i32
    return %arg0, %c0_i32 : i32, i32
  }
}

module attributes {stable_mosaic.version = 11 : i64} {
  func.func @_yolo_kernel(%arg0: i32, %arg1: memref<1x8x8x128xf32, #tpu.memory_space<vmem>>, %arg2: memref<2x128xf32, #tpu.memory_space<vmem>>, %arg3: memref<1x8x8x128xf32, #tpu.memory_space<vmem>>) attributes {dimension_semantics = [#tpu.dimension_semantics<parallel>], iteration_bounds = array<i64: 2>, scalar_prefetch = 0 : i64, scratch_operands = 0 : i64, tpu.core_type = #tpu.core_type<tc>, window_params = [{transform_indices = @transform_0, window_bounds = array<i64: 1, 8, 8, 128>}, {pipeline_mode = #tpu.pipeline_mode<synchronous>, transform_indices = @transform_1, window_bounds = array<i64: 2, 128>}, {transform_indices = @transform_2, window_bounds = array<i64: 1, 8, 8, 128>}]} {
    %c0 = arith.constant 0 : index
    %c0_0 = arith.constant 0 : index
    %c0_1 = arith.constant 0 : index
    %c0_2 = arith.constant 0 : index
    %0 = vector.load %arg1[%c0, %c0_0, %c0_1, %c0_2] : memref<1x8x8x128xf32, #tpu.memory_space<vmem>>, vector<1x8x8x128xf32>
    %c0_3 = arith.constant 0 : index
    %c0_4 = arith.constant 0 : index
    %1 = vector.load %arg2[%c0_3, %c0_4] : memref<2x128xf32, #tpu.memory_space<vmem>>, vector<1x128xf32>
    %c1 = arith.constant 1 : index
    %c0_5 = arith.constant 0 : index
    %2 = vector.load %arg2[%c1, %c0_5] : memref<2x128xf32, #tpu.memory_space<vmem>>, vector<1x128xf32>
    %3 = tpu.iota {dimensions = array<i32: 1>} : vector<1x8x8x128xi32>
    %4 = arith.sitofp %3 : vector<1x8x8x128xi32> to vector<1x8x8x128xf32>
    %5 = tpu.iota {dimensions = array<i32: 2>} : vector<1x8x8x128xi32>
    %6 = arith.sitofp %5 : vector<1x8x8x128xi32> to vector<1x8x8x128xf32>
    %7 = arith.negf %0 : vector<1x8x8x128xf32>
    %8 = math.exp %7 : vector<1x8x8x128xf32>
    %cst = arith.constant 1.000000e+00 : f32
    %9 = vector.broadcast %cst : f32 to vector<1x8x8x128xf32>
    %10 = arith.addf %9, %8 : vector<1x8x8x128xf32>
    %11 = arith.divf %9, %10 : vector<1x8x8x128xf32>
    %cst_6 = arith.constant 0.000000e+00 : f32
    %12 = vector.broadcast %cst_6 : f32 to vector<1x128xf32>
    %13 = arith.cmpf oeq, %1, %12 : vector<1x128xf32>
    %cst_7 = arith.constant 0.000000e+00 : f32
    %14 = vector.shape_cast %13 : vector<1x128xi1> to vector<1x1x1x128xi1>
    %15 = vector.broadcast %14 : vector<1x1x1x128xi1> to vector<1x8x8x128xi1>
    %16 = vector.broadcast %cst_7 : f32 to vector<1x8x8x128xf32>
    %17 = arith.select %15, %6, %16 : vector<1x8x8x128xi1>, vector<1x8x8x128xf32>
    %cst_8 = arith.constant 1.000000e+00 : f32
    %18 = vector.broadcast %cst_8 : f32 to vector<1x128xf32>
    %19 = arith.cmpf oeq, %1, %18 : vector<1x128xf32>
    %cst_9 = arith.constant 0.000000e+00 : f32
    %20 = vector.shape_cast %19 : vector<1x128xi1> to vector<1x1x1x128xi1>
    %21 = vector.broadcast %20 : vector<1x1x1x128xi1> to vector<1x8x8x128xi1>
    %22 = vector.broadcast %cst_9 : f32 to vector<1x8x8x128xf32>
    %23 = arith.select %21, %4, %22 : vector<1x8x8x128xi1>, vector<1x8x8x128xf32>
    %24 = arith.addf %17, %23 : vector<1x8x8x128xf32>
    %25 = arith.addf %11, %24 : vector<1x8x8x128xf32>
    %cst_10 = arith.constant 2.000000e+00 : f32
    %26 = vector.broadcast %cst_10 : f32 to vector<1x8x8x128xf32>
    %27 = arith.mulf %25, %26 : vector<1x8x8x128xf32>
    %cst_11 = arith.constant 2.000000e+00 : f32
    %28 = vector.broadcast %cst_11 : f32 to vector<1x128xf32>
    %29 = arith.cmpf oeq, %1, %28 : vector<1x128xf32>
    %cst_12 = arith.constant 0.000000e+00 : f32
    %30 = vector.shape_cast %29 : vector<1x128xi1> to vector<1x1x1x128xi1>
    %31 = vector.broadcast %30 : vector<1x1x1x128xi1> to vector<1x8x8x128xi1>
    %32 = vector.broadcast %cst_12 : f32 to vector<1x8x8x128xf32>
    %33 = arith.select %31, %0, %32 : vector<1x8x8x128xi1>, vector<1x8x8x128xf32>
    %34 = math.exp %33 : vector<1x8x8x128xf32>
    %35 = vector.shape_cast %2 : vector<1x128xf32> to vector<1x1x1x128xf32>
    %36 = vector.broadcast %35 : vector<1x1x1x128xf32> to vector<1x8x8x128xf32>
    %37 = arith.mulf %34, %36 : vector<1x8x8x128xf32>
    %cst_13 = arith.constant 1.000000e+00 : f32
    %38 = vector.broadcast %cst_13 : f32 to vector<1x128xf32>
    %39 = arith.cmpf ole, %1, %38 : vector<1x128xf32>
    %40 = vector.shape_cast %29 : vector<1x128xi1> to vector<1x1x1x128xi1>
    %41 = vector.broadcast %40 : vector<1x1x1x128xi1> to vector<1x8x8x128xi1>
    %42 = arith.select %41, %37, %11 : vector<1x8x8x128xi1>, vector<1x8x8x128xf32>
    %43 = vector.shape_cast %39 : vector<1x128xi1> to vector<1x1x1x128xi1>
    %44 = vector.broadcast %43 : vector<1x1x1x128xi1> to vector<1x8x8x128xi1>
    %45 = arith.select %44, %27, %42 : vector<1x8x8x128xi1>, vector<1x8x8x128xf32>
    %c0_14 = arith.constant 0 : index
    %c0_15 = arith.constant 0 : index
    %c0_16 = arith.constant 0 : index
    %c0_17 = arith.constant 0 : index
    %46 = vector.load %arg3[%c0_14, %c0_15, %c0_16, %c0_17] : memref<1x8x8x128xf32, #tpu.memory_space<vmem>>, vector<1x8x8x128xf32>
    tpu.vector_store %arg3[%c0_14, %c0_15, %c0_16, %c0_17], %45 {strides = array<i32>} : memref<1x8x8x128xf32, #tpu.memory_space<vmem>>, vector<1x8x8x128xf32>,
    return
  }
  func.func @transform_0(%arg0: i32) -> (i32, i32, i32, i32) {
    %c0_i32 = arith.constant 0 : i32
    %c0_i32_0 = arith.constant 0 : i32
    %c0_i32_1 = arith.constant 0 : i32
    %c0_i32_2 = arith.constant 0 : i32
    return %arg0, %c0_i32, %c0_i32_0, %c0_i32_1 : i32, i32, i32, i32
  }
  func.func @transform_1(%arg0: i32) -> (i32, i32) {
    %c0_i32 = arith.constant 0 : i32
    %c0_i32_0 = arith.constant 0 : i32
    %c0_i32_1 = arith.constant 0 : i32
    return %c0_i32, %c0_i32_0 : i32, i32
  }
  func.func @transform_2(%arg0: i32) -> (i32, i32, i32, i32) {
    %c0_i32 = arith.constant 0 : i32
    %c0_i32_0 = arith.constant 0 : i32
    %c0_i32_1 = arith.constant 0 : i32
    %c0_i32_2 = arith.constant 0 : i32
    return %arg0, %c0_i32, %c0_i32_0, %c0_i32_1 : i32, i32, i32, i32
  }
}

module attributes {stable_mosaic.version = 11 : i64} {
  func.func @_conv_kernel(%arg0: i32, %arg1: memref<1x16x16x256xbf16, #tpu.memory_space<vmem>>, %arg2: memref<1x256x128xbf16, #tpu.memory_space<vmem>>, %arg3: memref<2x128xf32, #tpu.memory_space<vmem>>, %arg4: memref<256x128xf32, #tpu.memory_space<vmem>>) attributes {dimension_semantics = [#tpu.dimension_semantics<parallel>], iteration_bounds = array<i64: 2>, scalar_prefetch = 0 : i64, scratch_operands = 0 : i64, tpu.core_type = #tpu.core_type<tc>, window_params = [{transform_indices = @transform_0, window_bounds = array<i64: 1, 16, 16, 256>}, {pipeline_mode = #tpu.pipeline_mode<synchronous>, transform_indices = @transform_1, window_bounds = array<i64: 1, 256, 128>}, {pipeline_mode = #tpu.pipeline_mode<synchronous>, transform_indices = @transform_2, window_bounds = array<i64: 2, 128>}, {transform_indices = @transform_3, window_bounds = array<i64: 256, 128>}]} {
    %c0 = arith.constant 0 : index
    %c0_0 = arith.constant 0 : index
    %c0_1 = arith.constant 0 : index
    %c0_2 = arith.constant 0 : index
    %0 = vector.load %arg1[%c0, %c0_0, %c0_1, %c0_2] : memref<1x16x16x256xbf16, #tpu.memory_space<vmem>>, vector<1x16x16x256xbf16>
    %1 = vector.shape_cast %0 : vector<1x16x16x256xbf16> to vector<256x256xbf16>
    %c0_3 = arith.constant 0 : index
    %c0_4 = arith.constant 0 : index
    %c0_5 = arith.constant 0 : index
    %2 = vector.load %arg2[%c0_3, %c0_4, %c0_5] : memref<1x256x128xbf16, #tpu.memory_space<vmem>>, vector<1x256x128xbf16>
    %3 = vector.shape_cast %2 : vector<1x256x128xbf16> to vector<256x128xbf16>
    %cst = arith.constant dense<0.000000e+00> : vector<256x128xf32>
    %4 = tpu.matmul %1, %3, %cst {dimension_numbers = #tpu.dot_dimension_numbers<[1], [0], [0], [1], [0, 0, 1, 1], [], []>} : vector<256x256xbf16>, vector<256x128xbf16>, vector<256x128xf32> -> vector<256x128xf32>
    %c0_6 = arith.constant 0 : index
    %c0_7 = arith.constant 0 : index
    %5 = vector.load %arg3[%c0_6, %c0_7] : memref<2x128xf32, #tpu.memory_space<vmem>>, vector<1x128xf32>
    %6 = vector.broadcast %5 : vector<1x128xf32> to vector<256x128xf32>
    %7 = arith.mulf %4, %6 : vector<256x128xf32>
    %c1 = arith.constant 1 : index
    %c0_8 = arith.constant 0 : index
    %8 = vector.load %arg3[%c1, %c0_8] : memref<2x128xf32, #tpu.memory_space<vmem>>, vector<1x128xf32>
    %9 = vector.broadcast %8 : vector<1x128xf32> to vector<256x128xf32>
    %10 = arith.addf %7, %9 : vector<256x128xf32>
    %c0_9 = arith.constant 0 : index
    %c0_10 = arith.constant 0 : index
    %11 = vector.load %arg4[%c0_9, %c0_10] : memref<256x128xf32, #tpu.memory_space<vmem>>, vector<256x128xf32>
    tpu.vector_store %arg4[%c0_9, %c0_10], %10 {strides = array<i32>} : memref<256x128xf32, #tpu.memory_space<vmem>>, vector<256x128xf32>,
    return
  }
  func.func @transform_0(%arg0: i32) -> (i32, i32, i32, i32) {
    %c0_i32 = arith.constant 0 : i32
    %c0_i32_0 = arith.constant 0 : i32
    %c0_i32_1 = arith.constant 0 : i32
    %c0_i32_2 = arith.constant 0 : i32
    return %arg0, %c0_i32, %c0_i32_0, %c0_i32_1 : i32, i32, i32, i32
  }
  func.func @transform_1(%arg0: i32) -> (i32, i32, i32) {
    %c0_i32 = arith.constant 0 : i32
    %c0_i32_0 = arith.constant 0 : i32
    %c0_i32_1 = arith.constant 0 : i32
    %c0_i32_2 = arith.constant 0 : i32
    return %c0_i32, %c0_i32_0, %c0_i32_1 : i32, i32, i32
  }
  func.func @transform_2(%arg0: i32) -> (i32, i32) {
    %c0_i32 = arith.constant 0 : i32
    %c0_i32_0 = arith.constant 0 : i32
    %c0_i32_1 = arith.constant 0 : i32
    return %c0_i32, %c0_i32_0 : i32, i32
  }
  func.func @transform_3(%arg0: i32) -> (i32, i32) {
    %c0_i32 = arith.constant 0 : i32
    %c0_i32_0 = arith.constant 0 : i32
    return %arg0, %c0_i32 : i32, i32
  }
}

module attributes {stable_mosaic.version = 11 : i64} {
  func.func @_yolo_kernel(%arg0: i32, %arg1: memref<1x16x16x128xf32, #tpu.memory_space<vmem>>, %arg2: memref<2x128xf32, #tpu.memory_space<vmem>>, %arg3: memref<1x16x16x128xf32, #tpu.memory_space<vmem>>) attributes {dimension_semantics = [#tpu.dimension_semantics<parallel>], iteration_bounds = array<i64: 2>, scalar_prefetch = 0 : i64, scratch_operands = 0 : i64, tpu.core_type = #tpu.core_type<tc>, window_params = [{transform_indices = @transform_0, window_bounds = array<i64: 1, 16, 16, 128>}, {pipeline_mode = #tpu.pipeline_mode<synchronous>, transform_indices = @transform_1, window_bounds = array<i64: 2, 128>}, {transform_indices = @transform_2, window_bounds = array<i64: 1, 16, 16, 128>}]} {
    %c0 = arith.constant 0 : index
    %c0_0 = arith.constant 0 : index
    %c0_1 = arith.constant 0 : index
    %c0_2 = arith.constant 0 : index
    %0 = vector.load %arg1[%c0, %c0_0, %c0_1, %c0_2] : memref<1x16x16x128xf32, #tpu.memory_space<vmem>>, vector<1x16x16x128xf32>
    %c0_3 = arith.constant 0 : index
    %c0_4 = arith.constant 0 : index
    %1 = vector.load %arg2[%c0_3, %c0_4] : memref<2x128xf32, #tpu.memory_space<vmem>>, vector<1x128xf32>
    %c1 = arith.constant 1 : index
    %c0_5 = arith.constant 0 : index
    %2 = vector.load %arg2[%c1, %c0_5] : memref<2x128xf32, #tpu.memory_space<vmem>>, vector<1x128xf32>
    %3 = tpu.iota {dimensions = array<i32: 1>} : vector<1x16x16x128xi32>
    %4 = arith.sitofp %3 : vector<1x16x16x128xi32> to vector<1x16x16x128xf32>
    %5 = tpu.iota {dimensions = array<i32: 2>} : vector<1x16x16x128xi32>
    %6 = arith.sitofp %5 : vector<1x16x16x128xi32> to vector<1x16x16x128xf32>
    %7 = arith.negf %0 : vector<1x16x16x128xf32>
    %8 = math.exp %7 : vector<1x16x16x128xf32>
    %cst = arith.constant 1.000000e+00 : f32
    %9 = vector.broadcast %cst : f32 to vector<1x16x16x128xf32>
    %10 = arith.addf %9, %8 : vector<1x16x16x128xf32>
    %11 = arith.divf %9, %10 : vector<1x16x16x128xf32>
    %cst_6 = arith.constant 0.000000e+00 : f32
    %12 = vector.broadcast %cst_6 : f32 to vector<1x128xf32>
    %13 = arith.cmpf oeq, %1, %12 : vector<1x128xf32>
    %cst_7 = arith.constant 0.000000e+00 : f32
    %14 = vector.shape_cast %13 : vector<1x128xi1> to vector<1x1x1x128xi1>
    %15 = vector.broadcast %14 : vector<1x1x1x128xi1> to vector<1x16x16x128xi1>
    %16 = vector.broadcast %cst_7 : f32 to vector<1x16x16x128xf32>
    %17 = arith.select %15, %6, %16 : vector<1x16x16x128xi1>, vector<1x16x16x128xf32>
    %cst_8 = arith.constant 1.000000e+00 : f32
    %18 = vector.broadcast %cst_8 : f32 to vector<1x128xf32>
    %19 = arith.cmpf oeq, %1, %18 : vector<1x128xf32>
    %cst_9 = arith.constant 0.000000e+00 : f32
    %20 = vector.shape_cast %19 : vector<1x128xi1> to vector<1x1x1x128xi1>
    %21 = vector.broadcast %20 : vector<1x1x1x128xi1> to vector<1x16x16x128xi1>
    %22 = vector.broadcast %cst_9 : f32 to vector<1x16x16x128xf32>
    %23 = arith.select %21, %4, %22 : vector<1x16x16x128xi1>, vector<1x16x16x128xf32>
    %24 = arith.addf %17, %23 : vector<1x16x16x128xf32>
    %25 = arith.addf %11, %24 : vector<1x16x16x128xf32>
    %cst_10 = arith.constant 1.000000e+00 : f32
    %26 = vector.broadcast %cst_10 : f32 to vector<1x16x16x128xf32>
    %27 = arith.mulf %25, %26 : vector<1x16x16x128xf32>
    %cst_11 = arith.constant 2.000000e+00 : f32
    %28 = vector.broadcast %cst_11 : f32 to vector<1x128xf32>
    %29 = arith.cmpf oeq, %1, %28 : vector<1x128xf32>
    %cst_12 = arith.constant 0.000000e+00 : f32
    %30 = vector.shape_cast %29 : vector<1x128xi1> to vector<1x1x1x128xi1>
    %31 = vector.broadcast %30 : vector<1x1x1x128xi1> to vector<1x16x16x128xi1>
    %32 = vector.broadcast %cst_12 : f32 to vector<1x16x16x128xf32>
    %33 = arith.select %31, %0, %32 : vector<1x16x16x128xi1>, vector<1x16x16x128xf32>
    %34 = math.exp %33 : vector<1x16x16x128xf32>
    %35 = vector.shape_cast %2 : vector<1x128xf32> to vector<1x1x1x128xf32>
    %36 = vector.broadcast %35 : vector<1x1x1x128xf32> to vector<1x16x16x128xf32>
    %37 = arith.mulf %34, %36 : vector<1x16x16x128xf32>
    %cst_13 = arith.constant 1.000000e+00 : f32
    %38 = vector.broadcast %cst_13 : f32 to vector<1x128xf32>
    %39 = arith.cmpf ole, %1, %38 : vector<1x128xf32>
    %40 = vector.shape_cast %29 : vector<1x128xi1> to vector<1x1x1x128xi1>
    %41 = vector.broadcast %40 : vector<1x1x1x128xi1> to vector<1x16x16x128xi1>
    %42 = arith.select %41, %37, %11 : vector<1x16x16x128xi1>, vector<1x16x16x128xf32>
    %43 = vector.shape_cast %39 : vector<1x128xi1> to vector<1x1x1x128xi1>
    %44 = vector.broadcast %43 : vector<1x1x1x128xi1> to vector<1x16x16x128xi1>
    %45 = arith.select %44, %27, %42 : vector<1x16x16x128xi1>, vector<1x16x16x128xf32>
    %c0_14 = arith.constant 0 : index
    %c0_15 = arith.constant 0 : index
    %c0_16 = arith.constant 0 : index
    %c0_17 = arith.constant 0 : index
    %46 = vector.load %arg3[%c0_14, %c0_15, %c0_16, %c0_17] : memref<1x16x16x128xf32, #tpu.memory_space<vmem>>, vector<1x16x16x128xf32>
    tpu.vector_store %arg3[%c0_14, %c0_15, %c0_16, %c0_17], %45 {strides = array<i32>} : memref<1x16x16x128xf32, #tpu.memory_space<vmem>>, vector<1x16x16x128xf32>,
    return
  }
  func.func @transform_0(%arg0: i32) -> (i32, i32, i32, i32) {
    %c0_i32 = arith.constant 0 : i32
    %c0_i32_0 = arith.constant 0 : i32
    %c0_i32_1 = arith.constant 0 : i32
    %c0_i32_2 = arith.constant 0 : i32
    return %arg0, %c0_i32, %c0_i32_0, %c0_i32_1 : i32, i32, i32, i32
  }
  func.func @transform_1(%arg0: i32) -> (i32, i32) {
    %c0_i32 = arith.constant 0 : i32
    %c0_i32_0 = arith.constant 0 : i32
    %c0_i32_1 = arith.constant 0 : i32
    return %c0_i32, %c0_i32_0 : i32, i32
  }
  func.func @transform_2(%arg0: i32) -> (i32, i32, i32, i32) {
    %c0_i32 = arith.constant 0 : i32
    %c0_i32_0 = arith.constant 0 : i32
    %c0_i32_1 = arith.constant 0 : i32
    %c0_i32_2 = arith.constant 0 : i32
    return %arg0, %c0_i32, %c0_i32_0, %c0_i32_1 : i32, i32, i32, i32
  }
}

</mosaic_0001>

<llo_original>
// kernel: _forward.10
$region0: #{_forward.10}
  #allocation0 [shape = 'u32[]', space=smem, size = 0x4, offset = 0x4, fixed_abs, tag = 'smem constant byte address 0x4 - core index']
  #allocation1 [shape = 'u32[144,128]{1,0:T(1,128)}', space=vmem, size = 0x12000, scoped, tag = 'internal scratch']
  %s0 = inlined_call_operand.vmem [shape: bf16[2,8,8,128], index: 0, kind: input, shape index: {}, may-alias: {0,3}]
  %s1 = inlined_call_operand.vmem [shape: bf16[1,128,128], index: 1, kind: input, shape index: {}]
  %s2 = inlined_call_operand.vmem [shape: f32[2,128], index: 2, kind: input, shape index: {}]
  %s3 = inlined_call_operand.vmem [shape: bf16[128,128], index: 3, kind: input, shape index: {}, may-alias: {0,3}]
  %s4 = inlined_call_operand.vmem [shape: bf16[128,128], index: 4, kind: output, shape index: {}]
  %s5 = sld [smem:[#allocation0]]
  $region49: #{_forward.10} parent=0
    _
  %s7 = ssub.s32 1, %s5
  %s8 = scalar_select 0, %s7, %s5
  loop: start=0, step=1, limit=4
  $region2: #{_forward.10} parent=0 // loop_pre_header
    _
  $region3: #{_forward.10} parent=0 // loop_header
    %s10 = sphi 0, %s14
    %p11 = scmp.ge.s32.totalorder %s10, 4
    %s20 = sphi 0, %s22
    %s23 = sphi 0, %s20
    %s24 = sphi 0, %s23
    %s40 = sphi 0, %s24
    %s44 = sphi 0, %s44
    %s46 = sphi 0, %s44
    %s47 = sphi 0, %s46
    %s61 = sphi 0, %s47
    %s65 = sphi 0, %s65
    %s67 = sphi 0, %s65
    %s68 = sphi 0, %s67
    %s82 = sphi 0, %s68
    %s88 = sphi 0, %s90
    %s91 = sphi 0, %s88
    %s92 = sphi 0, %s91
    %s108 = sphi 0, %s92
    %s114 = sphi 0, %s116
    %s117 = sphi 0, %s114
    %s118 = sphi 0, %s117
    %s134 = sphi 0, %s118
  $region4: #{_forward.10} parent=0 // loop_header_branch
    %13 = sbr.rel (%p11) target = $region8
  $region5: #{_forward.10} parent=0 // loop_body
    %s15 = ssub.s32 %s10, 1
    %s16 = ssub.s32 %s10, 2
    %s17 = sadd.s32 %s10, 1
    %s18 = ssub.s32 %s10, %s17
    %p19 = scmp.eq.s32.totalorder %s18, 0
    %s21 = sadd.s32 %s20, 1
    %s22 = scalar_select %p19, %s20, %s21
    %p25 = pneg %p19
    %p26 = scmp.eq.s32.totalorder %s10, 1
    %p27 = por %p25, %p26
    %p28 = scmp.ne.s32.totalorder %s20, %s23
    %p29 = scmp.eq.s32.totalorder %s10, 0
    %p30 = por %p28, %p29
    %p31 = scmp.ne.s32.totalorder %s20, %s23
    %p32 = scmp.eq.s32.totalorder %s15, 1
    %p33 = por %p31, %p32
    %p34 = scmp.ne.s32.totalorder %s23, %s24
    %p35 = scmp.eq.s32.totalorder %s15, 0
    %p36 = por %p34, %p35
    %p37 = scmp.ne.s32.totalorder %s23, %s24
    %p38 = scmp.eq.s32.totalorder %s16, 1
    %p39 = por %p37, %p38
    %p41 = scmp.ne.s32.totalorder %s24, %s40
    %p42 = scmp.eq.s32.totalorder %s16, 0
    %p43 = por %p41, %p42
    %s45 = sadd.s32 %s44, 1
    %p48 = scmp.eq.s32.totalorder %s10, 1
    %p49 = scmp.ne.s32.totalorder %s44, %s46
    %p50 = scmp.eq.s32.totalorder %s10, 0
    %p51 = por %p49, %p50
    %p52 = scmp.ne.s32.totalorder %s44, %s46
    %p53 = scmp.eq.s32.totalorder %s15, 1
    %p54 = por %p52, %p53
    %p55 = scmp.ne.s32.totalorder %s46, %s47
    %p56 = scmp.eq.s32.totalorder %s15, 0
    %p57 = por %p55, %p56
    %p58 = scmp.ne.s32.totalorder %s46, %s47
    %p59 = scmp.eq.s32.totalorder %s16, 1
    %p60 = por %p58, %p59
    %p62 = scmp.ne.s32.totalorder %s47, %s61
    %p63 = scmp.eq.s32.totalorder %s16, 0
    %p64 = por %p62, %p63
    %s66 = sadd.s32 %s65, 1
    %p69 = scmp.eq.s32.totalorder %s10, 1
    %p70 = scmp.ne.s32.totalorder %s65, %s67
    %p71 = scmp.eq.s32.totalorder %s10, 0
    %p72 = por %p70, %p71
    %p73 = scmp.ne.s32.totalorder %s65, %s67
    %p74 = scmp.eq.s32.totalorder %s15, 1
    %p75 = por %p73, %p74
    %p76 = scmp.ne.s32.totalorder %s67, %s68
    %p77 = scmp.eq.s32.totalorder %s15, 0
    %p78 = por %p76, %p77
    %p79 = scmp.ne.s32.totalorder %s67, %s68
    %p80 = scmp.eq.s32.totalorder %s16, 1
    %p81 = por %p79, %p80
    %p83 = scmp.ne.s32.totalorder %s68, %s82
    %p84 = scmp.eq.s32.totalorder %s16, 0
    %p85 = por %p83, %p84
    %s86 = ssub.s32 %s10, %s17
    %p87 = scmp.eq.s32.totalorder %s86, 0
    %s89 = sadd.s32 %s88, 1
    %s90 = scalar_select %p87, %s88, %s89
    %p93 = pneg %p87
    %p94 = scmp.eq.s32.totalorder %s10, 1
    %p95 = por %p93, %p94
    %p96 = scmp.ne.s32.totalorder %s88, %s91
    %p97 = scmp.eq.s32.totalorder %s10, 0
    %p98 = por %p96, %p97
    %p99 = scmp.ne.s32.totalorder %s88, %s91
    %p100 = scmp.eq.s32.totalorder %s15, 1
    %p101 = por %p99, %p100
    %p102 = scmp.ne.s32.totalorder %s91, %s92
    %p103 = scmp.eq.s32.totalorder %s15, 0
    %p104 = por %p102, %p103
    %p105 = scmp.ne.s32.totalorder %s91, %s92
    %p106 = scmp.eq.s32.totalorder %s16, 1
    %p107 = por %p105, %p106
    %p109 = scmp.ne.s32.totalorder %s92, %s108
    %p110 = scmp.eq.s32.totalorder %s16, 0
    %p111 = por %p109, %p110
    %s112 = ssub.s32 %s10, %s17
    %p113 = scmp.eq.s32.totalorder %s112, 0
    %s115 = sadd.s32 %s114, 1
    %s116 = scalar_select %p113, %s114, %s115
    %p119 = pneg %p113
    %p120 = scmp.eq.s32.totalorder %s10, 1
    %p121 = por %p119, %p120
    %p122 = scmp.ne.s32.totalorder %s114, %s117
    %p123 = scmp.eq.s32.totalorder %s10, 0
    %p124 = por %p122, %p123
    %p125 = scmp.ne.s32.totalorder %s114, %s117
    %p126 = scmp.eq.s32.totalorder %s15, 1
    %p127 = por %p125, %p126
    %p128 = scmp.ne.s32.totalorder %s117, %s118
    %p129 = scmp.eq.s32.totalorder %s15, 0
    %p130 = por %p128, %p129
    %p131 = scmp.ne.s32.totalorder %s117, %s118
    %p132 = scmp.eq.s32.totalorder %s16, 1
    %p133 = por %p131, %p132
    %p135 = scmp.ne.s32.totalorder %s118, %s134
    %p136 = scmp.eq.s32.totalorder %s16, 0
    %p137 = por %p135, %p136
    %p138 = scmp.le.s32.totalorder 1, %s10
    %p139 = scmp.lt.s32.totalorder %s10, 3
    %p140 = pnand %p138, %p139
    %p141 = pneg %p140
    // Predicated region
    $region9: #{_forward.10} parent=5 // pred_check
      _
    $region10: #{_forward.10} parent=5 // pred_check_branch
      %143 = sbr.rel (%p140) target = $region12
    $region11: #{_forward.10} parent=5 // pred_region
      %s144 = ssub.s32 %s10, 1
      // Predicated region
      $region13: #{_forward.10} parent=11 // pred_check
        %p145 = pneg %p57
      $region14: #{_forward.10} parent=11 // pred_check_branch
        %147 = sbr.rel (%p145) target = $region16
      $region15: #{_forward.10} parent=11 // pred_region
        _
      $region16: #{_forward.10} parent=11 // pred_fallthru
        _
      // Predicated region
      $region17: #{_forward.10} parent=11 // pred_check
        %p148 = pneg %p78
      $region18: #{_forward.10} parent=11 // pred_check_branch
        %150 = sbr.rel (%p148) target = $region20
      $region19: #{_forward.10} parent=11 // pred_region
        _
      $region20: #{_forward.10} parent=11 // pred_fallthru
        _
    $region12: #{_forward.10} parent=5 // pred_fallthru
      _
    %p151 = scmp.lt.s32.totalorder %s10, 2
    // Predicated region
    $region21: #{_forward.10} parent=5 // pred_check
      %p152 = pneg %p151
    $region22: #{_forward.10} parent=5 // pred_check_branch
      %154 = sbr.rel (%p152) target = $region24
    $region23: #{_forward.10} parent=5 // pred_region
      // Predicated region
      $region25: #{_forward.10} parent=23 // pred_check
        %p155 = pneg %p30
      $region26: #{_forward.10} parent=23 // pred_check_branch
        %157 = sbr.rel (%p155) target = $region28
      $region27: #{_forward.10} parent=23 // pred_region
        %p158 = scmp.lt.s32.totalorder %s10, 1
        %s159 = scalar_select %p158, %s10, 1
        %s160 = smul.addr %s159, 8
        %s161 = smul.addr %s160, 4
        %s162 = scalar_lea.vmem %s0, %s161
      $region28: #{_forward.10} parent=23 // pred_fallthru
        _
      // Predicated region
      $region29: #{_forward.10} parent=23 // pred_check
        %p163 = pneg %p98
      $region30: #{_forward.10} parent=23 // pred_check_branch
        %165 = sbr.rel (%p163) target = $region32
      $region31: #{_forward.10} parent=23 // pred_region
        %s166 = smul.u32 8, %s10
        %p167 = scmp.lt.s32.totalorder %s166, 15
        %s168 = scalar_select %p167, %s166, 15
        %s169 = smul.addr %s168, 4
        %s170 = scalar_lea.vmem %s3, %s169
        %s171 = smul.u32 8, %s10
      $region32: #{_forward.10} parent=23 // pred_fallthru
        _
    $region24: #{_forward.10} parent=5 // pred_fallthru
      _
    %p172 = scmp.le.s32.totalorder 1, %s10
    %p173 = scmp.lt.s32.totalorder %s10, 3
    %p174 = pnand %p172, %p173
    %p175 = pneg %p174
    // Predicated region
    $region33: #{_forward.10} parent=5 // pred_check
      _
    $region34: #{_forward.10} parent=5 // pred_check_branch
      %177 = sbr.rel (%p174) target = $region36
    $region35: #{_forward.10} parent=5 // pred_region
      %s178 = ssub.s32 %s10, 1
      %p179 = scmp.lt.s32.totalorder %s15, 1
      %s180 = scalar_select %p179, %s15, 1
      %s181 = smul.addr %s180, 8
      %s182 = smul.addr %s181, 4
      %s183 = scalar_lea.vmem %s0, %s182
      %p184 = pneg %p36
      %p185 = pneg %p33
      %p186 = pneg %p57
      %p187 = pneg %p54
      %p188 = pneg %p78
      %p189 = pneg %p75
      %s190 = smul.u32 8, %s15
      %p191 = scmp.lt.s32.totalorder %s190, 15
      %s192 = scalar_select %p191, %s190, 15
      %s193 = smul.addr %s192, 4
      %s194 = scalar_lea.vmem %s3, %s193
      %p195 = pneg %p104
      %p196 = pneg %p101
      %p197 = pneg %p130
      %p198 = pneg %p127
      %s199 = smul.u32 8, %s15
      %p200 = scmp.lt.s32.totalorder %s199, 15
      %s201 = scalar_select %p200, %s199, 15
      %s202 = smul.addr %s201, 4
      %s203 = scalar_lea.vmem %s4, %s202
      %p204 = scmp.lt.s32.totalorder %s15, 1
      %s205 = scalar_select %p204, %s15, 1
      %s206 = smul.addr %s205, 8
      %s207 = smul.addr %s206, 4
      %s208 = scalar_lea.vmem %s0, %s207
      %s209 = smul.u32 8, %s15
      %p210 = scmp.lt.s32.totalorder %s209, 15
      %s211 = scalar_select %p210, %s209, 15
      %s212 = smul.addr %s211, 4
      %s213 = scalar_lea.vmem %s3, %s212
      %s214 = smul.u32 8, %s15
      %s215 = smul.u32 8, %s15
      %p216 = scmp.lt.s32.totalorder %s215, 15
      %s217 = scalar_select %p216, %s215, 15
      %s218 = smul.addr %s217, 4
      %s219 = scalar_lea.vmem %s4, %s218
      %s220 = smul.u32 8, %s15
      %v222 = vld [vmem:[%s208] sm:$0xf]
      %v223 = vld [vmem:[%s208 + $0x4] sm:$0xf]
      %v224 = vld [vmem:[%s208 + $0x8] sm:$0xf]
      %v225 = vld [vmem:[%s208 + $0xc] sm:$0xf]
      %v226 = vld [vmem:[%s208 + $0x10] sm:$0xf]
      %v227 = vld [vmem:[%s208 + $0x14] sm:$0xf]
      %v228 = vld [vmem:[%s208 + $0x18] sm:$0xf]
      %v229 = vld [vmem:[%s208 + $0x1c] sm:$0xf]
      %v230 = vld [vmem:[%s1] sm:$0xf]
      %v231 = vld [vmem:[%s1 + $0x4] sm:$0xf]
      %v232 = vld [vmem:[%s1 + $0x8] sm:$0xf]
      %v233 = vld [vmem:[%s1 + $0xc] sm:$0xf]
      %v234 = vld [vmem:[%s1 + $0x10] sm:$0xf]
      %v235 = vld [vmem:[%s1 + $0x14] sm:$0xf]
      %v236 = vld [vmem:[%s1 + $0x18] sm:$0xf]
      %v237 = vld [vmem:[%s1 + $0x1c] sm:$0xf]
      %v238 = vld [vmem:[%s1 + $0x20] sm:$0xf]
      %v239 = vld [vmem:[%s1 + $0x24] sm:$0xf]
      %v240 = vld [vmem:[%s1 + $0x28] sm:$0xf]
      %v241 = vld [vmem:[%s1 + $0x2c] sm:$0xf]
      %v242 = vld [vmem:[%s1 + $0x30] sm:$0xf]
      %v243 = vld [vmem:[%s1 + $0x34] sm:$0xf]
      %v244 = vld [vmem:[%s1 + $0x38] sm:$0xf]
      %v245 = vld [vmem:[%s1 + $0x3c] sm:$0xf]
      %v254 = vunpack.c.l.b16 %v222
      %v255 = vunpack.c.l.b16 %v223
      %v256 = vunpack.c.l.b16 %v224
      %v257 = vunpack.c.l.b16 %v225
      %v258 = vunpack.c.l.b16 %v226
      %v259 = vunpack.c.l.b16 %v227
      %v260 = vunpack.c.l.b16 %v228
      %v261 = vunpack.c.l.b16 %v229
      %v262 = vpack.c.b16 %v255, %v254
      %v263 = vpack.c.b16 %v257, %v256
      %v264 = vpack.c.b16 %v259, %v258
      %v265 = vpack.c.b16 %v261, %v260
      %v286 = vunpack.c.l.b16 %v230
      %v287 = vunpack.c.l.b16 %v231
      %v288 = vunpack.c.l.b16 %v232
      %v289 = vunpack.c.l.b16 %v233
      %v290 = vunpack.c.l.b16 %v234
      %v291 = vunpack.c.l.b16 %v235
      %v292 = vunpack.c.l.b16 %v236
      %v293 = vunpack.c.l.b16 %v237
      %v294 = vunpack.c.l.b16 %v238
      %v295 = vunpack.c.l.b16 %v239
      %v296 = vunpack.c.l.b16 %v240
      %v297 = vunpack.c.l.b16 %v241
      %v298 = vunpack.c.l.b16 %v242
      %v299 = vunpack.c.l.b16 %v243
      %v300 = vunpack.c.l.b16 %v244
      %v301 = vunpack.c.l.b16 %v245
      %v302 = vpack.c.b16 %v287, %v286
      %v303 = vpack.c.b16 %v289, %v288
      %v304 = vpack.c.b16 %v291, %v290
      %v305 = vpack.c.b16 %v293, %v292
      %v306 = vpack.c.b16 %v295, %v294
      %v307 = vpack.c.b16 %v297, %v296
      %v308 = vpack.c.b16 %v299, %v298
      %v309 = vpack.c.b16 %v301, %v300
      %318 = vmatprep.subr.bf16.mxu0 0
      %319 = vmatpush1.bf16.msra.mxu0 %v302
      %320 = vmatprep.subr.bf16.mxu0 0
      %321 = vmatpush1.bf16.msra.mxu0 %v303
      %322 = vmatprep.subr.bf16.mxu0 0
      %323 = vmatpush1.bf16.msra.mxu0 %v304
      %324 = vmatprep.subr.bf16.mxu0 0
      %325 = vmatpush1.bf16.msra.mxu0 %v305
      %326 = vmatprep.subr.bf16.mxu0 0
      %327 = vmatpush1.bf16.msra.mxu0 %v306
      %328 = vmatprep.subr.bf16.mxu0 0
      %329 = vmatpush1.bf16.msra.mxu0 %v307
      %330 = vmatprep.subr.bf16.mxu0 0
      %331 = vmatpush1.bf16.msra.mxu0 %v308
      %332 = vmatprep.subr.bf16.mxu0 0
      %333 = vmatpush1.bf16.msra.mxu0 %v309
      %334 = vmatprep.subr.bf16.mxu0 0
      %335 = vmatpush1.bf16.msra.mxu0 0
      %336 = vmatprep.subr.bf16.mxu0 0
      %337 = vmatpush1.bf16.msra.mxu0 0
      %338 = vmatprep.subr.bf16.mxu0 0
      %339 = vmatpush1.bf16.msra.mxu0 0
      %340 = vmatprep.subr.bf16.mxu0 0
      %341 = vmatpush1.bf16.msra.mxu0 0
      %342 = vmatprep.subr.bf16.mxu0 0
      %343 = vmatpush1.bf16.msra.mxu0 0
      %344 = vmatprep.subr.bf16.mxu0 0
      %345 = vmatpush1.bf16.msra.mxu0 0
      %346 = vmatprep.subr.bf16.mxu0 0
      %347 = vmatpush1.bf16.msra.mxu0 0
      %348 = vmatprep.subr.bf16.mxu0 0
      %349 = vmatpush1.bf16.msra.mxu0 0
      %350 = vmatprep.mubr.bf16.mxu0 0
      %351 = vmatmul.mubr.bf16.gmra.mrb[0].mxu0 %v262
      %v352 = vpop.f32.mrb[0].mxu0
      %v353 = vadd.f32 0.0, %v352
      %v354 = vpop.f32.mrb[0].mxu0
      %v355 = vpop.f32.mrb[0].mxu0
      %v356 = vadd.f32 0.0, %v355
      %v357 = vpop.f32.mrb[0].mxu0
      %358 = vmatprep.mubr.bf16.mxu0 0
      %359 = vmatmul.mubr.bf16.gmra.mrb[0].mxu0 %v263
      %v360 = vpop.f32.mrb[0].mxu0
      %v361 = vadd.f32 0.0, %v360
      %v362 = vpop.f32.mrb[0].mxu0
      %v363 = vpop.f32.mrb[0].mxu0
      %v364 = vadd.f32 0.0, %v363
      %v365 = vpop.f32.mrb[0].mxu0
      %366 = vmatprep.mubr.bf16.mxu0 0
      %367 = vmatmul.mubr.bf16.gmra.mrb[0].mxu0 %v264
      %v368 = vpop.f32.mrb[0].mxu0
      %v369 = vadd.f32 0.0, %v368
      %v370 = vpop.f32.mrb[0].mxu0
      %v371 = vpop.f32.mrb[0].mxu0
      %v372 = vadd.f32 0.0, %v371
      %v373 = vpop.f32.mrb[0].mxu0
      %374 = vmatprep.mubr.bf16.mxu0 0
      %375 = vmatmul.mubr.bf16.gmra.mrb[0].mxu0 %v265
      %v376 = vpop.f32.mrb[0].mxu0
      %v377 = vadd.f32 0.0, %v376
      %v378 = vpop.f32.mrb[0].mxu0
      %v379 = vpop.f32.mrb[0].mxu0
      %v380 = vadd.f32 0.0, %v379
      %v381 = vpop.f32.mrb[0].mxu0
      %382 = vdwg.mxu0
      %v383 = vld [vmem:[%s2] sm:$0x1]
      %v384 = vlaneseq
      %v385 = vshrl.u32 %v384, 7
      %v386 = vsub.s32 0, %v385
      %v387 = vrot.slane %v383, %v386
      %v388 = vmul.f32 %v353, %v387
      %v389 = vmul.f32 %v356, %v387
      %v390 = vmul.f32 %v361, %v387
      %v391 = vmul.f32 %v364, %v387
      %v392 = vmul.f32 %v369, %v387
      %v393 = vmul.f32 %v372, %v387
      %v394 = vmul.f32 %v377, %v387
      %v395 = vmul.f32 %v380, %v387
      %v396 = vld [vmem:[%s2 + $0x1] sm:$0x1]
      %v397 = vlaneseq
      %v398 = vshrl.u32 %v397, 7
      %v399 = vsub.s32 0, %v398
      %v400 = vrot.slane %v396, %v399
      %v401 = vadd.f32 %v388, %v400
      %v402 = vadd.f32 %v389, %v400
      %v403 = vadd.f32 %v390, %v400
      %v404 = vadd.f32 %v391, %v400
      %v405 = vadd.f32 %v392, %v400
      %v406 = vadd.f32 %v393, %v400
      %v407 = vadd.f32 %v394, %v400
      %v408 = vadd.f32 %v395, %v400
      %vm409 = vcmp.gt.f32.partialorder %v401, 0.0
      %vm410 = vcmp.gt.f32.partialorder %v402, 0.0
      %vm411 = vcmp.gt.f32.partialorder %v403, 0.0
      %vm412 = vcmp.gt.f32.partialorder %v404, 0.0
      %vm413 = vcmp.gt.f32.partialorder %v405, 0.0
      %vm414 = vcmp.gt.f32.partialorder %v406, 0.0
      %vm415 = vcmp.gt.f32.partialorder %v407, 0.0
      %vm416 = vcmp.gt.f32.partialorder %v408, 0.0
      %v417 = vmul.f32 %v401, 0.1
      %v418 = vmul.f32 %v402, 0.1
      %v419 = vmul.f32 %v403, 0.1
      %v420 = vmul.f32 %v404, 0.1
      %v421 = vmul.f32 %v405, 0.1
      %v422 = vmul.f32 %v406, 0.1
      %v423 = vmul.f32 %v407, 0.1
      %v424 = vmul.f32 %v408, 0.1
      %v425 = vsel %vm409, %v401, %v417
      %v426 = vsel %vm410, %v402, %v418
      %v427 = vsel %vm411, %v403, %v419
      %v428 = vsel %vm412, %v404, %v420
      %v429 = vsel %vm413, %v405, %v421
      %v430 = vsel %vm414, %v406, %v422
      %v431 = vsel %vm415, %v407, %v423
      %v432 = vsel %vm416, %v408, %v424
      %v433 = vld [vmem:[%s213] sm:$0xf]
      %v434 = vld [vmem:[%s213 + $0x4] sm:$0xf]
      %v435 = vld [vmem:[%s213 + $0x8] sm:$0xf]
      %v436 = vld [vmem:[%s213 + $0xc] sm:$0xf]
      %v437 = vld [vmem:[%s213 + $0x10] sm:$0xf]
      %v438 = vld [vmem:[%s213 + $0x14] sm:$0xf]
      %v439 = vld [vmem:[%s213 + $0x18] sm:$0xf]
      %v440 = vld [vmem:[%s213 + $0x1c] sm:$0xf]
      %v441 = vunpack.c.l.bf16 %v433
      %v442 = vunpack.c.l.bf16 %v434
      %v443 = vunpack.c.l.bf16 %v435
      %v444 = vunpack.c.l.bf16 %v436
      %v445 = vunpack.c.l.bf16 %v437
      %v446 = vunpack.c.l.bf16 %v438
      %v447 = vunpack.c.l.bf16 %v439
      %v448 = vunpack.c.l.bf16 %v440
      %v449 = vadd.f32 %v425, %v441
      %v450 = vadd.f32 %v426, %v442
      %v451 = vadd.f32 %v427, %v443
      %v452 = vadd.f32 %v428, %v444
      %v453 = vadd.f32 %v429, %v445
      %v454 = vadd.f32 %v430, %v446
      %v455 = vadd.f32 %v431, %v447
      %v456 = vadd.f32 %v432, %v448
      %v457 = vpack.c.bf16 %v450, %v449
      %v458 = vpack.c.bf16 %v452, %v451
      %v459 = vpack.c.bf16 %v454, %v453
      %v460 = vpack.c.bf16 %v456, %v455
      %v465 = vunpack.c.l.b16 %v457
      %v466 = vunpack.c.h.b16 %v457
      %v467 = vunpack.c.l.b16 %v458
      %v468 = vunpack.c.h.b16 %v458
      %v469 = vunpack.c.l.b16 %v459
      %v470 = vunpack.c.h.b16 %v459
      %v471 = vunpack.c.l.b16 %v460
      %v472 = vunpack.c.h.b16 %v460
      %v473 = vpack.c.b16 %v465, %v465
      %v474 = vpack.c.b16 %v466, %v466
      %v475 = vpack.c.b16 %v467, %v467
      %v476 = vpack.c.b16 %v468, %v468
      %v477 = vpack.c.b16 %v469, %v469
      %v478 = vpack.c.b16 %v470, %v470
      %v479 = vpack.c.b16 %v471, %v471
      %v480 = vpack.c.b16 %v472, %v472
      %489 = vst [vmem:[%s219] sm:$0xf] %v473
      %490 = vst [vmem:[%s219 + $0x4] sm:$0xf] %v474
      %491 = vst [vmem:[%s219 + $0x8] sm:$0xf] %v475
      %492 = vst [vmem:[%s219 + $0xc] sm:$0xf] %v476
      %493 = vst [vmem:[%s219 + $0x10] sm:$0xf] %v477
      %494 = vst [vmem:[%s219 + $0x14] sm:$0xf] %v478
      %495 = vst [vmem:[%s219 + $0x18] sm:$0xf] %v479
      %496 = vst [vmem:[%s219 + $0x1c] sm:$0xf] %v480
      %s497 = smul.u32 8, %s15
      %p498 = scmp.lt.s32.totalorder %s497, 15
      %s499 = scalar_select %p498, %s497, 15
      %s500 = smul.addr %s499, 4
      %s501 = scalar_lea.vmem %s4, %s500
      // Predicated region
      $region37: #{_forward.10} parent=35 // pred_check
        %p502 = pneg %p127
      $region38: #{_forward.10} parent=35 // pred_check_branch
        %504 = sbr.rel (%p502) target = $region40
      $region39: #{_forward.10} parent=35 // pred_region
        %s505 = smul.u32 8, %s15
      $region40: #{_forward.10} parent=35 // pred_fallthru
        _
    $region36: #{_forward.10} parent=5 // pred_fallthru
      _
    %p506 = scmp.le.s32.totalorder 2, %s10
    // Predicated region
    $region41: #{_forward.10} parent=5 // pred_check
      %p507 = pneg %p506
    $region42: #{_forward.10} parent=5 // pred_check_branch
      %509 = sbr.rel (%p507) target = $region44
    $region43: #{_forward.10} parent=5 // pred_region
      %s510 = ssub.s32 %s10, 2
      // Predicated region
      $region45: #{_forward.10} parent=43 // pred_check
        %p511 = pneg %p133
      $region46: #{_forward.10} parent=43 // pred_check_branch
        %513 = sbr.rel (%p511) target = $region48
      $region47: #{_forward.10} parent=43 // pred_region
        %s514 = smul.u32 8, %s16
        %p515 = scmp.lt.s32.totalorder %s514, 15
        %s516 = scalar_select %p515, %s514, 15
        %s517 = smul.addr %s516, 4
        %s518 = scalar_lea.vmem %s4, %s517
      $region48: #{_forward.10} parent=43 // pred_fallthru
        _
    $region44: #{_forward.10} parent=5 // pred_fallthru
      _
  $region6: #{_forward.10} parent=0 // loop_footer
    %s14 = sadd.s32 1, %s10
  $region7: #{_forward.10} parent=0 // loop_footer_branch
    %9 = sbr.rel target = $region3
  $region8: #{_forward.10} parent=0 // loop_exit
    _

// kernel: _forward.11
$region0: #{_forward.11}
  #allocation0 [shape = 'u32[]', space=smem, size = 0x4, offset = 0x4, fixed_abs, tag = 'smem constant byte address 0x4 - core index']
  #allocation1 [shape = 'u32[144,128]{1,0:T(1,128)}', space=vmem, size = 0x12000, scoped, tag = 'internal scratch']
  %s0 = inlined_call_operand.vmem [shape: bf16[2,9,9,128], index: 0, kind: input, shape index: {}]
  %s1 = inlined_call_operand.vmem [shape: bf16[2,8,8,128], index: 1, kind: output, shape index: {}]
  %s2 = sld [smem:[#allocation0]]
  $region37: #{_forward.11} parent=0
    _
  %s4 = ssub.s32 1, %s2
  %s5 = scalar_select 0, %s4, %s2
  loop: start=0, step=1, limit=4
  $region2: #{_forward.11} parent=0 // loop_pre_header
    _
  $region3: #{_forward.11} parent=0 // loop_header
    %s7 = sphi 0, %s11
    %p8 = scmp.ge.s32.totalorder %s7, 4
    %s17 = sphi 0, %s19
    %s20 = sphi 0, %s17
    %s21 = sphi 0, %s20
    %s37 = sphi 0, %s21
    %s43 = sphi 0, %s45
    %s46 = sphi 0, %s43
    %s47 = sphi 0, %s46
    %s63 = sphi 0, %s47
  $region4: #{_forward.11} parent=0 // loop_header_branch
    %10 = sbr.rel (%p8) target = $region8
  $region5: #{_forward.11} parent=0 // loop_body
    %s12 = ssub.s32 %s7, 1
    %s13 = ssub.s32 %s7, 2
    %s14 = sadd.s32 %s7, 1
    %s15 = ssub.s32 %s7, %s14
    %p16 = scmp.eq.s32.totalorder %s15, 0
    %s18 = sadd.s32 %s17, 1
    %s19 = scalar_select %p16, %s17, %s18
    %p22 = pneg %p16
    %p23 = scmp.eq.s32.totalorder %s7, 1
    %p24 = por %p22, %p23
    %p25 = scmp.ne.s32.totalorder %s17, %s20
    %p26 = scmp.eq.s32.totalorder %s7, 0
    %p27 = por %p25, %p26
    %p28 = scmp.ne.s32.totalorder %s17, %s20
    %p29 = scmp.eq.s32.totalorder %s12, 1
    %p30 = por %p28, %p29
    %p31 = scmp.ne.s32.totalorder %s20, %s21
    %p32 = scmp.eq.s32.totalorder %s12, 0
    %p33 = por %p31, %p32
    %p34 = scmp.ne.s32.totalorder %s20, %s21
    %p35 = scmp.eq.s32.totalorder %s13, 1
    %p36 = por %p34, %p35
    %p38 = scmp.ne.s32.totalorder %s21, %s37
    %p39 = scmp.eq.s32.totalorder %s13, 0
    %p40 = por %p38, %p39
    %s41 = ssub.s32 %s7, %s14
    %p42 = scmp.eq.s32.totalorder %s41, 0
    %s44 = sadd.s32 %s43, 1
    %s45 = scalar_select %p42, %s43, %s44
    %p48 = pneg %p42
    %p49 = scmp.eq.s32.totalorder %s7, 1
    %p50 = por %p48, %p49
    %p51 = scmp.ne.s32.totalorder %s43, %s46
    %p52 = scmp.eq.s32.totalorder %s7, 0
    %p53 = por %p51, %p52
    %p54 = scmp.ne.s32.totalorder %s43, %s46
    %p55 = scmp.eq.s32.totalorder %s12, 1
    %p56 = por %p54, %p55
    %p57 = scmp.ne.s32.totalorder %s46, %s47
    %p58 = scmp.eq.s32.totalorder %s12, 0
    %p59 = por %p57, %p58
    %p60 = scmp.ne.s32.totalorder %s46, %s47
    %p61 = scmp.eq.s32.totalorder %s13, 1
    %p62 = por %p60, %p61
    %p64 = scmp.ne.s32.totalorder %s47, %s63
    %p65 = scmp.eq.s32.totalorder %s13, 0
    %p66 = por %p64, %p65
    %p67 = scmp.le.s32.totalorder 1, %s7
    %p68 = scmp.lt.s32.totalorder %s7, 3
    %p69 = pnand %p67, %p68
    %p70 = pneg %p69
    // Predicated region
    $region9: #{_forward.11} parent=5 // pred_check
      _
    $region10: #{_forward.11} parent=5 // pred_check_branch
      %72 = sbr.rel (%p69) target = $region12
    $region11: #{_forward.11} parent=5 // pred_region
      %s73 = ssub.s32 %s7, 1
    $region12: #{_forward.11} parent=5 // pred_fallthru
      _
    %p74 = scmp.lt.s32.totalorder %s7, 2
    // Predicated region
    $region13: #{_forward.11} parent=5 // pred_check
      %p75 = pneg %p74
    $region14: #{_forward.11} parent=5 // pred_check_branch
      %77 = sbr.rel (%p75) target = $region16
    $region15: #{_forward.11} parent=5 // pred_region
      // Predicated region
      $region17: #{_forward.11} parent=15 // pred_check
        %p78 = pneg %p27
      $region18: #{_forward.11} parent=15 // pred_check_branch
        %80 = sbr.rel (%p78) target = $region20
      $region19: #{_forward.11} parent=15 // pred_region
        %p81 = scmp.lt.s32.totalorder %s7, 1
        %s82 = scalar_select %p81, %s7, 1
        %s83 = smul.addr %s82, 18
        %s84 = smul.addr %s83, 4
        %s85 = scalar_lea.vmem %s0, %s84
      $region20: #{_forward.11} parent=15 // pred_fallthru
        _
    $region16: #{_forward.11} parent=5 // pred_fallthru
      _
    %p86 = scmp.le.s32.totalorder 1, %s7
    %p87 = scmp.lt.s32.totalorder %s7, 3
    %p88 = pnand %p86, %p87
    %p89 = pneg %p88
    // Predicated region
    $region21: #{_forward.11} parent=5 // pred_check
      _
    $region22: #{_forward.11} parent=5 // pred_check_branch
      %91 = sbr.rel (%p88) target = $region24
    $region23: #{_forward.11} parent=5 // pred_region
      %s92 = ssub.s32 %s7, 1
      %p93 = scmp.lt.s32.totalorder %s12, 1
      %s94 = scalar_select %p93, %s12, 1
      %s95 = smul.addr %s94, 18
      %s96 = smul.addr %s95, 4
      %s97 = scalar_lea.vmem %s0, %s96
      %p98 = pneg %p33
      %p99 = pneg %p30
      %p100 = pneg %p59
      %p101 = pneg %p56
      %p102 = scmp.lt.s32.totalorder %s12, 1
      %s103 = scalar_select %p102, %s12, 1
      %s104 = smul.addr %s103, 8
      %s105 = smul.addr %s104, 4
      %s106 = scalar_lea.vmem %s1, %s105
      %p107 = scmp.lt.s32.totalorder %s12, 1
      %s108 = scalar_select %p107, %s12, 1
      %s109 = smul.addr %s108, 18
      %s110 = smul.addr %s109, 4
      %s111 = scalar_lea.vmem %s0, %s110
      %p112 = scmp.lt.s32.totalorder %s12, 1
      %s113 = scalar_select %p112, %s12, 1
      %s114 = smul.addr %s113, 8
      %s115 = smul.addr %s114, 4
      %s116 = scalar_lea.vmem %s1, %s115
      %v117 = vld [vmem:[%s111] sm:$0xf]
      %v118 = vld [vmem:[%s111 + $0x4] sm:$0x1]
      %v119 = vld [vmem:[%s111 + $0x8] sm:$0xf]
      %v120 = vld [vmem:[%s111 + $0xc] sm:$0x1]
      %v121 = vld [vmem:[%s111 + $0x10] sm:$0xf]
      %v122 = vld [vmem:[%s111 + $0x14] sm:$0x1]
      %v123 = vld [vmem:[%s111 + $0x18] sm:$0xf]
      %v124 = vld [vmem:[%s111 + $0x1c] sm:$0x1]
      %v125 = vld [vmem:[%s111 + $0x20] sm:$0xf]
      %v126 = vld [vmem:[%s111 + $0x24] sm:$0x1]
      %v127 = vld [vmem:[%s111 + $0x28] sm:$0xf]
      %v128 = vld [vmem:[%s111 + $0x2c] sm:$0x1]
      %v129 = vld [vmem:[%s111 + $0x30] sm:$0xf]
      %v130 = vld [vmem:[%s111 + $0x34] sm:$0x1]
      %v131 = vld [vmem:[%s111 + $0x38] sm:$0xf]
      %v132 = vld [vmem:[%s111 + $0x3c] sm:$0x1]
      %v133 = vld [vmem:[%s111 + $0x40] sm:$0xf]
      %v134 = vld [vmem:[%s111 + $0x44] sm:$0x1]
      %vm135 = vsmask.f32 3328
      %vm136 = vsmask.f32 7440
      %vm137 = vmor %vm135, %vm136
      %v139 = vshrl.u32 %v117, 16
      %v141 = vrot.slane %v139, 4
      %v142 = vshll.u32 %v117, 16
      %v144 = vrot.slane %v142, 5
      %v145 = vor.u32 %v141, %v144
      %v146 = vrot.slane %v145, 4
      %v148 = vshll.u32 %v118, 16
      %v150 = vrot.slane %v148, 5
      %v151 = vsel %vm137, %v146, %v150
      %v153 = vshrl.u32 %v119, 16
      %v155 = vrot.slane %v153, 4
      %v156 = vshll.u32 %v119, 16
      %v158 = vrot.slane %v156, 5
      %v159 = vor.u32 %v155, %v158
      %v160 = vrot.slane %v159, 4
      %v162 = vshll.u32 %v120, 16
      %v164 = vrot.slane %v162, 5
      %v165 = vsel %vm137, %v160, %v164
      %v167 = vshrl.u32 %v121, 16
      %v169 = vrot.slane %v167, 4
      %v170 = vshll.u32 %v121, 16
      %v172 = vrot.slane %v170, 5
      %v173 = vor.u32 %v169, %v172
      %v174 = vrot.slane %v173, 4
      %v176 = vshll.u32 %v122, 16
      %v178 = vrot.slane %v176, 5
      %v179 = vsel %vm137, %v174, %v178
      %v181 = vshrl.u32 %v123, 16
      %v183 = vrot.slane %v181, 4
      %v184 = vshll.u32 %v123, 16
      %v186 = vrot.slane %v184, 5
      %v187 = vor.u32 %v183, %v186
      %v188 = vrot.slane %v187, 4
      %v190 = vshll.u32 %v124, 16
      %v192 = vrot.slane %v190, 5
      %v193 = vsel %vm137, %v188, %v192
      %v195 = vshrl.u32 %v125, 16
      %v197 = vrot.slane %v195, 4
      %v198 = vshll.u32 %v125, 16
      %v200 = vrot.slane %v198, 5
      %v201 = vor.u32 %v197, %v200
      %v202 = vrot.slane %v201, 4
      %v204 = vshll.u32 %v126, 16
      %v206 = vrot.slane %v204, 5
      %v207 = vsel %vm137, %v202, %v206
      %v209 = vshrl.u32 %v127, 16
      %v211 = vrot.slane %v209, 4
      %v212 = vshll.u32 %v127, 16
      %v214 = vrot.slane %v212, 5
      %v215 = vor.u32 %v211, %v214
      %v216 = vrot.slane %v215, 4
      %v218 = vshll.u32 %v128, 16
      %v220 = vrot.slane %v218, 5
      %v221 = vsel %vm137, %v216, %v220
      %v223 = vshrl.u32 %v129, 16
      %v225 = vrot.slane %v223, 4
      %v226 = vshll.u32 %v129, 16
      %v228 = vrot.slane %v226, 5
      %v229 = vor.u32 %v225, %v228
      %v230 = vrot.slane %v229, 4
      %v232 = vshll.u32 %v130, 16
      %v234 = vrot.slane %v232, 5
      %v235 = vsel %vm137, %v230, %v234
      %v237 = vshrl.u32 %v131, 16
      %v239 = vrot.slane %v237, 4
      %v240 = vshll.u32 %v131, 16
      %v242 = vrot.slane %v240, 5
      %v243 = vor.u32 %v239, %v242
      %v244 = vrot.slane %v243, 4
      %v246 = vshll.u32 %v132, 16
      %v248 = vrot.slane %v246, 5
      %v249 = vsel %vm137, %v244, %v248
      %v258 = vmax.bf16 %v117, %v151
      %v259 = vmax.bf16 %v119, %v165
      %v260 = vmax.bf16 %v121, %v179
      %v261 = vmax.bf16 %v123, %v193
      %v262 = vmax.bf16 %v125, %v207
      %v263 = vmax.bf16 %v127, %v221
      %v264 = vmax.bf16 %v129, %v235
      %v265 = vmax.bf16 %v131, %v249
      %v267 = vshrl.u32 %v133, 16
      %v269 = vrot.slane %v267, 4
      %v270 = vshll.u32 %v133, 16
      %v272 = vrot.slane %v270, 5
      %v273 = vor.u32 %v269, %v272
      %v274 = vrot.slane %v273, 4
      %v276 = vshll.u32 %v134, 16
      %v278 = vrot.slane %v276, 5
      %v279 = vsel %vm137, %v274, %v278
      %v281 = vmax.bf16 %v133, %v279
      %v282 = vmax.bf16 %v258, %v259
      %v283 = vmax.bf16 %v259, %v260
      %v284 = vmax.bf16 %v260, %v261
      %v285 = vmax.bf16 %v261, %v262
      %v286 = vmax.bf16 %v262, %v263
      %v287 = vmax.bf16 %v263, %v264
      %v288 = vmax.bf16 %v264, %v265
      %v289 = vmax.bf16 %v265, %v281
      %290 = vst [vmem:[%s116] sm:$0xf] %v282
      %291 = vst [vmem:[%s116 + $0x4] sm:$0xf] %v283
      %292 = vst [vmem:[%s116 + $0x8] sm:$0xf] %v284
      %293 = vst [vmem:[%s116 + $0xc] sm:$0xf] %v285
      %294 = vst [vmem:[%s116 + $0x10] sm:$0xf] %v286
      %295 = vst [vmem:[%s116 + $0x14] sm:$0xf] %v287
      %296 = vst [vmem:[%s116 + $0x18] sm:$0xf] %v288
      %297 = vst [vmem:[%s116 + $0x1c] sm:$0xf] %v289
      %p298 = scmp.lt.s32.totalorder %s12, 1
      %s299 = scalar_select %p298, %s12, 1
      %s300 = smul.addr %s299, 8
      %s301 = smul.addr %s300, 4
      %s302 = scalar_lea.vmem %s1, %s301
      // Predicated region
      $region25: #{_forward.11} parent=23 // pred_check
        %p303 = pneg %p56
      $region26: #{_forward.11} parent=23 // pred_check_branch
        %305 = sbr.rel (%p303) target = $region28
      $region27: #{_forward.11} parent=23 // pred_region
        _
      $region28: #{_forward.11} parent=23 // pred_fallthru
        _
    $region24: #{_forward.11} parent=5 // pred_fallthru
      _
    %p306 = scmp.le.s32.totalorder 2, %s7
    // Predicated region
    $region29: #{_forward.11} parent=5 // pred_check
      %p307 = pneg %p306
    $region30: #{_forward.11} parent=5 // pred_check_branch
      %309 = sbr.rel (%p307) target = $region32
    $region31: #{_forward.11} parent=5 // pred_region
      %s310 = ssub.s32 %s7, 2
      // Predicated region
      $region33: #{_forward.11} parent=31 // pred_check
        %p311 = pneg %p62
      $region34: #{_forward.11} parent=31 // pred_check_branch
        %313 = sbr.rel (%p311) target = $region36
      $region35: #{_forward.11} parent=31 // pred_region
        %p314 = scmp.lt.s32.totalorder %s13, 1
        %s315 = scalar_select %p314, %s13, 1
        %s316 = smul.addr %s315, 8
        %s317 = smul.addr %s316, 4
        %s318 = scalar_lea.vmem %s1, %s317
      $region36: #{_forward.11} parent=31 // pred_fallthru
        _
    $region32: #{_forward.11} parent=5 // pred_fallthru
      _
  $region6: #{_forward.11} parent=0 // loop_footer
    %s11 = sadd.s32 1, %s7
  $region7: #{_forward.11} parent=0 // loop_footer_branch
    %6 = sbr.rel target = $region3
  $region8: #{_forward.11} parent=0 // loop_exit
    _

// kernel: _forward.9
$region0: #{_forward.9}
  #allocation0 [shape = 'u32[]', space=smem, size = 0x4, offset = 0x4, fixed_abs, tag = 'smem constant byte address 0x4 - core index']
  #allocation1 [shape = 'u32[144,128]{1,0:T(1,128)}', space=vmem, size = 0x12000, scoped, tag = 'internal scratch']
  %s0 = inlined_call_operand.vmem [shape: bf16[2,36,9,128], index: 0, kind: input, shape index: {}]
  %s1 = inlined_call_operand.vmem [shape: bf16[9,128,128], index: 1, kind: input, shape index: {}]
  %s2 = inlined_call_operand.vmem [shape: f32[2,128], index: 2, kind: input, shape index: {}]
  %s3 = inlined_call_operand.vmem [shape: bf16[128,128], index: 3, kind: output, shape index: {}]
  %s4 = sld [smem:[#allocation0]]
  $region45: #{_forward.9} parent=0
    _
  %s6 = ssub.s32 1, %s4
  %s7 = scalar_select 0, %s6, %s4
  loop: start=0, step=1, limit=4
  $region2: #{_forward.9} parent=0 // loop_pre_header
    _
  $region3: #{_forward.9} parent=0 // loop_header
    %s9 = sphi 0, %s13
    %p10 = scmp.ge.s32.totalorder %s9, 4
    %s19 = sphi 0, %s21
    %s22 = sphi 0, %s19
    %s23 = sphi 0, %s22
    %s39 = sphi 0, %s23
    %s43 = sphi 0, %s43
    %s45 = sphi 0, %s43
    %s46 = sphi 0, %s45
    %s60 = sphi 0, %s46
    %s64 = sphi 0, %s64
    %s66 = sphi 0, %s64
    %s67 = sphi 0, %s66
    %s81 = sphi 0, %s67
    %s87 = sphi 0, %s89
    %s90 = sphi 0, %s87
    %s91 = sphi 0, %s90
    %s107 = sphi 0, %s91
  $region4: #{_forward.9} parent=0 // loop_header_branch
    %12 = sbr.rel (%p10) target = $region8
  $region5: #{_forward.9} parent=0 // loop_body
    %s14 = ssub.s32 %s9, 1
    %s15 = ssub.s32 %s9, 2
    %s16 = sadd.s32 %s9, 1
    %s17 = ssub.s32 %s9, %s16
    %p18 = scmp.eq.s32.totalorder %s17, 0
    %s20 = sadd.s32 %s19, 1
    %s21 = scalar_select %p18, %s19, %s20
    %p24 = pneg %p18
    %p25 = scmp.eq.s32.totalorder %s9, 1
    %p26 = por %p24, %p25
    %p27 = scmp.ne.s32.totalorder %s19, %s22
    %p28 = scmp.eq.s32.totalorder %s9, 0
    %p29 = por %p27, %p28
    %p30 = scmp.ne.s32.totalorder %s19, %s22
    %p31 = scmp.eq.s32.totalorder %s14, 1
    %p32 = por %p30, %p31
    %p33 = scmp.ne.s32.totalorder %s22, %s23
    %p34 = scmp.eq.s32.totalorder %s14, 0
    %p35 = por %p33, %p34
    %p36 = scmp.ne.s32.totalorder %s22, %s23
    %p37 = scmp.eq.s32.totalorder %s15, 1
    %p38 = por %p36, %p37
    %p40 = scmp.ne.s32.totalorder %s23, %s39
    %p41 = scmp.eq.s32.totalorder %s15, 0
    %p42 = por %p40, %p41
    %s44 = sadd.s32 %s43, 1
    %p47 = scmp.eq.s32.totalorder %s9, 1
    %p48 = scmp.ne.s32.totalorder %s43, %s45
    %p49 = scmp.eq.s32.totalorder %s9, 0
    %p50 = por %p48, %p49
    %p51 = scmp.ne.s32.totalorder %s43, %s45
    %p52 = scmp.eq.s32.totalorder %s14, 1
    %p53 = por %p51, %p52
    %p54 = scmp.ne.s32.totalorder %s45, %s46
    %p55 = scmp.eq.s32.totalorder %s14, 0
    %p56 = por %p54, %p55
    %p57 = scmp.ne.s32.totalorder %s45, %s46
    %p58 = scmp.eq.s32.totalorder %s15, 1
    %p59 = por %p57, %p58
    %p61 = scmp.ne.s32.totalorder %s46, %s60
    %p62 = scmp.eq.s32.totalorder %s15, 0
    %p63 = por %p61, %p62
    %s65 = sadd.s32 %s64, 1
    %p68 = scmp.eq.s32.totalorder %s9, 1
    %p69 = scmp.ne.s32.totalorder %s64, %s66
    %p70 = scmp.eq.s32.totalorder %s9, 0
    %p71 = por %p69, %p70
    %p72 = scmp.ne.s32.totalorder %s64, %s66
    %p73 = scmp.eq.s32.totalorder %s14, 1
    %p74 = por %p72, %p73
    %p75 = scmp.ne.s32.totalorder %s66, %s67
    %p76 = scmp.eq.s32.totalorder %s14, 0
    %p77 = por %p75, %p76
    %p78 = scmp.ne.s32.totalorder %s66, %s67
    %p79 = scmp.eq.s32.totalorder %s15, 1
    %p80 = por %p78, %p79
    %p82 = scmp.ne.s32.totalorder %s67, %s81
    %p83 = scmp.eq.s32.totalorder %s15, 0
    %p84 = por %p82, %p83
    %s85 = ssub.s32 %s9, %s16
    %p86 = scmp.eq.s32.totalorder %s85, 0
    %s88 = sadd.s32 %s87, 1
    %s89 = scalar_select %p86, %s87, %s88
    %p92 = pneg %p86
    %p93 = scmp.eq.s32.totalorder %s9, 1
    %p94 = por %p92, %p93
    %p95 = scmp.ne.s32.totalorder %s87, %s90
    %p96 = scmp.eq.s32.totalorder %s9, 0
    %p97 = por %p95, %p96
    %p98 = scmp.ne.s32.totalorder %s87, %s90
    %p99 = scmp.eq.s32.totalorder %s14, 1
    %p100 = por %p98, %p99
    %p101 = scmp.ne.s32.totalorder %s90, %s91
    %p102 = scmp.eq.s32.totalorder %s14, 0
    %p103 = por %p101, %p102
    %p104 = scmp.ne.s32.totalorder %s90, %s91
    %p105 = scmp.eq.s32.totalorder %s15, 1
    %p106 = por %p104, %p105
    %p108 = scmp.ne.s32.totalorder %s91, %s107
    %p109 = scmp.eq.s32.totalorder %s15, 0
    %p110 = por %p108, %p109
    %p111 = scmp.le.s32.totalorder 1, %s9
    %p112 = scmp.lt.s32.totalorder %s9, 3
    %p113 = pnand %p111, %p112
    %p114 = pneg %p113
    // Predicated region
    $region9: #{_forward.9} parent=5 // pred_check
      _
    $region10: #{_forward.9} parent=5 // pred_check_branch
      %116 = sbr.rel (%p113) target = $region12
    $region11: #{_forward.9} parent=5 // pred_region
      %s117 = ssub.s32 %s9, 1
      // Predicated region
      $region13: #{_forward.9} parent=11 // pred_check
        %p118 = pneg %p56
      $region14: #{_forward.9} parent=11 // pred_check_branch
        %120 = sbr.rel (%p118) target = $region16
      $region15: #{_forward.9} parent=11 // pred_region
        _
      $region16: #{_forward.9} parent=11 // pred_fallthru
        _
      // Predicated region
      $region17: #{_forward.9} parent=11 // pred_check
        %p121 = pneg %p77
      $region18: #{_forward.9} parent=11 // pred_check_branch
        %123 = sbr.rel (%p121) target = $region20
      $region19: #{_forward.9} parent=11 // pred_region
        _
      $region20: #{_forward.9} parent=11 // pred_fallthru
        _
    $region12: #{_forward.9} parent=5 // pred_fallthru
      _
    %p124 = scmp.lt.s32.totalorder %s9, 2
    // Predicated region
    $region21: #{_forward.9} parent=5 // pred_check
      %p125 = pneg %p124
    $region22: #{_forward.9} parent=5 // pred_check_branch
      %127 = sbr.rel (%p125) target = $region24
    $region23: #{_forward.9} parent=5 // pred_region
      // Predicated region
      $region25: #{_forward.9} parent=23 // pred_check
        %p128 = pneg %p29
      $region26: #{_forward.9} parent=23 // pred_check_branch
        %130 = sbr.rel (%p128) target = $region28
      $region27: #{_forward.9} parent=23 // pred_region
        %p131 = scmp.lt.s32.totalorder %s9, 1
        %s132 = scalar_select %p131, %s9, 1
        %s133 = smul.addr %s132, 72
        %s134 = smul.addr %s133, 4
        %s135 = scalar_lea.vmem %s0, %s134
      $region28: #{_forward.9} parent=23 // pred_fallthru
        _
    $region24: #{_forward.9} parent=5 // pred_fallthru
      _
    %p136 = scmp.le.s32.totalorder 1, %s9
    %p137 = scmp.lt.s32.totalorder %s9, 3
    %p138 = pnand %p136, %p137
    %p139 = pneg %p138
    // Predicated region
    $region29: #{_forward.9} parent=5 // pred_check
      _
    $region30: #{_forward.9} parent=5 // pred_check_branch
      %141 = sbr.rel (%p138) target = $region32
    $region31: #{_forward.9} parent=5 // pred_region
      %s142 = ssub.s32 %s9, 1
      %p143 = scmp.lt.s32.totalorder %s14, 1
      %s144 = scalar_select %p143, %s14, 1
      %s145 = smul.addr %s144, 72
      %s146 = smul.addr %s145, 4
      %s147 = scalar_lea.vmem %s0, %s146
      %p148 = pneg %p35
      %p149 = pneg %p32
      %p150 = pneg %p56
      %p151 = pneg %p53
      %p152 = pneg %p77
      %p153 = pneg %p74
      %p154 = pneg %p103
      %p155 = pneg %p100
      %s156 = smul.u32 8, %s14
      %p157 = scmp.lt.s32.totalorder %s156, 15
      %s158 = scalar_select %p157, %s156, 15
      %s159 = smul.addr %s158, 4
      %s160 = scalar_lea.vmem %s3, %s159
      %p161 = scmp.lt.s32.totalorder %s14, 1
      %s162 = scalar_select %p161, %s14, 1
      %s163 = smul.addr %s162, 72
      %s164 = smul.addr %s163, 4
      %s165 = scalar_lea.vmem %s0, %s164
      %s166 = smul.u32 8, %s14
      %p167 = scmp.lt.s32.totalorder %s166, 15
      %s168 = scalar_select %p167, %s166, 15
      %s169 = smul.addr %s168, 4
      %s170 = scalar_lea.vmem %s3, %s169
      %s171 = smul.u32 8, %s14
      %v173 = vld [vmem:[%s165] sm:$0xf]
      %v174 = vld [vmem:[%s165 + $0x8] sm:$0xf]
      %v175 = vld [vmem:[%s165 + $0x10] sm:$0xf]
      %v176 = vld [vmem:[%s165 + $0x18] sm:$0xf]
      %v177 = vld [vmem:[%s165 + $0x20] sm:$0xf]
      %v178 = vld [vmem:[%s165 + $0x28] sm:$0xf]
      %v179 = vld [vmem:[%s165 + $0x30] sm:$0xf]
      %v180 = vld [vmem:[%s165 + $0x38] sm:$0xf]
      %v181 = vld [vmem:[%s1] sm:$0xf]
      %v182 = vld [vmem:[%s1 + $0x4] sm:$0xf]
      %v183 = vld [vmem:[%s1 + $0x8] sm:$0xf]
      %v184 = vld [vmem:[%s1 + $0xc] sm:$0xf]
      %v185 = vld [vmem:[%s1 + $0x10] sm:$0xf]
      %v186 = vld [vmem:[%s1 + $0x14] sm:$0xf]
      %v187 = vld [vmem:[%s1 + $0x18] sm:$0xf]
      %v188 = vld [vmem:[%s1 + $0x1c] sm:$0xf]
      %v189 = vld [vmem:[%s1 + $0x20] sm:$0xf]
      %v190 = vld [vmem:[%s1 + $0x24] sm:$0xf]
      %v191 = vld [vmem:[%s1 + $0x28] sm:$0xf]
      %v192 = vld [vmem:[%s1 + $0x2c] sm:$0xf]
      %v193 = vld [vmem:[%s1 + $0x30] sm:$0xf]
      %v194 = vld [vmem:[%s1 + $0x34] sm:$0xf]
      %v195 = vld [vmem:[%s1 + $0x38] sm:$0xf]
      %v196 = vld [vmem:[%s1 + $0x3c] sm:$0xf]
      %s197 = scalar_lea.vmem %s165, 72
      %v198 = vld [vmem:[%s197] sm:$0xf]
      %v199 = vld [vmem:[%s197 + $0x8] sm:$0xf]
      %v200 = vld [vmem:[%s197 + $0x10] sm:$0xf]
      %v201 = vld [vmem:[%s197 + $0x18] sm:$0xf]
      %v202 = vld [vmem:[%s197 + $0x20] sm:$0xf]
      %v203 = vld [vmem:[%s197 + $0x28] sm:$0xf]
      %v204 = vld [vmem:[%s197 + $0x30] sm:$0xf]
      %v205 = vld [vmem:[%s197 + $0x38] sm:$0xf]
      %s206 = scalar_lea.vmem %s1, 64
      %v207 = vld [vmem:[%s206] sm:$0xf]
      %v208 = vld [vmem:[%s206 + $0x4] sm:$0xf]
      %v209 = vld [vmem:[%s206 + $0x8] sm:$0xf]
      %v210 = vld [vmem:[%s206 + $0xc] sm:$0xf]
      %v211 = vld [vmem:[%s206 + $0x10] sm:$0xf]
      %v212 = vld [vmem:[%s206 + $0x14] sm:$0xf]
      %v213 = vld [vmem:[%s206 + $0x18] sm:$0xf]
      %v214 = vld [vmem:[%s206 + $0x1c] sm:$0xf]
      %v215 = vld [vmem:[%s206 + $0x20] sm:$0xf]
      %v216 = vld [vmem:[%s206 + $0x24] sm:$0xf]
      %v217 = vld [vmem:[%s206 + $0x28] sm:$0xf]
      %v218 = vld [vmem:[%s206 + $0x2c] sm:$0xf]
      %v219 = vld [vmem:[%s206 + $0x30] sm:$0xf]
      %v220 = vld [vmem:[%s206 + $0x34] sm:$0xf]
      %v221 = vld [vmem:[%s206 + $0x38] sm:$0xf]
      %v222 = vld [vmem:[%s206 + $0x3c] sm:$0xf]
      %v231 = vunpack.c.l.b16 %v198
      %v232 = vunpack.c.l.b16 %v199
      %v233 = vunpack.c.l.b16 %v200
      %v234 = vunpack.c.l.b16 %v201
      %v235 = vunpack.c.l.b16 %v202
      %v236 = vunpack.c.l.b16 %v203
      %v237 = vunpack.c.l.b16 %v204
      %v238 = vunpack.c.l.b16 %v205
      %v239 = vpack.c.b16 %v232, %v231
      %v240 = vpack.c.b16 %v234, %v233
      %v241 = vpack.c.b16 %v236, %v235
      %v242 = vpack.c.b16 %v238, %v237
      %v263 = vunpack.c.l.b16 %v207
      %v264 = vunpack.c.l.b16 %v208
      %v265 = vunpack.c.l.b16 %v209
      %v266 = vunpack.c.l.b16 %v210
      %v267 = vunpack.c.l.b16 %v211
      %v268 = vunpack.c.l.b16 %v212
      %v269 = vunpack.c.l.b16 %v213
      %v270 = vunpack.c.l.b16 %v214
      %v271 = vunpack.c.l.b16 %v215
      %v272 = vunpack.c.l.b16 %v216
      %v273 = vunpack.c.l.b16 %v217
      %v274 = vunpack.c.l.b16 %v218
      %v275 = vunpack.c.l.b16 %v219
      %v276 = vunpack.c.l.b16 %v220
      %v277 = vunpack.c.l.b16 %v221
      %v278 = vunpack.c.l.b16 %v222
      %v279 = vpack.c.b16 %v264, %v263
      %v280 = vpack.c.b16 %v266, %v265
      %v281 = vpack.c.b16 %v268, %v267
      %v282 = vpack.c.b16 %v270, %v269
      %v283 = vpack.c.b16 %v272, %v271
      %v284 = vpack.c.b16 %v274, %v273
      %v285 = vpack.c.b16 %v276, %v275
      %v286 = vpack.c.b16 %v278, %v277
      %295 = vmatprep.subr.bf16.mxu0 0
      %296 = vmatpush1.bf16.msra.mxu0 %v279
      %297 = vmatprep.subr.bf16.mxu0 0
      %298 = vmatpush1.bf16.msra.mxu0 %v280
      %299 = vmatprep.subr.bf16.mxu0 0
      %300 = vmatpush1.bf16.msra.mxu0 %v281
      %301 = vmatprep.subr.bf16.mxu0 0
      %302 = vmatpush1.bf16.msra.mxu0 %v282
      %303 = vmatprep.subr.bf16.mxu0 0
      %304 = vmatpush1.bf16.msra.mxu0 %v283
      %305 = vmatprep.subr.bf16.mxu0 0
      %306 = vmatpush1.bf16.msra.mxu0 %v284
      %307 = vmatprep.subr.bf16.mxu0 0
      %308 = vmatpush1.bf16.msra.mxu0 %v285
      %309 = vmatprep.subr.bf16.mxu0 0
      %310 = vmatpush1.bf16.msra.mxu0 %v286
      %311 = vmatprep.subr.bf16.mxu0 0
      %312 = vmatpush1.bf16.msra.mxu0 0
      %313 = vmatprep.subr.bf16.mxu0 0
      %314 = vmatpush1.bf16.msra.mxu0 0
      %315 = vmatprep.subr.bf16.mxu0 0
      %316 = vmatpush1.bf16.msra.mxu0 0
      %317 = vmatprep.subr.bf16.mxu0 0
      %318 = vmatpush1.bf16.msra.mxu0 0
      %319 = vmatprep.subr.bf16.mxu0 0
      %320 = vmatpush1.bf16.msra.mxu0 0
      %321 = vmatprep.subr.bf16.mxu0 0
      %322 = vmatpush1.bf16.msra.mxu0 0
      %323 = vmatprep.subr.bf16.mxu0 0
      %324 = vmatpush1.bf16.msra.mxu0 0
      %325 = vmatprep.subr.bf16.mxu0 0
      %326 = vmatpush1.bf16.msra.mxu0 0
      %327 = vmatprep.mubr.bf16.mxu0 0
      %328 = vmatmul.mubr.bf16.gmra.mrb[0].mxu0 %v239
      %v329 = vpop.f32.mrb[0].mxu0
      %v330 = vadd.f32 0.0, %v329
      %v331 = vpop.f32.mrb[0].mxu0
      %v332 = vpop.f32.mrb[0].mxu0
      %v333 = vadd.f32 0.0, %v332
      %v334 = vpop.f32.mrb[0].mxu0
      %335 = vmatprep.mubr.bf16.mxu0 0
      %336 = vmatmul.mubr.bf16.gmra.mrb[0].mxu0 %v240
      %v337 = vpop.f32.mrb[0].mxu0
      %v338 = vadd.f32 0.0, %v337
      %v339 = vpop.f32.mrb[0].mxu0
      %v340 = vpop.f32.mrb[0].mxu0
      %v341 = vadd.f32 0.0, %v340
      %v342 = vpop.f32.mrb[0].mxu0
      %343 = vmatprep.mubr.bf16.mxu0 0
      %344 = vmatmul.mubr.bf16.gmra.mrb[0].mxu0 %v241
      %v345 = vpop.f32.mrb[0].mxu0
      %v346 = vadd.f32 0.0, %v345
      %v347 = vpop.f32.mrb[0].mxu0
      %v348 = vpop.f32.mrb[0].mxu0
      %v349 = vadd.f32 0.0, %v348
      %v350 = vpop.f32.mrb[0].mxu0
      %351 = vmatprep.mubr.bf16.mxu0 0
      %352 = vmatmul.mubr.bf16.gmra.mrb[0].mxu0 %v242
      %v353 = vpop.f32.mrb[0].mxu0
      %v354 = vadd.f32 0.0, %v353
      %v355 = vpop.f32.mrb[0].mxu0
      %v356 = vpop.f32.mrb[0].mxu0
      %v357 = vadd.f32 0.0, %v356
      %v358 = vpop.f32.mrb[0].mxu0
      %359 = vdwg.mxu0
      %v368 = vunpack.c.l.b16 %v173
      %v369 = vunpack.c.l.b16 %v174
      %v370 = vunpack.c.l.b16 %v175
      %v371 = vunpack.c.l.b16 %v176
      %v372 = vunpack.c.l.b16 %v177
      %v373 = vunpack.c.l.b16 %v178
      %v374 = vunpack.c.l.b16 %v179
      %v375 = vunpack.c.l.b16 %v180
      %v376 = vpack.c.b16 %v369, %v368
      %v377 = vpack.c.b16 %v371, %v370
      %v378 = vpack.c.b16 %v373, %v372
      %v379 = vpack.c.b16 %v375, %v374
      %v400 = vunpack.c.l.b16 %v181
      %v401 = vunpack.c.l.b16 %v182
      %v402 = vunpack.c.l.b16 %v183
      %v403 = vunpack.c.l.b16 %v184
      %v404 = vunpack.c.l.b16 %v185
      %v405 = vunpack.c.l.b16 %v186
      %v406 = vunpack.c.l.b16 %v187
      %v407 = vunpack.c.l.b16 %v188
      %v408 = vunpack.c.l.b16 %v189
      %v409 = vunpack.c.l.b16 %v190
      %v410 = vunpack.c.l.b16 %v191
      %v411 = vunpack.c.l.b16 %v192
      %v412 = vunpack.c.l.b16 %v193
      %v413 = vunpack.c.l.b16 %v194
      %v414 = vunpack.c.l.b16 %v195
      %v415 = vunpack.c.l.b16 %v196
      %v416 = vpack.c.b16 %v401, %v400
      %v417 = vpack.c.b16 %v403, %v402
      %v418 = vpack.c.b16 %v405, %v404
      %v419 = vpack.c.b16 %v407, %v406
      %v420 = vpack.c.b16 %v409, %v408
      %v421 = vpack.c.b16 %v411, %v410
      %v422 = vpack.c.b16 %v413, %v412
      %v423 = vpack.c.b16 %v415, %v414
      %432 = vmatprep.subr.bf16.mxu0 0
      %433 = vmatpush1.bf16.msra.mxu0 %v416
      %434 = vmatprep.subr.bf16.mxu0 0
      %435 = vmatpush1.bf16.msra.mxu0 %v417
      %436 = vmatprep.subr.bf16.mxu0 0
      %437 = vmatpush1.bf16.msra.mxu0 %v418
      %438 = vmatprep.subr.bf16.mxu0 0
      %439 = vmatpush1.bf16.msra.mxu0 %v419
      %440 = vmatprep.subr.bf16.mxu0 0
      %441 = vmatpush1.bf16.msra.mxu0 %v420
      %442 = vmatprep.subr.bf16.mxu0 0
      %443 = vmatpush1.bf16.msra.mxu0 %v421
      %444 = vmatprep.subr.bf16.mxu0 0
      %445 = vmatpush1.bf16.msra.mxu0 %v422
      %446 = vmatprep.subr.bf16.mxu0 0
      %447 = vmatpush1.bf16.msra.mxu0 %v423
      %448 = vmatprep.subr.bf16.mxu0 0
      %449 = vmatpush1.bf16.msra.mxu0 0
      %450 = vmatprep.subr.bf16.mxu0 0
      %451 = vmatpush1.bf16.msra.mxu0 0
      %452 = vmatprep.subr.bf16.mxu0 0
      %453 = vmatpush1.bf16.msra.mxu0 0
      %454 = vmatprep.subr.bf16.mxu0 0
      %455 = vmatpush1.bf16.msra.mxu0 0
      %456 = vmatprep.subr.bf16.mxu0 0
      %457 = vmatpush1.bf16.msra.mxu0 0
      %458 = vmatprep.subr.bf16.mxu0 0
      %459 = vmatpush1.bf16.msra.mxu0 0
      %460 = vmatprep.subr.bf16.mxu0 0
      %461 = vmatpush1.bf16.msra.mxu0 0
      %462 = vmatprep.subr.bf16.mxu0 0
      %463 = vmatpush1.bf16.msra.mxu0 0
      %464 = vmatprep.mubr.bf16.mxu0 0
      %465 = vmatmul.mubr.bf16.gmra.mrb[0].mxu0 %v376
      %v466 = vpop.f32.mrb[0].mxu0
      %v467 = vadd.f32 %v330, %v466
      %v468 = vpop.f32.mrb[0].mxu0
      %v469 = vpop.f32.mrb[0].mxu0
      %v470 = vadd.f32 %v333, %v469
      %v471 = vpop.f32.mrb[0].mxu0
      %472 = vmatprep.mubr.bf16.mxu0 0
      %473 = vmatmul.mubr.bf16.gmra.mrb[0].mxu0 %v377
      %v474 = vpop.f32.mrb[0].mxu0
      %v475 = vadd.f32 %v338, %v474
      %v476 = vpop.f32.mrb[0].mxu0
      %v477 = vpop.f32.mrb[0].mxu0
      %v478 = vadd.f32 %v341, %v477
      %v479 = vpop.f32.mrb[0].mxu0
      %480 = vmatprep.mubr.bf16.mxu0 0
      %481 = vmatmul.mubr.bf16.gmra.mrb[0].mxu0 %v378
      %v482 = vpop.f32.mrb[0].mxu0
      %v483 = vadd.f32 %v346, %v482
      %v484 = vpop.f32.mrb[0].mxu0
      %v485 = vpop.f32.mrb[0].mxu0
      %v486 = vadd.f32 %v349, %v485
      %v487 = vpop.f32.mrb[0].mxu0
      %488 = vmatprep.mubr.bf16.mxu0 0
      %489 = vmatmul.mubr.bf16.gmra.mrb[0].mxu0 %v379
      %v490 = vpop.f32.mrb[0].mxu0
      %v491 = vadd.f32 %v354, %v490
      %v492 = vpop.f32.mrb[0].mxu0
      %v493 = vpop.f32.mrb[0].mxu0
      %v494 = vadd.f32 %v357, %v493
      %v495 = vpop.f32.mrb[0].mxu0
      %496 = vdwg.mxu0
      %v497 = vld [vmem:[%s165] sm:$0xf]
      %v498 = vld [vmem:[%s165 + $0x4] sm:$0x1]
      %v499 = vld [vmem:[%s165 + $0x8] sm:$0xf]
      %v500 = vld [vmem:[%s165 + $0xc] sm:$0x1]
      %v501 = vld [vmem:[%s165 + $0x10] sm:$0xf]
      %v502 = vld [vmem:[%s165 + $0x14] sm:$0x1]
      %v503 = vld [vmem:[%s165 + $0x18] sm:$0xf]
      %v504 = vld [vmem:[%s165 + $0x1c] sm:$0x1]
      %v505 = vld [vmem:[%s165 + $0x20] sm:$0xf]
      %v506 = vld [vmem:[%s165 + $0x24] sm:$0x1]
      %v507 = vld [vmem:[%s165 + $0x28] sm:$0xf]
      %v508 = vld [vmem:[%s165 + $0x2c] sm:$0x1]
      %v509 = vld [vmem:[%s165 + $0x30] sm:$0xf]
      %v510 = vld [vmem:[%s165 + $0x34] sm:$0x1]
      %v511 = vld [vmem:[%s165 + $0x38] sm:$0xf]
      %v512 = vld [vmem:[%s165 + $0x3c] sm:$0x1]
      %vm513 = vsmask.f32 3328
      %vm514 = vsmask.f32 7440
      %vm515 = vmor %vm513, %vm514
      %v517 = vshrl.u32 %v497, 16
      %v519 = vrot.slane %v517, 4
      %v520 = vshll.u32 %v497, 16
      %v522 = vrot.slane %v520, 5
      %v523 = vor.u32 %v519, %v522
      %v524 = vrot.slane %v523, 4
      %v526 = vshll.u32 %v498, 16
      %v528 = vrot.slane %v526, 5
      %v529 = vsel %vm515, %v524, %v528
      %v531 = vshrl.u32 %v499, 16
      %v533 = vrot.slane %v531, 4
      %v534 = vshll.u32 %v499, 16
      %v536 = vrot.slane %v534, 5
      %v537 = vor.u32 %v533, %v536
      %v538 = vrot.slane %v537, 4
      %v540 = vshll.u32 %v500, 16
      %v542 = vrot.slane %v540, 5
      %v543 = vsel %vm515, %v538, %v542
      %v545 = vshrl.u32 %v501, 16
      %v547 = vrot.slane %v545, 4
      %v548 = vshll.u32 %v501, 16
      %v550 = vrot.slane %v548, 5
      %v551 = vor.u32 %v547, %v550
      %v552 = vrot.slane %v551, 4
      %v554 = vshll.u32 %v502, 16
      %v556 = vrot.slane %v554, 5
      %v557 = vsel %vm515, %v552, %v556
      %v559 = vshrl.u32 %v503, 16
      %v561 = vrot.slane %v559, 4
      %v562 = vshll.u32 %v503, 16
      %v564 = vrot.slane %v562, 5
      %v565 = vor.u32 %v561, %v564
      %v566 = vrot.slane %v565, 4
      %v568 = vshll.u32 %v504, 16
      %v570 = vrot.slane %v568, 5
      %v571 = vsel %vm515, %v566, %v570
      %v573 = vshrl.u32 %v505, 16
      %v575 = vrot.slane %v573, 4
      %v576 = vshll.u32 %v505, 16
      %v578 = vrot.slane %v576, 5
      %v579 = vor.u32 %v575, %v578
      %v580 = vrot.slane %v579, 4
      %v582 = vshll.u32 %v506, 16
      %v584 = vrot.slane %v582, 5
      %v585 = vsel %vm515, %v580, %v584
      %v587 = vshrl.u32 %v507, 16
      %v589 = vrot.slane %v587, 4
      %v590 = vshll.u32 %v507, 16
      %v592 = vrot.slane %v590, 5
      %v593 = vor.u32 %v589, %v592
      %v594 = vrot.slane %v593, 4
      %v596 = vshll.u32 %v508, 16
      %v598 = vrot.slane %v596, 5
      %v599 = vsel %vm515, %v594, %v598
      %v601 = vshrl.u32 %v509, 16
      %v603 = vrot.slane %v601, 4
      %v604 = vshll.u32 %v509, 16
      %v606 = vrot.slane %v604, 5
      %v607 = vor.u32 %v603, %v606
      %v608 = vrot.slane %v607, 4
      %v610 = vshll.u32 %v510, 16
      %v612 = vrot.slane %v610, 5
      %v613 = vsel %vm515, %v608, %v612
      %v615 = vshrl.u32 %v511, 16
      %v617 = vrot.slane %v615, 4
      %v618 = vshll.u32 %v511, 16
      %v620 = vrot.slane %v618, 5
      %v621 = vor.u32 %v617, %v620
      %v622 = vrot.slane %v621, 4
      %v624 = vshll.u32 %v512, 16
      %v626 = vrot.slane %v624, 5
      %v627 = vsel %vm515, %v622, %v626
      %s628 = scalar_lea.vmem %s1, 128
      %v629 = vld [vmem:[%s628] sm:$0xf]
      %v630 = vld [vmem:[%s628 + $0x4] sm:$0xf]
      %v631 = vld [vmem:[%s628 + $0x8] sm:$0xf]
      %v632 = vld [vmem:[%s628 + $0xc] sm:$0xf]
      %v633 = vld [vmem:[%s628 + $0x10] sm:$0xf]
      %v634 = vld [vmem:[%s628 + $0x14] sm:$0xf]
      %v635 = vld [vmem:[%s628 + $0x18] sm:$0xf]
      %v636 = vld [vmem:[%s628 + $0x1c] sm:$0xf]
      %v637 = vld [vmem:[%s628 + $0x20] sm:$0xf]
      %v638 = vld [vmem:[%s628 + $0x24] sm:$0xf]
      %v639 = vld [vmem:[%s628 + $0x28] sm:$0xf]
      %v640 = vld [vmem:[%s628 + $0x2c] sm:$0xf]
      %v641 = vld [vmem:[%s628 + $0x30] sm:$0xf]
      %v642 = vld [vmem:[%s628 + $0x34] sm:$0xf]
      %v643 = vld [vmem:[%s628 + $0x38] sm:$0xf]
      %v644 = vld [vmem:[%s628 + $0x3c] sm:$0xf]
      %v645 = vunpack.c.l.b16 %v529
      %v646 = vunpack.c.l.b16 %v543
      %v647 = vunpack.c.l.b16 %v557
      %v648 = vunpack.c.l.b16 %v571
      %v649 = vunpack.c.l.b16 %v585
      %v650 = vunpack.c.l.b16 %v599
      %v651 = vunpack.c.l.b16 %v613
      %v652 = vunpack.c.l.b16 %v627
      %v653 = vpack.c.b16 %v646, %v645
      %v654 = vpack.c.b16 %v648, %v647
      %v655 = vpack.c.b16 %v650, %v649
      %v656 = vpack.c.b16 %v652, %v651
      %v677 = vunpack.c.l.b16 %v629
      %v678 = vunpack.c.l.b16 %v630
      %v679 = vunpack.c.l.b16 %v631
      %v680 = vunpack.c.l.b16 %v632
      %v681 = vunpack.c.l.b16 %v633
      %v682 = vunpack.c.l.b16 %v634
      %v683 = vunpack.c.l.b16 %v635
      %v684 = vunpack.c.l.b16 %v636
      %v685 = vunpack.c.l.b16 %v637
      %v686 = vunpack.c.l.b16 %v638
      %v687 = vunpack.c.l.b16 %v639
      %v688 = vunpack.c.l.b16 %v640
      %v689 = vunpack.c.l.b16 %v641
      %v690 = vunpack.c.l.b16 %v642
      %v691 = vunpack.c.l.b16 %v643
      %v692 = vunpack.c.l.b16 %v644
      %v693 = vpack.c.b16 %v678, %v677
      %v694 = vpack.c.b16 %v680, %v679
      %v695 = vpack.c.b16 %v682, %v681
      %v696 = vpack.c.b16 %v684, %v683
      %v697 = vpack.c.b16 %v686, %v685
      %v698 = vpack.c.b16 %v688, %v687
      %v699 = vpack.c.b16 %v690, %v689
      %v700 = vpack.c.b16 %v692, %v691
      %709 = vmatprep.subr.bf16.mxu0 0
      %710 = vmatpush1.bf16.msra.mxu0 %v693
      %711 = vmatprep.subr.bf16.mxu0 0
      %712 = vmatpush1.bf16.msra.mxu0 %v694
      %713 = vmatprep.subr.bf16.mxu0 0
      %714 = vmatpush1.bf16.msra.mxu0 %v695
      %715 = vmatprep.subr.bf16.mxu0 0
      %716 = vmatpush1.bf16.msra.mxu0 %v696
      %717 = vmatprep.subr.bf16.mxu0 0
      %718 = vmatpush1.bf16.msra.mxu0 %v697
      %719 = vmatprep.subr.bf16.mxu0 0
      %720 = vmatpush1.bf16.msra.mxu0 %v698
      %721 = vmatprep.subr.bf16.mxu0 0
      %722 = vmatpush1.bf16.msra.mxu0 %v699
      %723 = vmatprep.subr.bf16.mxu0 0
      %724 = vmatpush1.bf16.msra.mxu0 %v700
      %725 = vmatprep.subr.bf16.mxu0 0
      %726 = vmatpush1.bf16.msra.mxu0 0
      %727 = vmatprep.subr.bf16.mxu0 0
      %728 = vmatpush1.bf16.msra.mxu0 0
      %729 = vmatprep.subr.bf16.mxu0 0
      %730 = vmatpush1.bf16.msra.mxu0 0
      %731 = vmatprep.subr.bf16.mxu0 0
      %732 = vmatpush1.bf16.msra.mxu0 0
      %733 = vmatprep.subr.bf16.mxu0 0
      %734 = vmatpush1.bf16.msra.mxu0 0
      %735 = vmatprep.subr.bf16.mxu0 0
      %736 = vmatpush1.bf16.msra.mxu0 0
      %737 = vmatprep.subr.bf16.mxu0 0
      %738 = vmatpush1.bf16.msra.mxu0 0
      %739 = vmatprep.subr.bf16.mxu0 0
      %740 = vmatpush1.bf16.msra.mxu0 0
      %741 = vmatprep.mubr.bf16.mxu0 0
      %742 = vmatmul.mubr.bf16.gmra.mrb[0].mxu0 %v653
      %v743 = vpop.f32.mrb[0].mxu0
      %v744 = vadd.f32 0.0, %v743
      %v745 = vpop.f32.mrb[0].mxu0
      %v746 = vpop.f32.mrb[0].mxu0
      %v747 = vadd.f32 0.0, %v746
      %v748 = vpop.f32.mrb[0].mxu0
      %749 = vmatprep.mubr.bf16.mxu0 0
      %750 = vmatmul.mubr.bf16.gmra.mrb[0].mxu0 %v654
      %v751 = vpop.f32.mrb[0].mxu0
      %v752 = vadd.f32 0.0, %v751
      %v753 = vpop.f32.mrb[0].mxu0
      %v754 = vpop.f32.mrb[0].mxu0
      %v755 = vadd.f32 0.0, %v754
      %v756 = vpop.f32.mrb[0].mxu0
      %757 = vmatprep.mubr.bf16.mxu0 0
      %758 = vmatmul.mubr.bf16.gmra.mrb[0].mxu0 %v655
      %v759 = vpop.f32.mrb[0].mxu0
      %v760 = vadd.f32 0.0, %v759
      %v761 = vpop.f32.mrb[0].mxu0
      %v762 = vpop.f32.mrb[0].mxu0
      %v763 = vadd.f32 0.0, %v762
      %v764 = vpop.f32.mrb[0].mxu0
      %765 = vmatprep.mubr.bf16.mxu0 0
      %766 = vmatmul.mubr.bf16.gmra.mrb[0].mxu0 %v656
      %v767 = vpop.f32.mrb[0].mxu0
      %v768 = vadd.f32 0.0, %v767
      %v769 = vpop.f32.mrb[0].mxu0
      %v770 = vpop.f32.mrb[0].mxu0
      %v771 = vadd.f32 0.0, %v770
      %v772 = vpop.f32.mrb[0].mxu0
      %773 = vdwg.mxu0
      %v774 = vadd.f32 %v467, %v744
      %v775 = vadd.f32 %v470, %v747
      %v776 = vadd.f32 %v475, %v752
      %v777 = vadd.f32 %v478, %v755
      %v778 = vadd.f32 %v483, %v760
      %v779 = vadd.f32 %v486, %v763
      %v780 = vadd.f32 %v491, %v768
      %v781 = vadd.f32 %v494, %v771
      %s782 = scalar_lea.vmem %s165, 144
      %v783 = vld [vmem:[%s782] sm:$0xf]
      %v784 = vld [vmem:[%s782 + $0x8] sm:$0xf]
      %v785 = vld [vmem:[%s782 + $0x10] sm:$0xf]
      %v786 = vld [vmem:[%s782 + $0x18] sm:$0xf]
      %v787 = vld [vmem:[%s782 + $0x20] sm:$0xf]
      %v788 = vld [vmem:[%s782 + $0x28] sm:$0xf]
      %v789 = vld [vmem:[%s782 + $0x30] sm:$0xf]
      %v790 = vld [vmem:[%s782 + $0x38] sm:$0xf]
      %s791 = scalar_lea.vmem %s1, 192
      %v792 = vld [vmem:[%s791] sm:$0xf]
      %v793 = vld [vmem:[%s791 + $0x4] sm:$0xf]
      %v794 = vld [vmem:[%s791 + $0x8] sm:$0xf]
      %v795 = vld [vmem:[%s791 + $0xc] sm:$0xf]
      %v796 = vld [vmem:[%s791 + $0x10] sm:$0xf]
      %v797 = vld [vmem:[%s791 + $0x14] sm:$0xf]
      %v798 = vld [vmem:[%s791 + $0x18] sm:$0xf]
      %v799 = vld [vmem:[%s791 + $0x1c] sm:$0xf]
      %v800 = vld [vmem:[%s791 + $0x20] sm:$0xf]
      %v801 = vld [vmem:[%s791 + $0x24] sm:$0xf]
      %v802 = vld [vmem:[%s791 + $0x28] sm:$0xf]
      %v803 = vld [vmem:[%s791 + $0x2c] sm:$0xf]
      %v804 = vld [vmem:[%s791 + $0x30] sm:$0xf]
      %v805 = vld [vmem:[%s791 + $0x34] sm:$0xf]
      %v806 = vld [vmem:[%s791 + $0x38] sm:$0xf]
      %v807 = vld [vmem:[%s791 + $0x3c] sm:$0xf]
      %v816 = vunpack.c.l.b16 %v783
      %v817 = vunpack.c.l.b16 %v784
      %v818 = vunpack.c.l.b16 %v785
      %v819 = vunpack.c.l.b16 %v786
      %v820 = vunpack.c.l.b16 %v787
      %v821 = vunpack.c.l.b16 %v788
      %v822 = vunpack.c.l.b16 %v789
      %v823 = vunpack.c.l.b16 %v790
      %v824 = vpack.c.b16 %v817, %v816
      %v825 = vpack.c.b16 %v819, %v818
      %v826 = vpack.c.b16 %v821, %v820
      %v827 = vpack.c.b16 %v823, %v822
      %v848 = vunpack.c.l.b16 %v792
      %v849 = vunpack.c.l.b16 %v793
      %v850 = vunpack.c.l.b16 %v794
      %v851 = vunpack.c.l.b16 %v795
      %v852 = vunpack.c.l.b16 %v796
      %v853 = vunpack.c.l.b16 %v797
      %v854 = vunpack.c.l.b16 %v798
      %v855 = vunpack.c.l.b16 %v799
      %v856 = vunpack.c.l.b16 %v800
      %v857 = vunpack.c.l.b16 %v801
      %v858 = vunpack.c.l.b16 %v802
      %v859 = vunpack.c.l.b16 %v803
      %v860 = vunpack.c.l.b16 %v804
      %v861 = vunpack.c.l.b16 %v805
      %v862 = vunpack.c.l.b16 %v806
      %v863 = vunpack.c.l.b16 %v807
      %v864 = vpack.c.b16 %v849, %v848
      %v865 = vpack.c.b16 %v851, %v850
      %v866 = vpack.c.b16 %v853, %v852
      %v867 = vpack.c.b16 %v855, %v854
      %v868 = vpack.c.b16 %v857, %v856
      %v869 = vpack.c.b16 %v859, %v858
      %v870 = vpack.c.b16 %v861, %v860
      %v871 = vpack.c.b16 %v863, %v862
      %880 = vmatprep.subr.bf16.mxu0 0
      %881 = vmatpush1.bf16.msra.mxu0 %v864
      %882 = vmatprep.subr.bf16.mxu0 0
      %883 = vmatpush1.bf16.msra.mxu0 %v865
      %884 = vmatprep.subr.bf16.mxu0 0
      %885 = vmatpush1.bf16.msra.mxu0 %v866
      %886 = vmatprep.subr.bf16.mxu0 0
      %887 = vmatpush1.bf16.msra.mxu0 %v867
      %888 = vmatprep.subr.bf16.mxu0 0
      %889 = vmatpush1.bf16.msra.mxu0 %v868
      %890 = vmatprep.subr.bf16.mxu0 0
      %891 = vmatpush1.bf16.msra.mxu0 %v869
      %892 = vmatprep.subr.bf16.mxu0 0
      %893 = vmatpush1.bf16.msra.mxu0 %v870
      %894 = vmatprep.subr.bf16.mxu0 0
      %895 = vmatpush1.bf16.msra.mxu0 %v871
      %896 = vmatprep.subr.bf16.mxu0 0
      %897 = vmatpush1.bf16.msra.mxu0 0
      %898 = vmatprep.subr.bf16.mxu0 0
      %899 = vmatpush1.bf16.msra.mxu0 0
      %900 = vmatprep.subr.bf16.mxu0 0
      %901 = vmatpush1.bf16.msra.mxu0 0
      %902 = vmatprep.subr.bf16.mxu0 0
      %903 = vmatpush1.bf16.msra.mxu0 0
      %904 = vmatprep.subr.bf16.mxu0 0
      %905 = vmatpush1.bf16.msra.mxu0 0
      %906 = vmatprep.subr.bf16.mxu0 0
      %907 = vmatpush1.bf16.msra.mxu0 0
      %908 = vmatprep.subr.bf16.mxu0 0
      %909 = vmatpush1.bf16.msra.mxu0 0
      %910 = vmatprep.subr.bf16.mxu0 0
      %911 = vmatpush1.bf16.msra.mxu0 0
      %912 = vmatprep.mubr.bf16.mxu0 0
      %913 = vmatmul.mubr.bf16.gmra.mrb[0].mxu0 %v824
      %v914 = vpop.f32.mrb[0].mxu0
      %v915 = vadd.f32 0.0, %v914
      %v916 = vpop.f32.mrb[0].mxu0
      %v917 = vpop.f32.mrb[0].mxu0
      %v918 = vadd.f32 0.0, %v917
      %v919 = vpop.f32.mrb[0].mxu0
      %920 = vmatprep.mubr.bf16.mxu0 0
      %921 = vmatmul.mubr.bf16.gmra.mrb[0].mxu0 %v825
      %v922 = vpop.f32.mrb[0].mxu0
      %v923 = vadd.f32 0.0, %v922
      %v924 = vpop.f32.mrb[0].mxu0
      %v925 = vpop.f32.mrb[0].mxu0
      %v926 = vadd.f32 0.0, %v925
      %v927 = vpop.f32.mrb[0].mxu0
      %928 = vmatprep.mubr.bf16.mxu0 0
      %929 = vmatmul.mubr.bf16.gmra.mrb[0].mxu0 %v826
      %v930 = vpop.f32.mrb[0].mxu0
      %v931 = vadd.f32 0.0, %v930
      %v932 = vpop.f32.mrb[0].mxu0
      %v933 = vpop.f32.mrb[0].mxu0
      %v934 = vadd.f32 0.0, %v933
      %v935 = vpop.f32.mrb[0].mxu0
      %936 = vmatprep.mubr.bf16.mxu0 0
      %937 = vmatmul.mubr.bf16.gmra.mrb[0].mxu0 %v827
      %v938 = vpop.f32.mrb[0].mxu0
      %v939 = vadd.f32 0.0, %v938
      %v940 = vpop.f32.mrb[0].mxu0
      %v941 = vpop.f32.mrb[0].mxu0
      %v942 = vadd.f32 0.0, %v941
      %v943 = vpop.f32.mrb[0].mxu0
      %944 = vdwg.mxu0
      %v945 = vadd.f32 %v774, %v915
      %v946 = vadd.f32 %v775, %v918
      %v947 = vadd.f32 %v776, %v923
      %v948 = vadd.f32 %v777, %v926
      %v949 = vadd.f32 %v778, %v931
      %v950 = vadd.f32 %v779, %v934
      %v951 = vadd.f32 %v780, %v939
      %v952 = vadd.f32 %v781, %v942
      %s953 = scalar_lea.vmem %s165, 216
      %v954 = vld [vmem:[%s953] sm:$0xf]
      %v955 = vld [vmem:[%s953 + $0x8] sm:$0xf]
      %v956 = vld [vmem:[%s953 + $0x10] sm:$0xf]
      %v957 = vld [vmem:[%s953 + $0x18] sm:$0xf]
      %v958 = vld [vmem:[%s953 + $0x20] sm:$0xf]
      %v959 = vld [vmem:[%s953 + $0x28] sm:$0xf]
      %v960 = vld [vmem:[%s953 + $0x30] sm:$0xf]
      %v961 = vld [vmem:[%s953 + $0x38] sm:$0xf]
      %s962 = scalar_lea.vmem %s1, 256
      %v963 = vld [vmem:[%s962] sm:$0xf]
      %v964 = vld [vmem:[%s962 + $0x4] sm:$0xf]
      %v965 = vld [vmem:[%s962 + $0x8] sm:$0xf]
      %v966 = vld [vmem:[%s962 + $0xc] sm:$0xf]
      %v967 = vld [vmem:[%s962 + $0x10] sm:$0xf]
      %v968 = vld [vmem:[%s962 + $0x14] sm:$0xf]
      %v969 = vld [vmem:[%s962 + $0x18] sm:$0xf]
      %v970 = vld [vmem:[%s962 + $0x1c] sm:$0xf]
      %v971 = vld [vmem:[%s962 + $0x20] sm:$0xf]
      %v972 = vld [vmem:[%s962 + $0x24] sm:$0xf]
      %v973 = vld [vmem:[%s962 + $0x28] sm:$0xf]
      %v974 = vld [vmem:[%s962 + $0x2c] sm:$0xf]
      %v975 = vld [vmem:[%s962 + $0x30] sm:$0xf]
      %v976 = vld [vmem:[%s962 + $0x34] sm:$0xf]
      %v977 = vld [vmem:[%s962 + $0x38] sm:$0xf]
      %v978 = vld [vmem:[%s962 + $0x3c] sm:$0xf]
      %v987 = vunpack.c.l.b16 %v954
      %v988 = vunpack.c.l.b16 %v955
      %v989 = vunpack.c.l.b16 %v956
      %v990 = vunpack.c.l.b16 %v957
      %v991 = vunpack.c.l.b16 %v958
      %v992 = vunpack.c.l.b16 %v959
      %v993 = vunpack.c.l.b16 %v960
      %v994 = vunpack.c.l.b16 %v961
      %v995 = vpack.c.b16 %v988, %v987
      %v996 = vpack.c.b16 %v990, %v989
      %v997 = vpack.c.b16 %v992, %v991
      %v998 = vpack.c.b16 %v994, %v993
      %v1019 = vunpack.c.l.b16 %v963
      %v1020 = vunpack.c.l.b16 %v964
      %v1021 = vunpack.c.l.b16 %v965
      %v1022 = vunpack.c.l.b16 %v966
      %v1023 = vunpack.c.l.b16 %v967
      %v1024 = vunpack.c.l.b16 %v968
      %v1025 = vunpack.c.l.b16 %v969
      %v1026 = vunpack.c.l.b16 %v970
      %v1027 = vunpack.c.l.b16 %v971
      %v1028 = vunpack.c.l.b16 %v972
      %v1029 = vunpack.c.l.b16 %v973
      %v1030 = vunpack.c.l.b16 %v974
      %v1031 = vunpack.c.l.b16 %v975
      %v1032 = vunpack.c.l.b16 %v976
      %v1033 = vunpack.c.l.b16 %v977
      %v1034 = vunpack.c.l.b16 %v978
      %v1035 = vpack.c.b16 %v1020, %v1019
      %v1036 = vpack.c.b16 %v1022, %v1021
      %v1037 = vpack.c.b16 %v1024, %v1023
      %v1038 = vpack.c.b16 %v1026, %v1025
      %v1039 = vpack.c.b16 %v1028, %v1027
      %v1040 = vpack.c.b16 %v1030, %v1029
      %v1041 = vpack.c.b16 %v1032, %v1031
      %v1042 = vpack.c.b16 %v1034, %v1033
      %1051 = vmatprep.subr.bf16.mxu0 0
      %1052 = vmatpush1.bf16.msra.mxu0 %v1035
      %1053 = vmatprep.subr.bf16.mxu0 0
      %1054 = vmatpush1.bf16.msra.mxu0 %v1036
      %1055 = vmatprep.subr.bf16.mxu0 0
      %1056 = vmatpush1.bf16.msra.mxu0 %v1037
      %1057 = vmatprep.subr.bf16.mxu0 0
      %1058 = vmatpush1.bf16.msra.mxu0 %v1038
      %1059 = vmatprep.subr.bf16.mxu0 0
      %1060 = vmatpush1.bf16.msra.mxu0 %v1039
      %1061 = vmatprep.subr.bf16.mxu0 0
      %1062 = vmatpush1.bf16.msra.mxu0 %v1040
      %1063 = vmatprep.subr.bf16.mxu0 0
      %1064 = vmatpush1.bf16.msra.mxu0 %v1041
      %1065 = vmatprep.subr.bf16.mxu0 0
      %1066 = vmatpush1.bf16.msra.mxu0 %v1042
      %1067 = vmatprep.subr.bf16.mxu0 0
      %1068 = vmatpush1.bf16.msra.mxu0 0
      %1069 = vmatprep.subr.bf16.mxu0 0
      %1070 = vmatpush1.bf16.msra.mxu0 0
      %1071 = vmatprep.subr.bf16.mxu0 0
      %1072 = vmatpush1.bf16.msra.mxu0 0
      %1073 = vmatprep.subr.bf16.mxu0 0
      %1074 = vmatpush1.bf16.msra.mxu0 0
      %1075 = vmatprep.subr.bf16.mxu0 0
      %1076 = vmatpush1.bf16.msra.mxu0 0
      %1077 = vmatprep.subr.bf16.mxu0 0
      %1078 = vmatpush1.bf16.msra.mxu0 0
      %1079 = vmatprep.subr.bf16.mxu0 0
      %1080 = vmatpush1.bf16.msra.mxu0 0
      %1081 = vmatprep.subr.bf16.mxu0 0
      %1082 = vmatpush1.bf16.msra.mxu0 0
      %1083 = vmatprep.mubr.bf16.mxu0 0
      %1084 = vmatmul.mubr.bf16.gmra.mrb[0].mxu0 %v995
      %v1085 = vpop.f32.mrb[0].mxu0
      %v1086 = vadd.f32 0.0, %v1085
      %v1087 = vpop.f32.mrb[0].mxu0
      %v1088 = vpop.f32.mrb[0].mxu0
      %v1089 = vadd.f32 0.0, %v1088
      %v1090 = vpop.f32.mrb[0].mxu0
      %1091 = vmatprep.mubr.bf16.mxu0 0
      %1092 = vmatmul.mubr.bf16.gmra.mrb[0].mxu0 %v996
      %v1093 = vpop.f32.mrb[0].mxu0
      %v1094 = vadd.f32 0.0, %v1093
      %v1095 = vpop.f32.mrb[0].mxu0
      %v1096 = vpop.f32.mrb[0].mxu0
      %v1097 = vadd.f32 0.0, %v1096
      %v1098 = vpop.f32.mrb[0].mxu0
      %1099 = vmatprep.mubr.bf16.mxu0 0
      %1100 = vmatmul.mubr.bf16.gmra.mrb[0].mxu0 %v997
      %v1101 = vpop.f32.mrb[0].mxu0
      %v1102 = vadd.f32 0.0, %v1101
      %v1103 = vpop.f32.mrb[0].mxu0
      %v1104 = vpop.f32.mrb[0].mxu0
      %v1105 = vadd.f32 0.0, %v1104
      %v1106 = vpop.f32.mrb[0].mxu0
      %1107 = vmatprep.mubr.bf16.mxu0 0
      %1108 = vmatmul.mubr.bf16.gmra.mrb[0].mxu0 %v998
      %v1109 = vpop.f32.mrb[0].mxu0
      %v1110 = vadd.f32 0.0, %v1109
      %v1111 = vpop.f32.mrb[0].mxu0
      %v1112 = vpop.f32.mrb[0].mxu0
      %v1113 = vadd.f32 0.0, %v1112
      %v1114 = vpop.f32.mrb[0].mxu0
      %1115 = vdwg.mxu0
      %v1116 = vadd.f32 %v945, %v1086
      %v1117 = vadd.f32 %v946, %v1089
      %v1118 = vadd.f32 %v947, %v1094
      %v1119 = vadd.f32 %v948, %v1097
      %v1120 = vadd.f32 %v949, %v1102
      %v1121 = vadd.f32 %v950, %v1105
      %v1122 = vadd.f32 %v951, %v1110
      %v1123 = vadd.f32 %v952, %v1113
      %v1124 = vld [vmem:[%s782] sm:$0xf]
      %v1125 = vld [vmem:[%s782 + $0x4] sm:$0x1]
      %v1126 = vld [vmem:[%s782 + $0x8] sm:$0xf]
      %v1127 = vld [vmem:[%s782 + $0xc] sm:$0x1]
      %v1128 = vld [vmem:[%s782 + $0x10] sm:$0xf]
      %v1129 = vld [vmem:[%s782 + $0x14] sm:$0x1]
      %v1130 = vld [vmem:[%s782 + $0x18] sm:$0xf]
      %v1131 = vld [vmem:[%s782 + $0x1c] sm:$0x1]
      %v1132 = vld [vmem:[%s782 + $0x20] sm:$0xf]
      %v1133 = vld [vmem:[%s782 + $0x24] sm:$0x1]
      %v1134 = vld [vmem:[%s782 + $0x28] sm:$0xf]
      %v1135 = vld [vmem:[%s782 + $0x2c] sm:$0x1]
      %v1136 = vld [vmem:[%s782 + $0x30] sm:$0xf]
      %v1137 = vld [vmem:[%s782 + $0x34] sm:$0x1]
      %v1138 = vld [vmem:[%s782 + $0x38] sm:$0xf]
      %v1139 = vld [vmem:[%s782 + $0x3c] sm:$0x1]
      %v1141 = vshrl.u32 %v1124, 16
      %v1143 = vrot.slane %v1141, 4
      %v1144 = vshll.u32 %v1124, 16
      %v1146 = vrot.slane %v1144, 5
      %v1147 = vor.u32 %v1143, %v1146
      %v1148 = vrot.slane %v1147, 4
      %v1150 = vshll.u32 %v1125, 16
      %v1152 = vrot.slane %v1150, 5
      %v1153 = vsel %vm515, %v1148, %v1152
      %v1155 = vshrl.u32 %v1126, 16
      %v1157 = vrot.slane %v1155, 4
      %v1158 = vshll.u32 %v1126, 16
      %v1160 = vrot.slane %v1158, 5
      %v1161 = vor.u32 %v1157, %v1160
      %v1162 = vrot.slane %v1161, 4
      %v1164 = vshll.u32 %v1127, 16
      %v1166 = vrot.slane %v1164, 5
      %v1167 = vsel %vm515, %v1162, %v1166
      %v1169 = vshrl.u32 %v1128, 16
      %v1171 = vrot.slane %v1169, 4
      %v1172 = vshll.u32 %v1128, 16
      %v1174 = vrot.slane %v1172, 5
      %v1175 = vor.u32 %v1171, %v1174
      %v1176 = vrot.slane %v1175, 4
      %v1178 = vshll.u32 %v1129, 16
      %v1180 = vrot.slane %v1178, 5
      %v1181 = vsel %vm515, %v1176, %v1180
      %v1183 = vshrl.u32 %v1130, 16
      %v1185 = vrot.slane %v1183, 4
      %v1186 = vshll.u32 %v1130, 16
      %v1188 = vrot.slane %v1186, 5
      %v1189 = vor.u32 %v1185, %v1188
      %v1190 = vrot.slane %v1189, 4
      %v1192 = vshll.u32 %v1131, 16
      %v1194 = vrot.slane %v1192, 5
      %v1195 = vsel %vm515, %v1190, %v1194
      %v1197 = vshrl.u32 %v1132, 16
      %v1199 = vrot.slane %v1197, 4
      %v1200 = vshll.u32 %v1132, 16
      %v1202 = vrot.slane %v1200, 5
      %v1203 = vor.u32 %v1199, %v1202
      %v1204 = vrot.slane %v1203, 4
      %v1206 = vshll.u32 %v1133, 16
      %v1208 = vrot.slane %v1206, 5
      %v1209 = vsel %vm515, %v1204, %v1208
      %v1211 = vshrl.u32 %v1134, 16
      %v1213 = vrot.slane %v1211, 4
      %v1214 = vshll.u32 %v1134, 16
      %v1216 = vrot.slane %v1214, 5
      %v1217 = vor.u32 %v1213, %v1216
      %v1218 = vrot.slane %v1217, 4
      %v1220 = vshll.u32 %v1135, 16
      %v1222 = vrot.slane %v1220, 5
      %v1223 = vsel %vm515, %v1218, %v1222
      %v1225 = vshrl.u32 %v1136, 16
      %v1227 = vrot.slane %v1225, 4
      %v1228 = vshll.u32 %v1136, 16
      %v1230 = vrot.slane %v1228, 5
      %v1231 = vor.u32 %v1227, %v1230
      %v1232 = vrot.slane %v1231, 4
      %v1234 = vshll.u32 %v1137, 16
      %v1236 = vrot.slane %v1234, 5
      %v1237 = vsel %vm515, %v1232, %v1236
      %v1239 = vshrl.u32 %v1138, 16
      %v1241 = vrot.slane %v1239, 4
      %v1242 = vshll.u32 %v1138, 16
      %v1244 = vrot.slane %v1242, 5
      %v1245 = vor.u32 %v1241, %v1244
      %v1246 = vrot.slane %v1245, 4
      %v1248 = vshll.u32 %v1139, 16
      %v1250 = vrot.slane %v1248, 5
      %v1251 = vsel %vm515, %v1246, %v1250
      %s1252 = scalar_lea.vmem %s1, 320
      %v1253 = vld [vmem:[%s1252] sm:$0xf]
      %v1254 = vld [vmem:[%s1252 + $0x4] sm:$0xf]
      %v1255 = vld [vmem:[%s1252 + $0x8] sm:$0xf]
      %v1256 = vld [vmem:[%s1252 + $0xc] sm:$0xf]
      %v1257 = vld [vmem:[%s1252 + $0x10] sm:$0xf]
      %v1258 = vld [vmem:[%s1252 + $0x14] sm:$0xf]
      %v1259 = vld [vmem:[%s1252 + $0x18] sm:$0xf]
      %v1260 = vld [vmem:[%s1252 + $0x1c] sm:$0xf]
      %v1261 = vld [vmem:[%s1252 + $0x20] sm:$0xf]
      %v1262 = vld [vmem:[%s1252 + $0x24] sm:$0xf]
      %v1263 = vld [vmem:[%s1252 + $0x28] sm:$0xf]
      %v1264 = vld [vmem:[%s1252 + $0x2c] sm:$0xf]
      %v1265 = vld [vmem:[%s1252 + $0x30] sm:$0xf]
      %v1266 = vld [vmem:[%s1252 + $0x34] sm:$0xf]
      %v1267 = vld [vmem:[%s1252 + $0x38] sm:$0xf]
      %v1268 = vld [vmem:[%s1252 + $0x3c] sm:$0xf]
      %v1269 = vunpack.c.l.b16 %v1153
      %v1270 = vunpack.c.l.b16 %v1167
      %v1271 = vunpack.c.l.b16 %v1181
      %v1272 = vunpack.c.l.b16 %v1195
      %v1273 = vunpack.c.l.b16 %v1209
      %v1274 = vunpack.c.l.b16 %v1223
      %v1275 = vunpack.c.l.b16 %v1237
      %v1276 = vunpack.c.l.b16 %v1251
      %v1277 = vpack.c.b16 %v1270, %v1269
      %v1278 = vpack.c.b16 %v1272, %v1271
      %v1279 = vpack.c.b16 %v1274, %v1273
      %v1280 = vpack.c.b16 %v1276, %v1275
      %v1301 = vunpack.c.l.b16 %v1253
      %v1302 = vunpack.c.l.b16 %v1254
      %v1303 = vunpack.c.l.b16 %v1255
      %v1304 = vunpack.c.l.b16 %v1256
      %v1305 = vunpack.c.l.b16 %v1257
      %v1306 = vunpack.c.l.b16 %v1258
      %v1307 = vunpack.c.l.b16 %v1259
      %v1308 = vunpack.c.l.b16 %v1260
      %v1309 = vunpack.c.l.b16 %v1261
      %v1310 = vunpack.c.l.b16 %v1262
      %v1311 = vunpack.c.l.b16 %v1263
      %v1312 = vunpack.c.l.b16 %v1264
      %v1313 = vunpack.c.l.b16 %v1265
      %v1314 = vunpack.c.l.b16 %v1266
      %v1315 = vunpack.c.l.b16 %v1267
      %v1316 = vunpack.c.l.b16 %v1268
      %v1317 = vpack.c.b16 %v1302, %v1301
      %v1318 = vpack.c.b16 %v1304, %v1303
      %v1319 = vpack.c.b16 %v1306, %v1305
      %v1320 = vpack.c.b16 %v1308, %v1307
      %v1321 = vpack.c.b16 %v1310, %v1309
      %v1322 = vpack.c.b16 %v1312, %v1311
      %v1323 = vpack.c.b16 %v1314, %v1313
      %v1324 = vpack.c.b16 %v1316, %v1315
      %1333 = vmatprep.subr.bf16.mxu0 0
      %1334 = vmatpush1.bf16.msra.mxu0 %v1317
      %1335 = vmatprep.subr.bf16.mxu0 0
      %1336 = vmatpush1.bf16.msra.mxu0 %v1318
      %1337 = vmatprep.subr.bf16.mxu0 0
      %1338 = vmatpush1.bf16.msra.mxu0 %v1319
      %1339 = vmatprep.subr.bf16.mxu0 0
      %1340 = vmatpush1.bf16.msra.mxu0 %v1320
      %1341 = vmatprep.subr.bf16.mxu0 0
      %1342 = vmatpush1.bf16.msra.mxu0 %v1321
      %1343 = vmatprep.subr.bf16.mxu0 0
      %1344 = vmatpush1.bf16.msra.mxu0 %v1322
      %1345 = vmatprep.subr.bf16.mxu0 0
      %1346 = vmatpush1.bf16.msra.mxu0 %v1323
      %1347 = vmatprep.subr.bf16.mxu0 0
      %1348 = vmatpush1.bf16.msra.mxu0 %v1324
      %1349 = vmatprep.subr.bf16.mxu0 0
      %1350 = vmatpush1.bf16.msra.mxu0 0
      %1351 = vmatprep.subr.bf16.mxu0 0
      %1352 = vmatpush1.bf16.msra.mxu0 0
      %1353 = vmatprep.subr.bf16.mxu0 0
      %1354 = vmatpush1.bf16.msra.mxu0 0
      %1355 = vmatprep.subr.bf16.mxu0 0
      %1356 = vmatpush1.bf16.msra.mxu0 0
      %1357 = vmatprep.subr.bf16.mxu0 0
      %1358 = vmatpush1.bf16.msra.mxu0 0
      %1359 = vmatprep.subr.bf16.mxu0 0
      %1360 = vmatpush1.bf16.msra.mxu0 0
      %1361 = vmatprep.subr.bf16.mxu0 0
      %1362 = vmatpush1.bf16.msra.mxu0 0
      %1363 = vmatprep.subr.bf16.mxu0 0
      %1364 = vmatpush1.bf16.msra.mxu0 0
      %1365 = vmatprep.mubr.bf16.mxu0 0
      %1366 = vmatmul.mubr.bf16.gmra.mrb[0].mxu0 %v1277
      %v1367 = vpop.f32.mrb[0].mxu0
      %v1368 = vadd.f32 0.0, %v1367
      %v1369 = vpop.f32.mrb[0].mxu0
      %v1370 = vpop.f32.mrb[0].mxu0
      %v1371 = vadd.f32 0.0, %v1370
      %v1372 = vpop.f32.mrb[0].mxu0
      %1373 = vmatprep.mubr.bf16.mxu0 0
      %1374 = vmatmul.mubr.bf16.gmra.mrb[0].mxu0 %v1278
      %v1375 = vpop.f32.mrb[0].mxu0
      %v1376 = vadd.f32 0.0, %v1375
      %v1377 = vpop.f32.mrb[0].mxu0
      %v1378 = vpop.f32.mrb[0].mxu0
      %v1379 = vadd.f32 0.0, %v1378
      %v1380 = vpop.f32.mrb[0].mxu0
      %1381 = vmatprep.mubr.bf16.mxu0 0
      %1382 = vmatmul.mubr.bf16.gmra.mrb[0].mxu0 %v1279
      %v1383 = vpop.f32.mrb[0].mxu0
      %v1384 = vadd.f32 0.0, %v1383
      %v1385 = vpop.f32.mrb[0].mxu0
      %v1386 = vpop.f32.mrb[0].mxu0
      %v1387 = vadd.f32 0.0, %v1386
      %v1388 = vpop.f32.mrb[0].mxu0
      %1389 = vmatprep.mubr.bf16.mxu0 0
      %1390 = vmatmul.mubr.bf16.gmra.mrb[0].mxu0 %v1280
      %v1391 = vpop.f32.mrb[0].mxu0
      %v1392 = vadd.f32 0.0, %v1391
      %v1393 = vpop.f32.mrb[0].mxu0
      %v1394 = vpop.f32.mrb[0].mxu0
      %v1395 = vadd.f32 0.0, %v1394
      %v1396 = vpop.f32.mrb[0].mxu0
      %1397 = vdwg.mxu0
      %v1398 = vadd.f32 %v1116, %v1368
      %v1399 = vadd.f32 %v1117, %v1371
      %v1400 = vadd.f32 %v1118, %v1376
      %v1401 = vadd.f32 %v1119, %v1379
      %v1402 = vadd.f32 %v1120, %v1384
      %v1403 = vadd.f32 %v1121, %v1387
      %v1404 = vadd.f32 %v1122, %v1392
      %v1405 = vadd.f32 %v1123, %v1395
      %s1406 = scalar_lea.vmem %s165, 8
      %v1407 = vld [vmem:[%s1406] sm:$0xf]
      %v1408 = vld [vmem:[%s1406 + $0x8] sm:$0xf]
      %v1409 = vld [vmem:[%s1406 + $0x10] sm:$0xf]
      %v1410 = vld [vmem:[%s1406 + $0x18] sm:$0xf]
      %v1411 = vld [vmem:[%s1406 + $0x20] sm:$0xf]
      %v1412 = vld [vmem:[%s1406 + $0x28] sm:$0xf]
      %v1413 = vld [vmem:[%s1406 + $0x30] sm:$0xf]
      %v1414 = vld [vmem:[%s1406 + $0x38] sm:$0xf]
      %s1415 = scalar_lea.vmem %s1, 384
      %v1416 = vld [vmem:[%s1415] sm:$0xf]
      %v1417 = vld [vmem:[%s1415 + $0x4] sm:$0xf]
      %v1418 = vld [vmem:[%s1415 + $0x8] sm:$0xf]
      %v1419 = vld [vmem:[%s1415 + $0xc] sm:$0xf]
      %v1420 = vld [vmem:[%s1415 + $0x10] sm:$0xf]
      %v1421 = vld [vmem:[%s1415 + $0x14] sm:$0xf]
      %v1422 = vld [vmem:[%s1415 + $0x18] sm:$0xf]
      %v1423 = vld [vmem:[%s1415 + $0x1c] sm:$0xf]
      %v1424 = vld [vmem:[%s1415 + $0x20] sm:$0xf]
      %v1425 = vld [vmem:[%s1415 + $0x24] sm:$0xf]
      %v1426 = vld [vmem:[%s1415 + $0x28] sm:$0xf]
      %v1427 = vld [vmem:[%s1415 + $0x2c] sm:$0xf]
      %v1428 = vld [vmem:[%s1415 + $0x30] sm:$0xf]
      %v1429 = vld [vmem:[%s1415 + $0x34] sm:$0xf]
      %v1430 = vld [vmem:[%s1415 + $0x38] sm:$0xf]
      %v1431 = vld [vmem:[%s1415 + $0x3c] sm:$0xf]
      %v1440 = vunpack.c.l.b16 %v1407
      %v1441 = vunpack.c.l.b16 %v1408
      %v1442 = vunpack.c.l.b16 %v1409
      %v1443 = vunpack.c.l.b16 %v1410
      %v1444 = vunpack.c.l.b16 %v1411
      %v1445 = vunpack.c.l.b16 %v1412
      %v1446 = vunpack.c.l.b16 %v1413
      %v1447 = vunpack.c.l.b16 %v1414
      %v1448 = vpack.c.b16 %v1441, %v1440
      %v1449 = vpack.c.b16 %v1443, %v1442
      %v1450 = vpack.c.b16 %v1445, %v1444
      %v1451 = vpack.c.b16 %v1447, %v1446
      %v1472 = vunpack.c.l.b16 %v1416
      %v1473 = vunpack.c.l.b16 %v1417
      %v1474 = vunpack.c.l.b16 %v1418
      %v1475 = vunpack.c.l.b16 %v1419
      %v1476 = vunpack.c.l.b16 %v1420
      %v1477 = vunpack.c.l.b16 %v1421
      %v1478 = vunpack.c.l.b16 %v1422
      %v1479 = vunpack.c.l.b16 %v1423
      %v1480 = vunpack.c.l.b16 %v1424
      %v1481 = vunpack.c.l.b16 %v1425
      %v1482 = vunpack.c.l.b16 %v1426
      %v1483 = vunpack.c.l.b16 %v1427
      %v1484 = vunpack.c.l.b16 %v1428
      %v1485 = vunpack.c.l.b16 %v1429
      %v1486 = vunpack.c.l.b16 %v1430
      %v1487 = vunpack.c.l.b16 %v1431
      %v1488 = vpack.c.b16 %v1473, %v1472
      %v1489 = vpack.c.b16 %v1475, %v1474
      %v1490 = vpack.c.b16 %v1477, %v1476
      %v1491 = vpack.c.b16 %v1479, %v1478
      %v1492 = vpack.c.b16 %v1481, %v1480
      %v1493 = vpack.c.b16 %v1483, %v1482
      %v1494 = vpack.c.b16 %v1485, %v1484
      %v1495 = vpack.c.b16 %v1487, %v1486
      %1504 = vmatprep.subr.bf16.mxu0 0
      %1505 = vmatpush1.bf16.msra.mxu0 %v1488
      %1506 = vmatprep.subr.bf16.mxu0 0
      %1507 = vmatpush1.bf16.msra.mxu0 %v1489
      %1508 = vmatprep.subr.bf16.mxu0 0
      %1509 = vmatpush1.bf16.msra.mxu0 %v1490
      %1510 = vmatprep.subr.bf16.mxu0 0
      %1511 = vmatpush1.bf16.msra.mxu0 %v1491
      %1512 = vmatprep.subr.bf16.mxu0 0
      %1513 = vmatpush1.bf16.msra.mxu0 %v1492
      %1514 = vmatprep.subr.bf16.mxu0 0
      %1515 = vmatpush1.bf16.msra.mxu0 %v1493
      %1516 = vmatprep.subr.bf16.mxu0 0
      %1517 = vmatpush1.bf16.msra.mxu0 %v1494
      %1518 = vmatprep.subr.bf16.mxu0 0
      %1519 = vmatpush1.bf16.msra.mxu0 %v1495
      %1520 = vmatprep.subr.bf16.mxu0 0
      %1521 = vmatpush1.bf16.msra.mxu0 0
      %1522 = vmatprep.subr.bf16.mxu0 0
      %1523 = vmatpush1.bf16.msra.mxu0 0
      %1524 = vmatprep.subr.bf16.mxu0 0
      %1525 = vmatpush1.bf16.msra.mxu0 0
      %1526 = vmatprep.subr.bf16.mxu0 0
      %1527 = vmatpush1.bf16.msra.mxu0 0
      %1528 = vmatprep.subr.bf16.mxu0 0
      %1529 = vmatpush1.bf16.msra.mxu0 0
      %1530 = vmatprep.subr.bf16.mxu0 0
      %1531 = vmatpush1.bf16.msra.mxu0 0
      %1532 = vmatprep.subr.bf16.mxu0 0
      %1533 = vmatpush1.bf16.msra.mxu0 0
      %1534 = vmatprep.subr.bf16.mxu0 0
      %1535 = vmatpush1.bf16.msra.mxu0 0
      %1536 = vmatprep.mubr.bf16.mxu0 0
      %1537 = vmatmul.mubr.bf16.gmra.mrb[0].mxu0 %v1448
      %v1538 = vpop.f32.mrb[0].mxu0
      %v1539 = vadd.f32 0.0, %v1538
      %v1540 = vpop.f32.mrb[0].mxu0
      %v1541 = vpop.f32.mrb[0].mxu0
      %v1542 = vadd.f32 0.0, %v1541
      %v1543 = vpop.f32.mrb[0].mxu0
      %1544 = vmatprep.mubr.bf16.mxu0 0
      %1545 = vmatmul.mubr.bf16.gmra.mrb[0].mxu0 %v1449
      %v1546 = vpop.f32.mrb[0].mxu0
      %v1547 = vadd.f32 0.0, %v1546
      %v1548 = vpop.f32.mrb[0].mxu0
      %v1549 = vpop.f32.mrb[0].mxu0
      %v1550 = vadd.f32 0.0, %v1549
      %v1551 = vpop.f32.mrb[0].mxu0
      %1552 = vmatprep.mubr.bf16.mxu0 0
      %1553 = vmatmul.mubr.bf16.gmra.mrb[0].mxu0 %v1450
      %v1554 = vpop.f32.mrb[0].mxu0
      %v1555 = vadd.f32 0.0, %v1554
      %v1556 = vpop.f32.mrb[0].mxu0
      %v1557 = vpop.f32.mrb[0].mxu0
      %v1558 = vadd.f32 0.0, %v1557
      %v1559 = vpop.f32.mrb[0].mxu0
      %1560 = vmatprep.mubr.bf16.mxu0 0
      %1561 = vmatmul.mubr.bf16.gmra.mrb[0].mxu0 %v1451
      %v1562 = vpop.f32.mrb[0].mxu0
      %v1563 = vadd.f32 0.0, %v1562
      %v1564 = vpop.f32.mrb[0].mxu0
      %v1565 = vpop.f32.mrb[0].mxu0
      %v1566 = vadd.f32 0.0, %v1565
      %v1567 = vpop.f32.mrb[0].mxu0
      %1568 = vdwg.mxu0
      %v1569 = vadd.f32 %v1398, %v1539
      %v1570 = vadd.f32 %v1399, %v1542
      %v1571 = vadd.f32 %v1400, %v1547
      %v1572 = vadd.f32 %v1401, %v1550
      %v1573 = vadd.f32 %v1402, %v1555
      %v1574 = vadd.f32 %v1403, %v1558
      %v1575 = vadd.f32 %v1404, %v1563
      %v1576 = vadd.f32 %v1405, %v1566
      %s1577 = scalar_lea.vmem %s165, 80
      %v1578 = vld [vmem:[%s1577] sm:$0xf]
      %v1579 = vld [vmem:[%s1577 + $0x8] sm:$0xf]
      %v1580 = vld [vmem:[%s1577 + $0x10] sm:$0xf]
      %v1581 = vld [vmem:[%s1577 + $0x18] sm:$0xf]
      %v1582 = vld [vmem:[%s1577 + $0x20] sm:$0xf]
      %v1583 = vld [vmem:[%s1577 + $0x28] sm:$0xf]
      %v1584 = vld [vmem:[%s1577 + $0x30] sm:$0xf]
      %v1585 = vld [vmem:[%s1577 + $0x38] sm:$0xf]
      %s1586 = scalar_lea.vmem %s1, 448
      %v1587 = vld [vmem:[%s1586] sm:$0xf]
      %v1588 = vld [vmem:[%s1586 + $0x4] sm:$0xf]
      %v1589 = vld [vmem:[%s1586 + $0x8] sm:$0xf]
      %v1590 = vld [vmem:[%s1586 + $0xc] sm:$0xf]
      %v1591 = vld [vmem:[%s1586 + $0x10] sm:$0xf]
      %v1592 = vld [vmem:[%s1586 + $0x14] sm:$0xf]
      %v1593 = vld [vmem:[%s1586 + $0x18] sm:$0xf]
      %v1594 = vld [vmem:[%s1586 + $0x1c] sm:$0xf]
      %v1595 = vld [vmem:[%s1586 + $0x20] sm:$0xf]
      %v1596 = vld [vmem:[%s1586 + $0x24] sm:$0xf]
      %v1597 = vld [vmem:[%s1586 + $0x28] sm:$0xf]
      %v1598 = vld [vmem:[%s1586 + $0x2c] sm:$0xf]
      %v1599 = vld [vmem:[%s1586 + $0x30] sm:$0xf]
      %v1600 = vld [vmem:[%s1586 + $0x34] sm:$0xf]
      %v1601 = vld [vmem:[%s1586 + $0x38] sm:$0xf]
      %v1602 = vld [vmem:[%s1586 + $0x3c] sm:$0xf]
      %v1611 = vunpack.c.l.b16 %v1578
      %v1612 = vunpack.c.l.b16 %v1579
      %v1613 = vunpack.c.l.b16 %v1580
      %v1614 = vunpack.c.l.b16 %v1581
      %v1615 = vunpack.c.l.b16 %v1582
      %v1616 = vunpack.c.l.b16 %v1583
      %v1617 = vunpack.c.l.b16 %v1584
      %v1618 = vunpack.c.l.b16 %v1585
      %v1619 = vpack.c.b16 %v1612, %v1611
      %v1620 = vpack.c.b16 %v1614, %v1613
      %v1621 = vpack.c.b16 %v1616, %v1615
      %v1622 = vpack.c.b16 %v1618, %v1617
      %v1643 = vunpack.c.l.b16 %v1587
      %v1644 = vunpack.c.l.b16 %v1588
      %v1645 = vunpack.c.l.b16 %v1589
      %v1646 = vunpack.c.l.b16 %v1590
      %v1647 = vunpack.c.l.b16 %v1591
      %v1648 = vunpack.c.l.b16 %v1592
      %v1649 = vunpack.c.l.b16 %v1593
      %v1650 = vunpack.c.l.b16 %v1594
      %v1651 = vunpack.c.l.b16 %v1595
      %v1652 = vunpack.c.l.b16 %v1596
      %v1653 = vunpack.c.l.b16 %v1597
      %v1654 = vunpack.c.l.b16 %v1598
      %v1655 = vunpack.c.l.b16 %v1599
      %v1656 = vunpack.c.l.b16 %v1600
      %v1657 = vunpack.c.l.b16 %v1601
      %v1658 = vunpack.c.l.b16 %v1602
      %v1659 = vpack.c.b16 %v1644, %v1643
      %v1660 = vpack.c.b16 %v1646, %v1645
      %v1661 = vpack.c.b16 %v1648, %v1647
      %v1662 = vpack.c.b16 %v1650, %v1649
      %v1663 = vpack.c.b16 %v1652, %v1651
      %v1664 = vpack.c.b16 %v1654, %v1653
      %v1665 = vpack.c.b16 %v1656, %v1655
      %v1666 = vpack.c.b16 %v1658, %v1657
      %1675 = vmatprep.subr.bf16.mxu0 0
      %1676 = vmatpush1.bf16.msra.mxu0 %v1659
      %1677 = vmatprep.subr.bf16.mxu0 0
      %1678 = vmatpush1.bf16.msra.mxu0 %v1660
      %1679 = vmatprep.subr.bf16.mxu0 0
      %1680 = vmatpush1.bf16.msra.mxu0 %v1661
      %1681 = vmatprep.subr.bf16.mxu0 0
      %1682 = vmatpush1.bf16.msra.mxu0 %v1662
      %1683 = vmatprep.subr.bf16.mxu0 0
      %1684 = vmatpush1.bf16.msra.mxu0 %v1663
      %1685 = vmatprep.subr.bf16.mxu0 0
      %1686 = vmatpush1.bf16.msra.mxu0 %v1664
      %1687 = vmatprep.subr.bf16.mxu0 0
      %1688 = vmatpush1.bf16.msra.mxu0 %v1665
      %1689 = vmatprep.subr.bf16.mxu0 0
      %1690 = vmatpush1.bf16.msra.mxu0 %v1666
      %1691 = vmatprep.subr.bf16.mxu0 0
      %1692 = vmatpush1.bf16.msra.mxu0 0
      %1693 = vmatprep.subr.bf16.mxu0 0
      %1694 = vmatpush1.bf16.msra.mxu0 0
      %1695 = vmatprep.subr.bf16.mxu0 0
      %1696 = vmatpush1.bf16.msra.mxu0 0
      %1697 = vmatprep.subr.bf16.mxu0 0
      %1698 = vmatpush1.bf16.msra.mxu0 0
      %1699 = vmatprep.subr.bf16.mxu0 0
      %1700 = vmatpush1.bf16.msra.mxu0 0
      %1701 = vmatprep.subr.bf16.mxu0 0
      %1702 = vmatpush1.bf16.msra.mxu0 0
      %1703 = vmatprep.subr.bf16.mxu0 0
      %1704 = vmatpush1.bf16.msra.mxu0 0
      %1705 = vmatprep.subr.bf16.mxu0 0
      %1706 = vmatpush1.bf16.msra.mxu0 0
      %1707 = vmatprep.mubr.bf16.mxu0 0
      %1708 = vmatmul.mubr.bf16.gmra.mrb[0].mxu0 %v1619
      %v1709 = vpop.f32.mrb[0].mxu0
      %v1710 = vadd.f32 0.0, %v1709
      %v1711 = vpop.f32.mrb[0].mxu0
      %v1712 = vpop.f32.mrb[0].mxu0
      %v1713 = vadd.f32 0.0, %v1712
      %v1714 = vpop.f32.mrb[0].mxu0
      %1715 = vmatprep.mubr.bf16.mxu0 0
      %1716 = vmatmul.mubr.bf16.gmra.mrb[0].mxu0 %v1620
      %v1717 = vpop.f32.mrb[0].mxu0
      %v1718 = vadd.f32 0.0, %v1717
      %v1719 = vpop.f32.mrb[0].mxu0
      %v1720 = vpop.f32.mrb[0].mxu0
      %v1721 = vadd.f32 0.0, %v1720
      %v1722 = vpop.f32.mrb[0].mxu0
      %1723 = vmatprep.mubr.bf16.mxu0 0
      %1724 = vmatmul.mubr.bf16.gmra.mrb[0].mxu0 %v1621
      %v1725 = vpop.f32.mrb[0].mxu0
      %v1726 = vadd.f32 0.0, %v1725
      %v1727 = vpop.f32.mrb[0].mxu0
      %v1728 = vpop.f32.mrb[0].mxu0
      %v1729 = vadd.f32 0.0, %v1728
      %v1730 = vpop.f32.mrb[0].mxu0
      %1731 = vmatprep.mubr.bf16.mxu0 0
      %1732 = vmatmul.mubr.bf16.gmra.mrb[0].mxu0 %v1622
      %v1733 = vpop.f32.mrb[0].mxu0
      %v1734 = vadd.f32 0.0, %v1733
      %v1735 = vpop.f32.mrb[0].mxu0
      %v1736 = vpop.f32.mrb[0].mxu0
      %v1737 = vadd.f32 0.0, %v1736
      %v1738 = vpop.f32.mrb[0].mxu0
      %1739 = vdwg.mxu0
      %v1740 = vadd.f32 %v1569, %v1710
      %v1741 = vadd.f32 %v1570, %v1713
      %v1742 = vadd.f32 %v1571, %v1718
      %v1743 = vadd.f32 %v1572, %v1721
      %v1744 = vadd.f32 %v1573, %v1726
      %v1745 = vadd.f32 %v1574, %v1729
      %v1746 = vadd.f32 %v1575, %v1734
      %v1747 = vadd.f32 %v1576, %v1737
      %v1748 = vld [vmem:[%s1406] sm:$0xf]
      %v1749 = vld [vmem:[%s1406 + $0x4] sm:$0x1]
      %v1750 = vld [vmem:[%s1406 + $0x8] sm:$0xf]
      %v1751 = vld [vmem:[%s1406 + $0xc] sm:$0x1]
      %v1752 = vld [vmem:[%s1406 + $0x10] sm:$0xf]
      %v1753 = vld [vmem:[%s1406 + $0x14] sm:$0x1]
      %v1754 = vld [vmem:[%s1406 + $0x18] sm:$0xf]
      %v1755 = vld [vmem:[%s1406 + $0x1c] sm:$0x1]
      %v1756 = vld [vmem:[%s1406 + $0x20] sm:$0xf]
      %v1757 = vld [vmem:[%s1406 + $0x24] sm:$0x1]
      %v1758 = vld [vmem:[%s1406 + $0x28] sm:$0xf]
      %v1759 = vld [vmem:[%s1406 + $0x2c] sm:$0x1]
      %v1760 = vld [vmem:[%s1406 + $0x30] sm:$0xf]
      %v1761 = vld [vmem:[%s1406 + $0x34] sm:$0x1]
      %v1762 = vld [vmem:[%s1406 + $0x38] sm:$0xf]
      %v1763 = vld [vmem:[%s1406 + $0x3c] sm:$0x1]
      %v1765 = vshrl.u32 %v1748, 16
      %v1767 = vrot.slane %v1765, 4
      %v1768 = vshll.u32 %v1748, 16
      %v1770 = vrot.slane %v1768, 5
      %v1771 = vor.u32 %v1767, %v1770
      %v1772 = vrot.slane %v1771, 4
      %v1774 = vshll.u32 %v1749, 16
      %v1776 = vrot.slane %v1774, 5
      %v1777 = vsel %vm515, %v1772, %v1776
      %v1779 = vshrl.u32 %v1750, 16
      %v1781 = vrot.slane %v1779, 4
      %v1782 = vshll.u32 %v1750, 16
      %v1784 = vrot.slane %v1782, 5
      %v1785 = vor.u32 %v1781, %v1784
      %v1786 = vrot.slane %v1785, 4
      %v1788 = vshll.u32 %v1751, 16
      %v1790 = vrot.slane %v1788, 5
      %v1791 = vsel %vm515, %v1786, %v1790
      %v1793 = vshrl.u32 %v1752, 16
      %v1795 = vrot.slane %v1793, 4
      %v1796 = vshll.u32 %v1752, 16
      %v1798 = vrot.slane %v1796, 5
      %v1799 = vor.u32 %v1795, %v1798
      %v1800 = vrot.slane %v1799, 4
      %v1802 = vshll.u32 %v1753, 16
      %v1804 = vrot.slane %v1802, 5
      %v1805 = vsel %vm515, %v1800, %v1804
      %v1807 = vshrl.u32 %v1754, 16
      %v1809 = vrot.slane %v1807, 4
      %v1810 = vshll.u32 %v1754, 16
      %v1812 = vrot.slane %v1810, 5
      %v1813 = vor.u32 %v1809, %v1812
      %v1814 = vrot.slane %v1813, 4
      %v1816 = vshll.u32 %v1755, 16
      %v1818 = vrot.slane %v1816, 5
      %v1819 = vsel %vm515, %v1814, %v1818
      %v1821 = vshrl.u32 %v1756, 16
      %v1823 = vrot.slane %v1821, 4
      %v1824 = vshll.u32 %v1756, 16
      %v1826 = vrot.slane %v1824, 5
      %v1827 = vor.u32 %v1823, %v1826
      %v1828 = vrot.slane %v1827, 4
      %v1830 = vshll.u32 %v1757, 16
      %v1832 = vrot.slane %v1830, 5
      %v1833 = vsel %vm515, %v1828, %v1832
      %v1835 = vshrl.u32 %v1758, 16
      %v1837 = vrot.slane %v1835, 4
      %v1838 = vshll.u32 %v1758, 16
      %v1840 = vrot.slane %v1838, 5
      %v1841 = vor.u32 %v1837, %v1840
      %v1842 = vrot.slane %v1841, 4
      %v1844 = vshll.u32 %v1759, 16
      %v1846 = vrot.slane %v1844, 5
      %v1847 = vsel %vm515, %v1842, %v1846
      %v1849 = vshrl.u32 %v1760, 16
      %v1851 = vrot.slane %v1849, 4
      %v1852 = vshll.u32 %v1760, 16
      %v1854 = vrot.slane %v1852, 5
      %v1855 = vor.u32 %v1851, %v1854
      %v1856 = vrot.slane %v1855, 4
      %v1858 = vshll.u32 %v1761, 16
      %v1860 = vrot.slane %v1858, 5
      %v1861 = vsel %vm515, %v1856, %v1860
      %v1863 = vshrl.u32 %v1762, 16
      %v1865 = vrot.slane %v1863, 4
      %v1866 = vshll.u32 %v1762, 16
      %v1868 = vrot.slane %v1866, 5
      %v1869 = vor.u32 %v1865, %v1868
      %v1870 = vrot.slane %v1869, 4
      %v1872 = vshll.u32 %v1763, 16
      %v1874 = vrot.slane %v1872, 5
      %v1875 = vsel %vm515, %v1870, %v1874
      %s1876 = scalar_lea.vmem %s1, 512
      %v1877 = vld [vmem:[%s1876] sm:$0xf]
      %v1878 = vld [vmem:[%s1876 + $0x4] sm:$0xf]
      %v1879 = vld [vmem:[%s1876 + $0x8] sm:$0xf]
      %v1880 = vld [vmem:[%s1876 + $0xc] sm:$0xf]
      %v1881 = vld [vmem:[%s1876 + $0x10] sm:$0xf]
      %v1882 = vld [vmem:[%s1876 + $0x14] sm:$0xf]
      %v1883 = vld [vmem:[%s1876 + $0x18] sm:$0xf]
      %v1884 = vld [vmem:[%s1876 + $0x1c] sm:$0xf]
      %v1885 = vld [vmem:[%s1876 + $0x20] sm:$0xf]
      %v1886 = vld [vmem:[%s1876 + $0x24] sm:$0xf]
      %v1887 = vld [vmem:[%s1876 + $0x28] sm:$0xf]
      %v1888 = vld [vmem:[%s1876 + $0x2c] sm:$0xf]
      %v1889 = vld [vmem:[%s1876 + $0x30] sm:$0xf]
      %v1890 = vld [vmem:[%s1876 + $0x34] sm:$0xf]
      %v1891 = vld [vmem:[%s1876 + $0x38] sm:$0xf]
      %v1892 = vld [vmem:[%s1876 + $0x3c] sm:$0xf]
      %v1893 = vunpack.c.l.b16 %v1777
      %v1894 = vunpack.c.l.b16 %v1791
      %v1895 = vunpack.c.l.b16 %v1805
      %v1896 = vunpack.c.l.b16 %v1819
      %v1897 = vunpack.c.l.b16 %v1833
      %v1898 = vunpack.c.l.b16 %v1847
      %v1899 = vunpack.c.l.b16 %v1861
      %v1900 = vunpack.c.l.b16 %v1875
      %v1901 = vpack.c.b16 %v1894, %v1893
      %v1902 = vpack.c.b16 %v1896, %v1895
      %v1903 = vpack.c.b16 %v1898, %v1897
      %v1904 = vpack.c.b16 %v1900, %v1899
      %v1925 = vunpack.c.l.b16 %v1877
      %v1926 = vunpack.c.l.b16 %v1878
      %v1927 = vunpack.c.l.b16 %v1879
      %v1928 = vunpack.c.l.b16 %v1880
      %v1929 = vunpack.c.l.b16 %v1881
      %v1930 = vunpack.c.l.b16 %v1882
      %v1931 = vunpack.c.l.b16 %v1883
      %v1932 = vunpack.c.l.b16 %v1884
      %v1933 = vunpack.c.l.b16 %v1885
      %v1934 = vunpack.c.l.b16 %v1886
      %v1935 = vunpack.c.l.b16 %v1887
      %v1936 = vunpack.c.l.b16 %v1888
      %v1937 = vunpack.c.l.b16 %v1889
      %v1938 = vunpack.c.l.b16 %v1890
      %v1939 = vunpack.c.l.b16 %v1891
      %v1940 = vunpack.c.l.b16 %v1892
      %v1941 = vpack.c.b16 %v1926, %v1925
      %v1942 = vpack.c.b16 %v1928, %v1927
      %v1943 = vpack.c.b16 %v1930, %v1929
      %v1944 = vpack.c.b16 %v1932, %v1931
      %v1945 = vpack.c.b16 %v1934, %v1933
      %v1946 = vpack.c.b16 %v1936, %v1935
      %v1947 = vpack.c.b16 %v1938, %v1937
      %v1948 = vpack.c.b16 %v1940, %v1939
      %1957 = vmatprep.subr.bf16.mxu0 0
      %1958 = vmatpush1.bf16.msra.mxu0 %v1941
      %1959 = vmatprep.subr.bf16.mxu0 0
      %1960 = vmatpush1.bf16.msra.mxu0 %v1942
      %1961 = vmatprep.subr.bf16.mxu0 0
      %1962 = vmatpush1.bf16.msra.mxu0 %v1943
      %1963 = vmatprep.subr.bf16.mxu0 0
      %1964 = vmatpush1.bf16.msra.mxu0 %v1944
      %1965 = vmatprep.subr.bf16.mxu0 0
      %1966 = vmatpush1.bf16.msra.mxu0 %v1945
      %1967 = vmatprep.subr.bf16.mxu0 0
      %1968 = vmatpush1.bf16.msra.mxu0 %v1946
      %1969 = vmatprep.subr.bf16.mxu0 0
      %1970 = vmatpush1.bf16.msra.mxu0 %v1947
      %1971 = vmatprep.subr.bf16.mxu0 0
      %1972 = vmatpush1.bf16.msra.mxu0 %v1948
      %1973 = vmatprep.subr.bf16.mxu0 0
      %1974 = vmatpush1.bf16.msra.mxu0 0
      %1975 = vmatprep.subr.bf16.mxu0 0
      %1976 = vmatpush1.bf16.msra.mxu0 0
      %1977 = vmatprep.subr.bf16.mxu0 0
      %1978 = vmatpush1.bf16.msra.mxu0 0
      %1979 = vmatprep.subr.bf16.mxu0 0
      %1980 = vmatpush1.bf16.msra.mxu0 0
      %1981 = vmatprep.subr.bf16.mxu0 0
      %1982 = vmatpush1.bf16.msra.mxu0 0
      %1983 = vmatprep.subr.bf16.mxu0 0
      %1984 = vmatpush1.bf16.msra.mxu0 0
      %1985 = vmatprep.subr.bf16.mxu0 0
      %1986 = vmatpush1.bf16.msra.mxu0 0
      %1987 = vmatprep.subr.bf16.mxu0 0
      %1988 = vmatpush1.bf16.msra.mxu0 0
      %1989 = vmatprep.mubr.bf16.mxu0 0
      %1990 = vmatmul.mubr.bf16.gmra.mrb[0].mxu0 %v1901
      %v1991 = vpop.f32.mrb[0].mxu0
      %v1992 = vadd.f32 0.0, %v1991
      %v1993 = vpop.f32.mrb[0].mxu0
      %v1994 = vpop.f32.mrb[0].mxu0
      %v1995 = vadd.f32 0.0, %v1994
      %v1996 = vpop.f32.mrb[0].mxu0
      %1997 = vmatprep.mubr.bf16.mxu0 0
      %1998 = vmatmul.mubr.bf16.gmra.mrb[0].mxu0 %v1902
      %v1999 = vpop.f32.mrb[0].mxu0
      %v2000 = vadd.f32 0.0, %v1999
      %v2001 = vpop.f32.mrb[0].mxu0
      %v2002 = vpop.f32.mrb[0].mxu0
      %v2003 = vadd.f32 0.0, %v2002
      %v2004 = vpop.f32.mrb[0].mxu0
      %2005 = vmatprep.mubr.bf16.mxu0 0
      %2006 = vmatmul.mubr.bf16.gmra.mrb[0].mxu0 %v1903
      %v2007 = vpop.f32.mrb[0].mxu0
      %v2008 = vadd.f32 0.0, %v2007
      %v2009 = vpop.f32.mrb[0].mxu0
      %v2010 = vpop.f32.mrb[0].mxu0
      %v2011 = vadd.f32 0.0, %v2010
      %v2012 = vpop.f32.mrb[0].mxu0
      %2013 = vmatprep.mubr.bf16.mxu0 0
      %2014 = vmatmul.mubr.bf16.gmra.mrb[0].mxu0 %v1904
      %v2015 = vpop.f32.mrb[0].mxu0
      %v2016 = vadd.f32 0.0, %v2015
      %v2017 = vpop.f32.mrb[0].mxu0
      %v2018 = vpop.f32.mrb[0].mxu0
      %v2019 = vadd.f32 0.0, %v2018
      %v2020 = vpop.f32.mrb[0].mxu0
      %2021 = vdwg.mxu0
      %v2022 = vadd.f32 %v1740, %v1992
      %v2023 = vadd.f32 %v1741, %v1995
      %v2024 = vadd.f32 %v1742, %v2000
      %v2025 = vadd.f32 %v1743, %v2003
      %v2026 = vadd.f32 %v1744, %v2008
      %v2027 = vadd.f32 %v1745, %v2011
      %v2028 = vadd.f32 %v1746, %v2016
      %v2029 = vadd.f32 %v1747, %v2019
      %v2030 = vld [vmem:[%s2] sm:$0x1]
      %v2031 = vlaneseq
      %v2032 = vshrl.u32 %v2031, 7
      %v2033 = vsub.s32 0, %v2032
      %v2034 = vrot.slane %v2030, %v2033
      %v2035 = vmul.f32 %v2022, %v2034
      %v2036 = vmul.f32 %v2023, %v2034
      %v2037 = vmul.f32 %v2024, %v2034
      %v2038 = vmul.f32 %v2025, %v2034
      %v2039 = vmul.f32 %v2026, %v2034
      %v2040 = vmul.f32 %v2027, %v2034
      %v2041 = vmul.f32 %v2028, %v2034
      %v2042 = vmul.f32 %v2029, %v2034
      %v2043 = vld [vmem:[%s2 + $0x1] sm:$0x1]
      %v2044 = vlaneseq
      %v2045 = vshrl.u32 %v2044, 7
      %v2046 = vsub.s32 0, %v2045
      %v2047 = vrot.slane %v2043, %v2046
      %v2048 = vadd.f32 %v2035, %v2047
      %v2049 = vadd.f32 %v2036, %v2047
      %v2050 = vadd.f32 %v2037, %v2047
      %v2051 = vadd.f32 %v2038, %v2047
      %v2052 = vadd.f32 %v2039, %v2047
      %v2053 = vadd.f32 %v2040, %v2047
      %v2054 = vadd.f32 %v2041, %v2047
      %v2055 = vadd.f32 %v2042, %v2047
      %vm2056 = vcmp.gt.f32.partialorder %v2048, 0.0
      %vm2057 = vcmp.gt.f32.partialorder %v2049, 0.0
      %vm2058 = vcmp.gt.f32.partialorder %v2050, 0.0
      %vm2059 = vcmp.gt.f32.partialorder %v2051, 0.0
      %vm2060 = vcmp.gt.f32.partialorder %v2052, 0.0
      %vm2061 = vcmp.gt.f32.partialorder %v2053, 0.0
      %vm2062 = vcmp.gt.f32.partialorder %v2054, 0.0
      %vm2063 = vcmp.gt.f32.partialorder %v2055, 0.0
      %v2064 = vmul.f32 %v2048, 0.1
      %v2065 = vmul.f32 %v2049, 0.1
      %v2066 = vmul.f32 %v2050, 0.1
      %v2067 = vmul.f32 %v2051, 0.1
      %v2068 = vmul.f32 %v2052, 0.1
      %v2069 = vmul.f32 %v2053, 0.1
      %v2070 = vmul.f32 %v2054, 0.1
      %v2071 = vmul.f32 %v2055, 0.1
      %v2072 = vsel %vm2056, %v2048, %v2064
      %v2073 = vsel %vm2057, %v2049, %v2065
      %v2074 = vsel %vm2058, %v2050, %v2066
      %v2075 = vsel %vm2059, %v2051, %v2067
      %v2076 = vsel %vm2060, %v2052, %v2068
      %v2077 = vsel %vm2061, %v2053, %v2069
      %v2078 = vsel %vm2062, %v2054, %v2070
      %v2079 = vsel %vm2063, %v2055, %v2071
      %v2080 = vpack.c.bf16 %v2073, %v2072
      %v2081 = vpack.c.bf16 %v2075, %v2074
      %v2082 = vpack.c.bf16 %v2077, %v2076
      %v2083 = vpack.c.bf16 %v2079, %v2078
      %v2088 = vunpack.c.l.b16 %v2080
      %v2089 = vunpack.c.h.b16 %v2080
      %v2090 = vunpack.c.l.b16 %v2081
      %v2091 = vunpack.c.h.b16 %v2081
      %v2092 = vunpack.c.l.b16 %v2082
      %v2093 = vunpack.c.h.b16 %v2082
      %v2094 = vunpack.c.l.b16 %v2083
      %v2095 = vunpack.c.h.b16 %v2083
      %v2096 = vpack.c.b16 %v2088, %v2088
      %v2097 = vpack.c.b16 %v2089, %v2089
      %v2098 = vpack.c.b16 %v2090, %v2090
      %v2099 = vpack.c.b16 %v2091, %v2091
      %v2100 = vpack.c.b16 %v2092, %v2092
      %v2101 = vpack.c.b16 %v2093, %v2093
      %v2102 = vpack.c.b16 %v2094, %v2094
      %v2103 = vpack.c.b16 %v2095, %v2095
      %2112 = vst [vmem:[%s170] sm:$0xf] %v2096
      %2113 = vst [vmem:[%s170 + $0x4] sm:$0xf] %v2097
      %2114 = vst [vmem:[%s170 + $0x8] sm:$0xf] %v2098
      %2115 = vst [vmem:[%s170 + $0xc] sm:$0xf] %v2099
      %2116 = vst [vmem:[%s170 + $0x10] sm:$0xf] %v2100
      %2117 = vst [vmem:[%s170 + $0x14] sm:$0xf] %v2101
      %2118 = vst [vmem:[%s170 + $0x18] sm:$0xf] %v2102
      %2119 = vst [vmem:[%s170 + $0x1c] sm:$0xf] %v2103
      %s2120 = smul.u32 8, %s14
      %p2121 = scmp.lt.s32.totalorder %s2120, 15
      %s2122 = scalar_select %p2121, %s2120, 15
      %s2123 = smul.addr %s2122, 4
      %s2124 = scalar_lea.vmem %s3, %s2123
      // Predicated region
      $region33: #{_forward.9} parent=31 // pred_check
        %p2125 = pneg %p100
      $region34: #{_forward.9} parent=31 // pred_check_branch
        %2127 = sbr.rel (%p2125) target = $region36
      $region35: #{_forward.9} parent=31 // pred_region
        %s2128 = smul.u32 8, %s14
      $region36: #{_forward.9} parent=31 // pred_fallthru
        _
    $region32: #{_forward.9} parent=5 // pred_fallthru
      _
    %p2129 = scmp.le.s32.totalorder 2, %s9
    // Predicated region
    $region37: #{_forward.9} parent=5 // pred_check
      %p2130 = pneg %p2129
    $region38: #{_forward.9} parent=5 // pred_check_branch
      %2132 = sbr.rel (%p2130) target = $region40
    $region39: #{_forward.9} parent=5 // pred_region
      %s2133 = ssub.s32 %s9, 2
      // Predicated region
      $region41: #{_forward.9} parent=39 // pred_check
        %p2134 = pneg %p106
      $region42: #{_forward.9} parent=39 // pred_check_branch
        %2136 = sbr.rel (%p2134) target = $region44
      $region43: #{_forward.9} parent=39 // pred_region
        %s2137 = smul.u32 8, %s15
        %p2138 = scmp.lt.s32.totalorder %s2137, 15
        %s2139 = scalar_select %p2138, %s2137, 15
        %s2140 = smul.addr %s2139, 4
        %s2141 = scalar_lea.vmem %s3, %s2140
      $region44: #{_forward.9} parent=39 // pred_fallthru
        _
    $region40: #{_forward.9} parent=5 // pred_fallthru
      _
  $region6: #{_forward.9} parent=0 // loop_footer
    %s13 = sadd.s32 1, %s9
  $region7: #{_forward.9} parent=0 // loop_footer_branch
    %8 = sbr.rel target = $region3
  $region8: #{_forward.9} parent=0 // loop_exit
    _

// kernel: _forward.12
$region0: #{_forward.12}
  #allocation0 [shape = 'u32[]', space=smem, size = 0x4, offset = 0x4, fixed_abs, tag = 'smem constant byte address 0x4 - core index']
  #allocation1 [shape = 'u32[144,128]{1,0:T(1,128)}', space=vmem, size = 0x12000, scoped, tag = 'internal scratch']
  %s0 = inlined_call_operand.vmem [shape: bf16[2,8,8,128], index: 0, kind: input, shape index: {}]
  %s1 = inlined_call_operand.vmem [shape: bf16[1,128,128], index: 1, kind: input, shape index: {}]
  %s2 = inlined_call_operand.vmem [shape: f32[2,128], index: 2, kind: input, shape index: {}]
  %s3 = inlined_call_operand.vmem [shape: f32[128,128], index: 3, kind: output, shape index: {}]
  %s4 = sld [smem:[#allocation0]]
  $region45: #{_forward.12} parent=0
    _
  %s6 = ssub.s32 1, %s4
  %s7 = scalar_select 0, %s6, %s4
  loop: start=0, step=1, limit=4
  $region2: #{_forward.12} parent=0 // loop_pre_header
    _
  $region3: #{_forward.12} parent=0 // loop_header
    %s9 = sphi 0, %s13
    %p10 = scmp.ge.s32.totalorder %s9, 4
    %s19 = sphi 0, %s21
    %s22 = sphi 0, %s19
    %s23 = sphi 0, %s22
    %s39 = sphi 0, %s23
    %s43 = sphi 0, %s43
    %s45 = sphi 0, %s43
    %s46 = sphi 0, %s45
    %s60 = sphi 0, %s46
    %s64 = sphi 0, %s64
    %s66 = sphi 0, %s64
    %s67 = sphi 0, %s66
    %s81 = sphi 0, %s67
    %s87 = sphi 0, %s89
    %s90 = sphi 0, %s87
    %s91 = sphi 0, %s90
    %s107 = sphi 0, %s91
  $region4: #{_forward.12} parent=0 // loop_header_branch
    %12 = sbr.rel (%p10) target = $region8
  $region5: #{_forward.12} parent=0 // loop_body
    %s14 = ssub.s32 %s9, 1
    %s15 = ssub.s32 %s9, 2
    %s16 = sadd.s32 %s9, 1
    %s17 = ssub.s32 %s9, %s16
    %p18 = scmp.eq.s32.totalorder %s17, 0
    %s20 = sadd.s32 %s19, 1
    %s21 = scalar_select %p18, %s19, %s20
    %p24 = pneg %p18
    %p25 = scmp.eq.s32.totalorder %s9, 1
    %p26 = por %p24, %p25
    %p27 = scmp.ne.s32.totalorder %s19, %s22
    %p28 = scmp.eq.s32.totalorder %s9, 0
    %p29 = por %p27, %p28
    %p30 = scmp.ne.s32.totalorder %s19, %s22
    %p31 = scmp.eq.s32.totalorder %s14, 1
    %p32 = por %p30, %p31
    %p33 = scmp.ne.s32.totalorder %s22, %s23
    %p34 = scmp.eq.s32.totalorder %s14, 0
    %p35 = por %p33, %p34
    %p36 = scmp.ne.s32.totalorder %s22, %s23
    %p37 = scmp.eq.s32.totalorder %s15, 1
    %p38 = por %p36, %p37
    %p40 = scmp.ne.s32.totalorder %s23, %s39
    %p41 = scmp.eq.s32.totalorder %s15, 0
    %p42 = por %p40, %p41
    %s44 = sadd.s32 %s43, 1
    %p47 = scmp.eq.s32.totalorder %s9, 1
    %p48 = scmp.ne.s32.totalorder %s43, %s45
    %p49 = scmp.eq.s32.totalorder %s9, 0
    %p50 = por %p48, %p49
    %p51 = scmp.ne.s32.totalorder %s43, %s45
    %p52 = scmp.eq.s32.totalorder %s14, 1
    %p53 = por %p51, %p52
    %p54 = scmp.ne.s32.totalorder %s45, %s46
    %p55 = scmp.eq.s32.totalorder %s14, 0
    %p56 = por %p54, %p55
    %p57 = scmp.ne.s32.totalorder %s45, %s46
    %p58 = scmp.eq.s32.totalorder %s15, 1
    %p59 = por %p57, %p58
    %p61 = scmp.ne.s32.totalorder %s46, %s60
    %p62 = scmp.eq.s32.totalorder %s15, 0
    %p63 = por %p61, %p62
    %s65 = sadd.s32 %s64, 1
    %p68 = scmp.eq.s32.totalorder %s9, 1
    %p69 = scmp.ne.s32.totalorder %s64, %s66
    %p70 = scmp.eq.s32.totalorder %s9, 0
    %p71 = por %p69, %p70
    %p72 = scmp.ne.s32.totalorder %s64, %s66
    %p73 = scmp.eq.s32.totalorder %s14, 1
    %p74 = por %p72, %p73
    %p75 = scmp.ne.s32.totalorder %s66, %s67
    %p76 = scmp.eq.s32.totalorder %s14, 0
    %p77 = por %p75, %p76
    %p78 = scmp.ne.s32.totalorder %s66, %s67
    %p79 = scmp.eq.s32.totalorder %s15, 1
    %p80 = por %p78, %p79
    %p82 = scmp.ne.s32.totalorder %s67, %s81
    %p83 = scmp.eq.s32.totalorder %s15, 0
    %p84 = por %p82, %p83
    %s85 = ssub.s32 %s9, %s16
    %p86 = scmp.eq.s32.totalorder %s85, 0
    %s88 = sadd.s32 %s87, 1
    %s89 = scalar_select %p86, %s87, %s88
    %p92 = pneg %p86
    %p93 = scmp.eq.s32.totalorder %s9, 1
    %p94 = por %p92, %p93
    %p95 = scmp.ne.s32.totalorder %s87, %s90
    %p96 = scmp.eq.s32.totalorder %s9, 0
    %p97 = por %p95, %p96
    %p98 = scmp.ne.s32.totalorder %s87, %s90
    %p99 = scmp.eq.s32.totalorder %s14, 1
    %p100 = por %p98, %p99
    %p101 = scmp.ne.s32.totalorder %s90, %s91
    %p102 = scmp.eq.s32.totalorder %s14, 0
    %p103 = por %p101, %p102
    %p104 = scmp.ne.s32.totalorder %s90, %s91
    %p105 = scmp.eq.s32.totalorder %s15, 1
    %p106 = por %p104, %p105
    %p108 = scmp.ne.s32.totalorder %s91, %s107
    %p109 = scmp.eq.s32.totalorder %s15, 0
    %p110 = por %p108, %p109
    %p111 = scmp.le.s32.totalorder 1, %s9
    %p112 = scmp.lt.s32.totalorder %s9, 3
    %p113 = pnand %p111, %p112
    %p114 = pneg %p113
    // Predicated region
    $region9: #{_forward.12} parent=5 // pred_check
      _
    $region10: #{_forward.12} parent=5 // pred_check_branch
      %116 = sbr.rel (%p113) target = $region12
    $region11: #{_forward.12} parent=5 // pred_region
      %s117 = ssub.s32 %s9, 1
      // Predicated region
      $region13: #{_forward.12} parent=11 // pred_check
        %p118 = pneg %p56
      $region14: #{_forward.12} parent=11 // pred_check_branch
        %120 = sbr.rel (%p118) target = $region16
      $region15: #{_forward.12} parent=11 // pred_region
        _
      $region16: #{_forward.12} parent=11 // pred_fallthru
        _
      // Predicated region
      $region17: #{_forward.12} parent=11 // pred_check
        %p121 = pneg %p77
      $region18: #{_forward.12} parent=11 // pred_check_branch
        %123 = sbr.rel (%p121) target = $region20
      $region19: #{_forward.12} parent=11 // pred_region
        _
      $region20: #{_forward.12} parent=11 // pred_fallthru
        _
    $region12: #{_forward.12} parent=5 // pred_fallthru
      _
    %p124 = scmp.lt.s32.totalorder %s9, 2
    // Predicated region
    $region21: #{_forward.12} parent=5 // pred_check
      %p125 = pneg %p124
    $region22: #{_forward.12} parent=5 // pred_check_branch
      %127 = sbr.rel (%p125) target = $region24
    $region23: #{_forward.12} parent=5 // pred_region
      // Predicated region
      $region25: #{_forward.12} parent=23 // pred_check
        %p128 = pneg %p29
      $region26: #{_forward.12} parent=23 // pred_check_branch
        %130 = sbr.rel (%p128) target = $region28
      $region27: #{_forward.12} parent=23 // pred_region
        %p131 = scmp.lt.s32.totalorder %s9, 1
        %s132 = scalar_select %p131, %s9, 1
        %s133 = smul.addr %s132, 8
        %s134 = smul.addr %s133, 4
        %s135 = scalar_lea.vmem %s0, %s134
      $region28: #{_forward.12} parent=23 // pred_fallthru
        _
    $region24: #{_forward.12} parent=5 // pred_fallthru
      _
    %p136 = scmp.le.s32.totalorder 1, %s9
    %p137 = scmp.lt.s32.totalorder %s9, 3
    %p138 = pnand %p136, %p137
    %p139 = pneg %p138
    // Predicated region
    $region29: #{_forward.12} parent=5 // pred_check
      _
    $region30: #{_forward.12} parent=5 // pred_check_branch
      %141 = sbr.rel (%p138) target = $region32
    $region31: #{_forward.12} parent=5 // pred_region
      %s142 = ssub.s32 %s9, 1
      %p143 = scmp.lt.s32.totalorder %s14, 1
      %s144 = scalar_select %p143, %s14, 1
      %s145 = smul.addr %s144, 8
      %s146 = smul.addr %s145, 4
      %s147 = scalar_lea.vmem %s0, %s146
      %p148 = pneg %p35
      %p149 = pneg %p32
      %p150 = pneg %p56
      %p151 = pneg %p53
      %p152 = pneg %p77
      %p153 = pneg %p74
      %p154 = pneg %p103
      %p155 = pneg %p100
      %s156 = smul.u32 8, %s14
      %p157 = scmp.lt.s32.totalorder %s156, 15
      %s158 = scalar_select %p157, %s156, 15
      %s159 = smul.addr %s158, 8
      %s160 = scalar_lea.vmem %s3, %s159
      %p161 = scmp.lt.s32.totalorder %s14, 1
      %s162 = scalar_select %p161, %s14, 1
      %s163 = smul.addr %s162, 8
      %s164 = smul.addr %s163, 4
      %s165 = scalar_lea.vmem %s0, %s164
      %s166 = smul.u32 8, %s14
      %p167 = scmp.lt.s32.totalorder %s166, 15
      %s168 = scalar_select %p167, %s166, 15
      %s169 = smul.addr %s168, 8
      %s170 = scalar_lea.vmem %s3, %s169
      %s171 = smul.u32 8, %s14
      %v173 = vld [vmem:[%s165] sm:$0xf]
      %v174 = vld [vmem:[%s165 + $0x4] sm:$0xf]
      %v175 = vld [vmem:[%s165 + $0x8] sm:$0xf]
      %v176 = vld [vmem:[%s165 + $0xc] sm:$0xf]
      %v177 = vld [vmem:[%s165 + $0x10] sm:$0xf]
      %v178 = vld [vmem:[%s165 + $0x14] sm:$0xf]
      %v179 = vld [vmem:[%s165 + $0x18] sm:$0xf]
      %v180 = vld [vmem:[%s165 + $0x1c] sm:$0xf]
      %v181 = vld [vmem:[%s1] sm:$0xf]
      %v182 = vld [vmem:[%s1 + $0x4] sm:$0xf]
      %v183 = vld [vmem:[%s1 + $0x8] sm:$0xf]
      %v184 = vld [vmem:[%s1 + $0xc] sm:$0xf]
      %v185 = vld [vmem:[%s1 + $0x10] sm:$0xf]
      %v186 = vld [vmem:[%s1 + $0x14] sm:$0xf]
      %v187 = vld [vmem:[%s1 + $0x18] sm:$0xf]
      %v188 = vld [vmem:[%s1 + $0x1c] sm:$0xf]
      %v189 = vld [vmem:[%s1 + $0x20] sm:$0xf]
      %v190 = vld [vmem:[%s1 + $0x24] sm:$0xf]
      %v191 = vld [vmem:[%s1 + $0x28] sm:$0xf]
      %v192 = vld [vmem:[%s1 + $0x2c] sm:$0xf]
      %v193 = vld [vmem:[%s1 + $0x30] sm:$0xf]
      %v194 = vld [vmem:[%s1 + $0x34] sm:$0xf]
      %v195 = vld [vmem:[%s1 + $0x38] sm:$0xf]
      %v196 = vld [vmem:[%s1 + $0x3c] sm:$0xf]
      %v205 = vunpack.c.l.b16 %v173
      %v206 = vunpack.c.l.b16 %v174
      %v207 = vunpack.c.l.b16 %v175
      %v208 = vunpack.c.l.b16 %v176
      %v209 = vunpack.c.l.b16 %v177
      %v210 = vunpack.c.l.b16 %v178
      %v211 = vunpack.c.l.b16 %v179
      %v212 = vunpack.c.l.b16 %v180
      %v213 = vpack.c.b16 %v206, %v205
      %v214 = vpack.c.b16 %v208, %v207
      %v215 = vpack.c.b16 %v210, %v209
      %v216 = vpack.c.b16 %v212, %v211
      %v237 = vunpack.c.l.b16 %v181
      %v238 = vunpack.c.l.b16 %v182
      %v239 = vunpack.c.l.b16 %v183
      %v240 = vunpack.c.l.b16 %v184
      %v241 = vunpack.c.l.b16 %v185
      %v242 = vunpack.c.l.b16 %v186
      %v243 = vunpack.c.l.b16 %v187
      %v244 = vunpack.c.l.b16 %v188
      %v245 = vunpack.c.l.b16 %v189
      %v246 = vunpack.c.l.b16 %v190
      %v247 = vunpack.c.l.b16 %v191
      %v248 = vunpack.c.l.b16 %v192
      %v249 = vunpack.c.l.b16 %v193
      %v250 = vunpack.c.l.b16 %v194
      %v251 = vunpack.c.l.b16 %v195
      %v252 = vunpack.c.l.b16 %v196
      %v253 = vpack.c.b16 %v238, %v237
      %v254 = vpack.c.b16 %v240, %v239
      %v255 = vpack.c.b16 %v242, %v241
      %v256 = vpack.c.b16 %v244, %v243
      %v257 = vpack.c.b16 %v246, %v245
      %v258 = vpack.c.b16 %v248, %v247
      %v259 = vpack.c.b16 %v250, %v249
      %v260 = vpack.c.b16 %v252, %v251
      %269 = vmatprep.subr.bf16.mxu0 0
      %270 = vmatpush1.bf16.msra.mxu0 %v253
      %271 = vmatprep.subr.bf16.mxu0 0
      %272 = vmatpush1.bf16.msra.mxu0 %v254
      %273 = vmatprep.subr.bf16.mxu0 0
      %274 = vmatpush1.bf16.msra.mxu0 %v255
      %275 = vmatprep.subr.bf16.mxu0 0
      %276 = vmatpush1.bf16.msra.mxu0 %v256
      %277 = vmatprep.subr.bf16.mxu0 0
      %278 = vmatpush1.bf16.msra.mxu0 %v257
      %279 = vmatprep.subr.bf16.mxu0 0
      %280 = vmatpush1.bf16.msra.mxu0 %v258
      %281 = vmatprep.subr.bf16.mxu0 0
      %282 = vmatpush1.bf16.msra.mxu0 %v259
      %283 = vmatprep.subr.bf16.mxu0 0
      %284 = vmatpush1.bf16.msra.mxu0 %v260
      %285 = vmatprep.subr.bf16.mxu0 0
      %286 = vmatpush1.bf16.msra.mxu0 0
      %287 = vmatprep.subr.bf16.mxu0 0
      %288 = vmatpush1.bf16.msra.mxu0 0
      %289 = vmatprep.subr.bf16.mxu0 0
      %290 = vmatpush1.bf16.msra.mxu0 0
      %291 = vmatprep.subr.bf16.mxu0 0
      %292 = vmatpush1.bf16.msra.mxu0 0
      %293 = vmatprep.subr.bf16.mxu0 0
      %294 = vmatpush1.bf16.msra.mxu0 0
      %295 = vmatprep.subr.bf16.mxu0 0
      %296 = vmatpush1.bf16.msra.mxu0 0
      %297 = vmatprep.subr.bf16.mxu0 0
      %298 = vmatpush1.bf16.msra.mxu0 0
      %299 = vmatprep.subr.bf16.mxu0 0
      %300 = vmatpush1.bf16.msra.mxu0 0
      %301 = vmatprep.mubr.bf16.mxu0 0
      %302 = vmatmul.mubr.bf16.gmra.mrb[0].mxu0 %v213
      %v303 = vpop.f32.mrb[0].mxu0
      %v304 = vadd.f32 0.0, %v303
      %v305 = vpop.f32.mrb[0].mxu0
      %v306 = vpop.f32.mrb[0].mxu0
      %v307 = vadd.f32 0.0, %v306
      %v308 = vpop.f32.mrb[0].mxu0
      %309 = vmatprep.mubr.bf16.mxu0 0
      %310 = vmatmul.mubr.bf16.gmra.mrb[0].mxu0 %v214
      %v311 = vpop.f32.mrb[0].mxu0
      %v312 = vadd.f32 0.0, %v311
      %v313 = vpop.f32.mrb[0].mxu0
      %v314 = vpop.f32.mrb[0].mxu0
      %v315 = vadd.f32 0.0, %v314
      %v316 = vpop.f32.mrb[0].mxu0
      %317 = vmatprep.mubr.bf16.mxu0 0
      %318 = vmatmul.mubr.bf16.gmra.mrb[0].mxu0 %v215
      %v319 = vpop.f32.mrb[0].mxu0
      %v320 = vadd.f32 0.0, %v319
      %v321 = vpop.f32.mrb[0].mxu0
      %v322 = vpop.f32.mrb[0].mxu0
      %v323 = vadd.f32 0.0, %v322
      %v324 = vpop.f32.mrb[0].mxu0
      %325 = vmatprep.mubr.bf16.mxu0 0
      %326 = vmatmul.mubr.bf16.gmra.mrb[0].mxu0 %v216
      %v327 = vpop.f32.mrb[0].mxu0
      %v328 = vadd.f32 0.0, %v327
      %v329 = vpop.f32.mrb[0].mxu0
      %v330 = vpop.f32.mrb[0].mxu0
      %v331 = vadd.f32 0.0, %v330
      %v332 = vpop.f32.mrb[0].mxu0
      %333 = vdwg.mxu0
      %v334 = vld [vmem:[%s2] sm:$0x1]
      %v335 = vlaneseq
      %v336 = vshrl.u32 %v335, 7
      %v337 = vsub.s32 0, %v336
      %v338 = vrot.slane %v334, %v337
      %v339 = vmul.f32 %v304, %v338
      %v340 = vmul.f32 %v307, %v338
      %v341 = vmul.f32 %v312, %v338
      %v342 = vmul.f32 %v315, %v338
      %v343 = vmul.f32 %v320, %v338
      %v344 = vmul.f32 %v323, %v338
      %v345 = vmul.f32 %v328, %v338
      %v346 = vmul.f32 %v331, %v338
      %v347 = vld [vmem:[%s2 + $0x1] sm:$0x1]
      %v348 = vlaneseq
      %v349 = vshrl.u32 %v348, 7
      %v350 = vsub.s32 0, %v349
      %v351 = vrot.slane %v347, %v350
      %v352 = vadd.f32 %v339, %v351
      %v353 = vadd.f32 %v340, %v351
      %v354 = vadd.f32 %v341, %v351
      %v355 = vadd.f32 %v342, %v351
      %v356 = vadd.f32 %v343, %v351
      %v357 = vadd.f32 %v344, %v351
      %v358 = vadd.f32 %v345, %v351
      %v359 = vadd.f32 %v346, %v351
      %360 = vst [vmem:[%s170] sm:$0xff] %v352
      %361 = vst [vmem:[%s170 + $0x8] sm:$0xff] %v353
      %362 = vst [vmem:[%s170 + $0x10] sm:$0xff] %v354
      %363 = vst [vmem:[%s170 + $0x18] sm:$0xff] %v355
      %364 = vst [vmem:[%s170 + $0x20] sm:$0xff] %v356
      %365 = vst [vmem:[%s170 + $0x28] sm:$0xff] %v357
      %366 = vst [vmem:[%s170 + $0x30] sm:$0xff] %v358
      %367 = vst [vmem:[%s170 + $0x38] sm:$0xff] %v359
      %s368 = smul.u32 8, %s14
      %p369 = scmp.lt.s32.totalorder %s368, 15
      %s370 = scalar_select %p369, %s368, 15
      %s371 = smul.addr %s370, 8
      %s372 = scalar_lea.vmem %s3, %s371
      // Predicated region
      $region33: #{_forward.12} parent=31 // pred_check
        %p373 = pneg %p100
      $region34: #{_forward.12} parent=31 // pred_check_branch
        %375 = sbr.rel (%p373) target = $region36
      $region35: #{_forward.12} parent=31 // pred_region
        %s376 = smul.u32 8, %s14
      $region36: #{_forward.12} parent=31 // pred_fallthru
        _
    $region32: #{_forward.12} parent=5 // pred_fallthru
      _
    %p377 = scmp.le.s32.totalorder 2, %s9
    // Predicated region
    $region37: #{_forward.12} parent=5 // pred_check
      %p378 = pneg %p377
    $region38: #{_forward.12} parent=5 // pred_check_branch
      %380 = sbr.rel (%p378) target = $region40
    $region39: #{_forward.12} parent=5 // pred_region
      %s381 = ssub.s32 %s9, 2
      // Predicated region
      $region41: #{_forward.12} parent=39 // pred_check
        %p382 = pneg %p106
      $region42: #{_forward.12} parent=39 // pred_check_branch
        %384 = sbr.rel (%p382) target = $region44
      $region43: #{_forward.12} parent=39 // pred_region
        %s385 = smul.u32 8, %s15
        %p386 = scmp.lt.s32.totalorder %s385, 15
        %s387 = scalar_select %p386, %s385, 15
        %s388 = smul.addr %s387, 8
        %s389 = scalar_lea.vmem %s3, %s388
      $region44: #{_forward.12} parent=39 // pred_fallthru
        _
    $region40: #{_forward.12} parent=5 // pred_fallthru
      _
  $region6: #{_forward.12} parent=0 // loop_footer
    %s13 = sadd.s32 1, %s9
  $region7: #{_forward.12} parent=0 // loop_footer_branch
    %8 = sbr.rel target = $region3
  $region8: #{_forward.12} parent=0 // loop_exit
    _

// kernel: _forward.13
$region0: #{_forward.13}
  #allocation0 [shape = 'u32[]', space=smem, size = 0x4, offset = 0x4, fixed_abs, tag = 'smem constant byte address 0x4 - core index']
  #allocation1 [shape = 'u32[144,128]{1,0:T(1,128)}', space=vmem, size = 0x12000, scoped, tag = 'internal scratch']
  %s0 = inlined_call_operand.vmem [shape: f32[2,8,8,128], index: 0, kind: input, shape index: {}]
  %s1 = inlined_call_operand.vmem [shape: f32[2,128], index: 1, kind: input, shape index: {}]
  %s2 = inlined_call_operand.vmem [shape: f32[2,8,8,128], index: 2, kind: output, shape index: {}]
  %s3 = sld [smem:[#allocation0]]
  $region41: #{_forward.13} parent=0
    _
  %s5 = ssub.s32 1, %s3
  %s6 = scalar_select 0, %s5, %s3
  loop: start=0, step=1, limit=4
  $region2: #{_forward.13} parent=0 // loop_pre_header
    _
  $region3: #{_forward.13} parent=0 // loop_header
    %s8 = sphi 0, %s12
    %p9 = scmp.ge.s32.totalorder %s8, 4
    %s18 = sphi 0, %s20
    %s21 = sphi 0, %s18
    %s22 = sphi 0, %s21
    %s38 = sphi 0, %s22
    %s42 = sphi 0, %s42
    %s44 = sphi 0, %s42
    %s45 = sphi 0, %s44
    %s59 = sphi 0, %s45
    %s65 = sphi 0, %s67
    %s68 = sphi 0, %s65
    %s69 = sphi 0, %s68
    %s85 = sphi 0, %s69
  $region4: #{_forward.13} parent=0 // loop_header_branch
    %11 = sbr.rel (%p9) target = $region8
  $region5: #{_forward.13} parent=0 // loop_body
    %s13 = ssub.s32 %s8, 1
    %s14 = ssub.s32 %s8, 2
    %s15 = sadd.s32 %s8, 1
    %s16 = ssub.s32 %s8, %s15
    %p17 = scmp.eq.s32.totalorder %s16, 0
    %s19 = sadd.s32 %s18, 1
    %s20 = scalar_select %p17, %s18, %s19
    %p23 = pneg %p17
    %p24 = scmp.eq.s32.totalorder %s8, 1
    %p25 = por %p23, %p24
    %p26 = scmp.ne.s32.totalorder %s18, %s21
    %p27 = scmp.eq.s32.totalorder %s8, 0
    %p28 = por %p26, %p27
    %p29 = scmp.ne.s32.totalorder %s18, %s21
    %p30 = scmp.eq.s32.totalorder %s13, 1
    %p31 = por %p29, %p30
    %p32 = scmp.ne.s32.totalorder %s21, %s22
    %p33 = scmp.eq.s32.totalorder %s13, 0
    %p34 = por %p32, %p33
    %p35 = scmp.ne.s32.totalorder %s21, %s22
    %p36 = scmp.eq.s32.totalorder %s14, 1
    %p37 = por %p35, %p36
    %p39 = scmp.ne.s32.totalorder %s22, %s38
    %p40 = scmp.eq.s32.totalorder %s14, 0
    %p41 = por %p39, %p40
    %s43 = sadd.s32 %s42, 1
    %p46 = scmp.eq.s32.totalorder %s8, 1
    %p47 = scmp.ne.s32.totalorder %s42, %s44
    %p48 = scmp.eq.s32.totalorder %s8, 0
    %p49 = por %p47, %p48
    %p50 = scmp.ne.s32.totalorder %s42, %s44
    %p51 = scmp.eq.s32.totalorder %s13, 1
    %p52 = por %p50, %p51
    %p53 = scmp.ne.s32.totalorder %s44, %s45
    %p54 = scmp.eq.s32.totalorder %s13, 0
    %p55 = por %p53, %p54
    %p56 = scmp.ne.s32.totalorder %s44, %s45
    %p57 = scmp.eq.s32.totalorder %s14, 1
    %p58 = por %p56, %p57
    %p60 = scmp.ne.s32.totalorder %s45, %s59
    %p61 = scmp.eq.s32.totalorder %s14, 0
    %p62 = por %p60, %p61
    %s63 = ssub.s32 %s8, %s15
    %p64 = scmp.eq.s32.totalorder %s63, 0
    %s66 = sadd.s32 %s65, 1
    %s67 = scalar_select %p64, %s65, %s66
    %p70 = pneg %p64
    %p71 = scmp.eq.s32.totalorder %s8, 1
    %p72 = por %p70, %p71
    %p73 = scmp.ne.s32.totalorder %s65, %s68
    %p74 = scmp.eq.s32.totalorder %s8, 0
    %p75 = por %p73, %p74
    %p76 = scmp.ne.s32.totalorder %s65, %s68
    %p77 = scmp.eq.s32.totalorder %s13, 1
    %p78 = por %p76, %p77
    %p79 = scmp.ne.s32.totalorder %s68, %s69
    %p80 = scmp.eq.s32.totalorder %s13, 0
    %p81 = por %p79, %p80
    %p82 = scmp.ne.s32.totalorder %s68, %s69
    %p83 = scmp.eq.s32.totalorder %s14, 1
    %p84 = por %p82, %p83
    %p86 = scmp.ne.s32.totalorder %s69, %s85
    %p87 = scmp.eq.s32.totalorder %s14, 0
    %p88 = por %p86, %p87
    %p89 = scmp.le.s32.totalorder 1, %s8
    %p90 = scmp.lt.s32.totalorder %s8, 3
    %p91 = pnand %p89, %p90
    %p92 = pneg %p91
    // Predicated region
    $region9: #{_forward.13} parent=5 // pred_check
      _
    $region10: #{_forward.13} parent=5 // pred_check_branch
      %94 = sbr.rel (%p91) target = $region12
    $region11: #{_forward.13} parent=5 // pred_region
      %s95 = ssub.s32 %s8, 1
      // Predicated region
      $region13: #{_forward.13} parent=11 // pred_check
        %p96 = pneg %p55
      $region14: #{_forward.13} parent=11 // pred_check_branch
        %98 = sbr.rel (%p96) target = $region16
      $region15: #{_forward.13} parent=11 // pred_region
        _
      $region16: #{_forward.13} parent=11 // pred_fallthru
        _
    $region12: #{_forward.13} parent=5 // pred_fallthru
      _
    %p99 = scmp.lt.s32.totalorder %s8, 2
    // Predicated region
    $region17: #{_forward.13} parent=5 // pred_check
      %p100 = pneg %p99
    $region18: #{_forward.13} parent=5 // pred_check_branch
      %102 = sbr.rel (%p100) target = $region20
    $region19: #{_forward.13} parent=5 // pred_region
      // Predicated region
      $region21: #{_forward.13} parent=19 // pred_check
        %p103 = pneg %p28
      $region22: #{_forward.13} parent=19 // pred_check_branch
        %105 = sbr.rel (%p103) target = $region24
      $region23: #{_forward.13} parent=19 // pred_region
        %p106 = scmp.lt.s32.totalorder %s8, 1
        %s107 = scalar_select %p106, %s8, 1
        %s108 = smul.addr %s107, 8
        %s109 = smul.addr %s108, 8
        %s110 = scalar_lea.vmem %s0, %s109
      $region24: #{_forward.13} parent=19 // pred_fallthru
        _
    $region20: #{_forward.13} parent=5 // pred_fallthru
      _
    %p111 = scmp.le.s32.totalorder 1, %s8
    %p112 = scmp.lt.s32.totalorder %s8, 3
    %p113 = pnand %p111, %p112
    %p114 = pneg %p113
    // Predicated region
    $region25: #{_forward.13} parent=5 // pred_check
      _
    $region26: #{_forward.13} parent=5 // pred_check_branch
      %116 = sbr.rel (%p113) target = $region28
    $region27: #{_forward.13} parent=5 // pred_region
      %s117 = ssub.s32 %s8, 1
      %p118 = scmp.lt.s32.totalorder %s13, 1
      %s119 = scalar_select %p118, %s13, 1
      %s120 = smul.addr %s119, 8
      %s121 = smul.addr %s120, 8
      %s122 = scalar_lea.vmem %s0, %s121
      %p123 = pneg %p34
      %p124 = pneg %p31
      %p125 = pneg %p55
      %p126 = pneg %p52
      %p127 = pneg %p81
      %p128 = pneg %p78
      %p129 = scmp.lt.s32.totalorder %s13, 1
      %s130 = scalar_select %p129, %s13, 1
      %s131 = smul.addr %s130, 8
      %s132 = smul.addr %s131, 8
      %s133 = scalar_lea.vmem %s2, %s132
      %p134 = scmp.lt.s32.totalorder %s13, 1
      %s135 = scalar_select %p134, %s13, 1
      %s136 = smul.addr %s135, 8
      %s137 = smul.addr %s136, 8
      %s138 = scalar_lea.vmem %s0, %s137
      %p139 = scmp.lt.s32.totalorder %s13, 1
      %s140 = scalar_select %p139, %s13, 1
      %s141 = smul.addr %s140, 8
      %s142 = smul.addr %s141, 8
      %s143 = scalar_lea.vmem %s2, %s142
      %v144 = vld [vmem:[%s138] sm:$0xff]
      %v145 = vld [vmem:[%s138 + $0x8] sm:$0xff]
      %v146 = vld [vmem:[%s138 + $0x10] sm:$0xff]
      %v147 = vld [vmem:[%s138 + $0x18] sm:$0xff]
      %v148 = vld [vmem:[%s138 + $0x20] sm:$0xff]
      %v149 = vld [vmem:[%s138 + $0x28] sm:$0xff]
      %v150 = vld [vmem:[%s138 + $0x30] sm:$0xff]
      %v151 = vld [vmem:[%s138 + $0x38] sm:$0xff]
      %v152 = vld [vmem:[%s1] sm:$0x1]
      %v153 = vld [vmem:[%s1 + $0x1] sm:$0x1]
      %v154 = vcvt.s32.f32 0
      %v155 = vcvt.s32.f32 1
      %v156 = vcvt.s32.f32 2
      %v157 = vcvt.s32.f32 3
      %v158 = vcvt.s32.f32 4
      %v159 = vcvt.s32.f32 5
      %v160 = vcvt.s32.f32 6
      %v161 = vcvt.s32.f32 7
      %v162 = vlaneseq
      %v163 = vshrl.u32 %v162, 7
      %v164 = vcvt.s32.f32 %v163
      %v165 = vxor.u32 %v144, 2147483648
      %v166 = vxor.u32 %v145, 2147483648
      %v167 = vxor.u32 %v146, 2147483648
      %v168 = vxor.u32 %v147, 2147483648
      %v169 = vxor.u32 %v148, 2147483648
      %v170 = vxor.u32 %v149, 2147483648
      %v171 = vxor.u32 %v150, 2147483648
      %v172 = vxor.u32 %v151, 2147483648
      %v173 = vmul.f32 %v165, 1.442695
      %v174 = vpow.pop %v173
      %v175 = vmul.f32 %v166, 1.442695
      %v176 = vpow.pop %v175
      %v177 = vmul.f32 %v167, 1.442695
      %v178 = vpow.pop %v177
      %v179 = vmul.f32 %v168, 1.442695
      %v180 = vpow.pop %v179
      %v181 = vmul.f32 %v169, 1.442695
      %v182 = vpow.pop %v181
      %v183 = vmul.f32 %v170, 1.442695
      %v184 = vpow.pop %v183
      %v185 = vmul.f32 %v171, 1.442695
      %v186 = vpow.pop %v185
      %v187 = vmul.f32 %v172, 1.442695
      %v188 = vpow.pop %v187
      %v189 = vadd.f32 %v174, 1.0
      %v190 = vadd.f32 %v176, 1.0
      %v191 = vadd.f32 %v178, 1.0
      %v192 = vadd.f32 %v180, 1.0
      %v193 = vadd.f32 %v182, 1.0
      %v194 = vadd.f32 %v184, 1.0
      %v195 = vadd.f32 %v186, 1.0
      %v196 = vadd.f32 %v188, 1.0
      %v197 = vrcp.pop %v189
      %v198 = vmul.f32 1.0, %v197
      %v199 = vrcp.pop %v190
      %v200 = vmul.f32 1.0, %v199
      %v201 = vrcp.pop %v191
      %v202 = vmul.f32 1.0, %v201
      %v203 = vrcp.pop %v192
      %v204 = vmul.f32 1.0, %v203
      %v205 = vrcp.pop %v193
      %v206 = vmul.f32 1.0, %v205
      %v207 = vrcp.pop %v194
      %v208 = vmul.f32 1.0, %v207
      %v209 = vrcp.pop %v195
      %v210 = vmul.f32 1.0, %v209
      %v211 = vrcp.pop %v196
      %v212 = vmul.f32 1.0, %v211
      %vm213 = vcmp.eq.f32.partialorder %v152, 0.0
      %v214 = vsel %vm213, 1, 0
      %v215 = vlaneseq
      %v216 = vshrl.u32 %v215, 7
      %v217 = vsub.s32 0, %v216
      %v218 = vrot.slane %v214, %v217
      %vm219 = vcmp.eq.s32.totalorder %v218, 1
      %v220 = vsel %vm219, %v164, 0.0
      %vm221 = vcmp.eq.f32.partialorder %v152, 1.0
      %v222 = vsel %vm221, 1, 0
      %v223 = vlaneseq
      %v224 = vshrl.u32 %v223, 7
      %v225 = vsub.s32 0, %v224
      %v226 = vrot.slane %v222, %v225
      %vm227 = vcmp.eq.s32.totalorder %v226, 1
      %v228 = vsel %vm227, %v154, 0.0
      %v229 = vsel %vm227, %v155, 0.0
      %v230 = vsel %vm227, %v156, 0.0
      %v231 = vsel %vm227, %v157, 0.0
      %v232 = vsel %vm227, %v158, 0.0
      %v233 = vsel %vm227, %v159, 0.0
      %v234 = vsel %vm227, %v160, 0.0
      %v235 = vsel %vm227, %v161, 0.0
      %v236 = vadd.f32 %v220, %v228
      %v237 = vadd.f32 %v220, %v229
      %v238 = vadd.f32 %v220, %v230
      %v239 = vadd.f32 %v220, %v231
      %v240 = vadd.f32 %v220, %v232
      %v241 = vadd.f32 %v220, %v233
      %v242 = vadd.f32 %v220, %v234
      %v243 = vadd.f32 %v220, %v235
      %v244 = vadd.f32 %v198, %v236
      %v245 = vadd.f32 %v200, %v237
      %v246 = vadd.f32 %v202, %v238
      %v247 = vadd.f32 %v204, %v239
      %v248 = vadd.f32 %v206, %v240
      %v249 = vadd.f32 %v208, %v241
      %v250 = vadd.f32 %v210, %v242
      %v251 = vadd.f32 %v212, %v243
      %v252 = vmul.f32 %v244, 2.0
      %v253 = vmul.f32 %v245, 2.0
      %v254 = vmul.f32 %v246, 2.0
      %v255 = vmul.f32 %v247, 2.0
      %v256 = vmul.f32 %v248, 2.0
      %v257 = vmul.f32 %v249, 2.0
      %v258 = vmul.f32 %v250, 2.0
      %v259 = vmul.f32 %v251, 2.0
      %vm260 = vcmp.eq.f32.partialorder %v152, 2.0
      %v261 = vsel %vm260, 1, 0
      %v262 = vlaneseq
      %v263 = vshrl.u32 %v262, 7
      %v264 = vsub.s32 0, %v263
      %v265 = vrot.slane %v261, %v264
      %vm266 = vcmp.eq.s32.totalorder %v265, 1
      %v267 = vsel %vm266, %v144, 0.0
      %v268 = vsel %vm266, %v145, 0.0
      %v269 = vsel %vm266, %v146, 0.0
      %v270 = vsel %vm266, %v147, 0.0
      %v271 = vsel %vm266, %v148, 0.0
      %v272 = vsel %vm266, %v149, 0.0
      %v273 = vsel %vm266, %v150, 0.0
      %v274 = vsel %vm266, %v151, 0.0
      %v275 = vmul.f32 %v267, 1.442695
      %v276 = vpow.pop %v275
      %v277 = vmul.f32 %v268, 1.442695
      %v278 = vpow.pop %v277
      %v279 = vmul.f32 %v269, 1.442695
      %v280 = vpow.pop %v279
      %v281 = vmul.f32 %v270, 1.442695
      %v282 = vpow.pop %v281
      %v283 = vmul.f32 %v271, 1.442695
      %v284 = vpow.pop %v283
      %v285 = vmul.f32 %v272, 1.442695
      %v286 = vpow.pop %v285
      %v287 = vmul.f32 %v273, 1.442695
      %v288 = vpow.pop %v287
      %v289 = vmul.f32 %v274, 1.442695
      %v290 = vpow.pop %v289
      %v291 = vlaneseq
      %v292 = vshrl.u32 %v291, 7
      %v293 = vsub.s32 0, %v292
      %v294 = vrot.slane %v153, %v293
      %v295 = vmul.f32 %v276, %v294
      %v296 = vmul.f32 %v278, %v294
      %v297 = vmul.f32 %v280, %v294
      %v298 = vmul.f32 %v282, %v294
      %v299 = vmul.f32 %v284, %v294
      %v300 = vmul.f32 %v286, %v294
      %v301 = vmul.f32 %v288, %v294
      %v302 = vmul.f32 %v290, %v294
      %vm303 = vcmp.le.f32.partialorder %v152, 1.0
      %v304 = vsel %vm266, %v295, %v198
      %v305 = vsel %vm266, %v296, %v200
      %v306 = vsel %vm266, %v297, %v202
      %v307 = vsel %vm266, %v298, %v204
      %v308 = vsel %vm266, %v299, %v206
      %v309 = vsel %vm266, %v300, %v208
      %v310 = vsel %vm266, %v301, %v210
      %v311 = vsel %vm266, %v302, %v212
      %v312 = vsel %vm303, 1, 0
      %v313 = vlaneseq
      %v314 = vshrl.u32 %v313, 7
      %v315 = vsub.s32 0, %v314
      %v316 = vrot.slane %v312, %v315
      %vm317 = vcmp.eq.s32.totalorder %v316, 1
      %v318 = vsel %vm317, %v252, %v304
      %v319 = vsel %vm317, %v253, %v305
      %v320 = vsel %vm317, %v254, %v306
      %v321 = vsel %vm317, %v255, %v307
      %v322 = vsel %vm317, %v256, %v308
      %v323 = vsel %vm317, %v257, %v309
      %v324 = vsel %vm317, %v258, %v310
      %v325 = vsel %vm317, %v259, %v311
      %326 = vst [vmem:[%s143] sm:$0xff] %v318
      %327 = vst [vmem:[%s143 + $0x8] sm:$0xff] %v319
      %328 = vst [vmem:[%s143 + $0x10] sm:$0xff] %v320
      %329 = vst [vmem:[%s143 + $0x18] sm:$0xff] %v321
      %330 = vst [vmem:[%s143 + $0x20] sm:$0xff] %v322
      %331 = vst [vmem:[%s143 + $0x28] sm:$0xff] %v323
      %332 = vst [vmem:[%s143 + $0x30] sm:$0xff] %v324
      %333 = vst [vmem:[%s143 + $0x38] sm:$0xff] %v325
      %p334 = scmp.lt.s32.totalorder %s13, 1
      %s335 = scalar_select %p334, %s13, 1
      %s336 = smul.addr %s335, 8
      %s337 = smul.addr %s336, 8
      %s338 = scalar_lea.vmem %s2, %s337
      // Predicated region
      $region29: #{_forward.13} parent=27 // pred_check
        %p339 = pneg %p78
      $region30: #{_forward.13} parent=27 // pred_check_branch
        %341 = sbr.rel (%p339) target = $region32
      $region31: #{_forward.13} parent=27 // pred_region
        _
      $region32: #{_forward.13} parent=27 // pred_fallthru
        _
    $region28: #{_forward.13} parent=5 // pred_fallthru
      _
    %p342 = scmp.le.s32.totalorder 2, %s8
    // Predicated region
    $region33: #{_forward.13} parent=5 // pred_check
      %p343 = pneg %p342
    $region34: #{_forward.13} parent=5 // pred_check_branch
      %345 = sbr.rel (%p343) target = $region36
    $region35: #{_forward.13} parent=5 // pred_region
      %s346 = ssub.s32 %s8, 2
      // Predicated region
      $region37: #{_forward.13} parent=35 // pred_check
        %p347 = pneg %p84
      $region38: #{_forward.13} parent=35 // pred_check_branch
        %349 = sbr.rel (%p347) target = $region40
      $region39: #{_forward.13} parent=35 // pred_region
        %p350 = scmp.lt.s32.totalorder %s14, 1
        %s351 = scalar_select %p350, %s14, 1
        %s352 = smul.addr %s351, 8
        %s353 = smul.addr %s352, 8
        %s354 = scalar_lea.vmem %s2, %s353
      $region40: #{_forward.13} parent=35 // pred_fallthru
        _
    $region36: #{_forward.13} parent=5 // pred_fallthru
      _
  $region6: #{_forward.13} parent=0 // loop_footer
    %s12 = sadd.s32 1, %s8
  $region7: #{_forward.13} parent=0 // loop_footer_branch
    %7 = sbr.rel target = $region3
  $region8: #{_forward.13} parent=0 // loop_exit
    _

// kernel: _forward.8
$region0: #{_forward.8}
  #allocation0 [shape = 'u32[]', space=smem, size = 0x4, offset = 0x4, fixed_abs, tag = 'smem constant byte address 0x4 - core index']
  #allocation1 [shape = 'u32[144,128]{1,0:T(1,128)}', space=vmem, size = 0x12000, scoped, tag = 'internal scratch']
  %s0 = inlined_call_operand.vmem [shape: bf16[2,18,18,128], index: 0, kind: input, shape index: {}]
  %s1 = inlined_call_operand.vmem [shape: bf16[9,128,128], index: 1, kind: input, shape index: {}]
  %s2 = inlined_call_operand.vmem [shape: f32[2,128], index: 2, kind: input, shape index: {}]
  %s3 = inlined_call_operand.vmem [shape: bf16[512,128], index: 3, kind: output, shape index: {}]
  %s4 = sld [smem:[#allocation0]]
  $region45: #{_forward.8} parent=0
    _
  %s6 = ssub.s32 1, %s4
  %s7 = scalar_select 0, %s6, %s4
  loop: start=0, step=1, limit=4
  $region2: #{_forward.8} parent=0 // loop_pre_header
    _
  $region3: #{_forward.8} parent=0 // loop_header
    %s9 = sphi 0, %s13
    %p10 = scmp.ge.s32.totalorder %s9, 4
    %s19 = sphi 0, %s21
    %s22 = sphi 0, %s19
    %s23 = sphi 0, %s22
    %s39 = sphi 0, %s23
    %s43 = sphi 0, %s43
    %s45 = sphi 0, %s43
    %s46 = sphi 0, %s45
    %s60 = sphi 0, %s46
    %s64 = sphi 0, %s64
    %s66 = sphi 0, %s64
    %s67 = sphi 0, %s66
    %s81 = sphi 0, %s67
    %s87 = sphi 0, %s89
    %s90 = sphi 0, %s87
    %s91 = sphi 0, %s90
    %s107 = sphi 0, %s91
  $region4: #{_forward.8} parent=0 // loop_header_branch
    %12 = sbr.rel (%p10) target = $region8
  $region5: #{_forward.8} parent=0 // loop_body
    %s14 = ssub.s32 %s9, 1
    %s15 = ssub.s32 %s9, 2
    %s16 = sadd.s32 %s9, 1
    %s17 = ssub.s32 %s9, %s16
    %p18 = scmp.eq.s32.totalorder %s17, 0
    %s20 = sadd.s32 %s19, 1
    %s21 = scalar_select %p18, %s19, %s20
    %p24 = pneg %p18
    %p25 = scmp.eq.s32.totalorder %s9, 1
    %p26 = por %p24, %p25
    %p27 = scmp.ne.s32.totalorder %s19, %s22
    %p28 = scmp.eq.s32.totalorder %s9, 0
    %p29 = por %p27, %p28
    %p30 = scmp.ne.s32.totalorder %s19, %s22
    %p31 = scmp.eq.s32.totalorder %s14, 1
    %p32 = por %p30, %p31
    %p33 = scmp.ne.s32.totalorder %s22, %s23
    %p34 = scmp.eq.s32.totalorder %s14, 0
    %p35 = por %p33, %p34
    %p36 = scmp.ne.s32.totalorder %s22, %s23
    %p37 = scmp.eq.s32.totalorder %s15, 1
    %p38 = por %p36, %p37
    %p40 = scmp.ne.s32.totalorder %s23, %s39
    %p41 = scmp.eq.s32.totalorder %s15, 0
    %p42 = por %p40, %p41
    %s44 = sadd.s32 %s43, 1
    %p47 = scmp.eq.s32.totalorder %s9, 1
    %p48 = scmp.ne.s32.totalorder %s43, %s45
    %p49 = scmp.eq.s32.totalorder %s9, 0
    %p50 = por %p48, %p49
    %p51 = scmp.ne.s32.totalorder %s43, %s45
    %p52 = scmp.eq.s32.totalorder %s14, 1
    %p53 = por %p51, %p52
    %p54 = scmp.ne.s32.totalorder %s45, %s46
    %p55 = scmp.eq.s32.totalorder %s14, 0
    %p56 = por %p54, %p55
    %p57 = scmp.ne.s32.totalorder %s45, %s46
    %p58 = scmp.eq.s32.totalorder %s15, 1
    %p59 = por %p57, %p58
    %p61 = scmp.ne.s32.totalorder %s46, %s60
    %p62 = scmp.eq.s32.totalorder %s15, 0
    %p63 = por %p61, %p62
    %s65 = sadd.s32 %s64, 1
    %p68 = scmp.eq.s32.totalorder %s9, 1
    %p69 = scmp.ne.s32.totalorder %s64, %s66
    %p70 = scmp.eq.s32.totalorder %s9, 0
    %p71 = por %p69, %p70
    %p72 = scmp.ne.s32.totalorder %s64, %s66
    %p73 = scmp.eq.s32.totalorder %s14, 1
    %p74 = por %p72, %p73
    %p75 = scmp.ne.s32.totalorder %s66, %s67
    %p76 = scmp.eq.s32.totalorder %s14, 0
    %p77 = por %p75, %p76
    %p78 = scmp.ne.s32.totalorder %s66, %s67
    %p79 = scmp.eq.s32.totalorder %s15, 1
    %p80 = por %p78, %p79
    %p82 = scmp.ne.s32.totalorder %s67, %s81
    %p83 = scmp.eq.s32.totalorder %s15, 0
    %p84 = por %p82, %p83
    %s85 = ssub.s32 %s9, %s16
    %p86 = scmp.eq.s32.totalorder %s85, 0
    %s88 = sadd.s32 %s87, 1
    %s89 = scalar_select %p86, %s87, %s88
    %p92 = pneg %p86
    %p93 = scmp.eq.s32.totalorder %s9, 1
    %p94 = por %p92, %p93
    %p95 = scmp.ne.s32.totalorder %s87, %s90
    %p96 = scmp.eq.s32.totalorder %s9, 0
    %p97 = por %p95, %p96
    %p98 = scmp.ne.s32.totalorder %s87, %s90
    %p99 = scmp.eq.s32.totalorder %s14, 1
    %p100 = por %p98, %p99
    %p101 = scmp.ne.s32.totalorder %s90, %s91
    %p102 = scmp.eq.s32.totalorder %s14, 0
    %p103 = por %p101, %p102
    %p104 = scmp.ne.s32.totalorder %s90, %s91
    %p105 = scmp.eq.s32.totalorder %s15, 1
    %p106 = por %p104, %p105
    %p108 = scmp.ne.s32.totalorder %s91, %s107
    %p109 = scmp.eq.s32.totalorder %s15, 0
    %p110 = por %p108, %p109
    %p111 = scmp.le.s32.totalorder 1, %s9
    %p112 = scmp.lt.s32.totalorder %s9, 3
    %p113 = pnand %p111, %p112
    %p114 = pneg %p113
    // Predicated region
    $region9: #{_forward.8} parent=5 // pred_check
      _
    $region10: #{_forward.8} parent=5 // pred_check_branch
      %116 = sbr.rel (%p113) target = $region12
    $region11: #{_forward.8} parent=5 // pred_region
      %s117 = ssub.s32 %s9, 1
      // Predicated region
      $region13: #{_forward.8} parent=11 // pred_check
        %p118 = pneg %p56
      $region14: #{_forward.8} parent=11 // pred_check_branch
        %120 = sbr.rel (%p118) target = $region16
      $region15: #{_forward.8} parent=11 // pred_region
        _
      $region16: #{_forward.8} parent=11 // pred_fallthru
        _
      // Predicated region
      $region17: #{_forward.8} parent=11 // pred_check
        %p121 = pneg %p77
      $region18: #{_forward.8} parent=11 // pred_check_branch
        %123 = sbr.rel (%p121) target = $region20
      $region19: #{_forward.8} parent=11 // pred_region
        _
      $region20: #{_forward.8} parent=11 // pred_fallthru
        _
    $region12: #{_forward.8} parent=5 // pred_fallthru
      _
    %p124 = scmp.lt.s32.totalorder %s9, 2
    // Predicated region
    $region21: #{_forward.8} parent=5 // pred_check
      %p125 = pneg %p124
    $region22: #{_forward.8} parent=5 // pred_check_branch
      %127 = sbr.rel (%p125) target = $region24
    $region23: #{_forward.8} parent=5 // pred_region
      // Predicated region
      $region25: #{_forward.8} parent=23 // pred_check
        %p128 = pneg %p29
      $region26: #{_forward.8} parent=23 // pred_check_branch
        %130 = sbr.rel (%p128) target = $region28
      $region27: #{_forward.8} parent=23 // pred_region
        %p131 = scmp.lt.s32.totalorder %s9, 1
        %s132 = scalar_select %p131, %s9, 1
        %s133 = smul.addr %s132, 54
        %s134 = smul.addr %s133, 4
        %s135 = scalar_lea.vmem %s0, %s134
      $region28: #{_forward.8} parent=23 // pred_fallthru
        _
    $region24: #{_forward.8} parent=5 // pred_fallthru
      _
    %p136 = scmp.le.s32.totalorder 1, %s9
    %p137 = scmp.lt.s32.totalorder %s9, 3
    %p138 = pnand %p136, %p137
    %p139 = pneg %p138
    // Predicated region
    $region29: #{_forward.8} parent=5 // pred_check
      _
    $region30: #{_forward.8} parent=5 // pred_check_branch
      %141 = sbr.rel (%p138) target = $region32
    $region31: #{_forward.8} parent=5 // pred_region
      %s142 = ssub.s32 %s9, 1
      %p143 = scmp.lt.s32.totalorder %s14, 1
      %s144 = scalar_select %p143, %s14, 1
      %s145 = smul.addr %s144, 54
      %s146 = smul.addr %s145, 4
      %s147 = scalar_lea.vmem %s0, %s146
      %p148 = pneg %p35
      %p149 = pneg %p32
      %p150 = pneg %p56
      %p151 = pneg %p53
      %p152 = pneg %p77
      %p153 = pneg %p74
      %p154 = pneg %p103
      %p155 = pneg %p100
      %s156 = smul.u32 32, %s14
      %p157 = scmp.lt.s32.totalorder %s156, 63
      %s158 = scalar_select %p157, %s156, 63
      %s159 = smul.addr %s158, 4
      %s160 = scalar_lea.vmem %s3, %s159
      %p161 = scmp.lt.s32.totalorder %s14, 1
      %s162 = scalar_select %p161, %s14, 1
      %s163 = smul.addr %s162, 54
      %s164 = smul.addr %s163, 4
      %s165 = scalar_lea.vmem %s0, %s164
      %s166 = smul.u32 32, %s14
      %p167 = scmp.lt.s32.totalorder %s166, 63
      %s168 = scalar_select %p167, %s166, 63
      %s169 = smul.addr %s168, 4
      %s170 = scalar_lea.vmem %s3, %s169
      %s171 = smul.u32 32, %s14
      %v173 = vld [vmem:[%s165] sm:$0xf]
      %v174 = vld [vmem:[%s165 + $0x4] sm:$0xf]
      %v175 = vld [vmem:[%s165 + $0xc] sm:$0xf]
      %v176 = vld [vmem:[%s165 + $0x10] sm:$0xf]
      %v177 = vld [vmem:[%s165 + $0x18] sm:$0xf]
      %v178 = vld [vmem:[%s165 + $0x1c] sm:$0xf]
      %v179 = vld [vmem:[%s165 + $0x24] sm:$0xf]
      %v180 = vld [vmem:[%s165 + $0x28] sm:$0xf]
      %v181 = vld [vmem:[%s165 + $0x30] sm:$0xf]
      %v182 = vld [vmem:[%s165 + $0x34] sm:$0xf]
      %v183 = vld [vmem:[%s165 + $0x3c] sm:$0xf]
      %v184 = vld [vmem:[%s165 + $0x40] sm:$0xf]
      %v185 = vld [vmem:[%s165 + $0x48] sm:$0xf]
      %v186 = vld [vmem:[%s165 + $0x4c] sm:$0xf]
      %v187 = vld [vmem:[%s165 + $0x54] sm:$0xf]
      %v188 = vld [vmem:[%s165 + $0x58] sm:$0xf]
      %v189 = vld [vmem:[%s165 + $0x60] sm:$0xf]
      %v190 = vld [vmem:[%s165 + $0x64] sm:$0xf]
      %v191 = vld [vmem:[%s165 + $0x6c] sm:$0xf]
      %v192 = vld [vmem:[%s165 + $0x70] sm:$0xf]
      %v193 = vld [vmem:[%s165 + $0x78] sm:$0xf]
      %v194 = vld [vmem:[%s165 + $0x7c] sm:$0xf]
      %v195 = vld [vmem:[%s165 + $0x84] sm:$0xf]
      %v196 = vld [vmem:[%s165 + $0x88] sm:$0xf]
      %v197 = vld [vmem:[%s165 + $0x90] sm:$0xf]
      %v198 = vld [vmem:[%s165 + $0x94] sm:$0xf]
      %v199 = vld [vmem:[%s165 + $0x9c] sm:$0xf]
      %v200 = vld [vmem:[%s165 + $0xa0] sm:$0xf]
      %v201 = vld [vmem:[%s165 + $0xa8] sm:$0xf]
      %v202 = vld [vmem:[%s165 + $0xac] sm:$0xf]
      %v203 = vld [vmem:[%s165 + $0xb4] sm:$0xf]
      %v204 = vld [vmem:[%s165 + $0xb8] sm:$0xf]
      %v205 = vld [vmem:[%s1] sm:$0xf]
      %v206 = vld [vmem:[%s1 + $0x4] sm:$0xf]
      %v207 = vld [vmem:[%s1 + $0x8] sm:$0xf]
      %v208 = vld [vmem:[%s1 + $0xc] sm:$0xf]
      %v209 = vld [vmem:[%s1 + $0x10] sm:$0xf]
      %v210 = vld [vmem:[%s1 + $0x14] sm:$0xf]
      %v211 = vld [vmem:[%s1 + $0x18] sm:$0xf]
      %v212 = vld [vmem:[%s1 + $0x1c] sm:$0xf]
      %v213 = vld [vmem:[%s1 + $0x20] sm:$0xf]
      %v214 = vld [vmem:[%s1 + $0x24] sm:$0xf]
      %v215 = vld [vmem:[%s1 + $0x28] sm:$0xf]
      %v216 = vld [vmem:[%s1 + $0x2c] sm:$0xf]
      %v217 = vld [vmem:[%s1 + $0x30] sm:$0xf]
      %v218 = vld [vmem:[%s1 + $0x34] sm:$0xf]
      %v219 = vld [vmem:[%s1 + $0x38] sm:$0xf]
      %v220 = vld [vmem:[%s1 + $0x3c] sm:$0xf]
      %v221 = vld [vmem:[%s165 + $0x8] sm:$0x1]
      %v222 = vld [vmem:[%s165 + $0x14] sm:$0x1]
      %v223 = vld [vmem:[%s165 + $0x20] sm:$0x1]
      %v224 = vld [vmem:[%s165 + $0x2c] sm:$0x1]
      %v225 = vld [vmem:[%s165 + $0x38] sm:$0x1]
      %v226 = vld [vmem:[%s165 + $0x44] sm:$0x1]
      %v227 = vld [vmem:[%s165 + $0x50] sm:$0x1]
      %v228 = vld [vmem:[%s165 + $0x5c] sm:$0x1]
      %v229 = vld [vmem:[%s165 + $0x68] sm:$0x1]
      %v230 = vld [vmem:[%s165 + $0x74] sm:$0x1]
      %v231 = vld [vmem:[%s165 + $0x80] sm:$0x1]
      %v232 = vld [vmem:[%s165 + $0x8c] sm:$0x1]
      %v233 = vld [vmem:[%s165 + $0x98] sm:$0x1]
      %v234 = vld [vmem:[%s165 + $0xa4] sm:$0x1]
      %v235 = vld [vmem:[%s165 + $0xb0] sm:$0x1]
      %v236 = vld [vmem:[%s165 + $0xbc] sm:$0x1]
      %vm237 = vsmask.f32 3328
      %vm238 = vsmask.f32 7440
      %vm239 = vmor %vm237, %vm238
      %v241 = vshrl.u32 %v173, 16
      %v243 = vrot.slane %v241, 4
      %v244 = vshll.u32 %v173, 16
      %v246 = vrot.slane %v244, 5
      %v247 = vor.u32 %v243, %v246
      %v248 = vrot.slane %v247, 4
      %v250 = vshll.u32 %v174, 16
      %v252 = vrot.slane %v250, 5
      %v253 = vsel %vm239, %v248, %v252
      %v254 = vshrl.u32 %v174, 16
      %v256 = vrot.slane %v254, 4
      %v257 = vor.u32 %v256, %v252
      %v258 = vrot.slane %v257, 4
      %v260 = vshll.u32 %v221, 16
      %v262 = vrot.slane %v260, 5
      %v263 = vsel %vm239, %v258, %v262
      %v265 = vshrl.u32 %v175, 16
      %v267 = vrot.slane %v265, 4
      %v268 = vshll.u32 %v175, 16
      %v270 = vrot.slane %v268, 5
      %v271 = vor.u32 %v267, %v270
      %v272 = vrot.slane %v271, 4
      %v274 = vshll.u32 %v176, 16
      %v276 = vrot.slane %v274, 5
      %v277 = vsel %vm239, %v272, %v276
      %v278 = vshrl.u32 %v176, 16
      %v280 = vrot.slane %v278, 4
      %v281 = vor.u32 %v280, %v276
      %v282 = vrot.slane %v281, 4
      %v284 = vshll.u32 %v222, 16
      %v286 = vrot.slane %v284, 5
      %v287 = vsel %vm239, %v282, %v286
      %v289 = vshrl.u32 %v177, 16
      %v291 = vrot.slane %v289, 4
      %v292 = vshll.u32 %v177, 16
      %v294 = vrot.slane %v292, 5
      %v295 = vor.u32 %v291, %v294
      %v296 = vrot.slane %v295, 4
      %v298 = vshll.u32 %v178, 16
      %v300 = vrot.slane %v298, 5
      %v301 = vsel %vm239, %v296, %v300
      %v302 = vshrl.u32 %v178, 16
      %v304 = vrot.slane %v302, 4
      %v305 = vor.u32 %v304, %v300
      %v306 = vrot.slane %v305, 4
      %v308 = vshll.u32 %v223, 16
      %v310 = vrot.slane %v308, 5
      %v311 = vsel %vm239, %v306, %v310
      %v313 = vshrl.u32 %v179, 16
      %v315 = vrot.slane %v313, 4
      %v316 = vshll.u32 %v179, 16
      %v318 = vrot.slane %v316, 5
      %v319 = vor.u32 %v315, %v318
      %v320 = vrot.slane %v319, 4
      %v322 = vshll.u32 %v180, 16
      %v324 = vrot.slane %v322, 5
      %v325 = vsel %vm239, %v320, %v324
      %v326 = vshrl.u32 %v180, 16
      %v328 = vrot.slane %v326, 4
      %v329 = vor.u32 %v328, %v324
      %v330 = vrot.slane %v329, 4
      %v332 = vshll.u32 %v224, 16
      %v334 = vrot.slane %v332, 5
      %v335 = vsel %vm239, %v330, %v334
      %v337 = vshrl.u32 %v181, 16
      %v339 = vrot.slane %v337, 4
      %v340 = vshll.u32 %v181, 16
      %v342 = vrot.slane %v340, 5
      %v343 = vor.u32 %v339, %v342
      %v344 = vrot.slane %v343, 4
      %v346 = vshll.u32 %v182, 16
      %v348 = vrot.slane %v346, 5
      %v349 = vsel %vm239, %v344, %v348
      %v350 = vshrl.u32 %v182, 16
      %v352 = vrot.slane %v350, 4
      %v353 = vor.u32 %v352, %v348
      %v354 = vrot.slane %v353, 4
      %v356 = vshll.u32 %v225, 16
      %v358 = vrot.slane %v356, 5
      %v359 = vsel %vm239, %v354, %v358
      %v361 = vshrl.u32 %v183, 16
      %v363 = vrot.slane %v361, 4
      %v364 = vshll.u32 %v183, 16
      %v366 = vrot.slane %v364, 5
      %v367 = vor.u32 %v363, %v366
      %v368 = vrot.slane %v367, 4
      %v370 = vshll.u32 %v184, 16
      %v372 = vrot.slane %v370, 5
      %v373 = vsel %vm239, %v368, %v372
      %v374 = vshrl.u32 %v184, 16
      %v376 = vrot.slane %v374, 4
      %v377 = vor.u32 %v376, %v372
      %v378 = vrot.slane %v377, 4
      %v380 = vshll.u32 %v226, 16
      %v382 = vrot.slane %v380, 5
      %v383 = vsel %vm239, %v378, %v382
      %v385 = vshrl.u32 %v185, 16
      %v387 = vrot.slane %v385, 4
      %v388 = vshll.u32 %v185, 16
      %v390 = vrot.slane %v388, 5
      %v391 = vor.u32 %v387, %v390
      %v392 = vrot.slane %v391, 4
      %v394 = vshll.u32 %v186, 16
      %v396 = vrot.slane %v394, 5
      %v397 = vsel %vm239, %v392, %v396
      %v398 = vshrl.u32 %v186, 16
      %v400 = vrot.slane %v398, 4
      %v401 = vor.u32 %v400, %v396
      %v402 = vrot.slane %v401, 4
      %v404 = vshll.u32 %v227, 16
      %v406 = vrot.slane %v404, 5
      %v407 = vsel %vm239, %v402, %v406
      %v409 = vshrl.u32 %v187, 16
      %v411 = vrot.slane %v409, 4
      %v412 = vshll.u32 %v187, 16
      %v414 = vrot.slane %v412, 5
      %v415 = vor.u32 %v411, %v414
      %v416 = vrot.slane %v415, 4
      %v418 = vshll.u32 %v188, 16
      %v420 = vrot.slane %v418, 5
      %v421 = vsel %vm239, %v416, %v420
      %v422 = vshrl.u32 %v188, 16
      %v424 = vrot.slane %v422, 4
      %v425 = vor.u32 %v424, %v420
      %v426 = vrot.slane %v425, 4
      %v428 = vshll.u32 %v228, 16
      %v430 = vrot.slane %v428, 5
      %v431 = vsel %vm239, %v426, %v430
      %v433 = vshrl.u32 %v189, 16
      %v435 = vrot.slane %v433, 4
      %v436 = vshll.u32 %v189, 16
      %v438 = vrot.slane %v436, 5
      %v439 = vor.u32 %v435, %v438
      %v440 = vrot.slane %v439, 4
      %v442 = vshll.u32 %v190, 16
      %v444 = vrot.slane %v442, 5
      %v445 = vsel %vm239, %v440, %v444
      %v446 = vshrl.u32 %v190, 16
      %v448 = vrot.slane %v446, 4
      %v449 = vor.u32 %v448, %v444
      %v450 = vrot.slane %v449, 4
      %v452 = vshll.u32 %v229, 16
      %v454 = vrot.slane %v452, 5
      %v455 = vsel %vm239, %v450, %v454
      %v457 = vshrl.u32 %v191, 16
      %v459 = vrot.slane %v457, 4
      %v460 = vshll.u32 %v191, 16
      %v462 = vrot.slane %v460, 5
      %v463 = vor.u32 %v459, %v462
      %v464 = vrot.slane %v463, 4
      %v466 = vshll.u32 %v192, 16
      %v468 = vrot.slane %v466, 5
      %v469 = vsel %vm239, %v464, %v468
      %v470 = vshrl.u32 %v192, 16
      %v472 = vrot.slane %v470, 4
      %v473 = vor.u32 %v472, %v468
      %v474 = vrot.slane %v473, 4
      %v476 = vshll.u32 %v230, 16
      %v478 = vrot.slane %v476, 5
      %v479 = vsel %vm239, %v474, %v478
      %v481 = vshrl.u32 %v193, 16
      %v483 = vrot.slane %v481, 4
      %v484 = vshll.u32 %v193, 16
      %v486 = vrot.slane %v484, 5
      %v487 = vor.u32 %v483, %v486
      %v488 = vrot.slane %v487, 4
      %v490 = vshll.u32 %v194, 16
      %v492 = vrot.slane %v490, 5
      %v493 = vsel %vm239, %v488, %v492
      %v494 = vshrl.u32 %v194, 16
      %v496 = vrot.slane %v494, 4
      %v497 = vor.u32 %v496, %v492
      %v498 = vrot.slane %v497, 4
      %v500 = vshll.u32 %v231, 16
      %v502 = vrot.slane %v500, 5
      %v503 = vsel %vm239, %v498, %v502
      %v505 = vshrl.u32 %v195, 16
      %v507 = vrot.slane %v505, 4
      %v508 = vshll.u32 %v195, 16
      %v510 = vrot.slane %v508, 5
      %v511 = vor.u32 %v507, %v510
      %v512 = vrot.slane %v511, 4
      %v514 = vshll.u32 %v196, 16
      %v516 = vrot.slane %v514, 5
      %v517 = vsel %vm239, %v512, %v516
      %v518 = vshrl.u32 %v196, 16
      %v520 = vrot.slane %v518, 4
      %v521 = vor.u32 %v520, %v516
      %v522 = vrot.slane %v521, 4
      %v524 = vshll.u32 %v232, 16
      %v526 = vrot.slane %v524, 5
      %v527 = vsel %vm239, %v522, %v526
      %v529 = vshrl.u32 %v197, 16
      %v531 = vrot.slane %v529, 4
      %v532 = vshll.u32 %v197, 16
      %v534 = vrot.slane %v532, 5
      %v535 = vor.u32 %v531, %v534
      %v536 = vrot.slane %v535, 4
      %v538 = vshll.u32 %v198, 16
      %v540 = vrot.slane %v538, 5
      %v541 = vsel %vm239, %v536, %v540
      %v542 = vshrl.u32 %v198, 16
      %v544 = vrot.slane %v542, 4
      %v545 = vor.u32 %v544, %v540
      %v546 = vrot.slane %v545, 4
      %v548 = vshll.u32 %v233, 16
      %v550 = vrot.slane %v548, 5
      %v551 = vsel %vm239, %v546, %v550
      %v553 = vshrl.u32 %v199, 16
      %v555 = vrot.slane %v553, 4
      %v556 = vshll.u32 %v199, 16
      %v558 = vrot.slane %v556, 5
      %v559 = vor.u32 %v555, %v558
      %v560 = vrot.slane %v559, 4
      %v562 = vshll.u32 %v200, 16
      %v564 = vrot.slane %v562, 5
      %v565 = vsel %vm239, %v560, %v564
      %v566 = vshrl.u32 %v200, 16
      %v568 = vrot.slane %v566, 4
      %v569 = vor.u32 %v568, %v564
      %v570 = vrot.slane %v569, 4
      %v572 = vshll.u32 %v234, 16
      %v574 = vrot.slane %v572, 5
      %v575 = vsel %vm239, %v570, %v574
      %v577 = vshrl.u32 %v201, 16
      %v579 = vrot.slane %v577, 4
      %v580 = vshll.u32 %v201, 16
      %v582 = vrot.slane %v580, 5
      %v583 = vor.u32 %v579, %v582
      %v584 = vrot.slane %v583, 4
      %v586 = vshll.u32 %v202, 16
      %v588 = vrot.slane %v586, 5
      %v589 = vsel %vm239, %v584, %v588
      %v590 = vshrl.u32 %v202, 16
      %v592 = vrot.slane %v590, 4
      %v593 = vor.u32 %v592, %v588
      %v594 = vrot.slane %v593, 4
      %v596 = vshll.u32 %v235, 16
      %v598 = vrot.slane %v596, 5
      %v599 = vsel %vm239, %v594, %v598
      %v601 = vshrl.u32 %v203, 16
      %v603 = vrot.slane %v601, 4
      %v604 = vshll.u32 %v203, 16
      %v606 = vrot.slane %v604, 5
      %v607 = vor.u32 %v603, %v606
      %v608 = vrot.slane %v607, 4
      %v610 = vshll.u32 %v204, 16
      %v612 = vrot.slane %v610, 5
      %v613 = vsel %vm239, %v608, %v612
      %v614 = vshrl.u32 %v204, 16
      %v616 = vrot.slane %v614, 4
      %v617 = vor.u32 %v616, %v612
      %v618 = vrot.slane %v617, 4
      %v620 = vshll.u32 %v236, 16
      %v622 = vrot.slane %v620, 5
      %v623 = vsel %vm239, %v618, %v622
      %s624 = scalar_lea.vmem %s1, 64
      %v625 = vld [vmem:[%s624] sm:$0xf]
      %v626 = vld [vmem:[%s624 + $0x4] sm:$0xf]
      %v627 = vld [vmem:[%s624 + $0x8] sm:$0xf]
      %v628 = vld [vmem:[%s624 + $0xc] sm:$0xf]
      %v629 = vld [vmem:[%s624 + $0x10] sm:$0xf]
      %v630 = vld [vmem:[%s624 + $0x14] sm:$0xf]
      %v631 = vld [vmem:[%s624 + $0x18] sm:$0xf]
      %v632 = vld [vmem:[%s624 + $0x1c] sm:$0xf]
      %v633 = vld [vmem:[%s624 + $0x20] sm:$0xf]
      %v634 = vld [vmem:[%s624 + $0x24] sm:$0xf]
      %v635 = vld [vmem:[%s624 + $0x28] sm:$0xf]
      %v636 = vld [vmem:[%s624 + $0x2c] sm:$0xf]
      %v637 = vld [vmem:[%s624 + $0x30] sm:$0xf]
      %v638 = vld [vmem:[%s624 + $0x34] sm:$0xf]
      %v639 = vld [vmem:[%s624 + $0x38] sm:$0xf]
      %v640 = vld [vmem:[%s624 + $0x3c] sm:$0xf]
      %v641 = vunpack.c.l.b16 %v253
      %v642 = vunpack.c.l.b16 %v263
      %v643 = vunpack.c.l.b16 %v277
      %v644 = vunpack.c.l.b16 %v287
      %v645 = vunpack.c.l.b16 %v301
      %v646 = vunpack.c.l.b16 %v311
      %v647 = vunpack.c.l.b16 %v325
      %v648 = vunpack.c.l.b16 %v335
      %v649 = vunpack.c.l.b16 %v349
      %v650 = vunpack.c.l.b16 %v359
      %v651 = vunpack.c.l.b16 %v373
      %v652 = vunpack.c.l.b16 %v383
      %v653 = vunpack.c.l.b16 %v397
      %v654 = vunpack.c.l.b16 %v407
      %v655 = vunpack.c.l.b16 %v421
      %v656 = vunpack.c.l.b16 %v431
      %v657 = vunpack.c.l.b16 %v445
      %v658 = vunpack.c.l.b16 %v455
      %v659 = vunpack.c.l.b16 %v469
      %v660 = vunpack.c.l.b16 %v479
      %v661 = vunpack.c.l.b16 %v493
      %v662 = vunpack.c.l.b16 %v503
      %v663 = vunpack.c.l.b16 %v517
      %v664 = vunpack.c.l.b16 %v527
      %v665 = vunpack.c.l.b16 %v541
      %v666 = vunpack.c.l.b16 %v551
      %v667 = vunpack.c.l.b16 %v565
      %v668 = vunpack.c.l.b16 %v575
      %v669 = vunpack.c.l.b16 %v589
      %v670 = vunpack.c.l.b16 %v599
      %v671 = vunpack.c.l.b16 %v613
      %v672 = vunpack.c.l.b16 %v623
      %v673 = vpack.c.b16 %v642, %v641
      %v674 = vpack.c.b16 %v644, %v643
      %v675 = vpack.c.b16 %v646, %v645
      %v676 = vpack.c.b16 %v648, %v647
      %v677 = vpack.c.b16 %v650, %v649
      %v678 = vpack.c.b16 %v652, %v651
      %v679 = vpack.c.b16 %v654, %v653
      %v680 = vpack.c.b16 %v656, %v655
      %v681 = vpack.c.b16 %v658, %v657
      %v682 = vpack.c.b16 %v660, %v659
      %v683 = vpack.c.b16 %v662, %v661
      %v684 = vpack.c.b16 %v664, %v663
      %v685 = vpack.c.b16 %v666, %v665
      %v686 = vpack.c.b16 %v668, %v667
      %v687 = vpack.c.b16 %v670, %v669
      %v688 = vpack.c.b16 %v672, %v671
      %v721 = vunpack.c.l.b16 %v625
      %v722 = vunpack.c.l.b16 %v626
      %v723 = vunpack.c.l.b16 %v627
      %v724 = vunpack.c.l.b16 %v628
      %v725 = vunpack.c.l.b16 %v629
      %v726 = vunpack.c.l.b16 %v630
      %v727 = vunpack.c.l.b16 %v631
      %v728 = vunpack.c.l.b16 %v632
      %v729 = vunpack.c.l.b16 %v633
      %v730 = vunpack.c.l.b16 %v634
      %v731 = vunpack.c.l.b16 %v635
      %v732 = vunpack.c.l.b16 %v636
      %v733 = vunpack.c.l.b16 %v637
      %v734 = vunpack.c.l.b16 %v638
      %v735 = vunpack.c.l.b16 %v639
      %v736 = vunpack.c.l.b16 %v640
      %v737 = vpack.c.b16 %v722, %v721
      %v738 = vpack.c.b16 %v724, %v723
      %v739 = vpack.c.b16 %v726, %v725
      %v740 = vpack.c.b16 %v728, %v727
      %v741 = vpack.c.b16 %v730, %v729
      %v742 = vpack.c.b16 %v732, %v731
      %v743 = vpack.c.b16 %v734, %v733
      %v744 = vpack.c.b16 %v736, %v735
      %753 = vmatprep.subr.bf16.mxu0 0
      %754 = vmatpush1.bf16.msra.mxu0 %v737
      %755 = vmatprep.subr.bf16.mxu0 0
      %756 = vmatpush1.bf16.msra.mxu0 %v738
      %757 = vmatprep.subr.bf16.mxu0 0
      %758 = vmatpush1.bf16.msra.mxu0 %v739
      %759 = vmatprep.subr.bf16.mxu0 0
      %760 = vmatpush1.bf16.msra.mxu0 %v740
      %761 = vmatprep.subr.bf16.mxu0 0
      %762 = vmatpush1.bf16.msra.mxu0 %v741
      %763 = vmatprep.subr.bf16.mxu0 0
      %764 = vmatpush1.bf16.msra.mxu0 %v742
      %765 = vmatprep.subr.bf16.mxu0 0
      %766 = vmatpush1.bf16.msra.mxu0 %v743
      %767 = vmatprep.subr.bf16.mxu0 0
      %768 = vmatpush1.bf16.msra.mxu0 %v744
      %769 = vmatprep.subr.bf16.mxu0 0
      %770 = vmatpush1.bf16.msra.mxu0 0
      %771 = vmatprep.subr.bf16.mxu0 0
      %772 = vmatpush1.bf16.msra.mxu0 0
      %773 = vmatprep.subr.bf16.mxu0 0
      %774 = vmatpush1.bf16.msra.mxu0 0
      %775 = vmatprep.subr.bf16.mxu0 0
      %776 = vmatpush1.bf16.msra.mxu0 0
      %777 = vmatprep.subr.bf16.mxu0 0
      %778 = vmatpush1.bf16.msra.mxu0 0
      %779 = vmatprep.subr.bf16.mxu0 0
      %780 = vmatpush1.bf16.msra.mxu0 0
      %781 = vmatprep.subr.bf16.mxu0 0
      %782 = vmatpush1.bf16.msra.mxu0 0
      %783 = vmatprep.subr.bf16.mxu0 0
      %784 = vmatpush1.bf16.msra.mxu0 0
      %785 = vmatprep.mubr.bf16.mxu0 0
      %786 = vmatmul.mubr.bf16.gmra.mrb[0].mxu0 %v673
      %v787 = vpop.f32.mrb[0].mxu0
      %v788 = vadd.f32 0.0, %v787
      %v789 = vpop.f32.mrb[0].mxu0
      %v790 = vpop.f32.mrb[0].mxu0
      %v791 = vadd.f32 0.0, %v790
      %v792 = vpop.f32.mrb[0].mxu0
      %793 = vmatprep.mubr.bf16.mxu0 0
      %794 = vmatmul.mubr.bf16.gmra.mrb[0].mxu0 %v674
      %v795 = vpop.f32.mrb[0].mxu0
      %v796 = vadd.f32 0.0, %v795
      %v797 = vpop.f32.mrb[0].mxu0
      %v798 = vpop.f32.mrb[0].mxu0
      %v799 = vadd.f32 0.0, %v798
      %v800 = vpop.f32.mrb[0].mxu0
      %801 = vmatprep.mubr.bf16.mxu0 0
      %802 = vmatmul.mubr.bf16.gmra.mrb[0].mxu0 %v675
      %v803 = vpop.f32.mrb[0].mxu0
      %v804 = vadd.f32 0.0, %v803
      %v805 = vpop.f32.mrb[0].mxu0
      %v806 = vpop.f32.mrb[0].mxu0
      %v807 = vadd.f32 0.0, %v806
      %v808 = vpop.f32.mrb[0].mxu0
      %809 = vmatprep.mubr.bf16.mxu0 0
      %810 = vmatmul.mubr.bf16.gmra.mrb[0].mxu0 %v676
      %v811 = vpop.f32.mrb[0].mxu0
      %v812 = vadd.f32 0.0, %v811
      %v813 = vpop.f32.mrb[0].mxu0
      %v814 = vpop.f32.mrb[0].mxu0
      %v815 = vadd.f32 0.0, %v814
      %v816 = vpop.f32.mrb[0].mxu0
      %817 = vmatprep.mubr.bf16.mxu0 0
      %818 = vmatmul.mubr.bf16.gmra.mrb[0].mxu0 %v677
      %v819 = vpop.f32.mrb[0].mxu0
      %v820 = vadd.f32 0.0, %v819
      %v821 = vpop.f32.mrb[0].mxu0
      %v822 = vpop.f32.mrb[0].mxu0
      %v823 = vadd.f32 0.0, %v822
      %v824 = vpop.f32.mrb[0].mxu0
      %825 = vmatprep.mubr.bf16.mxu0 0
      %826 = vmatmul.mubr.bf16.gmra.mrb[0].mxu0 %v678
      %v827 = vpop.f32.mrb[0].mxu0
      %v828 = vadd.f32 0.0, %v827
      %v829 = vpop.f32.mrb[0].mxu0
      %v830 = vpop.f32.mrb[0].mxu0
      %v831 = vadd.f32 0.0, %v830
      %v832 = vpop.f32.mrb[0].mxu0
      %833 = vmatprep.mubr.bf16.mxu0 0
      %834 = vmatmul.mubr.bf16.gmra.mrb[0].mxu0 %v679
      %v835 = vpop.f32.mrb[0].mxu0
      %v836 = vadd.f32 0.0, %v835
      %v837 = vpop.f32.mrb[0].mxu0
      %v838 = vpop.f32.mrb[0].mxu0
      %v839 = vadd.f32 0.0, %v838
      %v840 = vpop.f32.mrb[0].mxu0
      %841 = vmatprep.mubr.bf16.mxu0 0
      %842 = vmatmul.mubr.bf16.gmra.mrb[0].mxu0 %v680
      %v843 = vpop.f32.mrb[0].mxu0
      %v844 = vadd.f32 0.0, %v843
      %v845 = vpop.f32.mrb[0].mxu0
      %v846 = vpop.f32.mrb[0].mxu0
      %v847 = vadd.f32 0.0, %v846
      %v848 = vpop.f32.mrb[0].mxu0
      %849 = vmatprep.mubr.bf16.mxu0 0
      %850 = vmatmul.mubr.bf16.gmra.mrb[0].mxu0 %v681
      %v851 = vpop.f32.mrb[0].mxu0
      %v852 = vadd.f32 0.0, %v851
      %v853 = vpop.f32.mrb[0].mxu0
      %v854 = vpop.f32.mrb[0].mxu0
      %v855 = vadd.f32 0.0, %v854
      %v856 = vpop.f32.mrb[0].mxu0
      %857 = vmatprep.mubr.bf16.mxu0 0
      %858 = vmatmul.mubr.bf16.gmra.mrb[0].mxu0 %v682
      %v859 = vpop.f32.mrb[0].mxu0
      %v860 = vadd.f32 0.0, %v859
      %v861 = vpop.f32.mrb[0].mxu0
      %v862 = vpop.f32.mrb[0].mxu0
      %v863 = vadd.f32 0.0, %v862
      %v864 = vpop.f32.mrb[0].mxu0
      %865 = vmatprep.mubr.bf16.mxu0 0
      %866 = vmatmul.mubr.bf16.gmra.mrb[0].mxu0 %v683
      %v867 = vpop.f32.mrb[0].mxu0
      %v868 = vadd.f32 0.0, %v867
      %v869 = vpop.f32.mrb[0].mxu0
      %v870 = vpop.f32.mrb[0].mxu0
      %v871 = vadd.f32 0.0, %v870
      %v872 = vpop.f32.mrb[0].mxu0
      %873 = vmatprep.mubr.bf16.mxu0 0
      %874 = vmatmul.mubr.bf16.gmra.mrb[0].mxu0 %v684
      %v875 = vpop.f32.mrb[0].mxu0
      %v876 = vadd.f32 0.0, %v875
      %v877 = vpop.f32.mrb[0].mxu0
      %v878 = vpop.f32.mrb[0].mxu0
      %v879 = vadd.f32 0.0, %v878
      %v880 = vpop.f32.mrb[0].mxu0
      %881 = vmatprep.mubr.bf16.mxu0 0
      %882 = vmatmul.mubr.bf16.gmra.mrb[0].mxu0 %v685
      %v883 = vpop.f32.mrb[0].mxu0
      %v884 = vadd.f32 0.0, %v883
      %v885 = vpop.f32.mrb[0].mxu0
      %v886 = vpop.f32.mrb[0].mxu0
      %v887 = vadd.f32 0.0, %v886
      %v888 = vpop.f32.mrb[0].mxu0
      %889 = vmatprep.mubr.bf16.mxu0 0
      %890 = vmatmul.mubr.bf16.gmra.mrb[0].mxu0 %v686
      %v891 = vpop.f32.mrb[0].mxu0
      %v892 = vadd.f32 0.0, %v891
      %v893 = vpop.f32.mrb[0].mxu0
      %v894 = vpop.f32.mrb[0].mxu0
      %v895 = vadd.f32 0.0, %v894
      %v896 = vpop.f32.mrb[0].mxu0
      %897 = vmatprep.mubr.bf16.mxu0 0
      %898 = vmatmul.mubr.bf16.gmra.mrb[0].mxu0 %v687
      %v899 = vpop.f32.mrb[0].mxu0
      %v900 = vadd.f32 0.0, %v899
      %v901 = vpop.f32.mrb[0].mxu0
      %v902 = vpop.f32.mrb[0].mxu0
      %v903 = vadd.f32 0.0, %v902
      %v904 = vpop.f32.mrb[0].mxu0
      %905 = vmatprep.mubr.bf16.mxu0 0
      %906 = vmatmul.mubr.bf16.gmra.mrb[0].mxu0 %v688
      %v907 = vpop.f32.mrb[0].mxu0
      %v908 = vadd.f32 0.0, %v907
      %v909 = vpop.f32.mrb[0].mxu0
      %v910 = vpop.f32.mrb[0].mxu0
      %v911 = vadd.f32 0.0, %v910
      %v912 = vpop.f32.mrb[0].mxu0
      %913 = vdwg.mxu0
      %v946 = vunpack.c.l.b16 %v173
      %v947 = vunpack.c.l.b16 %v174
      %v948 = vunpack.c.l.b16 %v175
      %v949 = vunpack.c.l.b16 %v176
      %v950 = vunpack.c.l.b16 %v177
      %v951 = vunpack.c.l.b16 %v178
      %v952 = vunpack.c.l.b16 %v179
      %v953 = vunpack.c.l.b16 %v180
      %v954 = vunpack.c.l.b16 %v181
      %v955 = vunpack.c.l.b16 %v182
      %v956 = vunpack.c.l.b16 %v183
      %v957 = vunpack.c.l.b16 %v184
      %v958 = vunpack.c.l.b16 %v185
      %v959 = vunpack.c.l.b16 %v186
      %v960 = vunpack.c.l.b16 %v187
      %v961 = vunpack.c.l.b16 %v188
      %v962 = vunpack.c.l.b16 %v189
      %v963 = vunpack.c.l.b16 %v190
      %v964 = vunpack.c.l.b16 %v191
      %v965 = vunpack.c.l.b16 %v192
      %v966 = vunpack.c.l.b16 %v193
      %v967 = vunpack.c.l.b16 %v194
      %v968 = vunpack.c.l.b16 %v195
      %v969 = vunpack.c.l.b16 %v196
      %v970 = vunpack.c.l.b16 %v197
      %v971 = vunpack.c.l.b16 %v198
      %v972 = vunpack.c.l.b16 %v199
      %v973 = vunpack.c.l.b16 %v200
      %v974 = vunpack.c.l.b16 %v201
      %v975 = vunpack.c.l.b16 %v202
      %v976 = vunpack.c.l.b16 %v203
      %v977 = vunpack.c.l.b16 %v204
      %v978 = vpack.c.b16 %v947, %v946
      %v979 = vpack.c.b16 %v949, %v948
      %v980 = vpack.c.b16 %v951, %v950
      %v981 = vpack.c.b16 %v953, %v952
      %v982 = vpack.c.b16 %v955, %v954
      %v983 = vpack.c.b16 %v957, %v956
      %v984 = vpack.c.b16 %v959, %v958
      %v985 = vpack.c.b16 %v961, %v960
      %v986 = vpack.c.b16 %v963, %v962
      %v987 = vpack.c.b16 %v965, %v964
      %v988 = vpack.c.b16 %v967, %v966
      %v989 = vpack.c.b16 %v969, %v968
      %v990 = vpack.c.b16 %v971, %v970
      %v991 = vpack.c.b16 %v973, %v972
      %v992 = vpack.c.b16 %v975, %v974
      %v993 = vpack.c.b16 %v977, %v976
      %v1026 = vunpack.c.l.b16 %v205
      %v1027 = vunpack.c.l.b16 %v206
      %v1028 = vunpack.c.l.b16 %v207
      %v1029 = vunpack.c.l.b16 %v208
      %v1030 = vunpack.c.l.b16 %v209
      %v1031 = vunpack.c.l.b16 %v210
      %v1032 = vunpack.c.l.b16 %v211
      %v1033 = vunpack.c.l.b16 %v212
      %v1034 = vunpack.c.l.b16 %v213
      %v1035 = vunpack.c.l.b16 %v214
      %v1036 = vunpack.c.l.b16 %v215
      %v1037 = vunpack.c.l.b16 %v216
      %v1038 = vunpack.c.l.b16 %v217
      %v1039 = vunpack.c.l.b16 %v218
      %v1040 = vunpack.c.l.b16 %v219
      %v1041 = vunpack.c.l.b16 %v220
      %v1042 = vpack.c.b16 %v1027, %v1026
      %v1043 = vpack.c.b16 %v1029, %v1028
      %v1044 = vpack.c.b16 %v1031, %v1030
      %v1045 = vpack.c.b16 %v1033, %v1032
      %v1046 = vpack.c.b16 %v1035, %v1034
      %v1047 = vpack.c.b16 %v1037, %v1036
      %v1048 = vpack.c.b16 %v1039, %v1038
      %v1049 = vpack.c.b16 %v1041, %v1040
      %1058 = vmatprep.subr.bf16.mxu0 0
      %1059 = vmatpush1.bf16.msra.mxu0 %v1042
      %1060 = vmatprep.subr.bf16.mxu0 0
      %1061 = vmatpush1.bf16.msra.mxu0 %v1043
      %1062 = vmatprep.subr.bf16.mxu0 0
      %1063 = vmatpush1.bf16.msra.mxu0 %v1044
      %1064 = vmatprep.subr.bf16.mxu0 0
      %1065 = vmatpush1.bf16.msra.mxu0 %v1045
      %1066 = vmatprep.subr.bf16.mxu0 0
      %1067 = vmatpush1.bf16.msra.mxu0 %v1046
      %1068 = vmatprep.subr.bf16.mxu0 0
      %1069 = vmatpush1.bf16.msra.mxu0 %v1047
      %1070 = vmatprep.subr.bf16.mxu0 0
      %1071 = vmatpush1.bf16.msra.mxu0 %v1048
      %1072 = vmatprep.subr.bf16.mxu0 0
      %1073 = vmatpush1.bf16.msra.mxu0 %v1049
      %1074 = vmatprep.subr.bf16.mxu0 0
      %1075 = vmatpush1.bf16.msra.mxu0 0
      %1076 = vmatprep.subr.bf16.mxu0 0
      %1077 = vmatpush1.bf16.msra.mxu0 0
      %1078 = vmatprep.subr.bf16.mxu0 0
      %1079 = vmatpush1.bf16.msra.mxu0 0
      %1080 = vmatprep.subr.bf16.mxu0 0
      %1081 = vmatpush1.bf16.msra.mxu0 0
      %1082 = vmatprep.subr.bf16.mxu0 0
      %1083 = vmatpush1.bf16.msra.mxu0 0
      %1084 = vmatprep.subr.bf16.mxu0 0
      %1085 = vmatpush1.bf16.msra.mxu0 0
      %1086 = vmatprep.subr.bf16.mxu0 0
      %1087 = vmatpush1.bf16.msra.mxu0 0
      %1088 = vmatprep.subr.bf16.mxu0 0
      %1089 = vmatpush1.bf16.msra.mxu0 0
      %1090 = vmatprep.mubr.bf16.mxu0 0
      %1091 = vmatmul.mubr.bf16.gmra.mrb[0].mxu0 %v978
      %v1092 = vpop.f32.mrb[0].mxu0
      %v1093 = vadd.f32 %v788, %v1092
      %v1094 = vpop.f32.mrb[0].mxu0
      %v1095 = vpop.f32.mrb[0].mxu0
      %v1096 = vadd.f32 %v791, %v1095
      %v1097 = vpop.f32.mrb[0].mxu0
      %1098 = vmatprep.mubr.bf16.mxu0 0
      %1099 = vmatmul.mubr.bf16.gmra.mrb[0].mxu0 %v979
      %v1100 = vpop.f32.mrb[0].mxu0
      %v1101 = vadd.f32 %v796, %v1100
      %v1102 = vpop.f32.mrb[0].mxu0
      %v1103 = vpop.f32.mrb[0].mxu0
      %v1104 = vadd.f32 %v799, %v1103
      %v1105 = vpop.f32.mrb[0].mxu0
      %1106 = vmatprep.mubr.bf16.mxu0 0
      %1107 = vmatmul.mubr.bf16.gmra.mrb[0].mxu0 %v980
      %v1108 = vpop.f32.mrb[0].mxu0
      %v1109 = vadd.f32 %v804, %v1108
      %v1110 = vpop.f32.mrb[0].mxu0
      %v1111 = vpop.f32.mrb[0].mxu0
      %v1112 = vadd.f32 %v807, %v1111
      %v1113 = vpop.f32.mrb[0].mxu0
      %1114 = vmatprep.mubr.bf16.mxu0 0
      %1115 = vmatmul.mubr.bf16.gmra.mrb[0].mxu0 %v981
      %v1116 = vpop.f32.mrb[0].mxu0
      %v1117 = vadd.f32 %v812, %v1116
      %v1118 = vpop.f32.mrb[0].mxu0
      %v1119 = vpop.f32.mrb[0].mxu0
      %v1120 = vadd.f32 %v815, %v1119
      %v1121 = vpop.f32.mrb[0].mxu0
      %1122 = vmatprep.mubr.bf16.mxu0 0
      %1123 = vmatmul.mubr.bf16.gmra.mrb[0].mxu0 %v982
      %v1124 = vpop.f32.mrb[0].mxu0
      %v1125 = vadd.f32 %v820, %v1124
      %v1126 = vpop.f32.mrb[0].mxu0
      %v1127 = vpop.f32.mrb[0].mxu0
      %v1128 = vadd.f32 %v823, %v1127
      %v1129 = vpop.f32.mrb[0].mxu0
      %1130 = vmatprep.mubr.bf16.mxu0 0
      %1131 = vmatmul.mubr.bf16.gmra.mrb[0].mxu0 %v983
      %v1132 = vpop.f32.mrb[0].mxu0
      %v1133 = vadd.f32 %v828, %v1132
      %v1134 = vpop.f32.mrb[0].mxu0
      %v1135 = vpop.f32.mrb[0].mxu0
      %v1136 = vadd.f32 %v831, %v1135
      %v1137 = vpop.f32.mrb[0].mxu0
      %1138 = vmatprep.mubr.bf16.mxu0 0
      %1139 = vmatmul.mubr.bf16.gmra.mrb[0].mxu0 %v984
      %v1140 = vpop.f32.mrb[0].mxu0
      %v1141 = vadd.f32 %v836, %v1140
      %v1142 = vpop.f32.mrb[0].mxu0
      %v1143 = vpop.f32.mrb[0].mxu0
      %v1144 = vadd.f32 %v839, %v1143
      %v1145 = vpop.f32.mrb[0].mxu0
      %1146 = vmatprep.mubr.bf16.mxu0 0
      %1147 = vmatmul.mubr.bf16.gmra.mrb[0].mxu0 %v985
      %v1148 = vpop.f32.mrb[0].mxu0
      %v1149 = vadd.f32 %v844, %v1148
      %v1150 = vpop.f32.mrb[0].mxu0
      %v1151 = vpop.f32.mrb[0].mxu0
      %v1152 = vadd.f32 %v847, %v1151
      %v1153 = vpop.f32.mrb[0].mxu0
      %1154 = vmatprep.mubr.bf16.mxu0 0
      %1155 = vmatmul.mubr.bf16.gmra.mrb[0].mxu0 %v986
      %v1156 = vpop.f32.mrb[0].mxu0
      %v1157 = vadd.f32 %v852, %v1156
      %v1158 = vpop.f32.mrb[0].mxu0
      %v1159 = vpop.f32.mrb[0].mxu0
      %v1160 = vadd.f32 %v855, %v1159
      %v1161 = vpop.f32.mrb[0].mxu0
      %1162 = vmatprep.mubr.bf16.mxu0 0
      %1163 = vmatmul.mubr.bf16.gmra.mrb[0].mxu0 %v987
      %v1164 = vpop.f32.mrb[0].mxu0
      %v1165 = vadd.f32 %v860, %v1164
      %v1166 = vpop.f32.mrb[0].mxu0
      %v1167 = vpop.f32.mrb[0].mxu0
      %v1168 = vadd.f32 %v863, %v1167
      %v1169 = vpop.f32.mrb[0].mxu0
      %1170 = vmatprep.mubr.bf16.mxu0 0
      %1171 = vmatmul.mubr.bf16.gmra.mrb[0].mxu0 %v988
      %v1172 = vpop.f32.mrb[0].mxu0
      %v1173 = vadd.f32 %v868, %v1172
      %v1174 = vpop.f32.mrb[0].mxu0
      %v1175 = vpop.f32.mrb[0].mxu0
      %v1176 = vadd.f32 %v871, %v1175
      %v1177 = vpop.f32.mrb[0].mxu0
      %1178 = vmatprep.mubr.bf16.mxu0 0
      %1179 = vmatmul.mubr.bf16.gmra.mrb[0].mxu0 %v989
      %v1180 = vpop.f32.mrb[0].mxu0
      %v1181 = vadd.f32 %v876, %v1180
      %v1182 = vpop.f32.mrb[0].mxu0
      %v1183 = vpop.f32.mrb[0].mxu0
      %v1184 = vadd.f32 %v879, %v1183
      %v1185 = vpop.f32.mrb[0].mxu0
      %1186 = vmatprep.mubr.bf16.mxu0 0
      %1187 = vmatmul.mubr.bf16.gmra.mrb[0].mxu0 %v990
      %v1188 = vpop.f32.mrb[0].mxu0
      %v1189 = vadd.f32 %v884, %v1188
      %v1190 = vpop.f32.mrb[0].mxu0
      %v1191 = vpop.f32.mrb[0].mxu0
      %v1192 = vadd.f32 %v887, %v1191
      %v1193 = vpop.f32.mrb[0].mxu0
      %1194 = vmatprep.mubr.bf16.mxu0 0
      %1195 = vmatmul.mubr.bf16.gmra.mrb[0].mxu0 %v991
      %v1196 = vpop.f32.mrb[0].mxu0
      %v1197 = vadd.f32 %v892, %v1196
      %v1198 = vpop.f32.mrb[0].mxu0
      %v1199 = vpop.f32.mrb[0].mxu0
      %v1200 = vadd.f32 %v895, %v1199
      %v1201 = vpop.f32.mrb[0].mxu0
      %1202 = vmatprep.mubr.bf16.mxu0 0
      %1203 = vmatmul.mubr.bf16.gmra.mrb[0].mxu0 %v992
      %v1204 = vpop.f32.mrb[0].mxu0
      %v1205 = vadd.f32 %v900, %v1204
      %v1206 = vpop.f32.mrb[0].mxu0
      %v1207 = vpop.f32.mrb[0].mxu0
      %v1208 = vadd.f32 %v903, %v1207
      %v1209 = vpop.f32.mrb[0].mxu0
      %1210 = vmatprep.mubr.bf16.mxu0 0
      %1211 = vmatmul.mubr.bf16.gmra.mrb[0].mxu0 %v993
      %v1212 = vpop.f32.mrb[0].mxu0
      %v1213 = vadd.f32 %v908, %v1212
      %v1214 = vpop.f32.mrb[0].mxu0
      %v1215 = vpop.f32.mrb[0].mxu0
      %v1216 = vadd.f32 %v911, %v1215
      %v1217 = vpop.f32.mrb[0].mxu0
      %1218 = vdwg.mxu0
      %v1219 = vld [vmem:[%s165] sm:$0xe]
      %v1220 = vld [vmem:[%s165 + $0xc] sm:$0xe]
      %v1221 = vld [vmem:[%s165 + $0x18] sm:$0xe]
      %v1222 = vld [vmem:[%s165 + $0x24] sm:$0xe]
      %v1223 = vld [vmem:[%s165 + $0x30] sm:$0xe]
      %v1224 = vld [vmem:[%s165 + $0x3c] sm:$0xe]
      %v1225 = vld [vmem:[%s165 + $0x48] sm:$0xe]
      %v1226 = vld [vmem:[%s165 + $0x54] sm:$0xe]
      %v1227 = vld [vmem:[%s165 + $0x60] sm:$0xe]
      %v1228 = vld [vmem:[%s165 + $0x6c] sm:$0xe]
      %v1229 = vld [vmem:[%s165 + $0x78] sm:$0xe]
      %v1230 = vld [vmem:[%s165 + $0x84] sm:$0xe]
      %v1231 = vld [vmem:[%s165 + $0x90] sm:$0xe]
      %v1232 = vld [vmem:[%s165 + $0x9c] sm:$0xe]
      %v1233 = vld [vmem:[%s165 + $0xa8] sm:$0xe]
      %v1234 = vld [vmem:[%s165 + $0xb4] sm:$0xe]
      %vm1267 = vcmask 1042432
      %vm1268 = vcmask 1046532
      %vm1269 = vmor %vm1267, %vm1268
      %v1270 = vrot.slane %v1219, 5
      %v1271 = vrot.slane %v1270, 4
      %v1272 = vrot.slane %v174, 5
      %v1273 = vsel %vm1269, %v1271, %v1272
      %v1274 = vrot.slane %v1272, 4
      %v1275 = vrot.slane %v221, 5
      %v1276 = vsel %vm1269, %v1274, %v1275
      %v1277 = vrot.slane %v1220, 5
      %v1278 = vrot.slane %v1277, 4
      %v1279 = vrot.slane %v176, 5
      %v1280 = vsel %vm1269, %v1278, %v1279
      %v1281 = vrot.slane %v1279, 4
      %v1282 = vrot.slane %v222, 5
      %v1283 = vsel %vm1269, %v1281, %v1282
      %v1284 = vrot.slane %v1221, 5
      %v1285 = vrot.slane %v1284, 4
      %v1286 = vrot.slane %v178, 5
      %v1287 = vsel %vm1269, %v1285, %v1286
      %v1288 = vrot.slane %v1286, 4
      %v1289 = vrot.slane %v223, 5
      %v1290 = vsel %vm1269, %v1288, %v1289
      %v1291 = vrot.slane %v1222, 5
      %v1292 = vrot.slane %v1291, 4
      %v1293 = vrot.slane %v180, 5
      %v1294 = vsel %vm1269, %v1292, %v1293
      %v1295 = vrot.slane %v1293, 4
      %v1296 = vrot.slane %v224, 5
      %v1297 = vsel %vm1269, %v1295, %v1296
      %v1298 = vrot.slane %v1223, 5
      %v1299 = vrot.slane %v1298, 4
      %v1300 = vrot.slane %v182, 5
      %v1301 = vsel %vm1269, %v1299, %v1300
      %v1302 = vrot.slane %v1300, 4
      %v1303 = vrot.slane %v225, 5
      %v1304 = vsel %vm1269, %v1302, %v1303
      %v1305 = vrot.slane %v1224, 5
      %v1306 = vrot.slane %v1305, 4
      %v1307 = vrot.slane %v184, 5
      %v1308 = vsel %vm1269, %v1306, %v1307
      %v1309 = vrot.slane %v1307, 4
      %v1310 = vrot.slane %v226, 5
      %v1311 = vsel %vm1269, %v1309, %v1310
      %v1312 = vrot.slane %v1225, 5
      %v1313 = vrot.slane %v1312, 4
      %v1314 = vrot.slane %v186, 5
      %v1315 = vsel %vm1269, %v1313, %v1314
      %v1316 = vrot.slane %v1314, 4
      %v1317 = vrot.slane %v227, 5
      %v1318 = vsel %vm1269, %v1316, %v1317
      %v1319 = vrot.slane %v1226, 5
      %v1320 = vrot.slane %v1319, 4
      %v1321 = vrot.slane %v188, 5
      %v1322 = vsel %vm1269, %v1320, %v1321
      %v1323 = vrot.slane %v1321, 4
      %v1324 = vrot.slane %v228, 5
      %v1325 = vsel %vm1269, %v1323, %v1324
      %v1326 = vrot.slane %v1227, 5
      %v1327 = vrot.slane %v1326, 4
      %v1328 = vrot.slane %v190, 5
      %v1329 = vsel %vm1269, %v1327, %v1328
      %v1330 = vrot.slane %v1328, 4
      %v1331 = vrot.slane %v229, 5
      %v1332 = vsel %vm1269, %v1330, %v1331
      %v1333 = vrot.slane %v1228, 5
      %v1334 = vrot.slane %v1333, 4
      %v1335 = vrot.slane %v192, 5
      %v1336 = vsel %vm1269, %v1334, %v1335
      %v1337 = vrot.slane %v1335, 4
      %v1338 = vrot.slane %v230, 5
      %v1339 = vsel %vm1269, %v1337, %v1338
      %v1340 = vrot.slane %v1229, 5
      %v1341 = vrot.slane %v1340, 4
      %v1342 = vrot.slane %v194, 5
      %v1343 = vsel %vm1269, %v1341, %v1342
      %v1344 = vrot.slane %v1342, 4
      %v1345 = vrot.slane %v231, 5
      %v1346 = vsel %vm1269, %v1344, %v1345
      %v1347 = vrot.slane %v1230, 5
      %v1348 = vrot.slane %v1347, 4
      %v1349 = vrot.slane %v196, 5
      %v1350 = vsel %vm1269, %v1348, %v1349
      %v1351 = vrot.slane %v1349, 4
      %v1352 = vrot.slane %v232, 5
      %v1353 = vsel %vm1269, %v1351, %v1352
      %v1354 = vrot.slane %v1231, 5
      %v1355 = vrot.slane %v1354, 4
      %v1356 = vrot.slane %v198, 5
      %v1357 = vsel %vm1269, %v1355, %v1356
      %v1358 = vrot.slane %v1356, 4
      %v1359 = vrot.slane %v233, 5
      %v1360 = vsel %vm1269, %v1358, %v1359
      %v1361 = vrot.slane %v1232, 5
      %v1362 = vrot.slane %v1361, 4
      %v1363 = vrot.slane %v200, 5
      %v1364 = vsel %vm1269, %v1362, %v1363
      %v1365 = vrot.slane %v1363, 4
      %v1366 = vrot.slane %v234, 5
      %v1367 = vsel %vm1269, %v1365, %v1366
      %v1368 = vrot.slane %v1233, 5
      %v1369 = vrot.slane %v1368, 4
      %v1370 = vrot.slane %v202, 5
      %v1371 = vsel %vm1269, %v1369, %v1370
      %v1372 = vrot.slane %v1370, 4
      %v1373 = vrot.slane %v235, 5
      %v1374 = vsel %vm1269, %v1372, %v1373
      %v1375 = vrot.slane %v1234, 5
      %v1376 = vrot.slane %v1375, 4
      %v1377 = vrot.slane %v204, 5
      %v1378 = vsel %vm1269, %v1376, %v1377
      %v1379 = vrot.slane %v1377, 4
      %v1380 = vrot.slane %v236, 5
      %v1381 = vsel %vm1269, %v1379, %v1380
      %s1382 = scalar_lea.vmem %s1, 128
      %v1383 = vld [vmem:[%s1382] sm:$0xf]
      %v1384 = vld [vmem:[%s1382 + $0x4] sm:$0xf]
      %v1385 = vld [vmem:[%s1382 + $0x8] sm:$0xf]
      %v1386 = vld [vmem:[%s1382 + $0xc] sm:$0xf]
      %v1387 = vld [vmem:[%s1382 + $0x10] sm:$0xf]
      %v1388 = vld [vmem:[%s1382 + $0x14] sm:$0xf]
      %v1389 = vld [vmem:[%s1382 + $0x18] sm:$0xf]
      %v1390 = vld [vmem:[%s1382 + $0x1c] sm:$0xf]
      %v1391 = vld [vmem:[%s1382 + $0x20] sm:$0xf]
      %v1392 = vld [vmem:[%s1382 + $0x24] sm:$0xf]
      %v1393 = vld [vmem:[%s1382 + $0x28] sm:$0xf]
      %v1394 = vld [vmem:[%s1382 + $0x2c] sm:$0xf]
      %v1395 = vld [vmem:[%s1382 + $0x30] sm:$0xf]
      %v1396 = vld [vmem:[%s1382 + $0x34] sm:$0xf]
      %v1397 = vld [vmem:[%s1382 + $0x38] sm:$0xf]
      %v1398 = vld [vmem:[%s1382 + $0x3c] sm:$0xf]
      %v1399 = vunpack.c.l.b16 %v1273
      %v1400 = vunpack.c.l.b16 %v1276
      %v1401 = vunpack.c.l.b16 %v1280
      %v1402 = vunpack.c.l.b16 %v1283
      %v1403 = vunpack.c.l.b16 %v1287
      %v1404 = vunpack.c.l.b16 %v1290
      %v1405 = vunpack.c.l.b16 %v1294
      %v1406 = vunpack.c.l.b16 %v1297
      %v1407 = vunpack.c.l.b16 %v1301
      %v1408 = vunpack.c.l.b16 %v1304
      %v1409 = vunpack.c.l.b16 %v1308
      %v1410 = vunpack.c.l.b16 %v1311
      %v1411 = vunpack.c.l.b16 %v1315
      %v1412 = vunpack.c.l.b16 %v1318
      %v1413 = vunpack.c.l.b16 %v1322
      %v1414 = vunpack.c.l.b16 %v1325
      %v1415 = vunpack.c.l.b16 %v1329
      %v1416 = vunpack.c.l.b16 %v1332
      %v1417 = vunpack.c.l.b16 %v1336
      %v1418 = vunpack.c.l.b16 %v1339
      %v1419 = vunpack.c.l.b16 %v1343
      %v1420 = vunpack.c.l.b16 %v1346
      %v1421 = vunpack.c.l.b16 %v1350
      %v1422 = vunpack.c.l.b16 %v1353
      %v1423 = vunpack.c.l.b16 %v1357
      %v1424 = vunpack.c.l.b16 %v1360
      %v1425 = vunpack.c.l.b16 %v1364
      %v1426 = vunpack.c.l.b16 %v1367
      %v1427 = vunpack.c.l.b16 %v1371
      %v1428 = vunpack.c.l.b16 %v1374
      %v1429 = vunpack.c.l.b16 %v1378
      %v1430 = vunpack.c.l.b16 %v1381
      %v1431 = vpack.c.b16 %v1400, %v1399
      %v1432 = vpack.c.b16 %v1402, %v1401
      %v1433 = vpack.c.b16 %v1404, %v1403
      %v1434 = vpack.c.b16 %v1406, %v1405
      %v1435 = vpack.c.b16 %v1408, %v1407
      %v1436 = vpack.c.b16 %v1410, %v1409
      %v1437 = vpack.c.b16 %v1412, %v1411
      %v1438 = vpack.c.b16 %v1414, %v1413
      %v1439 = vpack.c.b16 %v1416, %v1415
      %v1440 = vpack.c.b16 %v1418, %v1417
      %v1441 = vpack.c.b16 %v1420, %v1419
      %v1442 = vpack.c.b16 %v1422, %v1421
      %v1443 = vpack.c.b16 %v1424, %v1423
      %v1444 = vpack.c.b16 %v1426, %v1425
      %v1445 = vpack.c.b16 %v1428, %v1427
      %v1446 = vpack.c.b16 %v1430, %v1429
      %v1479 = vunpack.c.l.b16 %v1383
      %v1480 = vunpack.c.l.b16 %v1384
      %v1481 = vunpack.c.l.b16 %v1385
      %v1482 = vunpack.c.l.b16 %v1386
      %v1483 = vunpack.c.l.b16 %v1387
      %v1484 = vunpack.c.l.b16 %v1388
      %v1485 = vunpack.c.l.b16 %v1389
      %v1486 = vunpack.c.l.b16 %v1390
      %v1487 = vunpack.c.l.b16 %v1391
      %v1488 = vunpack.c.l.b16 %v1392
      %v1489 = vunpack.c.l.b16 %v1393
      %v1490 = vunpack.c.l.b16 %v1394
      %v1491 = vunpack.c.l.b16 %v1395
      %v1492 = vunpack.c.l.b16 %v1396
      %v1493 = vunpack.c.l.b16 %v1397
      %v1494 = vunpack.c.l.b16 %v1398
      %v1495 = vpack.c.b16 %v1480, %v1479
      %v1496 = vpack.c.b16 %v1482, %v1481
      %v1497 = vpack.c.b16 %v1484, %v1483
      %v1498 = vpack.c.b16 %v1486, %v1485
      %v1499 = vpack.c.b16 %v1488, %v1487
      %v1500 = vpack.c.b16 %v1490, %v1489
      %v1501 = vpack.c.b16 %v1492, %v1491
      %v1502 = vpack.c.b16 %v1494, %v1493
      %1511 = vmatprep.subr.bf16.mxu0 0
      %1512 = vmatpush1.bf16.msra.mxu0 %v1495
      %1513 = vmatprep.subr.bf16.mxu0 0
      %1514 = vmatpush1.bf16.msra.mxu0 %v1496
      %1515 = vmatprep.subr.bf16.mxu0 0
      %1516 = vmatpush1.bf16.msra.mxu0 %v1497
      %1517 = vmatprep.subr.bf16.mxu0 0
      %1518 = vmatpush1.bf16.msra.mxu0 %v1498
      %1519 = vmatprep.subr.bf16.mxu0 0
      %1520 = vmatpush1.bf16.msra.mxu0 %v1499
      %1521 = vmatprep.subr.bf16.mxu0 0
      %1522 = vmatpush1.bf16.msra.mxu0 %v1500
      %1523 = vmatprep.subr.bf16.mxu0 0
      %1524 = vmatpush1.bf16.msra.mxu0 %v1501
      %1525 = vmatprep.subr.bf16.mxu0 0
      %1526 = vmatpush1.bf16.msra.mxu0 %v1502
      %1527 = vmatprep.subr.bf16.mxu0 0
      %1528 = vmatpush1.bf16.msra.mxu0 0
      %1529 = vmatprep.subr.bf16.mxu0 0
      %1530 = vmatpush1.bf16.msra.mxu0 0
      %1531 = vmatprep.subr.bf16.mxu0 0
      %1532 = vmatpush1.bf16.msra.mxu0 0
      %1533 = vmatprep.subr.bf16.mxu0 0
      %1534 = vmatpush1.bf16.msra.mxu0 0
      %1535 = vmatprep.subr.bf16.mxu0 0
      %1536 = vmatpush1.bf16.msra.mxu0 0
      %1537 = vmatprep.subr.bf16.mxu0 0
      %1538 = vmatpush1.bf16.msra.mxu0 0
      %1539 = vmatprep.subr.bf16.mxu0 0
      %1540 = vmatpush1.bf16.msra.mxu0 0
      %1541 = vmatprep.subr.bf16.mxu0 0
      %1542 = vmatpush1.bf16.msra.mxu0 0
      %1543 = vmatprep.mubr.bf16.mxu0 0
      %1544 = vmatmul.mubr.bf16.gmra.mrb[0].mxu0 %v1431
      %v1545 = vpop.f32.mrb[0].mxu0
      %v1546 = vadd.f32 0.0, %v1545
      %v1547 = vpop.f32.mrb[0].mxu0
      %v1548 = vpop.f32.mrb[0].mxu0
      %v1549 = vadd.f32 0.0, %v1548
      %v1550 = vpop.f32.mrb[0].mxu0
      %1551 = vmatprep.mubr.bf16.mxu0 0
      %1552 = vmatmul.mubr.bf16.gmra.mrb[0].mxu0 %v1432
      %v1553 = vpop.f32.mrb[0].mxu0
      %v1554 = vadd.f32 0.0, %v1553
      %v1555 = vpop.f32.mrb[0].mxu0
      %v1556 = vpop.f32.mrb[0].mxu0
      %v1557 = vadd.f32 0.0, %v1556
      %v1558 = vpop.f32.mrb[0].mxu0
      %1559 = vmatprep.mubr.bf16.mxu0 0
      %1560 = vmatmul.mubr.bf16.gmra.mrb[0].mxu0 %v1433
      %v1561 = vpop.f32.mrb[0].mxu0
      %v1562 = vadd.f32 0.0, %v1561
      %v1563 = vpop.f32.mrb[0].mxu0
      %v1564 = vpop.f32.mrb[0].mxu0
      %v1565 = vadd.f32 0.0, %v1564
      %v1566 = vpop.f32.mrb[0].mxu0
      %1567 = vmatprep.mubr.bf16.mxu0 0
      %1568 = vmatmul.mubr.bf16.gmra.mrb[0].mxu0 %v1434
      %v1569 = vpop.f32.mrb[0].mxu0
      %v1570 = vadd.f32 0.0, %v1569
      %v1571 = vpop.f32.mrb[0].mxu0
      %v1572 = vpop.f32.mrb[0].mxu0
      %v1573 = vadd.f32 0.0, %v1572
      %v1574 = vpop.f32.mrb[0].mxu0
      %1575 = vmatprep.mubr.bf16.mxu0 0
      %1576 = vmatmul.mubr.bf16.gmra.mrb[0].mxu0 %v1435
      %v1577 = vpop.f32.mrb[0].mxu0
      %v1578 = vadd.f32 0.0, %v1577
      %v1579 = vpop.f32.mrb[0].mxu0
      %v1580 = vpop.f32.mrb[0].mxu0
      %v1581 = vadd.f32 0.0, %v1580
      %v1582 = vpop.f32.mrb[0].mxu0
      %1583 = vmatprep.mubr.bf16.mxu0 0
      %1584 = vmatmul.mubr.bf16.gmra.mrb[0].mxu0 %v1436
      %v1585 = vpop.f32.mrb[0].mxu0
      %v1586 = vadd.f32 0.0, %v1585
      %v1587 = vpop.f32.mrb[0].mxu0
      %v1588 = vpop.f32.mrb[0].mxu0
      %v1589 = vadd.f32 0.0, %v1588
      %v1590 = vpop.f32.mrb[0].mxu0
      %1591 = vmatprep.mubr.bf16.mxu0 0
      %1592 = vmatmul.mubr.bf16.gmra.mrb[0].mxu0 %v1437
      %v1593 = vpop.f32.mrb[0].mxu0
      %v1594 = vadd.f32 0.0, %v1593
      %v1595 = vpop.f32.mrb[0].mxu0
      %v1596 = vpop.f32.mrb[0].mxu0
      %v1597 = vadd.f32 0.0, %v1596
      %v1598 = vpop.f32.mrb[0].mxu0
      %1599 = vmatprep.mubr.bf16.mxu0 0
      %1600 = vmatmul.mubr.bf16.gmra.mrb[0].mxu0 %v1438
      %v1601 = vpop.f32.mrb[0].mxu0
      %v1602 = vadd.f32 0.0, %v1601
      %v1603 = vpop.f32.mrb[0].mxu0
      %v1604 = vpop.f32.mrb[0].mxu0
      %v1605 = vadd.f32 0.0, %v1604
      %v1606 = vpop.f32.mrb[0].mxu0
      %1607 = vmatprep.mubr.bf16.mxu0 0
      %1608 = vmatmul.mubr.bf16.gmra.mrb[0].mxu0 %v1439
      %v1609 = vpop.f32.mrb[0].mxu0
      %v1610 = vadd.f32 0.0, %v1609
      %v1611 = vpop.f32.mrb[0].mxu0
      %v1612 = vpop.f32.mrb[0].mxu0
      %v1613 = vadd.f32 0.0, %v1612
      %v1614 = vpop.f32.mrb[0].mxu0
      %1615 = vmatprep.mubr.bf16.mxu0 0
      %1616 = vmatmul.mubr.bf16.gmra.mrb[0].mxu0 %v1440
      %v1617 = vpop.f32.mrb[0].mxu0
      %v1618 = vadd.f32 0.0, %v1617
      %v1619 = vpop.f32.mrb[0].mxu0
      %v1620 = vpop.f32.mrb[0].mxu0
      %v1621 = vadd.f32 0.0, %v1620
      %v1622 = vpop.f32.mrb[0].mxu0
      %1623 = vmatprep.mubr.bf16.mxu0 0
      %1624 = vmatmul.mubr.bf16.gmra.mrb[0].mxu0 %v1441
      %v1625 = vpop.f32.mrb[0].mxu0
      %v1626 = vadd.f32 0.0, %v1625
      %v1627 = vpop.f32.mrb[0].mxu0
      %v1628 = vpop.f32.mrb[0].mxu0
      %v1629 = vadd.f32 0.0, %v1628
      %v1630 = vpop.f32.mrb[0].mxu0
      %1631 = vmatprep.mubr.bf16.mxu0 0
      %1632 = vmatmul.mubr.bf16.gmra.mrb[0].mxu0 %v1442
      %v1633 = vpop.f32.mrb[0].mxu0
      %v1634 = vadd.f32 0.0, %v1633
      %v1635 = vpop.f32.mrb[0].mxu0
      %v1636 = vpop.f32.mrb[0].mxu0
      %v1637 = vadd.f32 0.0, %v1636
      %v1638 = vpop.f32.mrb[0].mxu0
      %1639 = vmatprep.mubr.bf16.mxu0 0
      %1640 = vmatmul.mubr.bf16.gmra.mrb[0].mxu0 %v1443
      %v1641 = vpop.f32.mrb[0].mxu0
      %v1642 = vadd.f32 0.0, %v1641
      %v1643 = vpop.f32.mrb[0].mxu0
      %v1644 = vpop.f32.mrb[0].mxu0
      %v1645 = vadd.f32 0.0, %v1644
      %v1646 = vpop.f32.mrb[0].mxu0
      %1647 = vmatprep.mubr.bf16.mxu0 0
      %1648 = vmatmul.mubr.bf16.gmra.mrb[0].mxu0 %v1444
      %v1649 = vpop.f32.mrb[0].mxu0
      %v1650 = vadd.f32 0.0, %v1649
      %v1651 = vpop.f32.mrb[0].mxu0
      %v1652 = vpop.f32.mrb[0].mxu0
      %v1653 = vadd.f32 0.0, %v1652
      %v1654 = vpop.f32.mrb[0].mxu0
      %1655 = vmatprep.mubr.bf16.mxu0 0
      %1656 = vmatmul.mubr.bf16.gmra.mrb[0].mxu0 %v1445
      %v1657 = vpop.f32.mrb[0].mxu0
      %v1658 = vadd.f32 0.0, %v1657
      %v1659 = vpop.f32.mrb[0].mxu0
      %v1660 = vpop.f32.mrb[0].mxu0
      %v1661 = vadd.f32 0.0, %v1660
      %v1662 = vpop.f32.mrb[0].mxu0
      %1663 = vmatprep.mubr.bf16.mxu0 0
      %1664 = vmatmul.mubr.bf16.gmra.mrb[0].mxu0 %v1446
      %v1665 = vpop.f32.mrb[0].mxu0
      %v1666 = vadd.f32 0.0, %v1665
      %v1667 = vpop.f32.mrb[0].mxu0
      %v1668 = vpop.f32.mrb[0].mxu0
      %v1669 = vadd.f32 0.0, %v1668
      %v1670 = vpop.f32.mrb[0].mxu0
      %1671 = vdwg.mxu0
      %v1672 = vadd.f32 %v1093, %v1546
      %v1673 = vadd.f32 %v1096, %v1549
      %v1674 = vadd.f32 %v1101, %v1554
      %v1675 = vadd.f32 %v1104, %v1557
      %v1676 = vadd.f32 %v1109, %v1562
      %v1677 = vadd.f32 %v1112, %v1565
      %v1678 = vadd.f32 %v1117, %v1570
      %v1679 = vadd.f32 %v1120, %v1573
      %v1680 = vadd.f32 %v1125, %v1578
      %v1681 = vadd.f32 %v1128, %v1581
      %v1682 = vadd.f32 %v1133, %v1586
      %v1683 = vadd.f32 %v1136, %v1589
      %v1684 = vadd.f32 %v1141, %v1594
      %v1685 = vadd.f32 %v1144, %v1597
      %v1686 = vadd.f32 %v1149, %v1602
      %v1687 = vadd.f32 %v1152, %v1605
      %v1688 = vadd.f32 %v1157, %v1610
      %v1689 = vadd.f32 %v1160, %v1613
      %v1690 = vadd.f32 %v1165, %v1618
      %v1691 = vadd.f32 %v1168, %v1621
      %v1692 = vadd.f32 %v1173, %v1626
      %v1693 = vadd.f32 %v1176, %v1629
      %v1694 = vadd.f32 %v1181, %v1634
      %v1695 = vadd.f32 %v1184, %v1637
      %v1696 = vadd.f32 %v1189, %v1642
      %v1697 = vadd.f32 %v1192, %v1645
      %v1698 = vadd.f32 %v1197, %v1650
      %v1699 = vadd.f32 %v1200, %v1653
      %v1700 = vadd.f32 %v1205, %v1658
      %v1701 = vadd.f32 %v1208, %v1661
      %v1702 = vadd.f32 %v1213, %v1666
      %v1703 = vadd.f32 %v1216, %v1669
      %s1704 = scalar_lea.vmem %s165, 12
      %v1705 = vld [vmem:[%s1704] sm:$0xf]
      %v1706 = vld [vmem:[%s1704 + $0x4] sm:$0xf]
      %v1707 = vld [vmem:[%s1704 + $0xc] sm:$0xf]
      %v1708 = vld [vmem:[%s1704 + $0x10] sm:$0xf]
      %v1709 = vld [vmem:[%s1704 + $0x18] sm:$0xf]
      %v1710 = vld [vmem:[%s1704 + $0x1c] sm:$0xf]
      %v1711 = vld [vmem:[%s1704 + $0x24] sm:$0xf]
      %v1712 = vld [vmem:[%s1704 + $0x28] sm:$0xf]
      %v1713 = vld [vmem:[%s1704 + $0x30] sm:$0xf]
      %v1714 = vld [vmem:[%s1704 + $0x34] sm:$0xf]
      %v1715 = vld [vmem:[%s1704 + $0x3c] sm:$0xf]
      %v1716 = vld [vmem:[%s1704 + $0x40] sm:$0xf]
      %v1717 = vld [vmem:[%s1704 + $0x48] sm:$0xf]
      %v1718 = vld [vmem:[%s1704 + $0x4c] sm:$0xf]
      %v1719 = vld [vmem:[%s1704 + $0x54] sm:$0xf]
      %v1720 = vld [vmem:[%s1704 + $0x58] sm:$0xf]
      %v1721 = vld [vmem:[%s1704 + $0x60] sm:$0xf]
      %v1722 = vld [vmem:[%s1704 + $0x64] sm:$0xf]
      %v1723 = vld [vmem:[%s1704 + $0x6c] sm:$0xf]
      %v1724 = vld [vmem:[%s1704 + $0x70] sm:$0xf]
      %v1725 = vld [vmem:[%s1704 + $0x78] sm:$0xf]
      %v1726 = vld [vmem:[%s1704 + $0x7c] sm:$0xf]
      %v1727 = vld [vmem:[%s1704 + $0x84] sm:$0xf]
      %v1728 = vld [vmem:[%s1704 + $0x88] sm:$0xf]
      %v1729 = vld [vmem:[%s1704 + $0x90] sm:$0xf]
      %v1730 = vld [vmem:[%s1704 + $0x94] sm:$0xf]
      %v1731 = vld [vmem:[%s1704 + $0x9c] sm:$0xf]
      %v1732 = vld [vmem:[%s1704 + $0xa0] sm:$0xf]
      %v1733 = vld [vmem:[%s1704 + $0xa8] sm:$0xf]
      %v1734 = vld [vmem:[%s1704 + $0xac] sm:$0xf]
      %v1735 = vld [vmem:[%s1704 + $0xb4] sm:$0xf]
      %v1736 = vld [vmem:[%s1704 + $0xb8] sm:$0xf]
      %s1737 = scalar_lea.vmem %s1, 192
      %v1738 = vld [vmem:[%s1737] sm:$0xf]
      %v1739 = vld [vmem:[%s1737 + $0x4] sm:$0xf]
      %v1740 = vld [vmem:[%s1737 + $0x8] sm:$0xf]
      %v1741 = vld [vmem:[%s1737 + $0xc] sm:$0xf]
      %v1742 = vld [vmem:[%s1737 + $0x10] sm:$0xf]
      %v1743 = vld [vmem:[%s1737 + $0x14] sm:$0xf]
      %v1744 = vld [vmem:[%s1737 + $0x18] sm:$0xf]
      %v1745 = vld [vmem:[%s1737 + $0x1c] sm:$0xf]
      %v1746 = vld [vmem:[%s1737 + $0x20] sm:$0xf]
      %v1747 = vld [vmem:[%s1737 + $0x24] sm:$0xf]
      %v1748 = vld [vmem:[%s1737 + $0x28] sm:$0xf]
      %v1749 = vld [vmem:[%s1737 + $0x2c] sm:$0xf]
      %v1750 = vld [vmem:[%s1737 + $0x30] sm:$0xf]
      %v1751 = vld [vmem:[%s1737 + $0x34] sm:$0xf]
      %v1752 = vld [vmem:[%s1737 + $0x38] sm:$0xf]
      %v1753 = vld [vmem:[%s1737 + $0x3c] sm:$0xf]
      %v1786 = vunpack.c.l.b16 %v1705
      %v1787 = vunpack.c.l.b16 %v1706
      %v1788 = vunpack.c.l.b16 %v1707
      %v1789 = vunpack.c.l.b16 %v1708
      %v1790 = vunpack.c.l.b16 %v1709
      %v1791 = vunpack.c.l.b16 %v1710
      %v1792 = vunpack.c.l.b16 %v1711
      %v1793 = vunpack.c.l.b16 %v1712
      %v1794 = vunpack.c.l.b16 %v1713
      %v1795 = vunpack.c.l.b16 %v1714
      %v1796 = vunpack.c.l.b16 %v1715
      %v1797 = vunpack.c.l.b16 %v1716
      %v1798 = vunpack.c.l.b16 %v1717
      %v1799 = vunpack.c.l.b16 %v1718
      %v1800 = vunpack.c.l.b16 %v1719
      %v1801 = vunpack.c.l.b16 %v1720
      %v1802 = vunpack.c.l.b16 %v1721
      %v1803 = vunpack.c.l.b16 %v1722
      %v1804 = vunpack.c.l.b16 %v1723
      %v1805 = vunpack.c.l.b16 %v1724
      %v1806 = vunpack.c.l.b16 %v1725
      %v1807 = vunpack.c.l.b16 %v1726
      %v1808 = vunpack.c.l.b16 %v1727
      %v1809 = vunpack.c.l.b16 %v1728
      %v1810 = vunpack.c.l.b16 %v1729
      %v1811 = vunpack.c.l.b16 %v1730
      %v1812 = vunpack.c.l.b16 %v1731
      %v1813 = vunpack.c.l.b16 %v1732
      %v1814 = vunpack.c.l.b16 %v1733
      %v1815 = vunpack.c.l.b16 %v1734
      %v1816 = vunpack.c.l.b16 %v1735
      %v1817 = vunpack.c.l.b16 %v1736
      %v1818 = vpack.c.b16 %v1787, %v1786
      %v1819 = vpack.c.b16 %v1789, %v1788
      %v1820 = vpack.c.b16 %v1791, %v1790
      %v1821 = vpack.c.b16 %v1793, %v1792
      %v1822 = vpack.c.b16 %v1795, %v1794
      %v1823 = vpack.c.b16 %v1797, %v1796
      %v1824 = vpack.c.b16 %v1799, %v1798
      %v1825 = vpack.c.b16 %v1801, %v1800
      %v1826 = vpack.c.b16 %v1803, %v1802
      %v1827 = vpack.c.b16 %v1805, %v1804
      %v1828 = vpack.c.b16 %v1807, %v1806
      %v1829 = vpack.c.b16 %v1809, %v1808
      %v1830 = vpack.c.b16 %v1811, %v1810
      %v1831 = vpack.c.b16 %v1813, %v1812
      %v1832 = vpack.c.b16 %v1815, %v1814
      %v1833 = vpack.c.b16 %v1817, %v1816
      %v1866 = vunpack.c.l.b16 %v1738
      %v1867 = vunpack.c.l.b16 %v1739
      %v1868 = vunpack.c.l.b16 %v1740
      %v1869 = vunpack.c.l.b16 %v1741
      %v1870 = vunpack.c.l.b16 %v1742
      %v1871 = vunpack.c.l.b16 %v1743
      %v1872 = vunpack.c.l.b16 %v1744
      %v1873 = vunpack.c.l.b16 %v1745
      %v1874 = vunpack.c.l.b16 %v1746
      %v1875 = vunpack.c.l.b16 %v1747
      %v1876 = vunpack.c.l.b16 %v1748
      %v1877 = vunpack.c.l.b16 %v1749
      %v1878 = vunpack.c.l.b16 %v1750
      %v1879 = vunpack.c.l.b16 %v1751
      %v1880 = vunpack.c.l.b16 %v1752
      %v1881 = vunpack.c.l.b16 %v1753
      %v1882 = vpack.c.b16 %v1867, %v1866
      %v1883 = vpack.c.b16 %v1869, %v1868
      %v1884 = vpack.c.b16 %v1871, %v1870
      %v1885 = vpack.c.b16 %v1873, %v1872
      %v1886 = vpack.c.b16 %v1875, %v1874
      %v1887 = vpack.c.b16 %v1877, %v1876
      %v1888 = vpack.c.b16 %v1879, %v1878
      %v1889 = vpack.c.b16 %v1881, %v1880
      %1898 = vmatprep.subr.bf16.mxu0 0
      %1899 = vmatpush1.bf16.msra.mxu0 %v1882
      %1900 = vmatprep.subr.bf16.mxu0 0
      %1901 = vmatpush1.bf16.msra.mxu0 %v1883
      %1902 = vmatprep.subr.bf16.mxu0 0
      %1903 = vmatpush1.bf16.msra.mxu0 %v1884
      %1904 = vmatprep.subr.bf16.mxu0 0
      %1905 = vmatpush1.bf16.msra.mxu0 %v1885
      %1906 = vmatprep.subr.bf16.mxu0 0
      %1907 = vmatpush1.bf16.msra.mxu0 %v1886
      %1908 = vmatprep.subr.bf16.mxu0 0
      %1909 = vmatpush1.bf16.msra.mxu0 %v1887
      %1910 = vmatprep.subr.bf16.mxu0 0
      %1911 = vmatpush1.bf16.msra.mxu0 %v1888
      %1912 = vmatprep.subr.bf16.mxu0 0
      %1913 = vmatpush1.bf16.msra.mxu0 %v1889
      %1914 = vmatprep.subr.bf16.mxu0 0
      %1915 = vmatpush1.bf16.msra.mxu0 0
      %1916 = vmatprep.subr.bf16.mxu0 0
      %1917 = vmatpush1.bf16.msra.mxu0 0
      %1918 = vmatprep.subr.bf16.mxu0 0
      %1919 = vmatpush1.bf16.msra.mxu0 0
      %1920 = vmatprep.subr.bf16.mxu0 0
      %1921 = vmatpush1.bf16.msra.mxu0 0
      %1922 = vmatprep.subr.bf16.mxu0 0
      %1923 = vmatpush1.bf16.msra.mxu0 0
      %1924 = vmatprep.subr.bf16.mxu0 0
      %1925 = vmatpush1.bf16.msra.mxu0 0
      %1926 = vmatprep.subr.bf16.mxu0 0
      %1927 = vmatpush1.bf16.msra.mxu0 0
      %1928 = vmatprep.subr.bf16.mxu0 0
      %1929 = vmatpush1.bf16.msra.mxu0 0
      %1930 = vmatprep.mubr.bf16.mxu0 0
      %1931 = vmatmul.mubr.bf16.gmra.mrb[0].mxu0 %v1818
      %v1932 = vpop.f32.mrb[0].mxu0
      %v1933 = vadd.f32 0.0, %v1932
      %v1934 = vpop.f32.mrb[0].mxu0
      %v1935 = vpop.f32.mrb[0].mxu0
      %v1936 = vadd.f32 0.0, %v1935
      %v1937 = vpop.f32.mrb[0].mxu0
      %1938 = vmatprep.mubr.bf16.mxu0 0
      %1939 = vmatmul.mubr.bf16.gmra.mrb[0].mxu0 %v1819
      %v1940 = vpop.f32.mrb[0].mxu0
      %v1941 = vadd.f32 0.0, %v1940
      %v1942 = vpop.f32.mrb[0].mxu0
      %v1943 = vpop.f32.mrb[0].mxu0
      %v1944 = vadd.f32 0.0, %v1943
      %v1945 = vpop.f32.mrb[0].mxu0
      %1946 = vmatprep.mubr.bf16.mxu0 0
      %1947 = vmatmul.mubr.bf16.gmra.mrb[0].mxu0 %v1820
      %v1948 = vpop.f32.mrb[0].mxu0
      %v1949 = vadd.f32 0.0, %v1948
      %v1950 = vpop.f32.mrb[0].mxu0
      %v1951 = vpop.f32.mrb[0].mxu0
      %v1952 = vadd.f32 0.0, %v1951
      %v1953 = vpop.f32.mrb[0].mxu0
      %1954 = vmatprep.mubr.bf16.mxu0 0
      %1955 = vmatmul.mubr.bf16.gmra.mrb[0].mxu0 %v1821
      %v1956 = vpop.f32.mrb[0].mxu0
      %v1957 = vadd.f32 0.0, %v1956
      %v1958 = vpop.f32.mrb[0].mxu0
      %v1959 = vpop.f32.mrb[0].mxu0
      %v1960 = vadd.f32 0.0, %v1959
      %v1961 = vpop.f32.mrb[0].mxu0
      %1962 = vmatprep.mubr.bf16.mxu0 0
      %1963 = vmatmul.mubr.bf16.gmra.mrb[0].mxu0 %v1822
      %v1964 = vpop.f32.mrb[0].mxu0
      %v1965 = vadd.f32 0.0, %v1964
      %v1966 = vpop.f32.mrb[0].mxu0
      %v1967 = vpop.f32.mrb[0].mxu0
      %v1968 = vadd.f32 0.0, %v1967
      %v1969 = vpop.f32.mrb[0].mxu0
      %1970 = vmatprep.mubr.bf16.mxu0 0
      %1971 = vmatmul.mubr.bf16.gmra.mrb[0].mxu0 %v1823
      %v1972 = vpop.f32.mrb[0].mxu0
      %v1973 = vadd.f32 0.0, %v1972
      %v1974 = vpop.f32.mrb[0].mxu0
      %v1975 = vpop.f32.mrb[0].mxu0
      %v1976 = vadd.f32 0.0, %v1975
      %v1977 = vpop.f32.mrb[0].mxu0
      %1978 = vmatprep.mubr.bf16.mxu0 0
      %1979 = vmatmul.mubr.bf16.gmra.mrb[0].mxu0 %v1824
      %v1980 = vpop.f32.mrb[0].mxu0
      %v1981 = vadd.f32 0.0, %v1980
      %v1982 = vpop.f32.mrb[0].mxu0
      %v1983 = vpop.f32.mrb[0].mxu0
      %v1984 = vadd.f32 0.0, %v1983
      %v1985 = vpop.f32.mrb[0].mxu0
      %1986 = vmatprep.mubr.bf16.mxu0 0
      %1987 = vmatmul.mubr.bf16.gmra.mrb[0].mxu0 %v1825
      %v1988 = vpop.f32.mrb[0].mxu0
      %v1989 = vadd.f32 0.0, %v1988
      %v1990 = vpop.f32.mrb[0].mxu0
      %v1991 = vpop.f32.mrb[0].mxu0
      %v1992 = vadd.f32 0.0, %v1991
      %v1993 = vpop.f32.mrb[0].mxu0
      %1994 = vmatprep.mubr.bf16.mxu0 0
      %1995 = vmatmul.mubr.bf16.gmra.mrb[0].mxu0 %v1826
      %v1996 = vpop.f32.mrb[0].mxu0
      %v1997 = vadd.f32 0.0, %v1996
      %v1998 = vpop.f32.mrb[0].mxu0
      %v1999 = vpop.f32.mrb[0].mxu0
      %v2000 = vadd.f32 0.0, %v1999
      %v2001 = vpop.f32.mrb[0].mxu0
      %2002 = vmatprep.mubr.bf16.mxu0 0
      %2003 = vmatmul.mubr.bf16.gmra.mrb[0].mxu0 %v1827
      %v2004 = vpop.f32.mrb[0].mxu0
      %v2005 = vadd.f32 0.0, %v2004
      %v2006 = vpop.f32.mrb[0].mxu0
      %v2007 = vpop.f32.mrb[0].mxu0
      %v2008 = vadd.f32 0.0, %v2007
      %v2009 = vpop.f32.mrb[0].mxu0
      %2010 = vmatprep.mubr.bf16.mxu0 0
      %2011 = vmatmul.mubr.bf16.gmra.mrb[0].mxu0 %v1828
      %v2012 = vpop.f32.mrb[0].mxu0
      %v2013 = vadd.f32 0.0, %v2012
      %v2014 = vpop.f32.mrb[0].mxu0
      %v2015 = vpop.f32.mrb[0].mxu0
      %v2016 = vadd.f32 0.0, %v2015
      %v2017 = vpop.f32.mrb[0].mxu0
      %2018 = vmatprep.mubr.bf16.mxu0 0
      %2019 = vmatmul.mubr.bf16.gmra.mrb[0].mxu0 %v1829
      %v2020 = vpop.f32.mrb[0].mxu0
      %v2021 = vadd.f32 0.0, %v2020
      %v2022 = vpop.f32.mrb[0].mxu0
      %v2023 = vpop.f32.mrb[0].mxu0
      %v2024 = vadd.f32 0.0, %v2023
      %v2025 = vpop.f32.mrb[0].mxu0
      %2026 = vmatprep.mubr.bf16.mxu0 0
      %2027 = vmatmul.mubr.bf16.gmra.mrb[0].mxu0 %v1830
      %v2028 = vpop.f32.mrb[0].mxu0
      %v2029 = vadd.f32 0.0, %v2028
      %v2030 = vpop.f32.mrb[0].mxu0
      %v2031 = vpop.f32.mrb[0].mxu0
      %v2032 = vadd.f32 0.0, %v2031
      %v2033 = vpop.f32.mrb[0].mxu0
      %2034 = vmatprep.mubr.bf16.mxu0 0
      %2035 = vmatmul.mubr.bf16.gmra.mrb[0].mxu0 %v1831
      %v2036 = vpop.f32.mrb[0].mxu0
      %v2037 = vadd.f32 0.0, %v2036
      %v2038 = vpop.f32.mrb[0].mxu0
      %v2039 = vpop.f32.mrb[0].mxu0
      %v2040 = vadd.f32 0.0, %v2039
      %v2041 = vpop.f32.mrb[0].mxu0
      %2042 = vmatprep.mubr.bf16.mxu0 0
      %2043 = vmatmul.mubr.bf16.gmra.mrb[0].mxu0 %v1832
      %v2044 = vpop.f32.mrb[0].mxu0
      %v2045 = vadd.f32 0.0, %v2044
      %v2046 = vpop.f32.mrb[0].mxu0
      %v2047 = vpop.f32.mrb[0].mxu0
      %v2048 = vadd.f32 0.0, %v2047
      %v2049 = vpop.f32.mrb[0].mxu0
      %2050 = vmatprep.mubr.bf16.mxu0 0
      %2051 = vmatmul.mubr.bf16.gmra.mrb[0].mxu0 %v1833
      %v2052 = vpop.f32.mrb[0].mxu0
      %v2053 = vadd.f32 0.0, %v2052
      %v2054 = vpop.f32.mrb[0].mxu0
      %v2055 = vpop.f32.mrb[0].mxu0
      %v2056 = vadd.f32 0.0, %v2055
      %v2057 = vpop.f32.mrb[0].mxu0
      %2058 = vdwg.mxu0
      %v2059 = vadd.f32 %v1672, %v1933
      %v2060 = vadd.f32 %v1673, %v1936
      %v2061 = vadd.f32 %v1674, %v1941
      %v2062 = vadd.f32 %v1675, %v1944
      %v2063 = vadd.f32 %v1676, %v1949
      %v2064 = vadd.f32 %v1677, %v1952
      %v2065 = vadd.f32 %v1678, %v1957
      %v2066 = vadd.f32 %v1679, %v1960
      %v2067 = vadd.f32 %v1680, %v1965
      %v2068 = vadd.f32 %v1681, %v1968
      %v2069 = vadd.f32 %v1682, %v1973
      %v2070 = vadd.f32 %v1683, %v1976
      %v2071 = vadd.f32 %v1684, %v1981
      %v2072 = vadd.f32 %v1685, %v1984
      %v2073 = vadd.f32 %v1686, %v1989
      %v2074 = vadd.f32 %v1687, %v1992
      %v2075 = vadd.f32 %v1688, %v1997
      %v2076 = vadd.f32 %v1689, %v2000
      %v2077 = vadd.f32 %v1690, %v2005
      %v2078 = vadd.f32 %v1691, %v2008
      %v2079 = vadd.f32 %v1692, %v2013
      %v2080 = vadd.f32 %v1693, %v2016
      %v2081 = vadd.f32 %v1694, %v2021
      %v2082 = vadd.f32 %v1695, %v2024
      %v2083 = vadd.f32 %v1696, %v2029
      %v2084 = vadd.f32 %v1697, %v2032
      %v2085 = vadd.f32 %v1698, %v2037
      %v2086 = vadd.f32 %v1699, %v2040
      %v2087 = vadd.f32 %v1700, %v2045
      %v2088 = vadd.f32 %v1701, %v2048
      %v2089 = vadd.f32 %v1702, %v2053
      %v2090 = vadd.f32 %v1703, %v2056
      %v2091 = vld [vmem:[%s1704] sm:$0xf]
      %v2092 = vld [vmem:[%s1704 + $0x4] sm:$0xf]
      %v2093 = vld [vmem:[%s1704 + $0x8] sm:$0x1]
      %v2094 = vld [vmem:[%s1704 + $0xc] sm:$0xf]
      %v2095 = vld [vmem:[%s1704 + $0x10] sm:$0xf]
      %v2096 = vld [vmem:[%s1704 + $0x14] sm:$0x1]
      %v2097 = vld [vmem:[%s1704 + $0x18] sm:$0xf]
      %v2098 = vld [vmem:[%s1704 + $0x1c] sm:$0xf]
      %v2099 = vld [vmem:[%s1704 + $0x20] sm:$0x1]
      %v2100 = vld [vmem:[%s1704 + $0x24] sm:$0xf]
      %v2101 = vld [vmem:[%s1704 + $0x28] sm:$0xf]
      %v2102 = vld [vmem:[%s1704 + $0x2c] sm:$0x1]
      %v2103 = vld [vmem:[%s1704 + $0x30] sm:$0xf]
      %v2104 = vld [vmem:[%s1704 + $0x34] sm:$0xf]
      %v2105 = vld [vmem:[%s1704 + $0x38] sm:$0x1]
      %v2106 = vld [vmem:[%s1704 + $0x3c] sm:$0xf]
      %v2107 = vld [vmem:[%s1704 + $0x40] sm:$0xf]
      %v2108 = vld [vmem:[%s1704 + $0x44] sm:$0x1]
      %v2109 = vld [vmem:[%s1704 + $0x48] sm:$0xf]
      %v2110 = vld [vmem:[%s1704 + $0x4c] sm:$0xf]
      %v2111 = vld [vmem:[%s1704 + $0x50] sm:$0x1]
      %v2112 = vld [vmem:[%s1704 + $0x54] sm:$0xf]
      %v2113 = vld [vmem:[%s1704 + $0x58] sm:$0xf]
      %v2114 = vld [vmem:[%s1704 + $0x5c] sm:$0x1]
      %v2115 = vld [vmem:[%s1704 + $0x60] sm:$0xf]
      %v2116 = vld [vmem:[%s1704 + $0x64] sm:$0xf]
      %v2117 = vld [vmem:[%s1704 + $0x68] sm:$0x1]
      %v2118 = vld [vmem:[%s1704 + $0x6c] sm:$0xf]
      %v2119 = vld [vmem:[%s1704 + $0x70] sm:$0xf]
      %v2120 = vld [vmem:[%s1704 + $0x74] sm:$0x1]
      %v2121 = vld [vmem:[%s1704 + $0x78] sm:$0xf]
      %v2122 = vld [vmem:[%s1704 + $0x7c] sm:$0xf]
      %v2123 = vld [vmem:[%s1704 + $0x80] sm:$0x1]
      %v2124 = vld [vmem:[%s1704 + $0x84] sm:$0xf]
      %v2125 = vld [vmem:[%s1704 + $0x88] sm:$0xf]
      %v2126 = vld [vmem:[%s1704 + $0x8c] sm:$0x1]
      %v2127 = vld [vmem:[%s1704 + $0x90] sm:$0xf]
      %v2128 = vld [vmem:[%s1704 + $0x94] sm:$0xf]
      %v2129 = vld [vmem:[%s1704 + $0x98] sm:$0x1]
      %v2130 = vld [vmem:[%s1704 + $0x9c] sm:$0xf]
      %v2131 = vld [vmem:[%s1704 + $0xa0] sm:$0xf]
      %v2132 = vld [vmem:[%s1704 + $0xa4] sm:$0x1]
      %v2133 = vld [vmem:[%s1704 + $0xa8] sm:$0xf]
      %v2134 = vld [vmem:[%s1704 + $0xac] sm:$0xf]
      %v2135 = vld [vmem:[%s1704 + $0xb0] sm:$0x1]
      %v2136 = vld [vmem:[%s1704 + $0xb4] sm:$0xf]
      %v2137 = vld [vmem:[%s1704 + $0xb8] sm:$0xf]
      %v2138 = vld [vmem:[%s1704 + $0xbc] sm:$0x1]
      %v2140 = vshrl.u32 %v2091, 16
      %v2142 = vrot.slane %v2140, 4
      %v2143 = vshll.u32 %v2091, 16
      %v2145 = vrot.slane %v2143, 5
      %v2146 = vor.u32 %v2142, %v2145
      %v2147 = vrot.slane %v2146, 4
      %v2149 = vshll.u32 %v2092, 16
      %v2151 = vrot.slane %v2149, 5
      %v2152 = vsel %vm239, %v2147, %v2151
      %v2153 = vshrl.u32 %v2092, 16
      %v2155 = vrot.slane %v2153, 4
      %v2156 = vor.u32 %v2155, %v2151
      %v2157 = vrot.slane %v2156, 4
      %v2159 = vshll.u32 %v2093, 16
      %v2161 = vrot.slane %v2159, 5
      %v2162 = vsel %vm239, %v2157, %v2161
      %v2164 = vshrl.u32 %v2094, 16
      %v2166 = vrot.slane %v2164, 4
      %v2167 = vshll.u32 %v2094, 16
      %v2169 = vrot.slane %v2167, 5
      %v2170 = vor.u32 %v2166, %v2169
      %v2171 = vrot.slane %v2170, 4
      %v2173 = vshll.u32 %v2095, 16
      %v2175 = vrot.slane %v2173, 5
      %v2176 = vsel %vm239, %v2171, %v2175
      %v2177 = vshrl.u32 %v2095, 16
      %v2179 = vrot.slane %v2177, 4
      %v2180 = vor.u32 %v2179, %v2175
      %v2181 = vrot.slane %v2180, 4
      %v2183 = vshll.u32 %v2096, 16
      %v2185 = vrot.slane %v2183, 5
      %v2186 = vsel %vm239, %v2181, %v2185
      %v2188 = vshrl.u32 %v2097, 16
      %v2190 = vrot.slane %v2188, 4
      %v2191 = vshll.u32 %v2097, 16
      %v2193 = vrot.slane %v2191, 5
      %v2194 = vor.u32 %v2190, %v2193
      %v2195 = vrot.slane %v2194, 4
      %v2197 = vshll.u32 %v2098, 16
      %v2199 = vrot.slane %v2197, 5
      %v2200 = vsel %vm239, %v2195, %v2199
      %v2201 = vshrl.u32 %v2098, 16
      %v2203 = vrot.slane %v2201, 4
      %v2204 = vor.u32 %v2203, %v2199
      %v2205 = vrot.slane %v2204, 4
      %v2207 = vshll.u32 %v2099, 16
      %v2209 = vrot.slane %v2207, 5
      %v2210 = vsel %vm239, %v2205, %v2209
      %v2212 = vshrl.u32 %v2100, 16
      %v2214 = vrot.slane %v2212, 4
      %v2215 = vshll.u32 %v2100, 16
      %v2217 = vrot.slane %v2215, 5
      %v2218 = vor.u32 %v2214, %v2217
      %v2219 = vrot.slane %v2218, 4
      %v2221 = vshll.u32 %v2101, 16
      %v2223 = vrot.slane %v2221, 5
      %v2224 = vsel %vm239, %v2219, %v2223
      %v2225 = vshrl.u32 %v2101, 16
      %v2227 = vrot.slane %v2225, 4
      %v2228 = vor.u32 %v2227, %v2223
      %v2229 = vrot.slane %v2228, 4
      %v2231 = vshll.u32 %v2102, 16
      %v2233 = vrot.slane %v2231, 5
      %v2234 = vsel %vm239, %v2229, %v2233
      %v2236 = vshrl.u32 %v2103, 16
      %v2238 = vrot.slane %v2236, 4
      %v2239 = vshll.u32 %v2103, 16
      %v2241 = vrot.slane %v2239, 5
      %v2242 = vor.u32 %v2238, %v2241
      %v2243 = vrot.slane %v2242, 4
      %v2245 = vshll.u32 %v2104, 16
      %v2247 = vrot.slane %v2245, 5
      %v2248 = vsel %vm239, %v2243, %v2247
      %v2249 = vshrl.u32 %v2104, 16
      %v2251 = vrot.slane %v2249, 4
      %v2252 = vor.u32 %v2251, %v2247
      %v2253 = vrot.slane %v2252, 4
      %v2255 = vshll.u32 %v2105, 16
      %v2257 = vrot.slane %v2255, 5
      %v2258 = vsel %vm239, %v2253, %v2257
      %v2260 = vshrl.u32 %v2106, 16
      %v2262 = vrot.slane %v2260, 4
      %v2263 = vshll.u32 %v2106, 16
      %v2265 = vrot.slane %v2263, 5
      %v2266 = vor.u32 %v2262, %v2265
      %v2267 = vrot.slane %v2266, 4
      %v2269 = vshll.u32 %v2107, 16
      %v2271 = vrot.slane %v2269, 5
      %v2272 = vsel %vm239, %v2267, %v2271
      %v2273 = vshrl.u32 %v2107, 16
      %v2275 = vrot.slane %v2273, 4
      %v2276 = vor.u32 %v2275, %v2271
      %v2277 = vrot.slane %v2276, 4
      %v2279 = vshll.u32 %v2108, 16
      %v2281 = vrot.slane %v2279, 5
      %v2282 = vsel %vm239, %v2277, %v2281
      %v2284 = vshrl.u32 %v2109, 16
      %v2286 = vrot.slane %v2284, 4
      %v2287 = vshll.u32 %v2109, 16
      %v2289 = vrot.slane %v2287, 5
      %v2290 = vor.u32 %v2286, %v2289
      %v2291 = vrot.slane %v2290, 4
      %v2293 = vshll.u32 %v2110, 16
      %v2295 = vrot.slane %v2293, 5
      %v2296 = vsel %vm239, %v2291, %v2295
      %v2297 = vshrl.u32 %v2110, 16
      %v2299 = vrot.slane %v2297, 4
      %v2300 = vor.u32 %v2299, %v2295
      %v2301 = vrot.slane %v2300, 4
      %v2303 = vshll.u32 %v2111, 16
      %v2305 = vrot.slane %v2303, 5
      %v2306 = vsel %vm239, %v2301, %v2305
      %v2308 = vshrl.u32 %v2112, 16
      %v2310 = vrot.slane %v2308, 4
      %v2311 = vshll.u32 %v2112, 16
      %v2313 = vrot.slane %v2311, 5
      %v2314 = vor.u32 %v2310, %v2313
      %v2315 = vrot.slane %v2314, 4
      %v2317 = vshll.u32 %v2113, 16
      %v2319 = vrot.slane %v2317, 5
      %v2320 = vsel %vm239, %v2315, %v2319
      %v2321 = vshrl.u32 %v2113, 16
      %v2323 = vrot.slane %v2321, 4
      %v2324 = vor.u32 %v2323, %v2319
      %v2325 = vrot.slane %v2324, 4
      %v2327 = vshll.u32 %v2114, 16
      %v2329 = vrot.slane %v2327, 5
      %v2330 = vsel %vm239, %v2325, %v2329
      %v2332 = vshrl.u32 %v2115, 16
      %v2334 = vrot.slane %v2332, 4
      %v2335 = vshll.u32 %v2115, 16
      %v2337 = vrot.slane %v2335, 5
      %v2338 = vor.u32 %v2334, %v2337
      %v2339 = vrot.slane %v2338, 4
      %v2341 = vshll.u32 %v2116, 16
      %v2343 = vrot.slane %v2341, 5
      %v2344 = vsel %vm239, %v2339, %v2343
      %v2345 = vshrl.u32 %v2116, 16
      %v2347 = vrot.slane %v2345, 4
      %v2348 = vor.u32 %v2347, %v2343
      %v2349 = vrot.slane %v2348, 4
      %v2351 = vshll.u32 %v2117, 16
      %v2353 = vrot.slane %v2351, 5
      %v2354 = vsel %vm239, %v2349, %v2353
      %v2356 = vshrl.u32 %v2118, 16
      %v2358 = vrot.slane %v2356, 4
      %v2359 = vshll.u32 %v2118, 16
      %v2361 = vrot.slane %v2359, 5
      %v2362 = vor.u32 %v2358, %v2361
      %v2363 = vrot.slane %v2362, 4
      %v2365 = vshll.u32 %v2119, 16
      %v2367 = vrot.slane %v2365, 5
      %v2368 = vsel %vm239, %v2363, %v2367
      %v2369 = vshrl.u32 %v2119, 16
      %v2371 = vrot.slane %v2369, 4
      %v2372 = vor.u32 %v2371, %v2367
      %v2373 = vrot.slane %v2372, 4
      %v2375 = vshll.u32 %v2120, 16
      %v2377 = vrot.slane %v2375, 5
      %v2378 = vsel %vm239, %v2373, %v2377
      %v2380 = vshrl.u32 %v2121, 16
      %v2382 = vrot.slane %v2380, 4
      %v2383 = vshll.u32 %v2121, 16
      %v2385 = vrot.slane %v2383, 5
      %v2386 = vor.u32 %v2382, %v2385
      %v2387 = vrot.slane %v2386, 4
      %v2389 = vshll.u32 %v2122, 16
      %v2391 = vrot.slane %v2389, 5
      %v2392 = vsel %vm239, %v2387, %v2391
      %v2393 = vshrl.u32 %v2122, 16
      %v2395 = vrot.slane %v2393, 4
      %v2396 = vor.u32 %v2395, %v2391
      %v2397 = vrot.slane %v2396, 4
      %v2399 = vshll.u32 %v2123, 16
      %v2401 = vrot.slane %v2399, 5
      %v2402 = vsel %vm239, %v2397, %v2401
      %v2404 = vshrl.u32 %v2124, 16
      %v2406 = vrot.slane %v2404, 4
      %v2407 = vshll.u32 %v2124, 16
      %v2409 = vrot.slane %v2407, 5
      %v2410 = vor.u32 %v2406, %v2409
      %v2411 = vrot.slane %v2410, 4
      %v2413 = vshll.u32 %v2125, 16
      %v2415 = vrot.slane %v2413, 5
      %v2416 = vsel %vm239, %v2411, %v2415
      %v2417 = vshrl.u32 %v2125, 16
      %v2419 = vrot.slane %v2417, 4
      %v2420 = vor.u32 %v2419, %v2415
      %v2421 = vrot.slane %v2420, 4
      %v2423 = vshll.u32 %v2126, 16
      %v2425 = vrot.slane %v2423, 5
      %v2426 = vsel %vm239, %v2421, %v2425
      %v2428 = vshrl.u32 %v2127, 16
      %v2430 = vrot.slane %v2428, 4
      %v2431 = vshll.u32 %v2127, 16
      %v2433 = vrot.slane %v2431, 5
      %v2434 = vor.u32 %v2430, %v2433
      %v2435 = vrot.slane %v2434, 4
      %v2437 = vshll.u32 %v2128, 16
      %v2439 = vrot.slane %v2437, 5
      %v2440 = vsel %vm239, %v2435, %v2439
      %v2441 = vshrl.u32 %v2128, 16
      %v2443 = vrot.slane %v2441, 4
      %v2444 = vor.u32 %v2443, %v2439
      %v2445 = vrot.slane %v2444, 4
      %v2447 = vshll.u32 %v2129, 16
      %v2449 = vrot.slane %v2447, 5
      %v2450 = vsel %vm239, %v2445, %v2449
      %v2452 = vshrl.u32 %v2130, 16
      %v2454 = vrot.slane %v2452, 4
      %v2455 = vshll.u32 %v2130, 16
      %v2457 = vrot.slane %v2455, 5
      %v2458 = vor.u32 %v2454, %v2457
      %v2459 = vrot.slane %v2458, 4
      %v2461 = vshll.u32 %v2131, 16
      %v2463 = vrot.slane %v2461, 5
      %v2464 = vsel %vm239, %v2459, %v2463
      %v2465 = vshrl.u32 %v2131, 16
      %v2467 = vrot.slane %v2465, 4
      %v2468 = vor.u32 %v2467, %v2463
      %v2469 = vrot.slane %v2468, 4
      %v2471 = vshll.u32 %v2132, 16
      %v2473 = vrot.slane %v2471, 5
      %v2474 = vsel %vm239, %v2469, %v2473
      %v2476 = vshrl.u32 %v2133, 16
      %v2478 = vrot.slane %v2476, 4
      %v2479 = vshll.u32 %v2133, 16
      %v2481 = vrot.slane %v2479, 5
      %v2482 = vor.u32 %v2478, %v2481
      %v2483 = vrot.slane %v2482, 4
      %v2485 = vshll.u32 %v2134, 16
      %v2487 = vrot.slane %v2485, 5
      %v2488 = vsel %vm239, %v2483, %v2487
      %v2489 = vshrl.u32 %v2134, 16
      %v2491 = vrot.slane %v2489, 4
      %v2492 = vor.u32 %v2491, %v2487
      %v2493 = vrot.slane %v2492, 4
      %v2495 = vshll.u32 %v2135, 16
      %v2497 = vrot.slane %v2495, 5
      %v2498 = vsel %vm239, %v2493, %v2497
      %v2500 = vshrl.u32 %v2136, 16
      %v2502 = vrot.slane %v2500, 4
      %v2503 = vshll.u32 %v2136, 16
      %v2505 = vrot.slane %v2503, 5
      %v2506 = vor.u32 %v2502, %v2505
      %v2507 = vrot.slane %v2506, 4
      %v2509 = vshll.u32 %v2137, 16
      %v2511 = vrot.slane %v2509, 5
      %v2512 = vsel %vm239, %v2507, %v2511
      %v2513 = vshrl.u32 %v2137, 16
      %v2515 = vrot.slane %v2513, 4
      %v2516 = vor.u32 %v2515, %v2511
      %v2517 = vrot.slane %v2516, 4
      %v2519 = vshll.u32 %v2138, 16
      %v2521 = vrot.slane %v2519, 5
      %v2522 = vsel %vm239, %v2517, %v2521
      %s2523 = scalar_lea.vmem %s1, 256
      %v2524 = vld [vmem:[%s2523] sm:$0xf]
      %v2525 = vld [vmem:[%s2523 + $0x4] sm:$0xf]
      %v2526 = vld [vmem:[%s2523 + $0x8] sm:$0xf]
      %v2527 = vld [vmem:[%s2523 + $0xc] sm:$0xf]
      %v2528 = vld [vmem:[%s2523 + $0x10] sm:$0xf]
      %v2529 = vld [vmem:[%s2523 + $0x14] sm:$0xf]
      %v2530 = vld [vmem:[%s2523 + $0x18] sm:$0xf]
      %v2531 = vld [vmem:[%s2523 + $0x1c] sm:$0xf]
      %v2532 = vld [vmem:[%s2523 + $0x20] sm:$0xf]
      %v2533 = vld [vmem:[%s2523 + $0x24] sm:$0xf]
      %v2534 = vld [vmem:[%s2523 + $0x28] sm:$0xf]
      %v2535 = vld [vmem:[%s2523 + $0x2c] sm:$0xf]
      %v2536 = vld [vmem:[%s2523 + $0x30] sm:$0xf]
      %v2537 = vld [vmem:[%s2523 + $0x34] sm:$0xf]
      %v2538 = vld [vmem:[%s2523 + $0x38] sm:$0xf]
      %v2539 = vld [vmem:[%s2523 + $0x3c] sm:$0xf]
      %v2540 = vunpack.c.l.b16 %v2152
      %v2541 = vunpack.c.l.b16 %v2162
      %v2542 = vunpack.c.l.b16 %v2176
      %v2543 = vunpack.c.l.b16 %v2186
      %v2544 = vunpack.c.l.b16 %v2200
      %v2545 = vunpack.c.l.b16 %v2210
      %v2546 = vunpack.c.l.b16 %v2224
      %v2547 = vunpack.c.l.b16 %v2234
      %v2548 = vunpack.c.l.b16 %v2248
      %v2549 = vunpack.c.l.b16 %v2258
      %v2550 = vunpack.c.l.b16 %v2272
      %v2551 = vunpack.c.l.b16 %v2282
      %v2552 = vunpack.c.l.b16 %v2296
      %v2553 = vunpack.c.l.b16 %v2306
      %v2554 = vunpack.c.l.b16 %v2320
      %v2555 = vunpack.c.l.b16 %v2330
      %v2556 = vunpack.c.l.b16 %v2344
      %v2557 = vunpack.c.l.b16 %v2354
      %v2558 = vunpack.c.l.b16 %v2368
      %v2559 = vunpack.c.l.b16 %v2378
      %v2560 = vunpack.c.l.b16 %v2392
      %v2561 = vunpack.c.l.b16 %v2402
      %v2562 = vunpack.c.l.b16 %v2416
      %v2563 = vunpack.c.l.b16 %v2426
      %v2564 = vunpack.c.l.b16 %v2440
      %v2565 = vunpack.c.l.b16 %v2450
      %v2566 = vunpack.c.l.b16 %v2464
      %v2567 = vunpack.c.l.b16 %v2474
      %v2568 = vunpack.c.l.b16 %v2488
      %v2569 = vunpack.c.l.b16 %v2498
      %v2570 = vunpack.c.l.b16 %v2512
      %v2571 = vunpack.c.l.b16 %v2522
      %v2572 = vpack.c.b16 %v2541, %v2540
      %v2573 = vpack.c.b16 %v2543, %v2542
      %v2574 = vpack.c.b16 %v2545, %v2544
      %v2575 = vpack.c.b16 %v2547, %v2546
      %v2576 = vpack.c.b16 %v2549, %v2548
      %v2577 = vpack.c.b16 %v2551, %v2550
      %v2578 = vpack.c.b16 %v2553, %v2552
      %v2579 = vpack.c.b16 %v2555, %v2554
      %v2580 = vpack.c.b16 %v2557, %v2556
      %v2581 = vpack.c.b16 %v2559, %v2558
      %v2582 = vpack.c.b16 %v2561, %v2560
      %v2583 = vpack.c.b16 %v2563, %v2562
      %v2584 = vpack.c.b16 %v2565, %v2564
      %v2585 = vpack.c.b16 %v2567, %v2566
      %v2586 = vpack.c.b16 %v2569, %v2568
      %v2587 = vpack.c.b16 %v2571, %v2570
      %v2620 = vunpack.c.l.b16 %v2524
      %v2621 = vunpack.c.l.b16 %v2525
      %v2622 = vunpack.c.l.b16 %v2526
      %v2623 = vunpack.c.l.b16 %v2527
      %v2624 = vunpack.c.l.b16 %v2528
      %v2625 = vunpack.c.l.b16 %v2529
      %v2626 = vunpack.c.l.b16 %v2530
      %v2627 = vunpack.c.l.b16 %v2531
      %v2628 = vunpack.c.l.b16 %v2532
      %v2629 = vunpack.c.l.b16 %v2533
      %v2630 = vunpack.c.l.b16 %v2534
      %v2631 = vunpack.c.l.b16 %v2535
      %v2632 = vunpack.c.l.b16 %v2536
      %v2633 = vunpack.c.l.b16 %v2537
      %v2634 = vunpack.c.l.b16 %v2538
      %v2635 = vunpack.c.l.b16 %v2539
      %v2636 = vpack.c.b16 %v2621, %v2620
      %v2637 = vpack.c.b16 %v2623, %v2622
      %v2638 = vpack.c.b16 %v2625, %v2624
      %v2639 = vpack.c.b16 %v2627, %v2626
      %v2640 = vpack.c.b16 %v2629, %v2628
      %v2641 = vpack.c.b16 %v2631, %v2630
      %v2642 = vpack.c.b16 %v2633, %v2632
      %v2643 = vpack.c.b16 %v2635, %v2634
      %2652 = vmatprep.subr.bf16.mxu0 0
      %2653 = vmatpush1.bf16.msra.mxu0 %v2636
      %2654 = vmatprep.subr.bf16.mxu0 0
      %2655 = vmatpush1.bf16.msra.mxu0 %v2637
      %2656 = vmatprep.subr.bf16.mxu0 0
      %2657 = vmatpush1.bf16.msra.mxu0 %v2638
      %2658 = vmatprep.subr.bf16.mxu0 0
      %2659 = vmatpush1.bf16.msra.mxu0 %v2639
      %2660 = vmatprep.subr.bf16.mxu0 0
      %2661 = vmatpush1.bf16.msra.mxu0 %v2640
      %2662 = vmatprep.subr.bf16.mxu0 0
      %2663 = vmatpush1.bf16.msra.mxu0 %v2641
      %2664 = vmatprep.subr.bf16.mxu0 0
      %2665 = vmatpush1.bf16.msra.mxu0 %v2642
      %2666 = vmatprep.subr.bf16.mxu0 0
      %2667 = vmatpush1.bf16.msra.mxu0 %v2643
      %2668 = vmatprep.subr.bf16.mxu0 0
      %2669 = vmatpush1.bf16.msra.mxu0 0
      %2670 = vmatprep.subr.bf16.mxu0 0
      %2671 = vmatpush1.bf16.msra.mxu0 0
      %2672 = vmatprep.subr.bf16.mxu0 0
      %2673 = vmatpush1.bf16.msra.mxu0 0
      %2674 = vmatprep.subr.bf16.mxu0 0
      %2675 = vmatpush1.bf16.msra.mxu0 0
      %2676 = vmatprep.subr.bf16.mxu0 0
      %2677 = vmatpush1.bf16.msra.mxu0 0
      %2678 = vmatprep.subr.bf16.mxu0 0
      %2679 = vmatpush1.bf16.msra.mxu0 0
      %2680 = vmatprep.subr.bf16.mxu0 0
      %2681 = vmatpush1.bf16.msra.mxu0 0
      %2682 = vmatprep.subr.bf16.mxu0 0
      %2683 = vmatpush1.bf16.msra.mxu0 0
      %2684 = vmatprep.mubr.bf16.mxu0 0
      %2685 = vmatmul.mubr.bf16.gmra.mrb[0].mxu0 %v2572
      %v2686 = vpop.f32.mrb[0].mxu0
      %v2687 = vadd.f32 0.0, %v2686
      %v2688 = vpop.f32.mrb[0].mxu0
      %v2689 = vpop.f32.mrb[0].mxu0
      %v2690 = vadd.f32 0.0, %v2689
      %v2691 = vpop.f32.mrb[0].mxu0
      %2692 = vmatprep.mubr.bf16.mxu0 0
      %2693 = vmatmul.mubr.bf16.gmra.mrb[0].mxu0 %v2573
      %v2694 = vpop.f32.mrb[0].mxu0
      %v2695 = vadd.f32 0.0, %v2694
      %v2696 = vpop.f32.mrb[0].mxu0
      %v2697 = vpop.f32.mrb[0].mxu0
      %v2698 = vadd.f32 0.0, %v2697
      %v2699 = vpop.f32.mrb[0].mxu0
      %2700 = vmatprep.mubr.bf16.mxu0 0
      %2701 = vmatmul.mubr.bf16.gmra.mrb[0].mxu0 %v2574
      %v2702 = vpop.f32.mrb[0].mxu0
      %v2703 = vadd.f32 0.0, %v2702
      %v2704 = vpop.f32.mrb[0].mxu0
      %v2705 = vpop.f32.mrb[0].mxu0
      %v2706 = vadd.f32 0.0, %v2705
      %v2707 = vpop.f32.mrb[0].mxu0
      %2708 = vmatprep.mubr.bf16.mxu0 0
      %2709 = vmatmul.mubr.bf16.gmra.mrb[0].mxu0 %v2575
      %v2710 = vpop.f32.mrb[0].mxu0
      %v2711 = vadd.f32 0.0, %v2710
      %v2712 = vpop.f32.mrb[0].mxu0
      %v2713 = vpop.f32.mrb[0].mxu0
      %v2714 = vadd.f32 0.0, %v2713
      %v2715 = vpop.f32.mrb[0].mxu0
      %2716 = vmatprep.mubr.bf16.mxu0 0
      %2717 = vmatmul.mubr.bf16.gmra.mrb[0].mxu0 %v2576
      %v2718 = vpop.f32.mrb[0].mxu0
      %v2719 = vadd.f32 0.0, %v2718
      %v2720 = vpop.f32.mrb[0].mxu0
      %v2721 = vpop.f32.mrb[0].mxu0
      %v2722 = vadd.f32 0.0, %v2721
      %v2723 = vpop.f32.mrb[0].mxu0
      %2724 = vmatprep.mubr.bf16.mxu0 0
      %2725 = vmatmul.mubr.bf16.gmra.mrb[0].mxu0 %v2577
      %v2726 = vpop.f32.mrb[0].mxu0
      %v2727 = vadd.f32 0.0, %v2726
      %v2728 = vpop.f32.mrb[0].mxu0
      %v2729 = vpop.f32.mrb[0].mxu0
      %v2730 = vadd.f32 0.0, %v2729
      %v2731 = vpop.f32.mrb[0].mxu0
      %2732 = vmatprep.mubr.bf16.mxu0 0
      %2733 = vmatmul.mubr.bf16.gmra.mrb[0].mxu0 %v2578
      %v2734 = vpop.f32.mrb[0].mxu0
      %v2735 = vadd.f32 0.0, %v2734
      %v2736 = vpop.f32.mrb[0].mxu0
      %v2737 = vpop.f32.mrb[0].mxu0
      %v2738 = vadd.f32 0.0, %v2737
      %v2739 = vpop.f32.mrb[0].mxu0
      %2740 = vmatprep.mubr.bf16.mxu0 0
      %2741 = vmatmul.mubr.bf16.gmra.mrb[0].mxu0 %v2579
      %v2742 = vpop.f32.mrb[0].mxu0
      %v2743 = vadd.f32 0.0, %v2742
      %v2744 = vpop.f32.mrb[0].mxu0
      %v2745 = vpop.f32.mrb[0].mxu0
      %v2746 = vadd.f32 0.0, %v2745
      %v2747 = vpop.f32.mrb[0].mxu0
      %2748 = vmatprep.mubr.bf16.mxu0 0
      %2749 = vmatmul.mubr.bf16.gmra.mrb[0].mxu0 %v2580
      %v2750 = vpop.f32.mrb[0].mxu0
      %v2751 = vadd.f32 0.0, %v2750
      %v2752 = vpop.f32.mrb[0].mxu0
      %v2753 = vpop.f32.mrb[0].mxu0
      %v2754 = vadd.f32 0.0, %v2753
      %v2755 = vpop.f32.mrb[0].mxu0
      %2756 = vmatprep.mubr.bf16.mxu0 0
      %2757 = vmatmul.mubr.bf16.gmra.mrb[0].mxu0 %v2581
      %v2758 = vpop.f32.mrb[0].mxu0
      %v2759 = vadd.f32 0.0, %v2758
      %v2760 = vpop.f32.mrb[0].mxu0
      %v2761 = vpop.f32.mrb[0].mxu0
      %v2762 = vadd.f32 0.0, %v2761
      %v2763 = vpop.f32.mrb[0].mxu0
      %2764 = vmatprep.mubr.bf16.mxu0 0
      %2765 = vmatmul.mubr.bf16.gmra.mrb[0].mxu0 %v2582
      %v2766 = vpop.f32.mrb[0].mxu0
      %v2767 = vadd.f32 0.0, %v2766
      %v2768 = vpop.f32.mrb[0].mxu0
      %v2769 = vpop.f32.mrb[0].mxu0
      %v2770 = vadd.f32 0.0, %v2769
      %v2771 = vpop.f32.mrb[0].mxu0
      %2772 = vmatprep.mubr.bf16.mxu0 0
      %2773 = vmatmul.mubr.bf16.gmra.mrb[0].mxu0 %v2583
      %v2774 = vpop.f32.mrb[0].mxu0
      %v2775 = vadd.f32 0.0, %v2774
      %v2776 = vpop.f32.mrb[0].mxu0
      %v2777 = vpop.f32.mrb[0].mxu0
      %v2778 = vadd.f32 0.0, %v2777
      %v2779 = vpop.f32.mrb[0].mxu0
      %2780 = vmatprep.mubr.bf16.mxu0 0
      %2781 = vmatmul.mubr.bf16.gmra.mrb[0].mxu0 %v2584
      %v2782 = vpop.f32.mrb[0].mxu0
      %v2783 = vadd.f32 0.0, %v2782
      %v2784 = vpop.f32.mrb[0].mxu0
      %v2785 = vpop.f32.mrb[0].mxu0
      %v2786 = vadd.f32 0.0, %v2785
      %v2787 = vpop.f32.mrb[0].mxu0
      %2788 = vmatprep.mubr.bf16.mxu0 0
      %2789 = vmatmul.mubr.bf16.gmra.mrb[0].mxu0 %v2585
      %v2790 = vpop.f32.mrb[0].mxu0
      %v2791 = vadd.f32 0.0, %v2790
      %v2792 = vpop.f32.mrb[0].mxu0
      %v2793 = vpop.f32.mrb[0].mxu0
      %v2794 = vadd.f32 0.0, %v2793
      %v2795 = vpop.f32.mrb[0].mxu0
      %2796 = vmatprep.mubr.bf16.mxu0 0
      %2797 = vmatmul.mubr.bf16.gmra.mrb[0].mxu0 %v2586
      %v2798 = vpop.f32.mrb[0].mxu0
      %v2799 = vadd.f32 0.0, %v2798
      %v2800 = vpop.f32.mrb[0].mxu0
      %v2801 = vpop.f32.mrb[0].mxu0
      %v2802 = vadd.f32 0.0, %v2801
      %v2803 = vpop.f32.mrb[0].mxu0
      %2804 = vmatprep.mubr.bf16.mxu0 0
      %2805 = vmatmul.mubr.bf16.gmra.mrb[0].mxu0 %v2587
      %v2806 = vpop.f32.mrb[0].mxu0
      %v2807 = vadd.f32 0.0, %v2806
      %v2808 = vpop.f32.mrb[0].mxu0
      %v2809 = vpop.f32.mrb[0].mxu0
      %v2810 = vadd.f32 0.0, %v2809
      %v2811 = vpop.f32.mrb[0].mxu0
      %2812 = vdwg.mxu0
      %v2813 = vadd.f32 %v2059, %v2687
      %v2814 = vadd.f32 %v2060, %v2690
      %v2815 = vadd.f32 %v2061, %v2695
      %v2816 = vadd.f32 %v2062, %v2698
      %v2817 = vadd.f32 %v2063, %v2703
      %v2818 = vadd.f32 %v2064, %v2706
      %v2819 = vadd.f32 %v2065, %v2711
      %v2820 = vadd.f32 %v2066, %v2714
      %v2821 = vadd.f32 %v2067, %v2719
      %v2822 = vadd.f32 %v2068, %v2722
      %v2823 = vadd.f32 %v2069, %v2727
      %v2824 = vadd.f32 %v2070, %v2730
      %v2825 = vadd.f32 %v2071, %v2735
      %v2826 = vadd.f32 %v2072, %v2738
      %v2827 = vadd.f32 %v2073, %v2743
      %v2828 = vadd.f32 %v2074, %v2746
      %v2829 = vadd.f32 %v2075, %v2751
      %v2830 = vadd.f32 %v2076, %v2754
      %v2831 = vadd.f32 %v2077, %v2759
      %v2832 = vadd.f32 %v2078, %v2762
      %v2833 = vadd.f32 %v2079, %v2767
      %v2834 = vadd.f32 %v2080, %v2770
      %v2835 = vadd.f32 %v2081, %v2775
      %v2836 = vadd.f32 %v2082, %v2778
      %v2837 = vadd.f32 %v2083, %v2783
      %v2838 = vadd.f32 %v2084, %v2786
      %v2839 = vadd.f32 %v2085, %v2791
      %v2840 = vadd.f32 %v2086, %v2794
      %v2841 = vadd.f32 %v2087, %v2799
      %v2842 = vadd.f32 %v2088, %v2802
      %v2843 = vadd.f32 %v2089, %v2807
      %v2844 = vadd.f32 %v2090, %v2810
      %v2845 = vld [vmem:[%s1704] sm:$0xe]
      %v2846 = vld [vmem:[%s1704 + $0xc] sm:$0xe]
      %v2847 = vld [vmem:[%s1704 + $0x18] sm:$0xe]
      %v2848 = vld [vmem:[%s1704 + $0x24] sm:$0xe]
      %v2849 = vld [vmem:[%s1704 + $0x30] sm:$0xe]
      %v2850 = vld [vmem:[%s1704 + $0x3c] sm:$0xe]
      %v2851 = vld [vmem:[%s1704 + $0x48] sm:$0xe]
      %v2852 = vld [vmem:[%s1704 + $0x54] sm:$0xe]
      %v2853 = vld [vmem:[%s1704 + $0x60] sm:$0xe]
      %v2854 = vld [vmem:[%s1704 + $0x6c] sm:$0xe]
      %v2855 = vld [vmem:[%s1704 + $0x78] sm:$0xe]
      %v2856 = vld [vmem:[%s1704 + $0x84] sm:$0xe]
      %v2857 = vld [vmem:[%s1704 + $0x90] sm:$0xe]
      %v2858 = vld [vmem:[%s1704 + $0x9c] sm:$0xe]
      %v2859 = vld [vmem:[%s1704 + $0xa8] sm:$0xe]
      %v2860 = vld [vmem:[%s1704 + $0xb4] sm:$0xe]
      %v2909 = vrot.slane %v2845, 5
      %v2910 = vrot.slane %v2909, 4
      %v2911 = vrot.slane %v2092, 5
      %v2912 = vsel %vm1269, %v2910, %v2911
      %v2913 = vrot.slane %v2911, 4
      %v2914 = vrot.slane %v2093, 5
      %v2915 = vsel %vm1269, %v2913, %v2914
      %v2916 = vrot.slane %v2846, 5
      %v2917 = vrot.slane %v2916, 4
      %v2918 = vrot.slane %v2095, 5
      %v2919 = vsel %vm1269, %v2917, %v2918
      %v2920 = vrot.slane %v2918, 4
      %v2921 = vrot.slane %v2096, 5
      %v2922 = vsel %vm1269, %v2920, %v2921
      %v2923 = vrot.slane %v2847, 5
      %v2924 = vrot.slane %v2923, 4
      %v2925 = vrot.slane %v2098, 5
      %v2926 = vsel %vm1269, %v2924, %v2925
      %v2927 = vrot.slane %v2925, 4
      %v2928 = vrot.slane %v2099, 5
      %v2929 = vsel %vm1269, %v2927, %v2928
      %v2930 = vrot.slane %v2848, 5
      %v2931 = vrot.slane %v2930, 4
      %v2932 = vrot.slane %v2101, 5
      %v2933 = vsel %vm1269, %v2931, %v2932
      %v2934 = vrot.slane %v2932, 4
      %v2935 = vrot.slane %v2102, 5
      %v2936 = vsel %vm1269, %v2934, %v2935
      %v2937 = vrot.slane %v2849, 5
      %v2938 = vrot.slane %v2937, 4
      %v2939 = vrot.slane %v2104, 5
      %v2940 = vsel %vm1269, %v2938, %v2939
      %v2941 = vrot.slane %v2939, 4
      %v2942 = vrot.slane %v2105, 5
      %v2943 = vsel %vm1269, %v2941, %v2942
      %v2944 = vrot.slane %v2850, 5
      %v2945 = vrot.slane %v2944, 4
      %v2946 = vrot.slane %v2107, 5
      %v2947 = vsel %vm1269, %v2945, %v2946
      %v2948 = vrot.slane %v2946, 4
      %v2949 = vrot.slane %v2108, 5
      %v2950 = vsel %vm1269, %v2948, %v2949
      %v2951 = vrot.slane %v2851, 5
      %v2952 = vrot.slane %v2951, 4
      %v2953 = vrot.slane %v2110, 5
      %v2954 = vsel %vm1269, %v2952, %v2953
      %v2955 = vrot.slane %v2953, 4
      %v2956 = vrot.slane %v2111, 5
      %v2957 = vsel %vm1269, %v2955, %v2956
      %v2958 = vrot.slane %v2852, 5
      %v2959 = vrot.slane %v2958, 4
      %v2960 = vrot.slane %v2113, 5
      %v2961 = vsel %vm1269, %v2959, %v2960
      %v2962 = vrot.slane %v2960, 4
      %v2963 = vrot.slane %v2114, 5
      %v2964 = vsel %vm1269, %v2962, %v2963
      %v2965 = vrot.slane %v2853, 5
      %v2966 = vrot.slane %v2965, 4
      %v2967 = vrot.slane %v2116, 5
      %v2968 = vsel %vm1269, %v2966, %v2967
      %v2969 = vrot.slane %v2967, 4
      %v2970 = vrot.slane %v2117, 5
      %v2971 = vsel %vm1269, %v2969, %v2970
      %v2972 = vrot.slane %v2854, 5
      %v2973 = vrot.slane %v2972, 4
      %v2974 = vrot.slane %v2119, 5
      %v2975 = vsel %vm1269, %v2973, %v2974
      %v2976 = vrot.slane %v2974, 4
      %v2977 = vrot.slane %v2120, 5
      %v2978 = vsel %vm1269, %v2976, %v2977
      %v2979 = vrot.slane %v2855, 5
      %v2980 = vrot.slane %v2979, 4
      %v2981 = vrot.slane %v2122, 5
      %v2982 = vsel %vm1269, %v2980, %v2981
      %v2983 = vrot.slane %v2981, 4
      %v2984 = vrot.slane %v2123, 5
      %v2985 = vsel %vm1269, %v2983, %v2984
      %v2986 = vrot.slane %v2856, 5
      %v2987 = vrot.slane %v2986, 4
      %v2988 = vrot.slane %v2125, 5
      %v2989 = vsel %vm1269, %v2987, %v2988
      %v2990 = vrot.slane %v2988, 4
      %v2991 = vrot.slane %v2126, 5
      %v2992 = vsel %vm1269, %v2990, %v2991
      %v2993 = vrot.slane %v2857, 5
      %v2994 = vrot.slane %v2993, 4
      %v2995 = vrot.slane %v2128, 5
      %v2996 = vsel %vm1269, %v2994, %v2995
      %v2997 = vrot.slane %v2995, 4
      %v2998 = vrot.slane %v2129, 5
      %v2999 = vsel %vm1269, %v2997, %v2998
      %v3000 = vrot.slane %v2858, 5
      %v3001 = vrot.slane %v3000, 4
      %v3002 = vrot.slane %v2131, 5
      %v3003 = vsel %vm1269, %v3001, %v3002
      %v3004 = vrot.slane %v3002, 4
      %v3005 = vrot.slane %v2132, 5
      %v3006 = vsel %vm1269, %v3004, %v3005
      %v3007 = vrot.slane %v2859, 5
      %v3008 = vrot.slane %v3007, 4
      %v3009 = vrot.slane %v2134, 5
      %v3010 = vsel %vm1269, %v3008, %v3009
      %v3011 = vrot.slane %v3009, 4
      %v3012 = vrot.slane %v2135, 5
      %v3013 = vsel %vm1269, %v3011, %v3012
      %v3014 = vrot.slane %v2860, 5
      %v3015 = vrot.slane %v3014, 4
      %v3016 = vrot.slane %v2137, 5
      %v3017 = vsel %vm1269, %v3015, %v3016
      %v3018 = vrot.slane %v3016, 4
      %v3019 = vrot.slane %v2138, 5
      %v3020 = vsel %vm1269, %v3018, %v3019
      %s3021 = scalar_lea.vmem %s1, 320
      %v3022 = vld [vmem:[%s3021] sm:$0xf]
      %v3023 = vld [vmem:[%s3021 + $0x4] sm:$0xf]
      %v3024 = vld [vmem:[%s3021 + $0x8] sm:$0xf]
      %v3025 = vld [vmem:[%s3021 + $0xc] sm:$0xf]
      %v3026 = vld [vmem:[%s3021 + $0x10] sm:$0xf]
      %v3027 = vld [vmem:[%s3021 + $0x14] sm:$0xf]
      %v3028 = vld [vmem:[%s3021 + $0x18] sm:$0xf]
      %v3029 = vld [vmem:[%s3021 + $0x1c] sm:$0xf]
      %v3030 = vld [vmem:[%s3021 + $0x20] sm:$0xf]
      %v3031 = vld [vmem:[%s3021 + $0x24] sm:$0xf]
      %v3032 = vld [vmem:[%s3021 + $0x28] sm:$0xf]
      %v3033 = vld [vmem:[%s3021 + $0x2c] sm:$0xf]
      %v3034 = vld [vmem:[%s3021 + $0x30] sm:$0xf]
      %v3035 = vld [vmem:[%s3021 + $0x34] sm:$0xf]
      %v3036 = vld [vmem:[%s3021 + $0x38] sm:$0xf]
      %v3037 = vld [vmem:[%s3021 + $0x3c] sm:$0xf]
      %v3038 = vunpack.c.l.b16 %v2912
      %v3039 = vunpack.c.l.b16 %v2915
      %v3040 = vunpack.c.l.b16 %v2919
      %v3041 = vunpack.c.l.b16 %v2922
      %v3042 = vunpack.c.l.b16 %v2926
      %v3043 = vunpack.c.l.b16 %v2929
      %v3044 = vunpack.c.l.b16 %v2933
      %v3045 = vunpack.c.l.b16 %v2936
      %v3046 = vunpack.c.l.b16 %v2940
      %v3047 = vunpack.c.l.b16 %v2943
      %v3048 = vunpack.c.l.b16 %v2947
      %v3049 = vunpack.c.l.b16 %v2950
      %v3050 = vunpack.c.l.b16 %v2954
      %v3051 = vunpack.c.l.b16 %v2957
      %v3052 = vunpack.c.l.b16 %v2961
      %v3053 = vunpack.c.l.b16 %v2964
      %v3054 = vunpack.c.l.b16 %v2968
      %v3055 = vunpack.c.l.b16 %v2971
      %v3056 = vunpack.c.l.b16 %v2975
      %v3057 = vunpack.c.l.b16 %v2978
      %v3058 = vunpack.c.l.b16 %v2982
      %v3059 = vunpack.c.l.b16 %v2985
      %v3060 = vunpack.c.l.b16 %v2989
      %v3061 = vunpack.c.l.b16 %v2992
      %v3062 = vunpack.c.l.b16 %v2996
      %v3063 = vunpack.c.l.b16 %v2999
      %v3064 = vunpack.c.l.b16 %v3003
      %v3065 = vunpack.c.l.b16 %v3006
      %v3066 = vunpack.c.l.b16 %v3010
      %v3067 = vunpack.c.l.b16 %v3013
      %v3068 = vunpack.c.l.b16 %v3017
      %v3069 = vunpack.c.l.b16 %v3020
      %v3070 = vpack.c.b16 %v3039, %v3038
      %v3071 = vpack.c.b16 %v3041, %v3040
      %v3072 = vpack.c.b16 %v3043, %v3042
      %v3073 = vpack.c.b16 %v3045, %v3044
      %v3074 = vpack.c.b16 %v3047, %v3046
      %v3075 = vpack.c.b16 %v3049, %v3048
      %v3076 = vpack.c.b16 %v3051, %v3050
      %v3077 = vpack.c.b16 %v3053, %v3052
      %v3078 = vpack.c.b16 %v3055, %v3054
      %v3079 = vpack.c.b16 %v3057, %v3056
      %v3080 = vpack.c.b16 %v3059, %v3058
      %v3081 = vpack.c.b16 %v3061, %v3060
      %v3082 = vpack.c.b16 %v3063, %v3062
      %v3083 = vpack.c.b16 %v3065, %v3064
      %v3084 = vpack.c.b16 %v3067, %v3066
      %v3085 = vpack.c.b16 %v3069, %v3068
      %v3118 = vunpack.c.l.b16 %v3022
      %v3119 = vunpack.c.l.b16 %v3023
      %v3120 = vunpack.c.l.b16 %v3024
      %v3121 = vunpack.c.l.b16 %v3025
      %v3122 = vunpack.c.l.b16 %v3026
      %v3123 = vunpack.c.l.b16 %v3027
      %v3124 = vunpack.c.l.b16 %v3028
      %v3125 = vunpack.c.l.b16 %v3029
      %v3126 = vunpack.c.l.b16 %v3030
      %v3127 = vunpack.c.l.b16 %v3031
      %v3128 = vunpack.c.l.b16 %v3032
      %v3129 = vunpack.c.l.b16 %v3033
      %v3130 = vunpack.c.l.b16 %v3034
      %v3131 = vunpack.c.l.b16 %v3035
      %v3132 = vunpack.c.l.b16 %v3036
      %v3133 = vunpack.c.l.b16 %v3037
      %v3134 = vpack.c.b16 %v3119, %v3118
      %v3135 = vpack.c.b16 %v3121, %v3120
      %v3136 = vpack.c.b16 %v3123, %v3122
      %v3137 = vpack.c.b16 %v3125, %v3124
      %v3138 = vpack.c.b16 %v3127, %v3126
      %v3139 = vpack.c.b16 %v3129, %v3128
      %v3140 = vpack.c.b16 %v3131, %v3130
      %v3141 = vpack.c.b16 %v3133, %v3132
      %3150 = vmatprep.subr.bf16.mxu0 0
      %3151 = vmatpush1.bf16.msra.mxu0 %v3134
      %3152 = vmatprep.subr.bf16.mxu0 0
      %3153 = vmatpush1.bf16.msra.mxu0 %v3135
      %3154 = vmatprep.subr.bf16.mxu0 0
      %3155 = vmatpush1.bf16.msra.mxu0 %v3136
      %3156 = vmatprep.subr.bf16.mxu0 0
      %3157 = vmatpush1.bf16.msra.mxu0 %v3137
      %3158 = vmatprep.subr.bf16.mxu0 0
      %3159 = vmatpush1.bf16.msra.mxu0 %v3138
      %3160 = vmatprep.subr.bf16.mxu0 0
      %3161 = vmatpush1.bf16.msra.mxu0 %v3139
      %3162 = vmatprep.subr.bf16.mxu0 0
      %3163 = vmatpush1.bf16.msra.mxu0 %v3140
      %3164 = vmatprep.subr.bf16.mxu0 0
      %3165 = vmatpush1.bf16.msra.mxu0 %v3141
      %3166 = vmatprep.subr.bf16.mxu0 0
      %3167 = vmatpush1.bf16.msra.mxu0 0
      %3168 = vmatprep.subr.bf16.mxu0 0
      %3169 = vmatpush1.bf16.msra.mxu0 0
      %3170 = vmatprep.subr.bf16.mxu0 0
      %3171 = vmatpush1.bf16.msra.mxu0 0
      %3172 = vmatprep.subr.bf16.mxu0 0
      %3173 = vmatpush1.bf16.msra.mxu0 0
      %3174 = vmatprep.subr.bf16.mxu0 0
      %3175 = vmatpush1.bf16.msra.mxu0 0
      %3176 = vmatprep.subr.bf16.mxu0 0
      %3177 = vmatpush1.bf16.msra.mxu0 0
      %3178 = vmatprep.subr.bf16.mxu0 0
      %3179 = vmatpush1.bf16.msra.mxu0 0
      %3180 = vmatprep.subr.bf16.mxu0 0
      %3181 = vmatpush1.bf16.msra.mxu0 0
      %3182 = vmatprep.mubr.bf16.mxu0 0
      %3183 = vmatmul.mubr.bf16.gmra.mrb[0].mxu0 %v3070
      %v3184 = vpop.f32.mrb[0].mxu0
      %v3185 = vadd.f32 0.0, %v3184
      %v3186 = vpop.f32.mrb[0].mxu0
      %v3187 = vpop.f32.mrb[0].mxu0
      %v3188 = vadd.f32 0.0, %v3187
      %v3189 = vpop.f32.mrb[0].mxu0
      %3190 = vmatprep.mubr.bf16.mxu0 0
      %3191 = vmatmul.mubr.bf16.gmra.mrb[0].mxu0 %v3071
      %v3192 = vpop.f32.mrb[0].mxu0
      %v3193 = vadd.f32 0.0, %v3192
      %v3194 = vpop.f32.mrb[0].mxu0
      %v3195 = vpop.f32.mrb[0].mxu0
      %v3196 = vadd.f32 0.0, %v3195
      %v3197 = vpop.f32.mrb[0].mxu0
      %3198 = vmatprep.mubr.bf16.mxu0 0
      %3199 = vmatmul.mubr.bf16.gmra.mrb[0].mxu0 %v3072
      %v3200 = vpop.f32.mrb[0].mxu0
      %v3201 = vadd.f32 0.0, %v3200
      %v3202 = vpop.f32.mrb[0].mxu0
      %v3203 = vpop.f32.mrb[0].mxu0
      %v3204 = vadd.f32 0.0, %v3203
      %v3205 = vpop.f32.mrb[0].mxu0
      %3206 = vmatprep.mubr.bf16.mxu0 0
      %3207 = vmatmul.mubr.bf16.gmra.mrb[0].mxu0 %v3073
      %v3208 = vpop.f32.mrb[0].mxu0
      %v3209 = vadd.f32 0.0, %v3208
      %v3210 = vpop.f32.mrb[0].mxu0
      %v3211 = vpop.f32.mrb[0].mxu0
      %v3212 = vadd.f32 0.0, %v3211
      %v3213 = vpop.f32.mrb[0].mxu0
      %3214 = vmatprep.mubr.bf16.mxu0 0
      %3215 = vmatmul.mubr.bf16.gmra.mrb[0].mxu0 %v3074
      %v3216 = vpop.f32.mrb[0].mxu0
      %v3217 = vadd.f32 0.0, %v3216
      %v3218 = vpop.f32.mrb[0].mxu0
      %v3219 = vpop.f32.mrb[0].mxu0
      %v3220 = vadd.f32 0.0, %v3219
      %v3221 = vpop.f32.mrb[0].mxu0
      %3222 = vmatprep.mubr.bf16.mxu0 0
      %3223 = vmatmul.mubr.bf16.gmra.mrb[0].mxu0 %v3075
      %v3224 = vpop.f32.mrb[0].mxu0
      %v3225 = vadd.f32 0.0, %v3224
      %v3226 = vpop.f32.mrb[0].mxu0
      %v3227 = vpop.f32.mrb[0].mxu0
      %v3228 = vadd.f32 0.0, %v3227
      %v3229 = vpop.f32.mrb[0].mxu0
      %3230 = vmatprep.mubr.bf16.mxu0 0
      %3231 = vmatmul.mubr.bf16.gmra.mrb[0].mxu0 %v3076
      %v3232 = vpop.f32.mrb[0].mxu0
      %v3233 = vadd.f32 0.0, %v3232
      %v3234 = vpop.f32.mrb[0].mxu0
      %v3235 = vpop.f32.mrb[0].mxu0
      %v3236 = vadd.f32 0.0, %v3235
      %v3237 = vpop.f32.mrb[0].mxu0
      %3238 = vmatprep.mubr.bf16.mxu0 0
      %3239 = vmatmul.mubr.bf16.gmra.mrb[0].mxu0 %v3077
      %v3240 = vpop.f32.mrb[0].mxu0
      %v3241 = vadd.f32 0.0, %v3240
      %v3242 = vpop.f32.mrb[0].mxu0
      %v3243 = vpop.f32.mrb[0].mxu0
      %v3244 = vadd.f32 0.0, %v3243
      %v3245 = vpop.f32.mrb[0].mxu0
      %3246 = vmatprep.mubr.bf16.mxu0 0
      %3247 = vmatmul.mubr.bf16.gmra.mrb[0].mxu0 %v3078
      %v3248 = vpop.f32.mrb[0].mxu0
      %v3249 = vadd.f32 0.0, %v3248
      %v3250 = vpop.f32.mrb[0].mxu0
      %v3251 = vpop.f32.mrb[0].mxu0
      %v3252 = vadd.f32 0.0, %v3251
      %v3253 = vpop.f32.mrb[0].mxu0
      %3254 = vmatprep.mubr.bf16.mxu0 0
      %3255 = vmatmul.mubr.bf16.gmra.mrb[0].mxu0 %v3079
      %v3256 = vpop.f32.mrb[0].mxu0
      %v3257 = vadd.f32 0.0, %v3256
      %v3258 = vpop.f32.mrb[0].mxu0
      %v3259 = vpop.f32.mrb[0].mxu0
      %v3260 = vadd.f32 0.0, %v3259
      %v3261 = vpop.f32.mrb[0].mxu0
      %3262 = vmatprep.mubr.bf16.mxu0 0
      %3263 = vmatmul.mubr.bf16.gmra.mrb[0].mxu0 %v3080
      %v3264 = vpop.f32.mrb[0].mxu0
      %v3265 = vadd.f32 0.0, %v3264
      %v3266 = vpop.f32.mrb[0].mxu0
      %v3267 = vpop.f32.mrb[0].mxu0
      %v3268 = vadd.f32 0.0, %v3267
      %v3269 = vpop.f32.mrb[0].mxu0
      %3270 = vmatprep.mubr.bf16.mxu0 0
      %3271 = vmatmul.mubr.bf16.gmra.mrb[0].mxu0 %v3081
      %v3272 = vpop.f32.mrb[0].mxu0
      %v3273 = vadd.f32 0.0, %v3272
      %v3274 = vpop.f32.mrb[0].mxu0
      %v3275 = vpop.f32.mrb[0].mxu0
      %v3276 = vadd.f32 0.0, %v3275
      %v3277 = vpop.f32.mrb[0].mxu0
      %3278 = vmatprep.mubr.bf16.mxu0 0
      %3279 = vmatmul.mubr.bf16.gmra.mrb[0].mxu0 %v3082
      %v3280 = vpop.f32.mrb[0].mxu0
      %v3281 = vadd.f32 0.0, %v3280
      %v3282 = vpop.f32.mrb[0].mxu0
      %v3283 = vpop.f32.mrb[0].mxu0
      %v3284 = vadd.f32 0.0, %v3283
      %v3285 = vpop.f32.mrb[0].mxu0
      %3286 = vmatprep.mubr.bf16.mxu0 0
      %3287 = vmatmul.mubr.bf16.gmra.mrb[0].mxu0 %v3083
      %v3288 = vpop.f32.mrb[0].mxu0
      %v3289 = vadd.f32 0.0, %v3288
      %v3290 = vpop.f32.mrb[0].mxu0
      %v3291 = vpop.f32.mrb[0].mxu0
      %v3292 = vadd.f32 0.0, %v3291
      %v3293 = vpop.f32.mrb[0].mxu0
      %3294 = vmatprep.mubr.bf16.mxu0 0
      %3295 = vmatmul.mubr.bf16.gmra.mrb[0].mxu0 %v3084
      %v3296 = vpop.f32.mrb[0].mxu0
      %v3297 = vadd.f32 0.0, %v3296
      %v3298 = vpop.f32.mrb[0].mxu0
      %v3299 = vpop.f32.mrb[0].mxu0
      %v3300 = vadd.f32 0.0, %v3299
      %v3301 = vpop.f32.mrb[0].mxu0
      %3302 = vmatprep.mubr.bf16.mxu0 0
      %3303 = vmatmul.mubr.bf16.gmra.mrb[0].mxu0 %v3085
      %v3304 = vpop.f32.mrb[0].mxu0
      %v3305 = vadd.f32 0.0, %v3304
      %v3306 = vpop.f32.mrb[0].mxu0
      %v3307 = vpop.f32.mrb[0].mxu0
      %v3308 = vadd.f32 0.0, %v3307
      %v3309 = vpop.f32.mrb[0].mxu0
      %3310 = vdwg.mxu0
      %v3311 = vadd.f32 %v2813, %v3185
      %v3312 = vadd.f32 %v2814, %v3188
      %v3313 = vadd.f32 %v2815, %v3193
      %v3314 = vadd.f32 %v2816, %v3196
      %v3315 = vadd.f32 %v2817, %v3201
      %v3316 = vadd.f32 %v2818, %v3204
      %v3317 = vadd.f32 %v2819, %v3209
      %v3318 = vadd.f32 %v2820, %v3212
      %v3319 = vadd.f32 %v2821, %v3217
      %v3320 = vadd.f32 %v2822, %v3220
      %v3321 = vadd.f32 %v2823, %v3225
      %v3322 = vadd.f32 %v2824, %v3228
      %v3323 = vadd.f32 %v2825, %v3233
      %v3324 = vadd.f32 %v2826, %v3236
      %v3325 = vadd.f32 %v2827, %v3241
      %v3326 = vadd.f32 %v2828, %v3244
      %v3327 = vadd.f32 %v2829, %v3249
      %v3328 = vadd.f32 %v2830, %v3252
      %v3329 = vadd.f32 %v2831, %v3257
      %v3330 = vadd.f32 %v2832, %v3260
      %v3331 = vadd.f32 %v2833, %v3265
      %v3332 = vadd.f32 %v2834, %v3268
      %v3333 = vadd.f32 %v2835, %v3273
      %v3334 = vadd.f32 %v2836, %v3276
      %v3335 = vadd.f32 %v2837, %v3281
      %v3336 = vadd.f32 %v2838, %v3284
      %v3337 = vadd.f32 %v2839, %v3289
      %v3338 = vadd.f32 %v2840, %v3292
      %v3339 = vadd.f32 %v2841, %v3297
      %v3340 = vadd.f32 %v2842, %v3300
      %v3341 = vadd.f32 %v2843, %v3305
      %v3342 = vadd.f32 %v2844, %v3308
      %s3343 = scalar_lea.vmem %s165, 24
      %v3344 = vld [vmem:[%s3343] sm:$0xf]
      %v3345 = vld [vmem:[%s3343 + $0x4] sm:$0xf]
      %v3346 = vld [vmem:[%s3343 + $0xc] sm:$0xf]
      %v3347 = vld [vmem:[%s3343 + $0x10] sm:$0xf]
      %v3348 = vld [vmem:[%s3343 + $0x18] sm:$0xf]
      %v3349 = vld [vmem:[%s3343 + $0x1c] sm:$0xf]
      %v3350 = vld [vmem:[%s3343 + $0x24] sm:$0xf]
      %v3351 = vld [vmem:[%s3343 + $0x28] sm:$0xf]
      %v3352 = vld [vmem:[%s3343 + $0x30] sm:$0xf]
      %v3353 = vld [vmem:[%s3343 + $0x34] sm:$0xf]
      %v3354 = vld [vmem:[%s3343 + $0x3c] sm:$0xf]
      %v3355 = vld [vmem:[%s3343 + $0x40] sm:$0xf]
      %v3356 = vld [vmem:[%s3343 + $0x48] sm:$0xf]
      %v3357 = vld [vmem:[%s3343 + $0x4c] sm:$0xf]
      %v3358 = vld [vmem:[%s3343 + $0x54] sm:$0xf]
      %v3359 = vld [vmem:[%s3343 + $0x58] sm:$0xf]
      %v3360 = vld [vmem:[%s3343 + $0x60] sm:$0xf]
      %v3361 = vld [vmem:[%s3343 + $0x64] sm:$0xf]
      %v3362 = vld [vmem:[%s3343 + $0x6c] sm:$0xf]
      %v3363 = vld [vmem:[%s3343 + $0x70] sm:$0xf]
      %v3364 = vld [vmem:[%s3343 + $0x78] sm:$0xf]
      %v3365 = vld [vmem:[%s3343 + $0x7c] sm:$0xf]
      %v3366 = vld [vmem:[%s3343 + $0x84] sm:$0xf]
      %v3367 = vld [vmem:[%s3343 + $0x88] sm:$0xf]
      %v3368 = vld [vmem:[%s3343 + $0x90] sm:$0xf]
      %v3369 = vld [vmem:[%s3343 + $0x94] sm:$0xf]
      %v3370 = vld [vmem:[%s3343 + $0x9c] sm:$0xf]
      %v3371 = vld [vmem:[%s3343 + $0xa0] sm:$0xf]
      %v3372 = vld [vmem:[%s3343 + $0xa8] sm:$0xf]
      %v3373 = vld [vmem:[%s3343 + $0xac] sm:$0xf]
      %v3374 = vld [vmem:[%s3343 + $0xb4] sm:$0xf]
      %v3375 = vld [vmem:[%s3343 + $0xb8] sm:$0xf]
      %s3376 = scalar_lea.vmem %s1, 384
      %v3377 = vld [vmem:[%s3376] sm:$0xf]
      %v3378 = vld [vmem:[%s3376 + $0x4] sm:$0xf]
      %v3379 = vld [vmem:[%s3376 + $0x8] sm:$0xf]
      %v3380 = vld [vmem:[%s3376 + $0xc] sm:$0xf]
      %v3381 = vld [vmem:[%s3376 + $0x10] sm:$0xf]
      %v3382 = vld [vmem:[%s3376 + $0x14] sm:$0xf]
      %v3383 = vld [vmem:[%s3376 + $0x18] sm:$0xf]
      %v3384 = vld [vmem:[%s3376 + $0x1c] sm:$0xf]
      %v3385 = vld [vmem:[%s3376 + $0x20] sm:$0xf]
      %v3386 = vld [vmem:[%s3376 + $0x24] sm:$0xf]
      %v3387 = vld [vmem:[%s3376 + $0x28] sm:$0xf]
      %v3388 = vld [vmem:[%s3376 + $0x2c] sm:$0xf]
      %v3389 = vld [vmem:[%s3376 + $0x30] sm:$0xf]
      %v3390 = vld [vmem:[%s3376 + $0x34] sm:$0xf]
      %v3391 = vld [vmem:[%s3376 + $0x38] sm:$0xf]
      %v3392 = vld [vmem:[%s3376 + $0x3c] sm:$0xf]
      %v3425 = vunpack.c.l.b16 %v3344
      %v3426 = vunpack.c.l.b16 %v3345
      %v3427 = vunpack.c.l.b16 %v3346
      %v3428 = vunpack.c.l.b16 %v3347
      %v3429 = vunpack.c.l.b16 %v3348
      %v3430 = vunpack.c.l.b16 %v3349
      %v3431 = vunpack.c.l.b16 %v3350
      %v3432 = vunpack.c.l.b16 %v3351
      %v3433 = vunpack.c.l.b16 %v3352
      %v3434 = vunpack.c.l.b16 %v3353
      %v3435 = vunpack.c.l.b16 %v3354
      %v3436 = vunpack.c.l.b16 %v3355
      %v3437 = vunpack.c.l.b16 %v3356
      %v3438 = vunpack.c.l.b16 %v3357
      %v3439 = vunpack.c.l.b16 %v3358
      %v3440 = vunpack.c.l.b16 %v3359
      %v3441 = vunpack.c.l.b16 %v3360
      %v3442 = vunpack.c.l.b16 %v3361
      %v3443 = vunpack.c.l.b16 %v3362
      %v3444 = vunpack.c.l.b16 %v3363
      %v3445 = vunpack.c.l.b16 %v3364
      %v3446 = vunpack.c.l.b16 %v3365
      %v3447 = vunpack.c.l.b16 %v3366
      %v3448 = vunpack.c.l.b16 %v3367
      %v3449 = vunpack.c.l.b16 %v3368
      %v3450 = vunpack.c.l.b16 %v3369
      %v3451 = vunpack.c.l.b16 %v3370
      %v3452 = vunpack.c.l.b16 %v3371
      %v3453 = vunpack.c.l.b16 %v3372
      %v3454 = vunpack.c.l.b16 %v3373
      %v3455 = vunpack.c.l.b16 %v3374
      %v3456 = vunpack.c.l.b16 %v3375
      %v3457 = vpack.c.b16 %v3426, %v3425
      %v3458 = vpack.c.b16 %v3428, %v3427
      %v3459 = vpack.c.b16 %v3430, %v3429
      %v3460 = vpack.c.b16 %v3432, %v3431
      %v3461 = vpack.c.b16 %v3434, %v3433
      %v3462 = vpack.c.b16 %v3436, %v3435
      %v3463 = vpack.c.b16 %v3438, %v3437
      %v3464 = vpack.c.b16 %v3440, %v3439
      %v3465 = vpack.c.b16 %v3442, %v3441
      %v3466 = vpack.c.b16 %v3444, %v3443
      %v3467 = vpack.c.b16 %v3446, %v3445
      %v3468 = vpack.c.b16 %v3448, %v3447
      %v3469 = vpack.c.b16 %v3450, %v3449
      %v3470 = vpack.c.b16 %v3452, %v3451
      %v3471 = vpack.c.b16 %v3454, %v3453
      %v3472 = vpack.c.b16 %v3456, %v3455
      %v3505 = vunpack.c.l.b16 %v3377
      %v3506 = vunpack.c.l.b16 %v3378
      %v3507 = vunpack.c.l.b16 %v3379
      %v3508 = vunpack.c.l.b16 %v3380
      %v3509 = vunpack.c.l.b16 %v3381
      %v3510 = vunpack.c.l.b16 %v3382
      %v3511 = vunpack.c.l.b16 %v3383
      %v3512 = vunpack.c.l.b16 %v3384
      %v3513 = vunpack.c.l.b16 %v3385
      %v3514 = vunpack.c.l.b16 %v3386
      %v3515 = vunpack.c.l.b16 %v3387
      %v3516 = vunpack.c.l.b16 %v3388
      %v3517 = vunpack.c.l.b16 %v3389
      %v3518 = vunpack.c.l.b16 %v3390
      %v3519 = vunpack.c.l.b16 %v3391
      %v3520 = vunpack.c.l.b16 %v3392
      %v3521 = vpack.c.b16 %v3506, %v3505
      %v3522 = vpack.c.b16 %v3508, %v3507
      %v3523 = vpack.c.b16 %v3510, %v3509
      %v3524 = vpack.c.b16 %v3512, %v3511
      %v3525 = vpack.c.b16 %v3514, %v3513
      %v3526 = vpack.c.b16 %v3516, %v3515
      %v3527 = vpack.c.b16 %v3518, %v3517
      %v3528 = vpack.c.b16 %v3520, %v3519
      %3537 = vmatprep.subr.bf16.mxu0 0
      %3538 = vmatpush1.bf16.msra.mxu0 %v3521
      %3539 = vmatprep.subr.bf16.mxu0 0
      %3540 = vmatpush1.bf16.msra.mxu0 %v3522
      %3541 = vmatprep.subr.bf16.mxu0 0
      %3542 = vmatpush1.bf16.msra.mxu0 %v3523
      %3543 = vmatprep.subr.bf16.mxu0 0
      %3544 = vmatpush1.bf16.msra.mxu0 %v3524
      %3545 = vmatprep.subr.bf16.mxu0 0
      %3546 = vmatpush1.bf16.msra.mxu0 %v3525
      %3547 = vmatprep.subr.bf16.mxu0 0
      %3548 = vmatpush1.bf16.msra.mxu0 %v3526
      %3549 = vmatprep.subr.bf16.mxu0 0
      %3550 = vmatpush1.bf16.msra.mxu0 %v3527
      %3551 = vmatprep.subr.bf16.mxu0 0
      %3552 = vmatpush1.bf16.msra.mxu0 %v3528
      %3553 = vmatprep.subr.bf16.mxu0 0
      %3554 = vmatpush1.bf16.msra.mxu0 0
      %3555 = vmatprep.subr.bf16.mxu0 0
      %3556 = vmatpush1.bf16.msra.mxu0 0
      %3557 = vmatprep.subr.bf16.mxu0 0
      %3558 = vmatpush1.bf16.msra.mxu0 0
      %3559 = vmatprep.subr.bf16.mxu0 0
      %3560 = vmatpush1.bf16.msra.mxu0 0
      %3561 = vmatprep.subr.bf16.mxu0 0
      %3562 = vmatpush1.bf16.msra.mxu0 0
      %3563 = vmatprep.subr.bf16.mxu0 0
      %3564 = vmatpush1.bf16.msra.mxu0 0
      %3565 = vmatprep.subr.bf16.mxu0 0
      %3566 = vmatpush1.bf16.msra.mxu0 0
      %3567 = vmatprep.subr.bf16.mxu0 0
      %3568 = vmatpush1.bf16.msra.mxu0 0
      %3569 = vmatprep.mubr.bf16.mxu0 0
      %3570 = vmatmul.mubr.bf16.gmra.mrb[0].mxu0 %v3457
      %v3571 = vpop.f32.mrb[0].mxu0
      %v3572 = vadd.f32 0.0, %v3571
      %v3573 = vpop.f32.mrb[0].mxu0
      %v3574 = vpop.f32.mrb[0].mxu0
      %v3575 = vadd.f32 0.0, %v3574
      %v3576 = vpop.f32.mrb[0].mxu0
      %3577 = vmatprep.mubr.bf16.mxu0 0
      %3578 = vmatmul.mubr.bf16.gmra.mrb[0].mxu0 %v3458
      %v3579 = vpop.f32.mrb[0].mxu0
      %v3580 = vadd.f32 0.0, %v3579
      %v3581 = vpop.f32.mrb[0].mxu0
      %v3582 = vpop.f32.mrb[0].mxu0
      %v3583 = vadd.f32 0.0, %v3582
      %v3584 = vpop.f32.mrb[0].mxu0
      %3585 = vmatprep.mubr.bf16.mxu0 0
      %3586 = vmatmul.mubr.bf16.gmra.mrb[0].mxu0 %v3459
      %v3587 = vpop.f32.mrb[0].mxu0
      %v3588 = vadd.f32 0.0, %v3587
      %v3589 = vpop.f32.mrb[0].mxu0
      %v3590 = vpop.f32.mrb[0].mxu0
      %v3591 = vadd.f32 0.0, %v3590
      %v3592 = vpop.f32.mrb[0].mxu0
      %3593 = vmatprep.mubr.bf16.mxu0 0
      %3594 = vmatmul.mubr.bf16.gmra.mrb[0].mxu0 %v3460
      %v3595 = vpop.f32.mrb[0].mxu0
      %v3596 = vadd.f32 0.0, %v3595
      %v3597 = vpop.f32.mrb[0].mxu0
      %v3598 = vpop.f32.mrb[0].mxu0
      %v3599 = vadd.f32 0.0, %v3598
      %v3600 = vpop.f32.mrb[0].mxu0
      %3601 = vmatprep.mubr.bf16.mxu0 0
      %3602 = vmatmul.mubr.bf16.gmra.mrb[0].mxu0 %v3461
      %v3603 = vpop.f32.mrb[0].mxu0
      %v3604 = vadd.f32 0.0, %v3603
      %v3605 = vpop.f32.mrb[0].mxu0
      %v3606 = vpop.f32.mrb[0].mxu0
      %v3607 = vadd.f32 0.0, %v3606
      %v3608 = vpop.f32.mrb[0].mxu0
      %3609 = vmatprep.mubr.bf16.mxu0 0
      %3610 = vmatmul.mubr.bf16.gmra.mrb[0].mxu0 %v3462
      %v3611 = vpop.f32.mrb[0].mxu0
      %v3612 = vadd.f32 0.0, %v3611
      %v3613 = vpop.f32.mrb[0].mxu0
      %v3614 = vpop.f32.mrb[0].mxu0
      %v3615 = vadd.f32 0.0, %v3614
      %v3616 = vpop.f32.mrb[0].mxu0
      %3617 = vmatprep.mubr.bf16.mxu0 0
      %3618 = vmatmul.mubr.bf16.gmra.mrb[0].mxu0 %v3463
      %v3619 = vpop.f32.mrb[0].mxu0
      %v3620 = vadd.f32 0.0, %v3619
      %v3621 = vpop.f32.mrb[0].mxu0
      %v3622 = vpop.f32.mrb[0].mxu0
      %v3623 = vadd.f32 0.0, %v3622
      %v3624 = vpop.f32.mrb[0].mxu0
      %3625 = vmatprep.mubr.bf16.mxu0 0
      %3626 = vmatmul.mubr.bf16.gmra.mrb[0].mxu0 %v3464
      %v3627 = vpop.f32.mrb[0].mxu0
      %v3628 = vadd.f32 0.0, %v3627
      %v3629 = vpop.f32.mrb[0].mxu0
      %v3630 = vpop.f32.mrb[0].mxu0
      %v3631 = vadd.f32 0.0, %v3630
      %v3632 = vpop.f32.mrb[0].mxu0
      %3633 = vmatprep.mubr.bf16.mxu0 0
      %3634 = vmatmul.mubr.bf16.gmra.mrb[0].mxu0 %v3465
      %v3635 = vpop.f32.mrb[0].mxu0
      %v3636 = vadd.f32 0.0, %v3635
      %v3637 = vpop.f32.mrb[0].mxu0
      %v3638 = vpop.f32.mrb[0].mxu0
      %v3639 = vadd.f32 0.0, %v3638
      %v3640 = vpop.f32.mrb[0].mxu0
      %3641 = vmatprep.mubr.bf16.mxu0 0
      %3642 = vmatmul.mubr.bf16.gmra.mrb[0].mxu0 %v3466
      %v3643 = vpop.f32.mrb[0].mxu0
      %v3644 = vadd.f32 0.0, %v3643
      %v3645 = vpop.f32.mrb[0].mxu0
      %v3646 = vpop.f32.mrb[0].mxu0
      %v3647 = vadd.f32 0.0, %v3646
      %v3648 = vpop.f32.mrb[0].mxu0
      %3649 = vmatprep.mubr.bf16.mxu0 0
      %3650 = vmatmul.mubr.bf16.gmra.mrb[0].mxu0 %v3467
      %v3651 = vpop.f32.mrb[0].mxu0
      %v3652 = vadd.f32 0.0, %v3651
      %v3653 = vpop.f32.mrb[0].mxu0
      %v3654 = vpop.f32.mrb[0].mxu0
      %v3655 = vadd.f32 0.0, %v3654
      %v3656 = vpop.f32.mrb[0].mxu0
      %3657 = vmatprep.mubr.bf16.mxu0 0
      %3658 = vmatmul.mubr.bf16.gmra.mrb[0].mxu0 %v3468
      %v3659 = vpop.f32.mrb[0].mxu0
      %v3660 = vadd.f32 0.0, %v3659
      %v3661 = vpop.f32.mrb[0].mxu0
      %v3662 = vpop.f32.mrb[0].mxu0
      %v3663 = vadd.f32 0.0, %v3662
      %v3664 = vpop.f32.mrb[0].mxu0
      %3665 = vmatprep.mubr.bf16.mxu0 0
      %3666 = vmatmul.mubr.bf16.gmra.mrb[0].mxu0 %v3469
      %v3667 = vpop.f32.mrb[0].mxu0
      %v3668 = vadd.f32 0.0, %v3667
      %v3669 = vpop.f32.mrb[0].mxu0
      %v3670 = vpop.f32.mrb[0].mxu0
      %v3671 = vadd.f32 0.0, %v3670
      %v3672 = vpop.f32.mrb[0].mxu0
      %3673 = vmatprep.mubr.bf16.mxu0 0
      %3674 = vmatmul.mubr.bf16.gmra.mrb[0].mxu0 %v3470
      %v3675 = vpop.f32.mrb[0].mxu0
      %v3676 = vadd.f32 0.0, %v3675
      %v3677 = vpop.f32.mrb[0].mxu0
      %v3678 = vpop.f32.mrb[0].mxu0
      %v3679 = vadd.f32 0.0, %v3678
      %v3680 = vpop.f32.mrb[0].mxu0
      %3681 = vmatprep.mubr.bf16.mxu0 0
      %3682 = vmatmul.mubr.bf16.gmra.mrb[0].mxu0 %v3471
      %v3683 = vpop.f32.mrb[0].mxu0
      %v3684 = vadd.f32 0.0, %v3683
      %v3685 = vpop.f32.mrb[0].mxu0
      %v3686 = vpop.f32.mrb[0].mxu0
      %v3687 = vadd.f32 0.0, %v3686
      %v3688 = vpop.f32.mrb[0].mxu0
      %3689 = vmatprep.mubr.bf16.mxu0 0
      %3690 = vmatmul.mubr.bf16.gmra.mrb[0].mxu0 %v3472
      %v3691 = vpop.f32.mrb[0].mxu0
      %v3692 = vadd.f32 0.0, %v3691
      %v3693 = vpop.f32.mrb[0].mxu0
      %v3694 = vpop.f32.mrb[0].mxu0
      %v3695 = vadd.f32 0.0, %v3694
      %v3696 = vpop.f32.mrb[0].mxu0
      %3697 = vdwg.mxu0
      %v3698 = vadd.f32 %v3311, %v3572
      %v3699 = vadd.f32 %v3312, %v3575
      %v3700 = vadd.f32 %v3313, %v3580
      %v3701 = vadd.f32 %v3314, %v3583
      %v3702 = vadd.f32 %v3315, %v3588
      %v3703 = vadd.f32 %v3316, %v3591
      %v3704 = vadd.f32 %v3317, %v3596
      %v3705 = vadd.f32 %v3318, %v3599
      %v3706 = vadd.f32 %v3319, %v3604
      %v3707 = vadd.f32 %v3320, %v3607
      %v3708 = vadd.f32 %v3321, %v3612
      %v3709 = vadd.f32 %v3322, %v3615
      %v3710 = vadd.f32 %v3323, %v3620
      %v3711 = vadd.f32 %v3324, %v3623
      %v3712 = vadd.f32 %v3325, %v3628
      %v3713 = vadd.f32 %v3326, %v3631
      %v3714 = vadd.f32 %v3327, %v3636
      %v3715 = vadd.f32 %v3328, %v3639
      %v3716 = vadd.f32 %v3329, %v3644
      %v3717 = vadd.f32 %v3330, %v3647
      %v3718 = vadd.f32 %v3331, %v3652
      %v3719 = vadd.f32 %v3332, %v3655
      %v3720 = vadd.f32 %v3333, %v3660
      %v3721 = vadd.f32 %v3334, %v3663
      %v3722 = vadd.f32 %v3335, %v3668
      %v3723 = vadd.f32 %v3336, %v3671
      %v3724 = vadd.f32 %v3337, %v3676
      %v3725 = vadd.f32 %v3338, %v3679
      %v3726 = vadd.f32 %v3339, %v3684
      %v3727 = vadd.f32 %v3340, %v3687
      %v3728 = vadd.f32 %v3341, %v3692
      %v3729 = vadd.f32 %v3342, %v3695
      %v3730 = vld [vmem:[%s3343] sm:$0xf]
      %v3731 = vld [vmem:[%s3343 + $0x4] sm:$0xf]
      %v3732 = vld [vmem:[%s3343 + $0x8] sm:$0x1]
      %v3733 = vld [vmem:[%s3343 + $0xc] sm:$0xf]
      %v3734 = vld [vmem:[%s3343 + $0x10] sm:$0xf]
      %v3735 = vld [vmem:[%s3343 + $0x14] sm:$0x1]
      %v3736 = vld [vmem:[%s3343 + $0x18] sm:$0xf]
      %v3737 = vld [vmem:[%s3343 + $0x1c] sm:$0xf]
      %v3738 = vld [vmem:[%s3343 + $0x20] sm:$0x1]
      %v3739 = vld [vmem:[%s3343 + $0x24] sm:$0xf]
      %v3740 = vld [vmem:[%s3343 + $0x28] sm:$0xf]
      %v3741 = vld [vmem:[%s3343 + $0x2c] sm:$0x1]
      %v3742 = vld [vmem:[%s3343 + $0x30] sm:$0xf]
      %v3743 = vld [vmem:[%s3343 + $0x34] sm:$0xf]
      %v3744 = vld [vmem:[%s3343 + $0x38] sm:$0x1]
      %v3745 = vld [vmem:[%s3343 + $0x3c] sm:$0xf]
      %v3746 = vld [vmem:[%s3343 + $0x40] sm:$0xf]
      %v3747 = vld [vmem:[%s3343 + $0x44] sm:$0x1]
      %v3748 = vld [vmem:[%s3343 + $0x48] sm:$0xf]
      %v3749 = vld [vmem:[%s3343 + $0x4c] sm:$0xf]
      %v3750 = vld [vmem:[%s3343 + $0x50] sm:$0x1]
      %v3751 = vld [vmem:[%s3343 + $0x54] sm:$0xf]
      %v3752 = vld [vmem:[%s3343 + $0x58] sm:$0xf]
      %v3753 = vld [vmem:[%s3343 + $0x5c] sm:$0x1]
      %v3754 = vld [vmem:[%s3343 + $0x60] sm:$0xf]
      %v3755 = vld [vmem:[%s3343 + $0x64] sm:$0xf]
      %v3756 = vld [vmem:[%s3343 + $0x68] sm:$0x1]
      %v3757 = vld [vmem:[%s3343 + $0x6c] sm:$0xf]
      %v3758 = vld [vmem:[%s3343 + $0x70] sm:$0xf]
      %v3759 = vld [vmem:[%s3343 + $0x74] sm:$0x1]
      %v3760 = vld [vmem:[%s3343 + $0x78] sm:$0xf]
      %v3761 = vld [vmem:[%s3343 + $0x7c] sm:$0xf]
      %v3762 = vld [vmem:[%s3343 + $0x80] sm:$0x1]
      %v3763 = vld [vmem:[%s3343 + $0x84] sm:$0xf]
      %v3764 = vld [vmem:[%s3343 + $0x88] sm:$0xf]
      %v3765 = vld [vmem:[%s3343 + $0x8c] sm:$0x1]
      %v3766 = vld [vmem:[%s3343 + $0x90] sm:$0xf]
      %v3767 = vld [vmem:[%s3343 + $0x94] sm:$0xf]
      %v3768 = vld [vmem:[%s3343 + $0x98] sm:$0x1]
      %v3769 = vld [vmem:[%s3343 + $0x9c] sm:$0xf]
      %v3770 = vld [vmem:[%s3343 + $0xa0] sm:$0xf]
      %v3771 = vld [vmem:[%s3343 + $0xa4] sm:$0x1]
      %v3772 = vld [vmem:[%s3343 + $0xa8] sm:$0xf]
      %v3773 = vld [vmem:[%s3343 + $0xac] sm:$0xf]
      %v3774 = vld [vmem:[%s3343 + $0xb0] sm:$0x1]
      %v3775 = vld [vmem:[%s3343 + $0xb4] sm:$0xf]
      %v3776 = vld [vmem:[%s3343 + $0xb8] sm:$0xf]
      %v3777 = vld [vmem:[%s3343 + $0xbc] sm:$0x1]
      %v3779 = vshrl.u32 %v3730, 16
      %v3781 = vrot.slane %v3779, 4
      %v3782 = vshll.u32 %v3730, 16
      %v3784 = vrot.slane %v3782, 5
      %v3785 = vor.u32 %v3781, %v3784
      %v3786 = vrot.slane %v3785, 4
      %v3788 = vshll.u32 %v3731, 16
      %v3790 = vrot.slane %v3788, 5
      %v3791 = vsel %vm239, %v3786, %v3790
      %v3792 = vshrl.u32 %v3731, 16
      %v3794 = vrot.slane %v3792, 4
      %v3795 = vor.u32 %v3794, %v3790
      %v3796 = vrot.slane %v3795, 4
      %v3798 = vshll.u32 %v3732, 16
      %v3800 = vrot.slane %v3798, 5
      %v3801 = vsel %vm239, %v3796, %v3800
      %v3803 = vshrl.u32 %v3733, 16
      %v3805 = vrot.slane %v3803, 4
      %v3806 = vshll.u32 %v3733, 16
      %v3808 = vrot.slane %v3806, 5
      %v3809 = vor.u32 %v3805, %v3808
      %v3810 = vrot.slane %v3809, 4
      %v3812 = vshll.u32 %v3734, 16
      %v3814 = vrot.slane %v3812, 5
      %v3815 = vsel %vm239, %v3810, %v3814
      %v3816 = vshrl.u32 %v3734, 16
      %v3818 = vrot.slane %v3816, 4
      %v3819 = vor.u32 %v3818, %v3814
      %v3820 = vrot.slane %v3819, 4
      %v3822 = vshll.u32 %v3735, 16
      %v3824 = vrot.slane %v3822, 5
      %v3825 = vsel %vm239, %v3820, %v3824
      %v3827 = vshrl.u32 %v3736, 16
      %v3829 = vrot.slane %v3827, 4
      %v3830 = vshll.u32 %v3736, 16
      %v3832 = vrot.slane %v3830, 5
      %v3833 = vor.u32 %v3829, %v3832
      %v3834 = vrot.slane %v3833, 4
      %v3836 = vshll.u32 %v3737, 16
      %v3838 = vrot.slane %v3836, 5
      %v3839 = vsel %vm239, %v3834, %v3838
      %v3840 = vshrl.u32 %v3737, 16
      %v3842 = vrot.slane %v3840, 4
      %v3843 = vor.u32 %v3842, %v3838
      %v3844 = vrot.slane %v3843, 4
      %v3846 = vshll.u32 %v3738, 16
      %v3848 = vrot.slane %v3846, 5
      %v3849 = vsel %vm239, %v3844, %v3848
      %v3851 = vshrl.u32 %v3739, 16
      %v3853 = vrot.slane %v3851, 4
      %v3854 = vshll.u32 %v3739, 16
      %v3856 = vrot.slane %v3854, 5
      %v3857 = vor.u32 %v3853, %v3856
      %v3858 = vrot.slane %v3857, 4
      %v3860 = vshll.u32 %v3740, 16
      %v3862 = vrot.slane %v3860, 5
      %v3863 = vsel %vm239, %v3858, %v3862
      %v3864 = vshrl.u32 %v3740, 16
      %v3866 = vrot.slane %v3864, 4
      %v3867 = vor.u32 %v3866, %v3862
      %v3868 = vrot.slane %v3867, 4
      %v3870 = vshll.u32 %v3741, 16
      %v3872 = vrot.slane %v3870, 5
      %v3873 = vsel %vm239, %v3868, %v3872
      %v3875 = vshrl.u32 %v3742, 16
      %v3877 = vrot.slane %v3875, 4
      %v3878 = vshll.u32 %v3742, 16
      %v3880 = vrot.slane %v3878, 5
      %v3881 = vor.u32 %v3877, %v3880
      %v3882 = vrot.slane %v3881, 4
      %v3884 = vshll.u32 %v3743, 16
      %v3886 = vrot.slane %v3884, 5
      %v3887 = vsel %vm239, %v3882, %v3886
      %v3888 = vshrl.u32 %v3743, 16
      %v3890 = vrot.slane %v3888, 4
      %v3891 = vor.u32 %v3890, %v3886
      %v3892 = vrot.slane %v3891, 4
      %v3894 = vshll.u32 %v3744, 16
      %v3896 = vrot.slane %v3894, 5
      %v3897 = vsel %vm239, %v3892, %v3896
      %v3899 = vshrl.u32 %v3745, 16
      %v3901 = vrot.slane %v3899, 4
      %v3902 = vshll.u32 %v3745, 16
      %v3904 = vrot.slane %v3902, 5
      %v3905 = vor.u32 %v3901, %v3904
      %v3906 = vrot.slane %v3905, 4
      %v3908 = vshll.u32 %v3746, 16
      %v3910 = vrot.slane %v3908, 5
      %v3911 = vsel %vm239, %v3906, %v3910
      %v3912 = vshrl.u32 %v3746, 16
      %v3914 = vrot.slane %v3912, 4
      %v3915 = vor.u32 %v3914, %v3910
      %v3916 = vrot.slane %v3915, 4
      %v3918 = vshll.u32 %v3747, 16
      %v3920 = vrot.slane %v3918, 5
      %v3921 = vsel %vm239, %v3916, %v3920
      %v3923 = vshrl.u32 %v3748, 16
      %v3925 = vrot.slane %v3923, 4
      %v3926 = vshll.u32 %v3748, 16
      %v3928 = vrot.slane %v3926, 5
      %v3929 = vor.u32 %v3925, %v3928
      %v3930 = vrot.slane %v3929, 4
      %v3932 = vshll.u32 %v3749, 16
      %v3934 = vrot.slane %v3932, 5
      %v3935 = vsel %vm239, %v3930, %v3934
      %v3936 = vshrl.u32 %v3749, 16
      %v3938 = vrot.slane %v3936, 4
      %v3939 = vor.u32 %v3938, %v3934
      %v3940 = vrot.slane %v3939, 4
      %v3942 = vshll.u32 %v3750, 16
      %v3944 = vrot.slane %v3942, 5
      %v3945 = vsel %vm239, %v3940, %v3944
      %v3947 = vshrl.u32 %v3751, 16
      %v3949 = vrot.slane %v3947, 4
      %v3950 = vshll.u32 %v3751, 16
      %v3952 = vrot.slane %v3950, 5
      %v3953 = vor.u32 %v3949, %v3952
      %v3954 = vrot.slane %v3953, 4
      %v3956 = vshll.u32 %v3752, 16
      %v3958 = vrot.slane %v3956, 5
      %v3959 = vsel %vm239, %v3954, %v3958
      %v3960 = vshrl.u32 %v3752, 16
      %v3962 = vrot.slane %v3960, 4
      %v3963 = vor.u32 %v3962, %v3958
      %v3964 = vrot.slane %v3963, 4
      %v3966 = vshll.u32 %v3753, 16
      %v3968 = vrot.slane %v3966, 5
      %v3969 = vsel %vm239, %v3964, %v3968
      %v3971 = vshrl.u32 %v3754, 16
      %v3973 = vrot.slane %v3971, 4
      %v3974 = vshll.u32 %v3754, 16
      %v3976 = vrot.slane %v3974, 5
      %v3977 = vor.u32 %v3973, %v3976
      %v3978 = vrot.slane %v3977, 4
      %v3980 = vshll.u32 %v3755, 16
      %v3982 = vrot.slane %v3980, 5
      %v3983 = vsel %vm239, %v3978, %v3982
      %v3984 = vshrl.u32 %v3755, 16
      %v3986 = vrot.slane %v3984, 4
      %v3987 = vor.u32 %v3986, %v3982
      %v3988 = vrot.slane %v3987, 4
      %v3990 = vshll.u32 %v3756, 16
      %v3992 = vrot.slane %v3990, 5
      %v3993 = vsel %vm239, %v3988, %v3992
      %v3995 = vshrl.u32 %v3757, 16
      %v3997 = vrot.slane %v3995, 4
      %v3998 = vshll.u32 %v3757, 16
      %v4000 = vrot.slane %v3998, 5
      %v4001 = vor.u32 %v3997, %v4000
      %v4002 = vrot.slane %v4001, 4
      %v4004 = vshll.u32 %v3758, 16
      %v4006 = vrot.slane %v4004, 5
      %v4007 = vsel %vm239, %v4002, %v4006
      %v4008 = vshrl.u32 %v3758, 16
      %v4010 = vrot.slane %v4008, 4
      %v4011 = vor.u32 %v4010, %v4006
      %v4012 = vrot.slane %v4011, 4
      %v4014 = vshll.u32 %v3759, 16
      %v4016 = vrot.slane %v4014, 5
      %v4017 = vsel %vm239, %v4012, %v4016
      %v4019 = vshrl.u32 %v3760, 16
      %v4021 = vrot.slane %v4019, 4
      %v4022 = vshll.u32 %v3760, 16
      %v4024 = vrot.slane %v4022, 5
      %v4025 = vor.u32 %v4021, %v4024
      %v4026 = vrot.slane %v4025, 4
      %v4028 = vshll.u32 %v3761, 16
      %v4030 = vrot.slane %v4028, 5
      %v4031 = vsel %vm239, %v4026, %v4030
      %v4032 = vshrl.u32 %v3761, 16
      %v4034 = vrot.slane %v4032, 4
      %v4035 = vor.u32 %v4034, %v4030
      %v4036 = vrot.slane %v4035, 4
      %v4038 = vshll.u32 %v3762, 16
      %v4040 = vrot.slane %v4038, 5
      %v4041 = vsel %vm239, %v4036, %v4040
      %v4043 = vshrl.u32 %v3763, 16
      %v4045 = vrot.slane %v4043, 4
      %v4046 = vshll.u32 %v3763, 16
      %v4048 = vrot.slane %v4046, 5
      %v4049 = vor.u32 %v4045, %v4048
      %v4050 = vrot.slane %v4049, 4
      %v4052 = vshll.u32 %v3764, 16
      %v4054 = vrot.slane %v4052, 5
      %v4055 = vsel %vm239, %v4050, %v4054
      %v4056 = vshrl.u32 %v3764, 16
      %v4058 = vrot.slane %v4056, 4
      %v4059 = vor.u32 %v4058, %v4054
      %v4060 = vrot.slane %v4059, 4
      %v4062 = vshll.u32 %v3765, 16
      %v4064 = vrot.slane %v4062, 5
      %v4065 = vsel %vm239, %v4060, %v4064
      %v4067 = vshrl.u32 %v3766, 16
      %v4069 = vrot.slane %v4067, 4
      %v4070 = vshll.u32 %v3766, 16
      %v4072 = vrot.slane %v4070, 5
      %v4073 = vor.u32 %v4069, %v4072
      %v4074 = vrot.slane %v4073, 4
      %v4076 = vshll.u32 %v3767, 16
      %v4078 = vrot.slane %v4076, 5
      %v4079 = vsel %vm239, %v4074, %v4078
      %v4080 = vshrl.u32 %v3767, 16
      %v4082 = vrot.slane %v4080, 4
      %v4083 = vor.u32 %v4082, %v4078
      %v4084 = vrot.slane %v4083, 4
      %v4086 = vshll.u32 %v3768, 16
      %v4088 = vrot.slane %v4086, 5
      %v4089 = vsel %vm239, %v4084, %v4088
      %v4091 = vshrl.u32 %v3769, 16
      %v4093 = vrot.slane %v4091, 4
      %v4094 = vshll.u32 %v3769, 16
      %v4096 = vrot.slane %v4094, 5
      %v4097 = vor.u32 %v4093, %v4096
      %v4098 = vrot.slane %v4097, 4
      %v4100 = vshll.u32 %v3770, 16
      %v4102 = vrot.slane %v4100, 5
      %v4103 = vsel %vm239, %v4098, %v4102
      %v4104 = vshrl.u32 %v3770, 16
      %v4106 = vrot.slane %v4104, 4
      %v4107 = vor.u32 %v4106, %v4102
      %v4108 = vrot.slane %v4107, 4
      %v4110 = vshll.u32 %v3771, 16
      %v4112 = vrot.slane %v4110, 5
      %v4113 = vsel %vm239, %v4108, %v4112
      %v4115 = vshrl.u32 %v3772, 16
      %v4117 = vrot.slane %v4115, 4
      %v4118 = vshll.u32 %v3772, 16
      %v4120 = vrot.slane %v4118, 5
      %v4121 = vor.u32 %v4117, %v4120
      %v4122 = vrot.slane %v4121, 4
      %v4124 = vshll.u32 %v3773, 16
      %v4126 = vrot.slane %v4124, 5
      %v4127 = vsel %vm239, %v4122, %v4126
      %v4128 = vshrl.u32 %v3773, 16
      %v4130 = vrot.slane %v4128, 4
      %v4131 = vor.u32 %v4130, %v4126
      %v4132 = vrot.slane %v4131, 4
      %v4134 = vshll.u32 %v3774, 16
      %v4136 = vrot.slane %v4134, 5
      %v4137 = vsel %vm239, %v4132, %v4136
      %v4139 = vshrl.u32 %v3775, 16
      %v4141 = vrot.slane %v4139, 4
      %v4142 = vshll.u32 %v3775, 16
      %v4144 = vrot.slane %v4142, 5
      %v4145 = vor.u32 %v4141, %v4144
      %v4146 = vrot.slane %v4145, 4
      %v4148 = vshll.u32 %v3776, 16
      %v4150 = vrot.slane %v4148, 5
      %v4151 = vsel %vm239, %v4146, %v4150
      %v4152 = vshrl.u32 %v3776, 16
      %v4154 = vrot.slane %v4152, 4
      %v4155 = vor.u32 %v4154, %v4150
      %v4156 = vrot.slane %v4155, 4
      %v4158 = vshll.u32 %v3777, 16
      %v4160 = vrot.slane %v4158, 5
      %v4161 = vsel %vm239, %v4156, %v4160
      %s4162 = scalar_lea.vmem %s1, 448
      %v4163 = vld [vmem:[%s4162] sm:$0xf]
      %v4164 = vld [vmem:[%s4162 + $0x4] sm:$0xf]
      %v4165 = vld [vmem:[%s4162 + $0x8] sm:$0xf]
      %v4166 = vld [vmem:[%s4162 + $0xc] sm:$0xf]
      %v4167 = vld [vmem:[%s4162 + $0x10] sm:$0xf]
      %v4168 = vld [vmem:[%s4162 + $0x14] sm:$0xf]
      %v4169 = vld [vmem:[%s4162 + $0x18] sm:$0xf]
      %v4170 = vld [vmem:[%s4162 + $0x1c] sm:$0xf]
      %v4171 = vld [vmem:[%s4162 + $0x20] sm:$0xf]
      %v4172 = vld [vmem:[%s4162 + $0x24] sm:$0xf]
      %v4173 = vld [vmem:[%s4162 + $0x28] sm:$0xf]
      %v4174 = vld [vmem:[%s4162 + $0x2c] sm:$0xf]
      %v4175 = vld [vmem:[%s4162 + $0x30] sm:$0xf]
      %v4176 = vld [vmem:[%s4162 + $0x34] sm:$0xf]
      %v4177 = vld [vmem:[%s4162 + $0x38] sm:$0xf]
      %v4178 = vld [vmem:[%s4162 + $0x3c] sm:$0xf]
      %v4179 = vunpack.c.l.b16 %v3791
      %v4180 = vunpack.c.l.b16 %v3801
      %v4181 = vunpack.c.l.b16 %v3815
      %v4182 = vunpack.c.l.b16 %v3825
      %v4183 = vunpack.c.l.b16 %v3839
      %v4184 = vunpack.c.l.b16 %v3849
      %v4185 = vunpack.c.l.b16 %v3863
      %v4186 = vunpack.c.l.b16 %v3873
      %v4187 = vunpack.c.l.b16 %v3887
      %v4188 = vunpack.c.l.b16 %v3897
      %v4189 = vunpack.c.l.b16 %v3911
      %v4190 = vunpack.c.l.b16 %v3921
      %v4191 = vunpack.c.l.b16 %v3935
      %v4192 = vunpack.c.l.b16 %v3945
      %v4193 = vunpack.c.l.b16 %v3959
      %v4194 = vunpack.c.l.b16 %v3969
      %v4195 = vunpack.c.l.b16 %v3983
      %v4196 = vunpack.c.l.b16 %v3993
      %v4197 = vunpack.c.l.b16 %v4007
      %v4198 = vunpack.c.l.b16 %v4017
      %v4199 = vunpack.c.l.b16 %v4031
      %v4200 = vunpack.c.l.b16 %v4041
      %v4201 = vunpack.c.l.b16 %v4055
      %v4202 = vunpack.c.l.b16 %v4065
      %v4203 = vunpack.c.l.b16 %v4079
      %v4204 = vunpack.c.l.b16 %v4089
      %v4205 = vunpack.c.l.b16 %v4103
      %v4206 = vunpack.c.l.b16 %v4113
      %v4207 = vunpack.c.l.b16 %v4127
      %v4208 = vunpack.c.l.b16 %v4137
      %v4209 = vunpack.c.l.b16 %v4151
      %v4210 = vunpack.c.l.b16 %v4161
      %v4211 = vpack.c.b16 %v4180, %v4179
      %v4212 = vpack.c.b16 %v4182, %v4181
      %v4213 = vpack.c.b16 %v4184, %v4183
      %v4214 = vpack.c.b16 %v4186, %v4185
      %v4215 = vpack.c.b16 %v4188, %v4187
      %v4216 = vpack.c.b16 %v4190, %v4189
      %v4217 = vpack.c.b16 %v4192, %v4191
      %v4218 = vpack.c.b16 %v4194, %v4193
      %v4219 = vpack.c.b16 %v4196, %v4195
      %v4220 = vpack.c.b16 %v4198, %v4197
      %v4221 = vpack.c.b16 %v4200, %v4199
      %v4222 = vpack.c.b16 %v4202, %v4201
      %v4223 = vpack.c.b16 %v4204, %v4203
      %v4224 = vpack.c.b16 %v4206, %v4205
      %v4225 = vpack.c.b16 %v4208, %v4207
      %v4226 = vpack.c.b16 %v4210, %v4209
      %v4259 = vunpack.c.l.b16 %v4163
      %v4260 = vunpack.c.l.b16 %v4164
      %v4261 = vunpack.c.l.b16 %v4165
      %v4262 = vunpack.c.l.b16 %v4166
      %v4263 = vunpack.c.l.b16 %v4167
      %v4264 = vunpack.c.l.b16 %v4168
      %v4265 = vunpack.c.l.b16 %v4169
      %v4266 = vunpack.c.l.b16 %v4170
      %v4267 = vunpack.c.l.b16 %v4171
      %v4268 = vunpack.c.l.b16 %v4172
      %v4269 = vunpack.c.l.b16 %v4173
      %v4270 = vunpack.c.l.b16 %v4174
      %v4271 = vunpack.c.l.b16 %v4175
      %v4272 = vunpack.c.l.b16 %v4176
      %v4273 = vunpack.c.l.b16 %v4177
      %v4274 = vunpack.c.l.b16 %v4178
      %v4275 = vpack.c.b16 %v4260, %v4259
      %v4276 = vpack.c.b16 %v4262, %v4261
      %v4277 = vpack.c.b16 %v4264, %v4263
      %v4278 = vpack.c.b16 %v4266, %v4265
      %v4279 = vpack.c.b16 %v4268, %v4267
      %v4280 = vpack.c.b16 %v4270, %v4269
      %v4281 = vpack.c.b16 %v4272, %v4271
      %v4282 = vpack.c.b16 %v4274, %v4273
      %4291 = vmatprep.subr.bf16.mxu0 0
      %4292 = vmatpush1.bf16.msra.mxu0 %v4275
      %4293 = vmatprep.subr.bf16.mxu0 0
      %4294 = vmatpush1.bf16.msra.mxu0 %v4276
      %4295 = vmatprep.subr.bf16.mxu0 0
      %4296 = vmatpush1.bf16.msra.mxu0 %v4277
      %4297 = vmatprep.subr.bf16.mxu0 0
      %4298 = vmatpush1.bf16.msra.mxu0 %v4278
      %4299 = vmatprep.subr.bf16.mxu0 0
      %4300 = vmatpush1.bf16.msra.mxu0 %v4279
      %4301 = vmatprep.subr.bf16.mxu0 0
      %4302 = vmatpush1.bf16.msra.mxu0 %v4280
      %4303 = vmatprep.subr.bf16.mxu0 0
      %4304 = vmatpush1.bf16.msra.mxu0 %v4281
      %4305 = vmatprep.subr.bf16.mxu0 0
      %4306 = vmatpush1.bf16.msra.mxu0 %v4282
      %4307 = vmatprep.subr.bf16.mxu0 0
      %4308 = vmatpush1.bf16.msra.mxu0 0
      %4309 = vmatprep.subr.bf16.mxu0 0
      %4310 = vmatpush1.bf16.msra.mxu0 0
      %4311 = vmatprep.subr.bf16.mxu0 0
      %4312 = vmatpush1.bf16.msra.mxu0 0
      %4313 = vmatprep.subr.bf16.mxu0 0
      %4314 = vmatpush1.bf16.msra.mxu0 0
      %4315 = vmatprep.subr.bf16.mxu0 0
      %4316 = vmatpush1.bf16.msra.mxu0 0
      %4317 = vmatprep.subr.bf16.mxu0 0
      %4318 = vmatpush1.bf16.msra.mxu0 0
      %4319 = vmatprep.subr.bf16.mxu0 0
      %4320 = vmatpush1.bf16.msra.mxu0 0
      %4321 = vmatprep.subr.bf16.mxu0 0
      %4322 = vmatpush1.bf16.msra.mxu0 0
      %4323 = vmatprep.mubr.bf16.mxu0 0
      %4324 = vmatmul.mubr.bf16.gmra.mrb[0].mxu0 %v4211
      %v4325 = vpop.f32.mrb[0].mxu0
      %v4326 = vadd.f32 0.0, %v4325
      %v4327 = vpop.f32.mrb[0].mxu0
      %v4328 = vpop.f32.mrb[0].mxu0
      %v4329 = vadd.f32 0.0, %v4328
      %v4330 = vpop.f32.mrb[0].mxu0
      %4331 = vmatprep.mubr.bf16.mxu0 0
      %4332 = vmatmul.mubr.bf16.gmra.mrb[0].mxu0 %v4212
      %v4333 = vpop.f32.mrb[0].mxu0
      %v4334 = vadd.f32 0.0, %v4333
      %v4335 = vpop.f32.mrb[0].mxu0
      %v4336 = vpop.f32.mrb[0].mxu0
      %v4337 = vadd.f32 0.0, %v4336
      %v4338 = vpop.f32.mrb[0].mxu0
      %4339 = vmatprep.mubr.bf16.mxu0 0
      %4340 = vmatmul.mubr.bf16.gmra.mrb[0].mxu0 %v4213
      %v4341 = vpop.f32.mrb[0].mxu0
      %v4342 = vadd.f32 0.0, %v4341
      %v4343 = vpop.f32.mrb[0].mxu0
      %v4344 = vpop.f32.mrb[0].mxu0
      %v4345 = vadd.f32 0.0, %v4344
      %v4346 = vpop.f32.mrb[0].mxu0
      %4347 = vmatprep.mubr.bf16.mxu0 0
      %4348 = vmatmul.mubr.bf16.gmra.mrb[0].mxu0 %v4214
      %v4349 = vpop.f32.mrb[0].mxu0
      %v4350 = vadd.f32 0.0, %v4349
      %v4351 = vpop.f32.mrb[0].mxu0
      %v4352 = vpop.f32.mrb[0].mxu0
      %v4353 = vadd.f32 0.0, %v4352
      %v4354 = vpop.f32.mrb[0].mxu0
      %4355 = vmatprep.mubr.bf16.mxu0 0
      %4356 = vmatmul.mubr.bf16.gmra.mrb[0].mxu0 %v4215
      %v4357 = vpop.f32.mrb[0].mxu0
      %v4358 = vadd.f32 0.0, %v4357
      %v4359 = vpop.f32.mrb[0].mxu0
      %v4360 = vpop.f32.mrb[0].mxu0
      %v4361 = vadd.f32 0.0, %v4360
      %v4362 = vpop.f32.mrb[0].mxu0
      %4363 = vmatprep.mubr.bf16.mxu0 0
      %4364 = vmatmul.mubr.bf16.gmra.mrb[0].mxu0 %v4216
      %v4365 = vpop.f32.mrb[0].mxu0
      %v4366 = vadd.f32 0.0, %v4365
      %v4367 = vpop.f32.mrb[0].mxu0
      %v4368 = vpop.f32.mrb[0].mxu0
      %v4369 = vadd.f32 0.0, %v4368
      %v4370 = vpop.f32.mrb[0].mxu0
      %4371 = vmatprep.mubr.bf16.mxu0 0
      %4372 = vmatmul.mubr.bf16.gmra.mrb[0].mxu0 %v4217
      %v4373 = vpop.f32.mrb[0].mxu0
      %v4374 = vadd.f32 0.0, %v4373
      %v4375 = vpop.f32.mrb[0].mxu0
      %v4376 = vpop.f32.mrb[0].mxu0
      %v4377 = vadd.f32 0.0, %v4376
      %v4378 = vpop.f32.mrb[0].mxu0
      %4379 = vmatprep.mubr.bf16.mxu0 0
      %4380 = vmatmul.mubr.bf16.gmra.mrb[0].mxu0 %v4218
      %v4381 = vpop.f32.mrb[0].mxu0
      %v4382 = vadd.f32 0.0, %v4381
      %v4383 = vpop.f32.mrb[0].mxu0
      %v4384 = vpop.f32.mrb[0].mxu0
      %v4385 = vadd.f32 0.0, %v4384
      %v4386 = vpop.f32.mrb[0].mxu0
      %4387 = vmatprep.mubr.bf16.mxu0 0
      %4388 = vmatmul.mubr.bf16.gmra.mrb[0].mxu0 %v4219
      %v4389 = vpop.f32.mrb[0].mxu0
      %v4390 = vadd.f32 0.0, %v4389
      %v4391 = vpop.f32.mrb[0].mxu0
      %v4392 = vpop.f32.mrb[0].mxu0
      %v4393 = vadd.f32 0.0, %v4392
      %v4394 = vpop.f32.mrb[0].mxu0
      %4395 = vmatprep.mubr.bf16.mxu0 0
      %4396 = vmatmul.mubr.bf16.gmra.mrb[0].mxu0 %v4220
      %v4397 = vpop.f32.mrb[0].mxu0
      %v4398 = vadd.f32 0.0, %v4397
      %v4399 = vpop.f32.mrb[0].mxu0
      %v4400 = vpop.f32.mrb[0].mxu0
      %v4401 = vadd.f32 0.0, %v4400
      %v4402 = vpop.f32.mrb[0].mxu0
      %4403 = vmatprep.mubr.bf16.mxu0 0
      %4404 = vmatmul.mubr.bf16.gmra.mrb[0].mxu0 %v4221
      %v4405 = vpop.f32.mrb[0].mxu0
      %v4406 = vadd.f32 0.0, %v4405
      %v4407 = vpop.f32.mrb[0].mxu0
      %v4408 = vpop.f32.mrb[0].mxu0
      %v4409 = vadd.f32 0.0, %v4408
      %v4410 = vpop.f32.mrb[0].mxu0
      %4411 = vmatprep.mubr.bf16.mxu0 0
      %4412 = vmatmul.mubr.bf16.gmra.mrb[0].mxu0 %v4222
      %v4413 = vpop.f32.mrb[0].mxu0
      %v4414 = vadd.f32 0.0, %v4413
      %v4415 = vpop.f32.mrb[0].mxu0
      %v4416 = vpop.f32.mrb[0].mxu0
      %v4417 = vadd.f32 0.0, %v4416
      %v4418 = vpop.f32.mrb[0].mxu0
      %4419 = vmatprep.mubr.bf16.mxu0 0
      %4420 = vmatmul.mubr.bf16.gmra.mrb[0].mxu0 %v4223
      %v4421 = vpop.f32.mrb[0].mxu0
      %v4422 = vadd.f32 0.0, %v4421
      %v4423 = vpop.f32.mrb[0].mxu0
      %v4424 = vpop.f32.mrb[0].mxu0
      %v4425 = vadd.f32 0.0, %v4424
      %v4426 = vpop.f32.mrb[0].mxu0
      %4427 = vmatprep.mubr.bf16.mxu0 0
      %4428 = vmatmul.mubr.bf16.gmra.mrb[0].mxu0 %v4224
      %v4429 = vpop.f32.mrb[0].mxu0
      %v4430 = vadd.f32 0.0, %v4429
      %v4431 = vpop.f32.mrb[0].mxu0
      %v4432 = vpop.f32.mrb[0].mxu0
      %v4433 = vadd.f32 0.0, %v4432
      %v4434 = vpop.f32.mrb[0].mxu0
      %4435 = vmatprep.mubr.bf16.mxu0 0
      %4436 = vmatmul.mubr.bf16.gmra.mrb[0].mxu0 %v4225
      %v4437 = vpop.f32.mrb[0].mxu0
      %v4438 = vadd.f32 0.0, %v4437
      %v4439 = vpop.f32.mrb[0].mxu0
      %v4440 = vpop.f32.mrb[0].mxu0
      %v4441 = vadd.f32 0.0, %v4440
      %v4442 = vpop.f32.mrb[0].mxu0
      %4443 = vmatprep.mubr.bf16.mxu0 0
      %4444 = vmatmul.mubr.bf16.gmra.mrb[0].mxu0 %v4226
      %v4445 = vpop.f32.mrb[0].mxu0
      %v4446 = vadd.f32 0.0, %v4445
      %v4447 = vpop.f32.mrb[0].mxu0
      %v4448 = vpop.f32.mrb[0].mxu0
      %v4449 = vadd.f32 0.0, %v4448
      %v4450 = vpop.f32.mrb[0].mxu0
      %4451 = vdwg.mxu0
      %v4452 = vadd.f32 %v3698, %v4326
      %v4453 = vadd.f32 %v3699, %v4329
      %v4454 = vadd.f32 %v3700, %v4334
      %v4455 = vadd.f32 %v3701, %v4337
      %v4456 = vadd.f32 %v3702, %v4342
      %v4457 = vadd.f32 %v3703, %v4345
      %v4458 = vadd.f32 %v3704, %v4350
      %v4459 = vadd.f32 %v3705, %v4353
      %v4460 = vadd.f32 %v3706, %v4358
      %v4461 = vadd.f32 %v3707, %v4361
      %v4462 = vadd.f32 %v3708, %v4366
      %v4463 = vadd.f32 %v3709, %v4369
      %v4464 = vadd.f32 %v3710, %v4374
      %v4465 = vadd.f32 %v3711, %v4377
      %v4466 = vadd.f32 %v3712, %v4382
      %v4467 = vadd.f32 %v3713, %v4385
      %v4468 = vadd.f32 %v3714, %v4390
      %v4469 = vadd.f32 %v3715, %v4393
      %v4470 = vadd.f32 %v3716, %v4398
      %v4471 = vadd.f32 %v3717, %v4401
      %v4472 = vadd.f32 %v3718, %v4406
      %v4473 = vadd.f32 %v3719, %v4409
      %v4474 = vadd.f32 %v3720, %v4414
      %v4475 = vadd.f32 %v3721, %v4417
      %v4476 = vadd.f32 %v3722, %v4422
      %v4477 = vadd.f32 %v3723, %v4425
      %v4478 = vadd.f32 %v3724, %v4430
      %v4479 = vadd.f32 %v3725, %v4433
      %v4480 = vadd.f32 %v3726, %v4438
      %v4481 = vadd.f32 %v3727, %v4441
      %v4482 = vadd.f32 %v3728, %v4446
      %v4483 = vadd.f32 %v3729, %v4449
      %v4484 = vld [vmem:[%s3343] sm:$0xe]
      %v4485 = vld [vmem:[%s3343 + $0xc] sm:$0xe]
      %v4486 = vld [vmem:[%s3343 + $0x18] sm:$0xe]
      %v4487 = vld [vmem:[%s3343 + $0x24] sm:$0xe]
      %v4488 = vld [vmem:[%s3343 + $0x30] sm:$0xe]
      %v4489 = vld [vmem:[%s3343 + $0x3c] sm:$0xe]
      %v4490 = vld [vmem:[%s3343 + $0x48] sm:$0xe]
      %v4491 = vld [vmem:[%s3343 + $0x54] sm:$0xe]
      %v4492 = vld [vmem:[%s3343 + $0x60] sm:$0xe]
      %v4493 = vld [vmem:[%s3343 + $0x6c] sm:$0xe]
      %v4494 = vld [vmem:[%s3343 + $0x78] sm:$0xe]
      %v4495 = vld [vmem:[%s3343 + $0x84] sm:$0xe]
      %v4496 = vld [vmem:[%s3343 + $0x90] sm:$0xe]
      %v4497 = vld [vmem:[%s3343 + $0x9c] sm:$0xe]
      %v4498 = vld [vmem:[%s3343 + $0xa8] sm:$0xe]
      %v4499 = vld [vmem:[%s3343 + $0xb4] sm:$0xe]
      %v4548 = vrot.slane %v4484, 5
      %v4549 = vrot.slane %v4548, 4
      %v4550 = vrot.slane %v3731, 5
      %v4551 = vsel %vm1269, %v4549, %v4550
      %v4552 = vrot.slane %v4550, 4
      %v4553 = vrot.slane %v3732, 5
      %v4554 = vsel %vm1269, %v4552, %v4553
      %v4555 = vrot.slane %v4485, 5
      %v4556 = vrot.slane %v4555, 4
      %v4557 = vrot.slane %v3734, 5
      %v4558 = vsel %vm1269, %v4556, %v4557
      %v4559 = vrot.slane %v4557, 4
      %v4560 = vrot.slane %v3735, 5
      %v4561 = vsel %vm1269, %v4559, %v4560
      %v4562 = vrot.slane %v4486, 5
      %v4563 = vrot.slane %v4562, 4
      %v4564 = vrot.slane %v3737, 5
      %v4565 = vsel %vm1269, %v4563, %v4564
      %v4566 = vrot.slane %v4564, 4
      %v4567 = vrot.slane %v3738, 5
      %v4568 = vsel %vm1269, %v4566, %v4567
      %v4569 = vrot.slane %v4487, 5
      %v4570 = vrot.slane %v4569, 4
      %v4571 = vrot.slane %v3740, 5
      %v4572 = vsel %vm1269, %v4570, %v4571
      %v4573 = vrot.slane %v4571, 4
      %v4574 = vrot.slane %v3741, 5
      %v4575 = vsel %vm1269, %v4573, %v4574
      %v4576 = vrot.slane %v4488, 5
      %v4577 = vrot.slane %v4576, 4
      %v4578 = vrot.slane %v3743, 5
      %v4579 = vsel %vm1269, %v4577, %v4578
      %v4580 = vrot.slane %v4578, 4
      %v4581 = vrot.slane %v3744, 5
      %v4582 = vsel %vm1269, %v4580, %v4581
      %v4583 = vrot.slane %v4489, 5
      %v4584 = vrot.slane %v4583, 4
      %v4585 = vrot.slane %v3746, 5
      %v4586 = vsel %vm1269, %v4584, %v4585
      %v4587 = vrot.slane %v4585, 4
      %v4588 = vrot.slane %v3747, 5
      %v4589 = vsel %vm1269, %v4587, %v4588
      %v4590 = vrot.slane %v4490, 5
      %v4591 = vrot.slane %v4590, 4
      %v4592 = vrot.slane %v3749, 5
      %v4593 = vsel %vm1269, %v4591, %v4592
      %v4594 = vrot.slane %v4592, 4
      %v4595 = vrot.slane %v3750, 5
      %v4596 = vsel %vm1269, %v4594, %v4595
      %v4597 = vrot.slane %v4491, 5
      %v4598 = vrot.slane %v4597, 4
      %v4599 = vrot.slane %v3752, 5
      %v4600 = vsel %vm1269, %v4598, %v4599
      %v4601 = vrot.slane %v4599, 4
      %v4602 = vrot.slane %v3753, 5
      %v4603 = vsel %vm1269, %v4601, %v4602
      %v4604 = vrot.slane %v4492, 5
      %v4605 = vrot.slane %v4604, 4
      %v4606 = vrot.slane %v3755, 5
      %v4607 = vsel %vm1269, %v4605, %v4606
      %v4608 = vrot.slane %v4606, 4
      %v4609 = vrot.slane %v3756, 5
      %v4610 = vsel %vm1269, %v4608, %v4609
      %v4611 = vrot.slane %v4493, 5
      %v4612 = vrot.slane %v4611, 4
      %v4613 = vrot.slane %v3758, 5
      %v4614 = vsel %vm1269, %v4612, %v4613
      %v4615 = vrot.slane %v4613, 4
      %v4616 = vrot.slane %v3759, 5
      %v4617 = vsel %vm1269, %v4615, %v4616
      %v4618 = vrot.slane %v4494, 5
      %v4619 = vrot.slane %v4618, 4
      %v4620 = vrot.slane %v3761, 5
      %v4621 = vsel %vm1269, %v4619, %v4620
      %v4622 = vrot.slane %v4620, 4
      %v4623 = vrot.slane %v3762, 5
      %v4624 = vsel %vm1269, %v4622, %v4623
      %v4625 = vrot.slane %v4495, 5
      %v4626 = vrot.slane %v4625, 4
      %v4627 = vrot.slane %v3764, 5
      %v4628 = vsel %vm1269, %v4626, %v4627
      %v4629 = vrot.slane %v4627, 4
      %v4630 = vrot.slane %v3765, 5
      %v4631 = vsel %vm1269, %v4629, %v4630
      %v4632 = vrot.slane %v4496, 5
      %v4633 = vrot.slane %v4632, 4
      %v4634 = vrot.slane %v3767, 5
      %v4635 = vsel %vm1269, %v4633, %v4634
      %v4636 = vrot.slane %v4634, 4
      %v4637 = vrot.slane %v3768, 5
      %v4638 = vsel %vm1269, %v4636, %v4637
      %v4639 = vrot.slane %v4497, 5
      %v4640 = vrot.slane %v4639, 4
      %v4641 = vrot.slane %v3770, 5
      %v4642 = vsel %vm1269, %v4640, %v4641
      %v4643 = vrot.slane %v4641, 4
      %v4644 = vrot.slane %v3771, 5
      %v4645 = vsel %vm1269, %v4643, %v4644
      %v4646 = vrot.slane %v4498, 5
      %v4647 = vrot.slane %v4646, 4
      %v4648 = vrot.slane %v3773, 5
      %v4649 = vsel %vm1269, %v4647, %v4648
      %v4650 = vrot.slane %v4648, 4
      %v4651 = vrot.slane %v3774, 5
      %v4652 = vsel %vm1269, %v4650, %v4651
      %v4653 = vrot.slane %v4499, 5
      %v4654 = vrot.slane %v4653, 4
      %v4655 = vrot.slane %v3776, 5
      %v4656 = vsel %vm1269, %v4654, %v4655
      %v4657 = vrot.slane %v4655, 4
      %v4658 = vrot.slane %v3777, 5
      %v4659 = vsel %vm1269, %v4657, %v4658
      %s4660 = scalar_lea.vmem %s1, 512
      %v4661 = vld [vmem:[%s4660] sm:$0xf]
      %v4662 = vld [vmem:[%s4660 + $0x4] sm:$0xf]
      %v4663 = vld [vmem:[%s4660 + $0x8] sm:$0xf]
      %v4664 = vld [vmem:[%s4660 + $0xc] sm:$0xf]
      %v4665 = vld [vmem:[%s4660 + $0x10] sm:$0xf]
      %v4666 = vld [vmem:[%s4660 + $0x14] sm:$0xf]
      %v4667 = vld [vmem:[%s4660 + $0x18] sm:$0xf]
      %v4668 = vld [vmem:[%s4660 + $0x1c] sm:$0xf]
      %v4669 = vld [vmem:[%s4660 + $0x20] sm:$0xf]
      %v4670 = vld [vmem:[%s4660 + $0x24] sm:$0xf]
      %v4671 = vld [vmem:[%s4660 + $0x28] sm:$0xf]
      %v4672 = vld [vmem:[%s4660 + $0x2c] sm:$0xf]
      %v4673 = vld [vmem:[%s4660 + $0x30] sm:$0xf]
      %v4674 = vld [vmem:[%s4660 + $0x34] sm:$0xf]
      %v4675 = vld [vmem:[%s4660 + $0x38] sm:$0xf]
      %v4676 = vld [vmem:[%s4660 + $0x3c] sm:$0xf]
      %v4677 = vunpack.c.l.b16 %v4551
      %v4678 = vunpack.c.l.b16 %v4554
      %v4679 = vunpack.c.l.b16 %v4558
      %v4680 = vunpack.c.l.b16 %v4561
      %v4681 = vunpack.c.l.b16 %v4565
      %v4682 = vunpack.c.l.b16 %v4568
      %v4683 = vunpack.c.l.b16 %v4572
      %v4684 = vunpack.c.l.b16 %v4575
      %v4685 = vunpack.c.l.b16 %v4579
      %v4686 = vunpack.c.l.b16 %v4582
      %v4687 = vunpack.c.l.b16 %v4586
      %v4688 = vunpack.c.l.b16 %v4589
      %v4689 = vunpack.c.l.b16 %v4593
      %v4690 = vunpack.c.l.b16 %v4596
      %v4691 = vunpack.c.l.b16 %v4600
      %v4692 = vunpack.c.l.b16 %v4603
      %v4693 = vunpack.c.l.b16 %v4607
      %v4694 = vunpack.c.l.b16 %v4610
      %v4695 = vunpack.c.l.b16 %v4614
      %v4696 = vunpack.c.l.b16 %v4617
      %v4697 = vunpack.c.l.b16 %v4621
      %v4698 = vunpack.c.l.b16 %v4624
      %v4699 = vunpack.c.l.b16 %v4628
      %v4700 = vunpack.c.l.b16 %v4631
      %v4701 = vunpack.c.l.b16 %v4635
      %v4702 = vunpack.c.l.b16 %v4638
      %v4703 = vunpack.c.l.b16 %v4642
      %v4704 = vunpack.c.l.b16 %v4645
      %v4705 = vunpack.c.l.b16 %v4649
      %v4706 = vunpack.c.l.b16 %v4652
      %v4707 = vunpack.c.l.b16 %v4656
      %v4708 = vunpack.c.l.b16 %v4659
      %v4709 = vpack.c.b16 %v4678, %v4677
      %v4710 = vpack.c.b16 %v4680, %v4679
      %v4711 = vpack.c.b16 %v4682, %v4681
      %v4712 = vpack.c.b16 %v4684, %v4683
      %v4713 = vpack.c.b16 %v4686, %v4685
      %v4714 = vpack.c.b16 %v4688, %v4687
      %v4715 = vpack.c.b16 %v4690, %v4689
      %v4716 = vpack.c.b16 %v4692, %v4691
      %v4717 = vpack.c.b16 %v4694, %v4693
      %v4718 = vpack.c.b16 %v4696, %v4695
      %v4719 = vpack.c.b16 %v4698, %v4697
      %v4720 = vpack.c.b16 %v4700, %v4699
      %v4721 = vpack.c.b16 %v4702, %v4701
      %v4722 = vpack.c.b16 %v4704, %v4703
      %v4723 = vpack.c.b16 %v4706, %v4705
      %v4724 = vpack.c.b16 %v4708, %v4707
      %v4757 = vunpack.c.l.b16 %v4661
      %v4758 = vunpack.c.l.b16 %v4662
      %v4759 = vunpack.c.l.b16 %v4663
      %v4760 = vunpack.c.l.b16 %v4664
      %v4761 = vunpack.c.l.b16 %v4665
      %v4762 = vunpack.c.l.b16 %v4666
      %v4763 = vunpack.c.l.b16 %v4667
      %v4764 = vunpack.c.l.b16 %v4668
      %v4765 = vunpack.c.l.b16 %v4669
      %v4766 = vunpack.c.l.b16 %v4670
      %v4767 = vunpack.c.l.b16 %v4671
      %v4768 = vunpack.c.l.b16 %v4672
      %v4769 = vunpack.c.l.b16 %v4673
      %v4770 = vunpack.c.l.b16 %v4674
      %v4771 = vunpack.c.l.b16 %v4675
      %v4772 = vunpack.c.l.b16 %v4676
      %v4773 = vpack.c.b16 %v4758, %v4757
      %v4774 = vpack.c.b16 %v4760, %v4759
      %v4775 = vpack.c.b16 %v4762, %v4761
      %v4776 = vpack.c.b16 %v4764, %v4763
      %v4777 = vpack.c.b16 %v4766, %v4765
      %v4778 = vpack.c.b16 %v4768, %v4767
      %v4779 = vpack.c.b16 %v4770, %v4769
      %v4780 = vpack.c.b16 %v4772, %v4771
      %4789 = vmatprep.subr.bf16.mxu0 0
      %4790 = vmatpush1.bf16.msra.mxu0 %v4773
      %4791 = vmatprep.subr.bf16.mxu0 0
      %4792 = vmatpush1.bf16.msra.mxu0 %v4774
      %4793 = vmatprep.subr.bf16.mxu0 0
      %4794 = vmatpush1.bf16.msra.mxu0 %v4775
      %4795 = vmatprep.subr.bf16.mxu0 0
      %4796 = vmatpush1.bf16.msra.mxu0 %v4776
      %4797 = vmatprep.subr.bf16.mxu0 0
      %4798 = vmatpush1.bf16.msra.mxu0 %v4777
      %4799 = vmatprep.subr.bf16.mxu0 0
      %4800 = vmatpush1.bf16.msra.mxu0 %v4778
      %4801 = vmatprep.subr.bf16.mxu0 0
      %4802 = vmatpush1.bf16.msra.mxu0 %v4779
      %4803 = vmatprep.subr.bf16.mxu0 0
      %4804 = vmatpush1.bf16.msra.mxu0 %v4780
      %4805 = vmatprep.subr.bf16.mxu0 0
      %4806 = vmatpush1.bf16.msra.mxu0 0
      %4807 = vmatprep.subr.bf16.mxu0 0
      %4808 = vmatpush1.bf16.msra.mxu0 0
      %4809 = vmatprep.subr.bf16.mxu0 0
      %4810 = vmatpush1.bf16.msra.mxu0 0
      %4811 = vmatprep.subr.bf16.mxu0 0
      %4812 = vmatpush1.bf16.msra.mxu0 0
      %4813 = vmatprep.subr.bf16.mxu0 0
      %4814 = vmatpush1.bf16.msra.mxu0 0
      %4815 = vmatprep.subr.bf16.mxu0 0
      %4816 = vmatpush1.bf16.msra.mxu0 0
      %4817 = vmatprep.subr.bf16.mxu0 0
      %4818 = vmatpush1.bf16.msra.mxu0 0
      %4819 = vmatprep.subr.bf16.mxu0 0
      %4820 = vmatpush1.bf16.msra.mxu0 0
      %4821 = vmatprep.mubr.bf16.mxu0 0
      %4822 = vmatmul.mubr.bf16.gmra.mrb[0].mxu0 %v4709
      %v4823 = vpop.f32.mrb[0].mxu0
      %v4824 = vadd.f32 0.0, %v4823
      %v4825 = vpop.f32.mrb[0].mxu0
      %v4826 = vpop.f32.mrb[0].mxu0
      %v4827 = vadd.f32 0.0, %v4826
      %v4828 = vpop.f32.mrb[0].mxu0
      %4829 = vmatprep.mubr.bf16.mxu0 0
      %4830 = vmatmul.mubr.bf16.gmra.mrb[0].mxu0 %v4710
      %v4831 = vpop.f32.mrb[0].mxu0
      %v4832 = vadd.f32 0.0, %v4831
      %v4833 = vpop.f32.mrb[0].mxu0
      %v4834 = vpop.f32.mrb[0].mxu0
      %v4835 = vadd.f32 0.0, %v4834
      %v4836 = vpop.f32.mrb[0].mxu0
      %4837 = vmatprep.mubr.bf16.mxu0 0
      %4838 = vmatmul.mubr.bf16.gmra.mrb[0].mxu0 %v4711
      %v4839 = vpop.f32.mrb[0].mxu0
      %v4840 = vadd.f32 0.0, %v4839
      %v4841 = vpop.f32.mrb[0].mxu0
      %v4842 = vpop.f32.mrb[0].mxu0
      %v4843 = vadd.f32 0.0, %v4842
      %v4844 = vpop.f32.mrb[0].mxu0
      %4845 = vmatprep.mubr.bf16.mxu0 0
      %4846 = vmatmul.mubr.bf16.gmra.mrb[0].mxu0 %v4712
      %v4847 = vpop.f32.mrb[0].mxu0
      %v4848 = vadd.f32 0.0, %v4847
      %v4849 = vpop.f32.mrb[0].mxu0
      %v4850 = vpop.f32.mrb[0].mxu0
      %v4851 = vadd.f32 0.0, %v4850
      %v4852 = vpop.f32.mrb[0].mxu0
      %4853 = vmatprep.mubr.bf16.mxu0 0
      %4854 = vmatmul.mubr.bf16.gmra.mrb[0].mxu0 %v4713
      %v4855 = vpop.f32.mrb[0].mxu0
      %v4856 = vadd.f32 0.0, %v4855
      %v4857 = vpop.f32.mrb[0].mxu0
      %v4858 = vpop.f32.mrb[0].mxu0
      %v4859 = vadd.f32 0.0, %v4858
      %v4860 = vpop.f32.mrb[0].mxu0
      %4861 = vmatprep.mubr.bf16.mxu0 0
      %4862 = vmatmul.mubr.bf16.gmra.mrb[0].mxu0 %v4714
      %v4863 = vpop.f32.mrb[0].mxu0
      %v4864 = vadd.f32 0.0, %v4863
      %v4865 = vpop.f32.mrb[0].mxu0
      %v4866 = vpop.f32.mrb[0].mxu0
      %v4867 = vadd.f32 0.0, %v4866
      %v4868 = vpop.f32.mrb[0].mxu0
      %4869 = vmatprep.mubr.bf16.mxu0 0
      %4870 = vmatmul.mubr.bf16.gmra.mrb[0].mxu0 %v4715
      %v4871 = vpop.f32.mrb[0].mxu0
      %v4872 = vadd.f32 0.0, %v4871
      %v4873 = vpop.f32.mrb[0].mxu0
      %v4874 = vpop.f32.mrb[0].mxu0
      %v4875 = vadd.f32 0.0, %v4874
      %v4876 = vpop.f32.mrb[0].mxu0
      %4877 = vmatprep.mubr.bf16.mxu0 0
      %4878 = vmatmul.mubr.bf16.gmra.mrb[0].mxu0 %v4716
      %v4879 = vpop.f32.mrb[0].mxu0
      %v4880 = vadd.f32 0.0, %v4879
      %v4881 = vpop.f32.mrb[0].mxu0
      %v4882 = vpop.f32.mrb[0].mxu0
      %v4883 = vadd.f32 0.0, %v4882
      %v4884 = vpop.f32.mrb[0].mxu0
      %4885 = vmatprep.mubr.bf16.mxu0 0
      %4886 = vmatmul.mubr.bf16.gmra.mrb[0].mxu0 %v4717
      %v4887 = vpop.f32.mrb[0].mxu0
      %v4888 = vadd.f32 0.0, %v4887
      %v4889 = vpop.f32.mrb[0].mxu0
      %v4890 = vpop.f32.mrb[0].mxu0
      %v4891 = vadd.f32 0.0, %v4890
      %v4892 = vpop.f32.mrb[0].mxu0
      %4893 = vmatprep.mubr.bf16.mxu0 0
      %4894 = vmatmul.mubr.bf16.gmra.mrb[0].mxu0 %v4718
      %v4895 = vpop.f32.mrb[0].mxu0
      %v4896 = vadd.f32 0.0, %v4895
      %v4897 = vpop.f32.mrb[0].mxu0
      %v4898 = vpop.f32.mrb[0].mxu0
      %v4899 = vadd.f32 0.0, %v4898
      %v4900 = vpop.f32.mrb[0].mxu0
      %4901 = vmatprep.mubr.bf16.mxu0 0
      %4902 = vmatmul.mubr.bf16.gmra.mrb[0].mxu0 %v4719
      %v4903 = vpop.f32.mrb[0].mxu0
      %v4904 = vadd.f32 0.0, %v4903
      %v4905 = vpop.f32.mrb[0].mxu0
      %v4906 = vpop.f32.mrb[0].mxu0
      %v4907 = vadd.f32 0.0, %v4906
      %v4908 = vpop.f32.mrb[0].mxu0
      %4909 = vmatprep.mubr.bf16.mxu0 0
      %4910 = vmatmul.mubr.bf16.gmra.mrb[0].mxu0 %v4720
      %v4911 = vpop.f32.mrb[0].mxu0
      %v4912 = vadd.f32 0.0, %v4911
      %v4913 = vpop.f32.mrb[0].mxu0
      %v4914 = vpop.f32.mrb[0].mxu0
      %v4915 = vadd.f32 0.0, %v4914
      %v4916 = vpop.f32.mrb[0].mxu0
      %4917 = vmatprep.mubr.bf16.mxu0 0
      %4918 = vmatmul.mubr.bf16.gmra.mrb[0].mxu0 %v4721
      %v4919 = vpop.f32.mrb[0].mxu0
      %v4920 = vadd.f32 0.0, %v4919
      %v4921 = vpop.f32.mrb[0].mxu0
      %v4922 = vpop.f32.mrb[0].mxu0
      %v4923 = vadd.f32 0.0, %v4922
      %v4924 = vpop.f32.mrb[0].mxu0
      %4925 = vmatprep.mubr.bf16.mxu0 0
      %4926 = vmatmul.mubr.bf16.gmra.mrb[0].mxu0 %v4722
      %v4927 = vpop.f32.mrb[0].mxu0
      %v4928 = vadd.f32 0.0, %v4927
      %v4929 = vpop.f32.mrb[0].mxu0
      %v4930 = vpop.f32.mrb[0].mxu0
      %v4931 = vadd.f32 0.0, %v4930
      %v4932 = vpop.f32.mrb[0].mxu0
      %4933 = vmatprep.mubr.bf16.mxu0 0
      %4934 = vmatmul.mubr.bf16.gmra.mrb[0].mxu0 %v4723
      %v4935 = vpop.f32.mrb[0].mxu0
      %v4936 = vadd.f32 0.0, %v4935
      %v4937 = vpop.f32.mrb[0].mxu0
      %v4938 = vpop.f32.mrb[0].mxu0
      %v4939 = vadd.f32 0.0, %v4938
      %v4940 = vpop.f32.mrb[0].mxu0
      %4941 = vmatprep.mubr.bf16.mxu0 0
      %4942 = vmatmul.mubr.bf16.gmra.mrb[0].mxu0 %v4724
      %v4943 = vpop.f32.mrb[0].mxu0
      %v4944 = vadd.f32 0.0, %v4943
      %v4945 = vpop.f32.mrb[0].mxu0
      %v4946 = vpop.f32.mrb[0].mxu0
      %v4947 = vadd.f32 0.0, %v4946
      %v4948 = vpop.f32.mrb[0].mxu0
      %4949 = vdwg.mxu0
      %v4950 = vadd.f32 %v4452, %v4824
      %v4951 = vadd.f32 %v4453, %v4827
      %v4952 = vadd.f32 %v4454, %v4832
      %v4953 = vadd.f32 %v4455, %v4835
      %v4954 = vadd.f32 %v4456, %v4840
      %v4955 = vadd.f32 %v4457, %v4843
      %v4956 = vadd.f32 %v4458, %v4848
      %v4957 = vadd.f32 %v4459, %v4851
      %v4958 = vadd.f32 %v4460, %v4856
      %v4959 = vadd.f32 %v4461, %v4859
      %v4960 = vadd.f32 %v4462, %v4864
      %v4961 = vadd.f32 %v4463, %v4867
      %v4962 = vadd.f32 %v4464, %v4872
      %v4963 = vadd.f32 %v4465, %v4875
      %v4964 = vadd.f32 %v4466, %v4880
      %v4965 = vadd.f32 %v4467, %v4883
      %v4966 = vadd.f32 %v4468, %v4888
      %v4967 = vadd.f32 %v4469, %v4891
      %v4968 = vadd.f32 %v4470, %v4896
      %v4969 = vadd.f32 %v4471, %v4899
      %v4970 = vadd.f32 %v4472, %v4904
      %v4971 = vadd.f32 %v4473, %v4907
      %v4972 = vadd.f32 %v4474, %v4912
      %v4973 = vadd.f32 %v4475, %v4915
      %v4974 = vadd.f32 %v4476, %v4920
      %v4975 = vadd.f32 %v4477, %v4923
      %v4976 = vadd.f32 %v4478, %v4928
      %v4977 = vadd.f32 %v4479, %v4931
      %v4978 = vadd.f32 %v4480, %v4936
      %v4979 = vadd.f32 %v4481, %v4939
      %v4980 = vadd.f32 %v4482, %v4944
      %v4981 = vadd.f32 %v4483, %v4947
      %v4982 = vld [vmem:[%s2] sm:$0x1]
      %v4983 = vlaneseq
      %v4984 = vshrl.u32 %v4983, 7
      %v4985 = vsub.s32 0, %v4984
      %v4986 = vrot.slane %v4982, %v4985
      %v4987 = vmul.f32 %v4950, %v4986
      %v4988 = vmul.f32 %v4951, %v4986
      %v4989 = vmul.f32 %v4952, %v4986
      %v4990 = vmul.f32 %v4953, %v4986
      %v4991 = vmul.f32 %v4954, %v4986
      %v4992 = vmul.f32 %v4955, %v4986
      %v4993 = vmul.f32 %v4956, %v4986
      %v4994 = vmul.f32 %v4957, %v4986
      %v4995 = vmul.f32 %v4958, %v4986
      %v4996 = vmul.f32 %v4959, %v4986
      %v4997 = vmul.f32 %v4960, %v4986
      %v4998 = vmul.f32 %v4961, %v4986
      %v4999 = vmul.f32 %v4962, %v4986
      %v5000 = vmul.f32 %v4963, %v4986
      %v5001 = vmul.f32 %v4964, %v4986
      %v5002 = vmul.f32 %v4965, %v4986
      %v5003 = vmul.f32 %v4966, %v4986
      %v5004 = vmul.f32 %v4967, %v4986
      %v5005 = vmul.f32 %v4968, %v4986
      %v5006 = vmul.f32 %v4969, %v4986
      %v5007 = vmul.f32 %v4970, %v4986
      %v5008 = vmul.f32 %v4971, %v4986
      %v5009 = vmul.f32 %v4972, %v4986
      %v5010 = vmul.f32 %v4973, %v4986
      %v5011 = vmul.f32 %v4974, %v4986
      %v5012 = vmul.f32 %v4975, %v4986
      %v5013 = vmul.f32 %v4976, %v4986
      %v5014 = vmul.f32 %v4977, %v4986
      %v5015 = vmul.f32 %v4978, %v4986
      %v5016 = vmul.f32 %v4979, %v4986
      %v5017 = vmul.f32 %v4980, %v4986
      %v5018 = vmul.f32 %v4981, %v4986
      %v5019 = vld [vmem:[%s2 + $0x1] sm:$0x1]
      %v5020 = vlaneseq
      %v5021 = vshrl.u32 %v5020, 7
      %v5022 = vsub.s32 0, %v5021
      %v5023 = vrot.slane %v5019, %v5022
      %v5024 = vadd.f32 %v4987, %v5023
      %v5025 = vadd.f32 %v4988, %v5023
      %v5026 = vadd.f32 %v4989, %v5023
      %v5027 = vadd.f32 %v4990, %v5023
      %v5028 = vadd.f32 %v4991, %v5023
      %v5029 = vadd.f32 %v4992, %v5023
      %v5030 = vadd.f32 %v4993, %v5023
      %v5031 = vadd.f32 %v4994, %v5023
      %v5032 = vadd.f32 %v4995, %v5023
      %v5033 = vadd.f32 %v4996, %v5023
      %v5034 = vadd.f32 %v4997, %v5023
      %v5035 = vadd.f32 %v4998, %v5023
      %v5036 = vadd.f32 %v4999, %v5023
      %v5037 = vadd.f32 %v5000, %v5023
      %v5038 = vadd.f32 %v5001, %v5023
      %v5039 = vadd.f32 %v5002, %v5023
      %v5040 = vadd.f32 %v5003, %v5023
      %v5041 = vadd.f32 %v5004, %v5023
      %v5042 = vadd.f32 %v5005, %v5023
      %v5043 = vadd.f32 %v5006, %v5023
      %v5044 = vadd.f32 %v5007, %v5023
      %v5045 = vadd.f32 %v5008, %v5023
      %v5046 = vadd.f32 %v5009, %v5023
      %v5047 = vadd.f32 %v5010, %v5023
      %v5048 = vadd.f32 %v5011, %v5023
      %v5049 = vadd.f32 %v5012, %v5023
      %v5050 = vadd.f32 %v5013, %v5023
      %v5051 = vadd.f32 %v5014, %v5023
      %v5052 = vadd.f32 %v5015, %v5023
      %v5053 = vadd.f32 %v5016, %v5023
      %v5054 = vadd.f32 %v5017, %v5023
      %v5055 = vadd.f32 %v5018, %v5023
      %vm5056 = vcmp.gt.f32.partialorder %v5024, 0.0
      %vm5057 = vcmp.gt.f32.partialorder %v5025, 0.0
      %vm5058 = vcmp.gt.f32.partialorder %v5026, 0.0
      %vm5059 = vcmp.gt.f32.partialorder %v5027, 0.0
      %vm5060 = vcmp.gt.f32.partialorder %v5028, 0.0
      %vm5061 = vcmp.gt.f32.partialorder %v5029, 0.0
      %vm5062 = vcmp.gt.f32.partialorder %v5030, 0.0
      %vm5063 = vcmp.gt.f32.partialorder %v5031, 0.0
      %vm5064 = vcmp.gt.f32.partialorder %v5032, 0.0
      %vm5065 = vcmp.gt.f32.partialorder %v5033, 0.0
      %vm5066 = vcmp.gt.f32.partialorder %v5034, 0.0
      %vm5067 = vcmp.gt.f32.partialorder %v5035, 0.0
      %vm5068 = vcmp.gt.f32.partialorder %v5036, 0.0
      %vm5069 = vcmp.gt.f32.partialorder %v5037, 0.0
      %vm5070 = vcmp.gt.f32.partialorder %v5038, 0.0
      %vm5071 = vcmp.gt.f32.partialorder %v5039, 0.0
      %vm5072 = vcmp.gt.f32.partialorder %v5040, 0.0
      %vm5073 = vcmp.gt.f32.partialorder %v5041, 0.0
      %vm5074 = vcmp.gt.f32.partialorder %v5042, 0.0
      %vm5075 = vcmp.gt.f32.partialorder %v5043, 0.0
      %vm5076 = vcmp.gt.f32.partialorder %v5044, 0.0
      %vm5077 = vcmp.gt.f32.partialorder %v5045, 0.0
      %vm5078 = vcmp.gt.f32.partialorder %v5046, 0.0
      %vm5079 = vcmp.gt.f32.partialorder %v5047, 0.0
      %vm5080 = vcmp.gt.f32.partialorder %v5048, 0.0
      %vm5081 = vcmp.gt.f32.partialorder %v5049, 0.0
      %vm5082 = vcmp.gt.f32.partialorder %v5050, 0.0
      %vm5083 = vcmp.gt.f32.partialorder %v5051, 0.0
      %vm5084 = vcmp.gt.f32.partialorder %v5052, 0.0
      %vm5085 = vcmp.gt.f32.partialorder %v5053, 0.0
      %vm5086 = vcmp.gt.f32.partialorder %v5054, 0.0
      %vm5087 = vcmp.gt.f32.partialorder %v5055, 0.0
      %v5088 = vmul.f32 %v5024, 0.1
      %v5089 = vmul.f32 %v5025, 0.1
      %v5090 = vmul.f32 %v5026, 0.1
      %v5091 = vmul.f32 %v5027, 0.1
      %v5092 = vmul.f32 %v5028, 0.1
      %v5093 = vmul.f32 %v5029, 0.1
      %v5094 = vmul.f32 %v5030, 0.1
      %v5095 = vmul.f32 %v5031, 0.1
      %v5096 = vmul.f32 %v5032, 0.1
      %v5097 = vmul.f32 %v5033, 0.1
      %v5098 = vmul.f32 %v5034, 0.1
      %v5099 = vmul.f32 %v5035, 0.1
      %v5100 = vmul.f32 %v5036, 0.1
      %v5101 = vmul.f32 %v5037, 0.1
      %v5102 = vmul.f32 %v5038, 0.1
      %v5103 = vmul.f32 %v5039, 0.1
      %v5104 = vmul.f32 %v5040, 0.1
      %v5105 = vmul.f32 %v5041, 0.1
      %v5106 = vmul.f32 %v5042, 0.1
      %v5107 = vmul.f32 %v5043, 0.1
      %v5108 = vmul.f32 %v5044, 0.1
      %v5109 = vmul.f32 %v5045, 0.1
      %v5110 = vmul.f32 %v5046, 0.1
      %v5111 = vmul.f32 %v5047, 0.1
      %v5112 = vmul.f32 %v5048, 0.1
      %v5113 = vmul.f32 %v5049, 0.1
      %v5114 = vmul.f32 %v5050, 0.1
      %v5115 = vmul.f32 %v5051, 0.1
      %v5116 = vmul.f32 %v5052, 0.1
      %v5117 = vmul.f32 %v5053, 0.1
      %v5118 = vmul.f32 %v5054, 0.1
      %v5119 = vmul.f32 %v5055, 0.1
      %v5120 = vsel %vm5056, %v5024, %v5088
      %v5121 = vsel %vm5057, %v5025, %v5089
      %v5122 = vsel %vm5058, %v5026, %v5090
      %v5123 = vsel %vm5059, %v5027, %v5091
      %v5124 = vsel %vm5060, %v5028, %v5092
      %v5125 = vsel %vm5061, %v5029, %v5093
      %v5126 = vsel %vm5062, %v5030, %v5094
      %v5127 = vsel %vm5063, %v5031, %v5095
      %v5128 = vsel %vm5064, %v5032, %v5096
      %v5129 = vsel %vm5065, %v5033, %v5097
      %v5130 = vsel %vm5066, %v5034, %v5098
      %v5131 = vsel %vm5067, %v5035, %v5099
      %v5132 = vsel %vm5068, %v5036, %v5100
      %v5133 = vsel %vm5069, %v5037, %v5101
      %v5134 = vsel %vm5070, %v5038, %v5102
      %v5135 = vsel %vm5071, %v5039, %v5103
      %v5136 = vsel %vm5072, %v5040, %v5104
      %v5137 = vsel %vm5073, %v5041, %v5105
      %v5138 = vsel %vm5074, %v5042, %v5106
      %v5139 = vsel %vm5075, %v5043, %v5107
      %v5140 = vsel %vm5076, %v5044, %v5108
      %v5141 = vsel %vm5077, %v5045, %v5109
      %v5142 = vsel %vm5078, %v5046, %v5110
      %v5143 = vsel %vm5079, %v5047, %v5111
      %v5144 = vsel %vm5080, %v5048, %v5112
      %v5145 = vsel %vm5081, %v5049, %v5113
      %v5146 = vsel %vm5082, %v5050, %v5114
      %v5147 = vsel %vm5083, %v5051, %v5115
      %v5148 = vsel %vm5084, %v5052, %v5116
      %v5149 = vsel %vm5085, %v5053, %v5117
      %v5150 = vsel %vm5086, %v5054, %v5118
      %v5151 = vsel %vm5087, %v5055, %v5119
      %v5152 = vpack.c.bf16 %v5121, %v5120
      %v5153 = vpack.c.bf16 %v5123, %v5122
      %v5154 = vpack.c.bf16 %v5125, %v5124
      %v5155 = vpack.c.bf16 %v5127, %v5126
      %v5156 = vpack.c.bf16 %v5129, %v5128
      %v5157 = vpack.c.bf16 %v5131, %v5130
      %v5158 = vpack.c.bf16 %v5133, %v5132
      %v5159 = vpack.c.bf16 %v5135, %v5134
      %v5160 = vpack.c.bf16 %v5137, %v5136
      %v5161 = vpack.c.bf16 %v5139, %v5138
      %v5162 = vpack.c.bf16 %v5141, %v5140
      %v5163 = vpack.c.bf16 %v5143, %v5142
      %v5164 = vpack.c.bf16 %v5145, %v5144
      %v5165 = vpack.c.bf16 %v5147, %v5146
      %v5166 = vpack.c.bf16 %v5149, %v5148
      %v5167 = vpack.c.bf16 %v5151, %v5150
      %v5184 = vunpack.c.l.b16 %v5152
      %v5185 = vunpack.c.h.b16 %v5152
      %v5186 = vunpack.c.l.b16 %v5153
      %v5187 = vunpack.c.h.b16 %v5153
      %v5188 = vunpack.c.l.b16 %v5154
      %v5189 = vunpack.c.h.b16 %v5154
      %v5190 = vunpack.c.l.b16 %v5155
      %v5191 = vunpack.c.h.b16 %v5155
      %v5192 = vunpack.c.l.b16 %v5156
      %v5193 = vunpack.c.h.b16 %v5156
      %v5194 = vunpack.c.l.b16 %v5157
      %v5195 = vunpack.c.h.b16 %v5157
      %v5196 = vunpack.c.l.b16 %v5158
      %v5197 = vunpack.c.h.b16 %v5158
      %v5198 = vunpack.c.l.b16 %v5159
      %v5199 = vunpack.c.h.b16 %v5159
      %v5200 = vunpack.c.l.b16 %v5160
      %v5201 = vunpack.c.h.b16 %v5160
      %v5202 = vunpack.c.l.b16 %v5161
      %v5203 = vunpack.c.h.b16 %v5161
      %v5204 = vunpack.c.l.b16 %v5162
      %v5205 = vunpack.c.h.b16 %v5162
      %v5206 = vunpack.c.l.b16 %v5163
      %v5207 = vunpack.c.h.b16 %v5163
      %v5208 = vunpack.c.l.b16 %v5164
      %v5209 = vunpack.c.h.b16 %v5164
      %v5210 = vunpack.c.l.b16 %v5165
      %v5211 = vunpack.c.h.b16 %v5165
      %v5212 = vunpack.c.l.b16 %v5166
      %v5213 = vunpack.c.h.b16 %v5166
      %v5214 = vunpack.c.l.b16 %v5167
      %v5215 = vunpack.c.h.b16 %v5167
      %v5216 = vpack.c.b16 %v5184, %v5184
      %v5217 = vpack.c.b16 %v5185, %v5185
      %v5218 = vpack.c.b16 %v5186, %v5186
      %v5219 = vpack.c.b16 %v5187, %v5187
      %v5220 = vpack.c.b16 %v5188, %v5188
      %v5221 = vpack.c.b16 %v5189, %v5189
      %v5222 = vpack.c.b16 %v5190, %v5190
      %v5223 = vpack.c.b16 %v5191, %v5191
      %v5224 = vpack.c.b16 %v5192, %v5192
      %v5225 = vpack.c.b16 %v5193, %v5193
      %v5226 = vpack.c.b16 %v5194, %v5194
      %v5227 = vpack.c.b16 %v5195, %v5195
      %v5228 = vpack.c.b16 %v5196, %v5196
      %v5229 = vpack.c.b16 %v5197, %v5197
      %v5230 = vpack.c.b16 %v5198, %v5198
      %v5231 = vpack.c.b16 %v5199, %v5199
      %v5232 = vpack.c.b16 %v5200, %v5200
      %v5233 = vpack.c.b16 %v5201, %v5201
      %v5234 = vpack.c.b16 %v5202, %v5202
      %v5235 = vpack.c.b16 %v5203, %v5203
      %v5236 = vpack.c.b16 %v5204, %v5204
      %v5237 = vpack.c.b16 %v5205, %v5205
      %v5238 = vpack.c.b16 %v5206, %v5206
      %v5239 = vpack.c.b16 %v5207, %v5207
      %v5240 = vpack.c.b16 %v5208, %v5208
      %v5241 = vpack.c.b16 %v5209, %v5209
      %v5242 = vpack.c.b16 %v5210, %v5210
      %v5243 = vpack.c.b16 %v5211, %v5211
      %v5244 = vpack.c.b16 %v5212, %v5212
      %v5245 = vpack.c.b16 %v5213, %v5213
      %v5246 = vpack.c.b16 %v5214, %v5214
      %v5247 = vpack.c.b16 %v5215, %v5215
      %5280 = vst [vmem:[%s170] sm:$0xf] %v5216
      %5281 = vst [vmem:[%s170 + $0x4] sm:$0xf] %v5217
      %5282 = vst [vmem:[%s170 + $0x8] sm:$0xf] %v5218
      %5283 = vst [vmem:[%s170 + $0xc] sm:$0xf] %v5219
      %5284 = vst [vmem:[%s170 + $0x10] sm:$0xf] %v5220
      %5285 = vst [vmem:[%s170 + $0x14] sm:$0xf] %v5221
      %5286 = vst [vmem:[%s170 + $0x18] sm:$0xf] %v5222
      %5287 = vst [vmem:[%s170 + $0x1c] sm:$0xf] %v5223
      %5288 = vst [vmem:[%s170 + $0x20] sm:$0xf] %v5224
      %5289 = vst [vmem:[%s170 + $0x24] sm:$0xf] %v5225
      %5290 = vst [vmem:[%s170 + $0x28] sm:$0xf] %v5226
      %5291 = vst [vmem:[%s170 + $0x2c] sm:$0xf] %v5227
      %5292 = vst [vmem:[%s170 + $0x30] sm:$0xf] %v5228
      %5293 = vst [vmem:[%s170 + $0x34] sm:$0xf] %v5229
      %5294 = vst [vmem:[%s170 + $0x38] sm:$0xf] %v5230
      %5295 = vst [vmem:[%s170 + $0x3c] sm:$0xf] %v5231
      %5296 = vst [vmem:[%s170 + $0x40] sm:$0xf] %v5232
      %5297 = vst [vmem:[%s170 + $0x44] sm:$0xf] %v5233
      %5298 = vst [vmem:[%s170 + $0x48] sm:$0xf] %v5234
      %5299 = vst [vmem:[%s170 + $0x4c] sm:$0xf] %v5235
      %5300 = vst [vmem:[%s170 + $0x50] sm:$0xf] %v5236
      %5301 = vst [vmem:[%s170 + $0x54] sm:$0xf] %v5237
      %5302 = vst [vmem:[%s170 + $0x58] sm:$0xf] %v5238
      %5303 = vst [vmem:[%s170 + $0x5c] sm:$0xf] %v5239
      %5304 = vst [vmem:[%s170 + $0x60] sm:$0xf] %v5240
      %5305 = vst [vmem:[%s170 + $0x64] sm:$0xf] %v5241
      %5306 = vst [vmem:[%s170 + $0x68] sm:$0xf] %v5242
      %5307 = vst [vmem:[%s170 + $0x6c] sm:$0xf] %v5243
      %5308 = vst [vmem:[%s170 + $0x70] sm:$0xf] %v5244
      %5309 = vst [vmem:[%s170 + $0x74] sm:$0xf] %v5245
      %5310 = vst [vmem:[%s170 + $0x78] sm:$0xf] %v5246
      %5311 = vst [vmem:[%s170 + $0x7c] sm:$0xf] %v5247
      %s5312 = smul.u32 32, %s14
      %p5313 = scmp.lt.s32.totalorder %s5312, 63
      %s5314 = scalar_select %p5313, %s5312, 63
      %s5315 = smul.addr %s5314, 4
      %s5316 = scalar_lea.vmem %s3, %s5315
      // Predicated region
      $region33: #{_forward.8} parent=31 // pred_check
        %p5317 = pneg %p100
      $region34: #{_forward.8} parent=31 // pred_check_branch
        %5319 = sbr.rel (%p5317) target = $region36
      $region35: #{_forward.8} parent=31 // pred_region
        %s5320 = smul.u32 32, %s14
      $region36: #{_forward.8} parent=31 // pred_fallthru
        _
    $region32: #{_forward.8} parent=5 // pred_fallthru
      _
    %p5321 = scmp.le.s32.totalorder 2, %s9
    // Predicated region
    $region37: #{_forward.8} parent=5 // pred_check
      %p5322 = pneg %p5321
    $region38: #{_forward.8} parent=5 // pred_check_branch
      %5324 = sbr.rel (%p5322) target = $region40
    $region39: #{_forward.8} parent=5 // pred_region
      %s5325 = ssub.s32 %s9, 2
      // Predicated region
      $region41: #{_forward.8} parent=39 // pred_check
        %p5326 = pneg %p106
      $region42: #{_forward.8} parent=39 // pred_check_branch
        %5328 = sbr.rel (%p5326) target = $region44
      $region43: #{_forward.8} parent=39 // pred_region
        %s5329 = smul.u32 32, %s15
        %p5330 = scmp.lt.s32.totalorder %s5329, 63
        %s5331 = scalar_select %p5330, %s5329, 63
        %s5332 = smul.addr %s5331, 4
        %s5333 = scalar_lea.vmem %s3, %s5332
      $region44: #{_forward.8} parent=39 // pred_fallthru
        _
    $region40: #{_forward.8} parent=5 // pred_fallthru
      _
  $region6: #{_forward.8} parent=0 // loop_footer
    %s13 = sadd.s32 1, %s9
  $region7: #{_forward.8} parent=0 // loop_footer_branch
    %8 = sbr.rel target = $region3
  $region8: #{_forward.8} parent=0 // loop_exit
    _

// kernel: _forward.14
$region0: #{_forward.14}
  #allocation0 [shape = 'u32[]', space=smem, size = 0x4, offset = 0x4, fixed_abs, tag = 'smem constant byte address 0x4 - core index']
  #allocation1 [shape = 'u32[144,128]{1,0:T(1,128)}', space=vmem, size = 0x12000, scoped, tag = 'internal scratch']
  %s0 = inlined_call_operand.vmem [shape: bf16[2,16,16,256], index: 0, kind: input, shape index: {}]
  %s1 = inlined_call_operand.vmem [shape: bf16[1,256,128], index: 1, kind: input, shape index: {}]
  %s2 = inlined_call_operand.vmem [shape: f32[2,128], index: 2, kind: input, shape index: {}]
  %s3 = inlined_call_operand.vmem [shape: f32[512,128], index: 3, kind: output, shape index: {}]
  %s4 = sld [smem:[#allocation0]]
  $region45: #{_forward.14} parent=0
    _
  %s6 = ssub.s32 1, %s4
  %s7 = scalar_select 0, %s6, %s4
  loop: start=0, step=1, limit=4
  $region2: #{_forward.14} parent=0 // loop_pre_header
    _
  $region3: #{_forward.14} parent=0 // loop_header
    %s9 = sphi 0, %s13
    %p10 = scmp.ge.s32.totalorder %s9, 4
    %s19 = sphi 0, %s21
    %s22 = sphi 0, %s19
    %s23 = sphi 0, %s22
    %s39 = sphi 0, %s23
    %s43 = sphi 0, %s43
    %s45 = sphi 0, %s43
    %s46 = sphi 0, %s45
    %s60 = sphi 0, %s46
    %s64 = sphi 0, %s64
    %s66 = sphi 0, %s64
    %s67 = sphi 0, %s66
    %s81 = sphi 0, %s67
    %s87 = sphi 0, %s89
    %s90 = sphi 0, %s87
    %s91 = sphi 0, %s90
    %s107 = sphi 0, %s91
  $region4: #{_forward.14} parent=0 // loop_header_branch
    %12 = sbr.rel (%p10) target = $region8
  $region5: #{_forward.14} parent=0 // loop_body
    %s14 = ssub.s32 %s9, 1
    %s15 = ssub.s32 %s9, 2
    %s16 = sadd.s32 %s9, 1
    %s17 = ssub.s32 %s9, %s16
    %p18 = scmp.eq.s32.totalorder %s17, 0
    %s20 = sadd.s32 %s19, 1
    %s21 = scalar_select %p18, %s19, %s20
    %p24 = pneg %p18
    %p25 = scmp.eq.s32.totalorder %s9, 1
    %p26 = por %p24, %p25
    %p27 = scmp.ne.s32.totalorder %s19, %s22
    %p28 = scmp.eq.s32.totalorder %s9, 0
    %p29 = por %p27, %p28
    %p30 = scmp.ne.s32.totalorder %s19, %s22
    %p31 = scmp.eq.s32.totalorder %s14, 1
    %p32 = por %p30, %p31
    %p33 = scmp.ne.s32.totalorder %s22, %s23
    %p34 = scmp.eq.s32.totalorder %s14, 0
    %p35 = por %p33, %p34
    %p36 = scmp.ne.s32.totalorder %s22, %s23
    %p37 = scmp.eq.s32.totalorder %s15, 1
    %p38 = por %p36, %p37
    %p40 = scmp.ne.s32.totalorder %s23, %s39
    %p41 = scmp.eq.s32.totalorder %s15, 0
    %p42 = por %p40, %p41
    %s44 = sadd.s32 %s43, 1
    %p47 = scmp.eq.s32.totalorder %s9, 1
    %p48 = scmp.ne.s32.totalorder %s43, %s45
    %p49 = scmp.eq.s32.totalorder %s9, 0
    %p50 = por %p48, %p49
    %p51 = scmp.ne.s32.totalorder %s43, %s45
    %p52 = scmp.eq.s32.totalorder %s14, 1
    %p53 = por %p51, %p52
    %p54 = scmp.ne.s32.totalorder %s45, %s46
    %p55 = scmp.eq.s32.totalorder %s14, 0
    %p56 = por %p54, %p55
    %p57 = scmp.ne.s32.totalorder %s45, %s46
    %p58 = scmp.eq.s32.totalorder %s15, 1
    %p59 = por %p57, %p58
    %p61 = scmp.ne.s32.totalorder %s46, %s60
    %p62 = scmp.eq.s32.totalorder %s15, 0
    %p63 = por %p61, %p62
    %s65 = sadd.s32 %s64, 1
    %p68 = scmp.eq.s32.totalorder %s9, 1
    %p69 = scmp.ne.s32.totalorder %s64, %s66
    %p70 = scmp.eq.s32.totalorder %s9, 0
    %p71 = por %p69, %p70
    %p72 = scmp.ne.s32.totalorder %s64, %s66
    %p73 = scmp.eq.s32.totalorder %s14, 1
    %p74 = por %p72, %p73
    %p75 = scmp.ne.s32.totalorder %s66, %s67
    %p76 = scmp.eq.s32.totalorder %s14, 0
    %p77 = por %p75, %p76
    %p78 = scmp.ne.s32.totalorder %s66, %s67
    %p79 = scmp.eq.s32.totalorder %s15, 1
    %p80 = por %p78, %p79
    %p82 = scmp.ne.s32.totalorder %s67, %s81
    %p83 = scmp.eq.s32.totalorder %s15, 0
    %p84 = por %p82, %p83
    %s85 = ssub.s32 %s9, %s16
    %p86 = scmp.eq.s32.totalorder %s85, 0
    %s88 = sadd.s32 %s87, 1
    %s89 = scalar_select %p86, %s87, %s88
    %p92 = pneg %p86
    %p93 = scmp.eq.s32.totalorder %s9, 1
    %p94 = por %p92, %p93
    %p95 = scmp.ne.s32.totalorder %s87, %s90
    %p96 = scmp.eq.s32.totalorder %s9, 0
    %p97 = por %p95, %p96
    %p98 = scmp.ne.s32.totalorder %s87, %s90
    %p99 = scmp.eq.s32.totalorder %s14, 1
    %p100 = por %p98, %p99
    %p101 = scmp.ne.s32.totalorder %s90, %s91
    %p102 = scmp.eq.s32.totalorder %s14, 0
    %p103 = por %p101, %p102
    %p104 = scmp.ne.s32.totalorder %s90, %s91
    %p105 = scmp.eq.s32.totalorder %s15, 1
    %p106 = por %p104, %p105
    %p108 = scmp.ne.s32.totalorder %s91, %s107
    %p109 = scmp.eq.s32.totalorder %s15, 0
    %p110 = por %p108, %p109
    %p111 = scmp.le.s32.totalorder 1, %s9
    %p112 = scmp.lt.s32.totalorder %s9, 3
    %p113 = pnand %p111, %p112
    %p114 = pneg %p113
    // Predicated region
    $region9: #{_forward.14} parent=5 // pred_check
      _
    $region10: #{_forward.14} parent=5 // pred_check_branch
      %116 = sbr.rel (%p113) target = $region12
    $region11: #{_forward.14} parent=5 // pred_region
      %s117 = ssub.s32 %s9, 1
      // Predicated region
      $region13: #{_forward.14} parent=11 // pred_check
        %p118 = pneg %p56
      $region14: #{_forward.14} parent=11 // pred_check_branch
        %120 = sbr.rel (%p118) target = $region16
      $region15: #{_forward.14} parent=11 // pred_region
        _
      $region16: #{_forward.14} parent=11 // pred_fallthru
        _
      // Predicated region
      $region17: #{_forward.14} parent=11 // pred_check
        %p121 = pneg %p77
      $region18: #{_forward.14} parent=11 // pred_check_branch
        %123 = sbr.rel (%p121) target = $region20
      $region19: #{_forward.14} parent=11 // pred_region
        _
      $region20: #{_forward.14} parent=11 // pred_fallthru
        _
    $region12: #{_forward.14} parent=5 // pred_fallthru
      _
    %p124 = scmp.lt.s32.totalorder %s9, 2
    // Predicated region
    $region21: #{_forward.14} parent=5 // pred_check
      %p125 = pneg %p124
    $region22: #{_forward.14} parent=5 // pred_check_branch
      %127 = sbr.rel (%p125) target = $region24
    $region23: #{_forward.14} parent=5 // pred_region
      // Predicated region
      $region25: #{_forward.14} parent=23 // pred_check
        %p128 = pneg %p29
      $region26: #{_forward.14} parent=23 // pred_check_branch
        %130 = sbr.rel (%p128) target = $region28
      $region27: #{_forward.14} parent=23 // pred_region
        %p131 = scmp.lt.s32.totalorder %s9, 1
        %s132 = scalar_select %p131, %s9, 1
        %s133 = smul.addr %s132, 64
        %s134 = smul.addr %s133, 4
        %s135 = scalar_lea.vmem %s0, %s134
      $region28: #{_forward.14} parent=23 // pred_fallthru
        _
    $region24: #{_forward.14} parent=5 // pred_fallthru
      _
    %p136 = scmp.le.s32.totalorder 1, %s9
    %p137 = scmp.lt.s32.totalorder %s9, 3
    %p138 = pnand %p136, %p137
    %p139 = pneg %p138
    // Predicated region
    $region29: #{_forward.14} parent=5 // pred_check
      _
    $region30: #{_forward.14} parent=5 // pred_check_branch
      %141 = sbr.rel (%p138) target = $region32
    $region31: #{_forward.14} parent=5 // pred_region
      %s142 = ssub.s32 %s9, 1
      %p143 = scmp.lt.s32.totalorder %s14, 1
      %s144 = scalar_select %p143, %s14, 1
      %s145 = smul.addr %s144, 64
      %s146 = smul.addr %s145, 4
      %s147 = scalar_lea.vmem %s0, %s146
      %p148 = pneg %p35
      %p149 = pneg %p32
      %p150 = pneg %p56
      %p151 = pneg %p53
      %p152 = pneg %p77
      %p153 = pneg %p74
      %p154 = pneg %p103
      %p155 = pneg %p100
      %s156 = smul.u32 32, %s14
      %p157 = scmp.lt.s32.totalorder %s156, 63
      %s158 = scalar_select %p157, %s156, 63
      %s159 = smul.addr %s158, 8
      %s160 = scalar_lea.vmem %s3, %s159
      %p161 = scmp.lt.s32.totalorder %s14, 1
      %s162 = scalar_select %p161, %s14, 1
      %s163 = smul.addr %s162, 64
      %s164 = smul.addr %s163, 4
      %s165 = scalar_lea.vmem %s0, %s164
      %s166 = smul.u32 32, %s14
      %p167 = scmp.lt.s32.totalorder %s166, 63
      %s168 = scalar_select %p167, %s166, 63
      %s169 = smul.addr %s168, 8
      %s170 = scalar_lea.vmem %s3, %s169
      %s171 = smul.u32 32, %s14
      %v173 = vld [vmem:[%s165] sm:$0xff]
      %v174 = vld [vmem:[%s165 + $0x8] sm:$0xff]
      %v175 = vld [vmem:[%s165 + $0x10] sm:$0xff]
      %v176 = vld [vmem:[%s165 + $0x18] sm:$0xff]
      %v177 = vld [vmem:[%s165 + $0x20] sm:$0xff]
      %v178 = vld [vmem:[%s165 + $0x28] sm:$0xff]
      %v179 = vld [vmem:[%s165 + $0x30] sm:$0xff]
      %v180 = vld [vmem:[%s165 + $0x38] sm:$0xff]
      %v181 = vld [vmem:[%s165 + $0x40] sm:$0xff]
      %v182 = vld [vmem:[%s165 + $0x48] sm:$0xff]
      %v183 = vld [vmem:[%s165 + $0x50] sm:$0xff]
      %v184 = vld [vmem:[%s165 + $0x58] sm:$0xff]
      %v185 = vld [vmem:[%s165 + $0x60] sm:$0xff]
      %v186 = vld [vmem:[%s165 + $0x68] sm:$0xff]
      %v187 = vld [vmem:[%s165 + $0x70] sm:$0xff]
      %v188 = vld [vmem:[%s165 + $0x78] sm:$0xff]
      %v189 = vld [vmem:[%s165 + $0x80] sm:$0xff]
      %v190 = vld [vmem:[%s165 + $0x88] sm:$0xff]
      %v191 = vld [vmem:[%s165 + $0x90] sm:$0xff]
      %v192 = vld [vmem:[%s165 + $0x98] sm:$0xff]
      %v193 = vld [vmem:[%s165 + $0xa0] sm:$0xff]
      %v194 = vld [vmem:[%s165 + $0xa8] sm:$0xff]
      %v195 = vld [vmem:[%s165 + $0xb0] sm:$0xff]
      %v196 = vld [vmem:[%s165 + $0xb8] sm:$0xff]
      %v197 = vld [vmem:[%s165 + $0xc0] sm:$0xff]
      %v198 = vld [vmem:[%s165 + $0xc8] sm:$0xff]
      %v199 = vld [vmem:[%s165 + $0xd0] sm:$0xff]
      %v200 = vld [vmem:[%s165 + $0xd8] sm:$0xff]
      %v201 = vld [vmem:[%s165 + $0xe0] sm:$0xff]
      %v202 = vld [vmem:[%s165 + $0xe8] sm:$0xff]
      %v203 = vld [vmem:[%s165 + $0xf0] sm:$0xff]
      %v204 = vld [vmem:[%s165 + $0xf8] sm:$0xff]
      %v205 = vld [vmem:[%s1] sm:$0xf]
      %v206 = vld [vmem:[%s1 + $0x4] sm:$0xf]
      %v207 = vld [vmem:[%s1 + $0x8] sm:$0xf]
      %v208 = vld [vmem:[%s1 + $0xc] sm:$0xf]
      %v209 = vld [vmem:[%s1 + $0x10] sm:$0xf]
      %v210 = vld [vmem:[%s1 + $0x14] sm:$0xf]
      %v211 = vld [vmem:[%s1 + $0x18] sm:$0xf]
      %v212 = vld [vmem:[%s1 + $0x1c] sm:$0xf]
      %v213 = vld [vmem:[%s1 + $0x20] sm:$0xf]
      %v214 = vld [vmem:[%s1 + $0x24] sm:$0xf]
      %v215 = vld [vmem:[%s1 + $0x28] sm:$0xf]
      %v216 = vld [vmem:[%s1 + $0x2c] sm:$0xf]
      %v217 = vld [vmem:[%s1 + $0x30] sm:$0xf]
      %v218 = vld [vmem:[%s1 + $0x34] sm:$0xf]
      %v219 = vld [vmem:[%s1 + $0x38] sm:$0xf]
      %v220 = vld [vmem:[%s1 + $0x3c] sm:$0xf]
      %v221 = vld [vmem:[%s1 + $0x40] sm:$0xf]
      %v222 = vld [vmem:[%s1 + $0x44] sm:$0xf]
      %v223 = vld [vmem:[%s1 + $0x48] sm:$0xf]
      %v224 = vld [vmem:[%s1 + $0x4c] sm:$0xf]
      %v225 = vld [vmem:[%s1 + $0x50] sm:$0xf]
      %v226 = vld [vmem:[%s1 + $0x54] sm:$0xf]
      %v227 = vld [vmem:[%s1 + $0x58] sm:$0xf]
      %v228 = vld [vmem:[%s1 + $0x5c] sm:$0xf]
      %v229 = vld [vmem:[%s1 + $0x60] sm:$0xf]
      %v230 = vld [vmem:[%s1 + $0x64] sm:$0xf]
      %v231 = vld [vmem:[%s1 + $0x68] sm:$0xf]
      %v232 = vld [vmem:[%s1 + $0x6c] sm:$0xf]
      %v233 = vld [vmem:[%s1 + $0x70] sm:$0xf]
      %v234 = vld [vmem:[%s1 + $0x74] sm:$0xf]
      %v235 = vld [vmem:[%s1 + $0x78] sm:$0xf]
      %v236 = vld [vmem:[%s1 + $0x7c] sm:$0xf]
      %v269 = vunpack.c.l.b16 %v173
      %v270 = vunpack.c.h.b16 %v173
      %v271 = vunpack.c.l.b16 %v174
      %v272 = vunpack.c.h.b16 %v174
      %v273 = vunpack.c.l.b16 %v175
      %v274 = vunpack.c.h.b16 %v175
      %v275 = vunpack.c.l.b16 %v176
      %v276 = vunpack.c.h.b16 %v176
      %v277 = vunpack.c.l.b16 %v177
      %v278 = vunpack.c.h.b16 %v177
      %v279 = vunpack.c.l.b16 %v178
      %v280 = vunpack.c.h.b16 %v178
      %v281 = vunpack.c.l.b16 %v179
      %v282 = vunpack.c.h.b16 %v179
      %v283 = vunpack.c.l.b16 %v180
      %v284 = vunpack.c.h.b16 %v180
      %v285 = vunpack.c.l.b16 %v181
      %v286 = vunpack.c.h.b16 %v181
      %v287 = vunpack.c.l.b16 %v182
      %v288 = vunpack.c.h.b16 %v182
      %v289 = vunpack.c.l.b16 %v183
      %v290 = vunpack.c.h.b16 %v183
      %v291 = vunpack.c.l.b16 %v184
      %v292 = vunpack.c.h.b16 %v184
      %v293 = vunpack.c.l.b16 %v185
      %v294 = vunpack.c.h.b16 %v185
      %v295 = vunpack.c.l.b16 %v186
      %v296 = vunpack.c.h.b16 %v186
      %v297 = vunpack.c.l.b16 %v187
      %v298 = vunpack.c.h.b16 %v187
      %v299 = vunpack.c.l.b16 %v188
      %v300 = vunpack.c.h.b16 %v188
      %v301 = vunpack.c.l.b16 %v189
      %v302 = vunpack.c.h.b16 %v189
      %v303 = vunpack.c.l.b16 %v190
      %v304 = vunpack.c.h.b16 %v190
      %v305 = vunpack.c.l.b16 %v191
      %v306 = vunpack.c.h.b16 %v191
      %v307 = vunpack.c.l.b16 %v192
      %v308 = vunpack.c.h.b16 %v192
      %v309 = vunpack.c.l.b16 %v193
      %v310 = vunpack.c.h.b16 %v193
      %v311 = vunpack.c.l.b16 %v194
      %v312 = vunpack.c.h.b16 %v194
      %v313 = vunpack.c.l.b16 %v195
      %v314 = vunpack.c.h.b16 %v195
      %v315 = vunpack.c.l.b16 %v196
      %v316 = vunpack.c.h.b16 %v196
      %v317 = vunpack.c.l.b16 %v197
      %v318 = vunpack.c.h.b16 %v197
      %v319 = vunpack.c.l.b16 %v198
      %v320 = vunpack.c.h.b16 %v198
      %v321 = vunpack.c.l.b16 %v199
      %v322 = vunpack.c.h.b16 %v199
      %v323 = vunpack.c.l.b16 %v200
      %v324 = vunpack.c.h.b16 %v200
      %v325 = vunpack.c.l.b16 %v201
      %v326 = vunpack.c.h.b16 %v201
      %v327 = vunpack.c.l.b16 %v202
      %v328 = vunpack.c.h.b16 %v202
      %v329 = vunpack.c.l.b16 %v203
      %v330 = vunpack.c.h.b16 %v203
      %v331 = vunpack.c.l.b16 %v204
      %v332 = vunpack.c.h.b16 %v204
      %v333 = vpack.c.b16 %v271, %v269
      %v334 = vpack.c.b16 %v272, %v270
      %v335 = vpack.c.b16 %v275, %v273
      %v336 = vpack.c.b16 %v276, %v274
      %v337 = vpack.c.b16 %v279, %v277
      %v338 = vpack.c.b16 %v280, %v278
      %v339 = vpack.c.b16 %v283, %v281
      %v340 = vpack.c.b16 %v284, %v282
      %v341 = vpack.c.b16 %v287, %v285
      %v342 = vpack.c.b16 %v288, %v286
      %v343 = vpack.c.b16 %v291, %v289
      %v344 = vpack.c.b16 %v292, %v290
      %v345 = vpack.c.b16 %v295, %v293
      %v346 = vpack.c.b16 %v296, %v294
      %v347 = vpack.c.b16 %v299, %v297
      %v348 = vpack.c.b16 %v300, %v298
      %v349 = vpack.c.b16 %v303, %v301
      %v350 = vpack.c.b16 %v304, %v302
      %v351 = vpack.c.b16 %v307, %v305
      %v352 = vpack.c.b16 %v308, %v306
      %v353 = vpack.c.b16 %v311, %v309
      %v354 = vpack.c.b16 %v312, %v310
      %v355 = vpack.c.b16 %v315, %v313
      %v356 = vpack.c.b16 %v316, %v314
      %v357 = vpack.c.b16 %v319, %v317
      %v358 = vpack.c.b16 %v320, %v318
      %v359 = vpack.c.b16 %v323, %v321
      %v360 = vpack.c.b16 %v324, %v322
      %v361 = vpack.c.b16 %v327, %v325
      %v362 = vpack.c.b16 %v328, %v326
      %v363 = vpack.c.b16 %v331, %v329
      %v364 = vpack.c.b16 %v332, %v330
      %v429 = vunpack.c.l.b16 %v205
      %v430 = vunpack.c.l.b16 %v206
      %v431 = vunpack.c.l.b16 %v207
      %v432 = vunpack.c.l.b16 %v208
      %v433 = vunpack.c.l.b16 %v209
      %v434 = vunpack.c.l.b16 %v210
      %v435 = vunpack.c.l.b16 %v211
      %v436 = vunpack.c.l.b16 %v212
      %v437 = vunpack.c.l.b16 %v213
      %v438 = vunpack.c.l.b16 %v214
      %v439 = vunpack.c.l.b16 %v215
      %v440 = vunpack.c.l.b16 %v216
      %v441 = vunpack.c.l.b16 %v217
      %v442 = vunpack.c.l.b16 %v218
      %v443 = vunpack.c.l.b16 %v219
      %v444 = vunpack.c.l.b16 %v220
      %v445 = vunpack.c.l.b16 %v221
      %v446 = vunpack.c.l.b16 %v222
      %v447 = vunpack.c.l.b16 %v223
      %v448 = vunpack.c.l.b16 %v224
      %v449 = vunpack.c.l.b16 %v225
      %v450 = vunpack.c.l.b16 %v226
      %v451 = vunpack.c.l.b16 %v227
      %v452 = vunpack.c.l.b16 %v228
      %v453 = vunpack.c.l.b16 %v229
      %v454 = vunpack.c.l.b16 %v230
      %v455 = vunpack.c.l.b16 %v231
      %v456 = vunpack.c.l.b16 %v232
      %v457 = vunpack.c.l.b16 %v233
      %v458 = vunpack.c.l.b16 %v234
      %v459 = vunpack.c.l.b16 %v235
      %v460 = vunpack.c.l.b16 %v236
      %v461 = vpack.c.b16 %v430, %v429
      %v462 = vpack.c.b16 %v432, %v431
      %v463 = vpack.c.b16 %v434, %v433
      %v464 = vpack.c.b16 %v436, %v435
      %v465 = vpack.c.b16 %v438, %v437
      %v466 = vpack.c.b16 %v440, %v439
      %v467 = vpack.c.b16 %v442, %v441
      %v468 = vpack.c.b16 %v444, %v443
      %v469 = vpack.c.b16 %v446, %v445
      %v470 = vpack.c.b16 %v448, %v447
      %v471 = vpack.c.b16 %v450, %v449
      %v472 = vpack.c.b16 %v452, %v451
      %v473 = vpack.c.b16 %v454, %v453
      %v474 = vpack.c.b16 %v456, %v455
      %v475 = vpack.c.b16 %v458, %v457
      %v476 = vpack.c.b16 %v460, %v459
      %493 = vmatprep.subr.bf16.mxu0 0
      %494 = vmatpush1.bf16.msra.mxu0 %v461
      %495 = vmatprep.subr.bf16.mxu0 0
      %496 = vmatpush1.bf16.msra.mxu0 %v462
      %497 = vmatprep.subr.bf16.mxu0 0
      %498 = vmatpush1.bf16.msra.mxu0 %v463
      %499 = vmatprep.subr.bf16.mxu0 0
      %500 = vmatpush1.bf16.msra.mxu0 %v464
      %501 = vmatprep.subr.bf16.mxu0 0
      %502 = vmatpush1.bf16.msra.mxu0 %v465
      %503 = vmatprep.subr.bf16.mxu0 0
      %504 = vmatpush1.bf16.msra.mxu0 %v466
      %505 = vmatprep.subr.bf16.mxu0 0
      %506 = vmatpush1.bf16.msra.mxu0 %v467
      %507 = vmatprep.subr.bf16.mxu0 0
      %508 = vmatpush1.bf16.msra.mxu0 %v468
      %509 = vmatprep.subr.bf16.mxu0 0
      %510 = vmatpush1.bf16.msra.mxu0 %v469
      %511 = vmatprep.subr.bf16.mxu0 0
      %512 = vmatpush1.bf16.msra.mxu0 %v470
      %513 = vmatprep.subr.bf16.mxu0 0
      %514 = vmatpush1.bf16.msra.mxu0 %v471
      %515 = vmatprep.subr.bf16.mxu0 0
      %516 = vmatpush1.bf16.msra.mxu0 %v472
      %517 = vmatprep.subr.bf16.mxu0 0
      %518 = vmatpush1.bf16.msra.mxu0 %v473
      %519 = vmatprep.subr.bf16.mxu0 0
      %520 = vmatpush1.bf16.msra.mxu0 %v474
      %521 = vmatprep.subr.bf16.mxu0 0
      %522 = vmatpush1.bf16.msra.mxu0 %v475
      %523 = vmatprep.subr.bf16.mxu0 0
      %524 = vmatpush1.bf16.msra.mxu0 %v476
      %525 = vmatprep.mubr.bf16.mxu0 %v334
      %526 = vmatmul.mubr.bf16.gmra.mrb[0].mxu0 %v333
      %v527 = vpop.f32.mrb[0].mxu0
      %v528 = vadd.f32 0.0, %v527
      %v529 = vpop.f32.mrb[0].mxu0
      %v530 = vpop.f32.mrb[0].mxu0
      %v531 = vadd.f32 0.0, %v530
      %v532 = vpop.f32.mrb[0].mxu0
      %533 = vmatprep.mubr.bf16.mxu0 %v336
      %534 = vmatmul.mubr.bf16.gmra.mrb[0].mxu0 %v335
      %v535 = vpop.f32.mrb[0].mxu0
      %v536 = vadd.f32 0.0, %v535
      %v537 = vpop.f32.mrb[0].mxu0
      %v538 = vpop.f32.mrb[0].mxu0
      %v539 = vadd.f32 0.0, %v538
      %v540 = vpop.f32.mrb[0].mxu0
      %541 = vmatprep.mubr.bf16.mxu0 %v338
      %542 = vmatmul.mubr.bf16.gmra.mrb[0].mxu0 %v337
      %v543 = vpop.f32.mrb[0].mxu0
      %v544 = vadd.f32 0.0, %v543
      %v545 = vpop.f32.mrb[0].mxu0
      %v546 = vpop.f32.mrb[0].mxu0
      %v547 = vadd.f32 0.0, %v546
      %v548 = vpop.f32.mrb[0].mxu0
      %549 = vmatprep.mubr.bf16.mxu0 %v340
      %550 = vmatmul.mubr.bf16.gmra.mrb[0].mxu0 %v339
      %v551 = vpop.f32.mrb[0].mxu0
      %v552 = vadd.f32 0.0, %v551
      %v553 = vpop.f32.mrb[0].mxu0
      %v554 = vpop.f32.mrb[0].mxu0
      %v555 = vadd.f32 0.0, %v554
      %v556 = vpop.f32.mrb[0].mxu0
      %557 = vmatprep.mubr.bf16.mxu0 %v342
      %558 = vmatmul.mubr.bf16.gmra.mrb[0].mxu0 %v341
      %v559 = vpop.f32.mrb[0].mxu0
      %v560 = vadd.f32 0.0, %v559
      %v561 = vpop.f32.mrb[0].mxu0
      %v562 = vpop.f32.mrb[0].mxu0
      %v563 = vadd.f32 0.0, %v562
      %v564 = vpop.f32.mrb[0].mxu0
      %565 = vmatprep.mubr.bf16.mxu0 %v344
      %566 = vmatmul.mubr.bf16.gmra.mrb[0].mxu0 %v343
      %v567 = vpop.f32.mrb[0].mxu0
      %v568 = vadd.f32 0.0, %v567
      %v569 = vpop.f32.mrb[0].mxu0
      %v570 = vpop.f32.mrb[0].mxu0
      %v571 = vadd.f32 0.0, %v570
      %v572 = vpop.f32.mrb[0].mxu0
      %573 = vmatprep.mubr.bf16.mxu0 %v346
      %574 = vmatmul.mubr.bf16.gmra.mrb[0].mxu0 %v345
      %v575 = vpop.f32.mrb[0].mxu0
      %v576 = vadd.f32 0.0, %v575
      %v577 = vpop.f32.mrb[0].mxu0
      %v578 = vpop.f32.mrb[0].mxu0
      %v579 = vadd.f32 0.0, %v578
      %v580 = vpop.f32.mrb[0].mxu0
      %581 = vmatprep.mubr.bf16.mxu0 %v348
      %582 = vmatmul.mubr.bf16.gmra.mrb[0].mxu0 %v347
      %v583 = vpop.f32.mrb[0].mxu0
      %v584 = vadd.f32 0.0, %v583
      %v585 = vpop.f32.mrb[0].mxu0
      %v586 = vpop.f32.mrb[0].mxu0
      %v587 = vadd.f32 0.0, %v586
      %v588 = vpop.f32.mrb[0].mxu0
      %589 = vmatprep.mubr.bf16.mxu0 %v350
      %590 = vmatmul.mubr.bf16.gmra.mrb[0].mxu0 %v349
      %v591 = vpop.f32.mrb[0].mxu0
      %v592 = vadd.f32 0.0, %v591
      %v593 = vpop.f32.mrb[0].mxu0
      %v594 = vpop.f32.mrb[0].mxu0
      %v595 = vadd.f32 0.0, %v594
      %v596 = vpop.f32.mrb[0].mxu0
      %597 = vmatprep.mubr.bf16.mxu0 %v352
      %598 = vmatmul.mubr.bf16.gmra.mrb[0].mxu0 %v351
      %v599 = vpop.f32.mrb[0].mxu0
      %v600 = vadd.f32 0.0, %v599
      %v601 = vpop.f32.mrb[0].mxu0
      %v602 = vpop.f32.mrb[0].mxu0
      %v603 = vadd.f32 0.0, %v602
      %v604 = vpop.f32.mrb[0].mxu0
      %605 = vmatprep.mubr.bf16.mxu0 %v354
      %606 = vmatmul.mubr.bf16.gmra.mrb[0].mxu0 %v353
      %v607 = vpop.f32.mrb[0].mxu0
      %v608 = vadd.f32 0.0, %v607
      %v609 = vpop.f32.mrb[0].mxu0
      %v610 = vpop.f32.mrb[0].mxu0
      %v611 = vadd.f32 0.0, %v610
      %v612 = vpop.f32.mrb[0].mxu0
      %613 = vmatprep.mubr.bf16.mxu0 %v356
      %614 = vmatmul.mubr.bf16.gmra.mrb[0].mxu0 %v355
      %v615 = vpop.f32.mrb[0].mxu0
      %v616 = vadd.f32 0.0, %v615
      %v617 = vpop.f32.mrb[0].mxu0
      %v618 = vpop.f32.mrb[0].mxu0
      %v619 = vadd.f32 0.0, %v618
      %v620 = vpop.f32.mrb[0].mxu0
      %621 = vmatprep.mubr.bf16.mxu0 %v358
      %622 = vmatmul.mubr.bf16.gmra.mrb[0].mxu0 %v357
      %v623 = vpop.f32.mrb[0].mxu0
      %v624 = vadd.f32 0.0, %v623
      %v625 = vpop.f32.mrb[0].mxu0
      %v626 = vpop.f32.mrb[0].mxu0
      %v627 = vadd.f32 0.0, %v626
      %v628 = vpop.f32.mrb[0].mxu0
      %629 = vmatprep.mubr.bf16.mxu0 %v360
      %630 = vmatmul.mubr.bf16.gmra.mrb[0].mxu0 %v359
      %v631 = vpop.f32.mrb[0].mxu0
      %v632 = vadd.f32 0.0, %v631
      %v633 = vpop.f32.mrb[0].mxu0
      %v634 = vpop.f32.mrb[0].mxu0
      %v635 = vadd.f32 0.0, %v634
      %v636 = vpop.f32.mrb[0].mxu0
      %637 = vmatprep.mubr.bf16.mxu0 %v362
      %638 = vmatmul.mubr.bf16.gmra.mrb[0].mxu0 %v361
      %v639 = vpop.f32.mrb[0].mxu0
      %v640 = vadd.f32 0.0, %v639
      %v641 = vpop.f32.mrb[0].mxu0
      %v642 = vpop.f32.mrb[0].mxu0
      %v643 = vadd.f32 0.0, %v642
      %v644 = vpop.f32.mrb[0].mxu0
      %645 = vmatprep.mubr.bf16.mxu0 %v364
      %646 = vmatmul.mubr.bf16.gmra.mrb[0].mxu0 %v363
      %v647 = vpop.f32.mrb[0].mxu0
      %v648 = vadd.f32 0.0, %v647
      %v649 = vpop.f32.mrb[0].mxu0
      %v650 = vpop.f32.mrb[0].mxu0
      %v651 = vadd.f32 0.0, %v650
      %v652 = vpop.f32.mrb[0].mxu0
      %653 = vdwg.mxu0
      %v654 = vld [vmem:[%s2] sm:$0x1]
      %v655 = vlaneseq
      %v656 = vshrl.u32 %v655, 7
      %v657 = vsub.s32 0, %v656
      %v658 = vrot.slane %v654, %v657
      %v659 = vmul.f32 %v528, %v658
      %v660 = vmul.f32 %v531, %v658
      %v661 = vmul.f32 %v536, %v658
      %v662 = vmul.f32 %v539, %v658
      %v663 = vmul.f32 %v544, %v658
      %v664 = vmul.f32 %v547, %v658
      %v665 = vmul.f32 %v552, %v658
      %v666 = vmul.f32 %v555, %v658
      %v667 = vmul.f32 %v560, %v658
      %v668 = vmul.f32 %v563, %v658
      %v669 = vmul.f32 %v568, %v658
      %v670 = vmul.f32 %v571, %v658
      %v671 = vmul.f32 %v576, %v658
      %v672 = vmul.f32 %v579, %v658
      %v673 = vmul.f32 %v584, %v658
      %v674 = vmul.f32 %v587, %v658
      %v675 = vmul.f32 %v592, %v658
      %v676 = vmul.f32 %v595, %v658
      %v677 = vmul.f32 %v600, %v658
      %v678 = vmul.f32 %v603, %v658
      %v679 = vmul.f32 %v608, %v658
      %v680 = vmul.f32 %v611, %v658
      %v681 = vmul.f32 %v616, %v658
      %v682 = vmul.f32 %v619, %v658
      %v683 = vmul.f32 %v624, %v658
      %v684 = vmul.f32 %v627, %v658
      %v685 = vmul.f32 %v632, %v658
      %v686 = vmul.f32 %v635, %v658
      %v687 = vmul.f32 %v640, %v658
      %v688 = vmul.f32 %v643, %v658
      %v689 = vmul.f32 %v648, %v658
      %v690 = vmul.f32 %v651, %v658
      %v691 = vld [vmem:[%s2 + $0x1] sm:$0x1]
      %v692 = vlaneseq
      %v693 = vshrl.u32 %v692, 7
      %v694 = vsub.s32 0, %v693
      %v695 = vrot.slane %v691, %v694
      %v696 = vadd.f32 %v659, %v695
      %v697 = vadd.f32 %v660, %v695
      %v698 = vadd.f32 %v661, %v695
      %v699 = vadd.f32 %v662, %v695
      %v700 = vadd.f32 %v663, %v695
      %v701 = vadd.f32 %v664, %v695
      %v702 = vadd.f32 %v665, %v695
      %v703 = vadd.f32 %v666, %v695
      %v704 = vadd.f32 %v667, %v695
      %v705 = vadd.f32 %v668, %v695
      %v706 = vadd.f32 %v669, %v695
      %v707 = vadd.f32 %v670, %v695
      %v708 = vadd.f32 %v671, %v695
      %v709 = vadd.f32 %v672, %v695
      %v710 = vadd.f32 %v673, %v695
      %v711 = vadd.f32 %v674, %v695
      %v712 = vadd.f32 %v675, %v695
      %v713 = vadd.f32 %v676, %v695
      %v714 = vadd.f32 %v677, %v695
      %v715 = vadd.f32 %v678, %v695
      %v716 = vadd.f32 %v679, %v695
      %v717 = vadd.f32 %v680, %v695
      %v718 = vadd.f32 %v681, %v695
      %v719 = vadd.f32 %v682, %v695
      %v720 = vadd.f32 %v683, %v695
      %v721 = vadd.f32 %v684, %v695
      %v722 = vadd.f32 %v685, %v695
      %v723 = vadd.f32 %v686, %v695
      %v724 = vadd.f32 %v687, %v695
      %v725 = vadd.f32 %v688, %v695
      %v726 = vadd.f32 %v689, %v695
      %v727 = vadd.f32 %v690, %v695
      %728 = vst [vmem:[%s170] sm:$0xff] %v696
      %729 = vst [vmem:[%s170 + $0x8] sm:$0xff] %v697
      %730 = vst [vmem:[%s170 + $0x10] sm:$0xff] %v698
      %731 = vst [vmem:[%s170 + $0x18] sm:$0xff] %v699
      %732 = vst [vmem:[%s170 + $0x20] sm:$0xff] %v700
      %733 = vst [vmem:[%s170 + $0x28] sm:$0xff] %v701
      %734 = vst [vmem:[%s170 + $0x30] sm:$0xff] %v702
      %735 = vst [vmem:[%s170 + $0x38] sm:$0xff] %v703
      %736 = vst [vmem:[%s170 + $0x40] sm:$0xff] %v704
      %737 = vst [vmem:[%s170 + $0x48] sm:$0xff] %v705
      %738 = vst [vmem:[%s170 + $0x50] sm:$0xff] %v706
      %739 = vst [vmem:[%s170 + $0x58] sm:$0xff] %v707
      %740 = vst [vmem:[%s170 + $0x60] sm:$0xff] %v708
      %741 = vst [vmem:[%s170 + $0x68] sm:$0xff] %v709
      %742 = vst [vmem:[%s170 + $0x70] sm:$0xff] %v710
      %743 = vst [vmem:[%s170 + $0x78] sm:$0xff] %v711
      %744 = vst [vmem:[%s170 + $0x80] sm:$0xff] %v712
      %745 = vst [vmem:[%s170 + $0x88] sm:$0xff] %v713
      %746 = vst [vmem:[%s170 + $0x90] sm:$0xff] %v714
      %747 = vst [vmem:[%s170 + $0x98] sm:$0xff] %v715
      %748 = vst [vmem:[%s170 + $0xa0] sm:$0xff] %v716
      %749 = vst [vmem:[%s170 + $0xa8] sm:$0xff] %v717
      %750 = vst [vmem:[%s170 + $0xb0] sm:$0xff] %v718
      %751 = vst [vmem:[%s170 + $0xb8] sm:$0xff] %v719
      %752 = vst [vmem:[%s170 + $0xc0] sm:$0xff] %v720
      %753 = vst [vmem:[%s170 + $0xc8] sm:$0xff] %v721
      %754 = vst [vmem:[%s170 + $0xd0] sm:$0xff] %v722
      %755 = vst [vmem:[%s170 + $0xd8] sm:$0xff] %v723
      %756 = vst [vmem:[%s170 + $0xe0] sm:$0xff] %v724
      %757 = vst [vmem:[%s170 + $0xe8] sm:$0xff] %v725
      %758 = vst [vmem:[%s170 + $0xf0] sm:$0xff] %v726
      %759 = vst [vmem:[%s170 + $0xf8] sm:$0xff] %v727
      %s760 = smul.u32 32, %s14
      %p761 = scmp.lt.s32.totalorder %s760, 63
      %s762 = scalar_select %p761, %s760, 63
      %s763 = smul.addr %s762, 8
      %s764 = scalar_lea.vmem %s3, %s763
      // Predicated region
      $region33: #{_forward.14} parent=31 // pred_check
        %p765 = pneg %p100
      $region34: #{_forward.14} parent=31 // pred_check_branch
        %767 = sbr.rel (%p765) target = $region36
      $region35: #{_forward.14} parent=31 // pred_region
        %s768 = smul.u32 32, %s14
      $region36: #{_forward.14} parent=31 // pred_fallthru
        _
    $region32: #{_forward.14} parent=5 // pred_fallthru
      _
    %p769 = scmp.le.s32.totalorder 2, %s9
    // Predicated region
    $region37: #{_forward.14} parent=5 // pred_check
      %p770 = pneg %p769
    $region38: #{_forward.14} parent=5 // pred_check_branch
      %772 = sbr.rel (%p770) target = $region40
    $region39: #{_forward.14} parent=5 // pred_region
      %s773 = ssub.s32 %s9, 2
      // Predicated region
      $region41: #{_forward.14} parent=39 // pred_check
        %p774 = pneg %p106
      $region42: #{_forward.14} parent=39 // pred_check_branch
        %776 = sbr.rel (%p774) target = $region44
      $region43: #{_forward.14} parent=39 // pred_region
        %s777 = smul.u32 32, %s15
        %p778 = scmp.lt.s32.totalorder %s777, 63
        %s779 = scalar_select %p778, %s777, 63
        %s780 = smul.addr %s779, 8
        %s781 = scalar_lea.vmem %s3, %s780
      $region44: #{_forward.14} parent=39 // pred_fallthru
        _
    $region40: #{_forward.14} parent=5 // pred_fallthru
      _
  $region6: #{_forward.14} parent=0 // loop_footer
    %s13 = sadd.s32 1, %s9
  $region7: #{_forward.14} parent=0 // loop_footer_branch
    %8 = sbr.rel target = $region3
  $region8: #{_forward.14} parent=0 // loop_exit
    _

// kernel: _forward.15
$region0: #{_forward.15}
  #allocation0 [shape = 'u32[]', space=smem, size = 0x4, offset = 0x4, fixed_abs, tag = 'smem constant byte address 0x4 - core index']
  #allocation1 [shape = 'u32[144,128]{1,0:T(1,128)}', space=vmem, size = 0x12000, scoped, tag = 'internal scratch']
  %s0 = inlined_call_operand.vmem [shape: f32[2,16,16,128], index: 0, kind: input, shape index: {}]
  %s1 = inlined_call_operand.vmem [shape: f32[2,128], index: 1, kind: input, shape index: {}]
  %s2 = inlined_call_operand.vmem [shape: f32[2,16,16,128], index: 2, kind: output, shape index: {}]
  %s3 = sld [smem:[#allocation0]]
  $region41: #{_forward.15} parent=0
    _
  %s5 = ssub.s32 1, %s3
  %s6 = scalar_select 0, %s5, %s3
  loop: start=0, step=1, limit=4
  $region2: #{_forward.15} parent=0 // loop_pre_header
    _
  $region3: #{_forward.15} parent=0 // loop_header
    %s8 = sphi 0, %s12
    %p9 = scmp.ge.s32.totalorder %s8, 4
    %s18 = sphi 0, %s20
    %s21 = sphi 0, %s18
    %s22 = sphi 0, %s21
    %s38 = sphi 0, %s22
    %s42 = sphi 0, %s42
    %s44 = sphi 0, %s42
    %s45 = sphi 0, %s44
    %s59 = sphi 0, %s45
    %s65 = sphi 0, %s67
    %s68 = sphi 0, %s65
    %s69 = sphi 0, %s68
    %s85 = sphi 0, %s69
  $region4: #{_forward.15} parent=0 // loop_header_branch
    %11 = sbr.rel (%p9) target = $region8
  $region5: #{_forward.15} parent=0 // loop_body
    %s13 = ssub.s32 %s8, 1
    %s14 = ssub.s32 %s8, 2
    %s15 = sadd.s32 %s8, 1
    %s16 = ssub.s32 %s8, %s15
    %p17 = scmp.eq.s32.totalorder %s16, 0
    %s19 = sadd.s32 %s18, 1
    %s20 = scalar_select %p17, %s18, %s19
    %p23 = pneg %p17
    %p24 = scmp.eq.s32.totalorder %s8, 1
    %p25 = por %p23, %p24
    %p26 = scmp.ne.s32.totalorder %s18, %s21
    %p27 = scmp.eq.s32.totalorder %s8, 0
    %p28 = por %p26, %p27
    %p29 = scmp.ne.s32.totalorder %s18, %s21
    %p30 = scmp.eq.s32.totalorder %s13, 1
    %p31 = por %p29, %p30
    %p32 = scmp.ne.s32.totalorder %s21, %s22
    %p33 = scmp.eq.s32.totalorder %s13, 0
    %p34 = por %p32, %p33
    %p35 = scmp.ne.s32.totalorder %s21, %s22
    %p36 = scmp.eq.s32.totalorder %s14, 1
    %p37 = por %p35, %p36
    %p39 = scmp.ne.s32.totalorder %s22, %s38
    %p40 = scmp.eq.s32.totalorder %s14, 0
    %p41 = por %p39, %p40
    %s43 = sadd.s32 %s42, 1
    %p46 = scmp.eq.s32.totalorder %s8, 1
    %p47 = scmp.ne.s32.totalorder %s42, %s44
    %p48 = scmp.eq.s32.totalorder %s8, 0
    %p49 = por %p47, %p48
    %p50 = scmp.ne.s32.totalorder %s42, %s44
    %p51 = scmp.eq.s32.totalorder %s13, 1
    %p52 = por %p50, %p51
    %p53 = scmp.ne.s32.totalorder %s44, %s45
    %p54 = scmp.eq.s32.totalorder %s13, 0
    %p55 = por %p53, %p54
    %p56 = scmp.ne.s32.totalorder %s44, %s45
    %p57 = scmp.eq.s32.totalorder %s14, 1
    %p58 = por %p56, %p57
    %p60 = scmp.ne.s32.totalorder %s45, %s59
    %p61 = scmp.eq.s32.totalorder %s14, 0
    %p62 = por %p60, %p61
    %s63 = ssub.s32 %s8, %s15
    %p64 = scmp.eq.s32.totalorder %s63, 0
    %s66 = sadd.s32 %s65, 1
    %s67 = scalar_select %p64, %s65, %s66
    %p70 = pneg %p64
    %p71 = scmp.eq.s32.totalorder %s8, 1
    %p72 = por %p70, %p71
    %p73 = scmp.ne.s32.totalorder %s65, %s68
    %p74 = scmp.eq.s32.totalorder %s8, 0
    %p75 = por %p73, %p74
    %p76 = scmp.ne.s32.totalorder %s65, %s68
    %p77 = scmp.eq.s32.totalorder %s13, 1
    %p78 = por %p76, %p77
    %p79 = scmp.ne.s32.totalorder %s68, %s69
    %p80 = scmp.eq.s32.totalorder %s13, 0
    %p81 = por %p79, %p80
    %p82 = scmp.ne.s32.totalorder %s68, %s69
    %p83 = scmp.eq.s32.totalorder %s14, 1
    %p84 = por %p82, %p83
    %p86 = scmp.ne.s32.totalorder %s69, %s85
    %p87 = scmp.eq.s32.totalorder %s14, 0
    %p88 = por %p86, %p87
    %p89 = scmp.le.s32.totalorder 1, %s8
    %p90 = scmp.lt.s32.totalorder %s8, 3
    %p91 = pnand %p89, %p90
    %p92 = pneg %p91
    // Predicated region
    $region9: #{_forward.15} parent=5 // pred_check
      _
    $region10: #{_forward.15} parent=5 // pred_check_branch
      %94 = sbr.rel (%p91) target = $region12
    $region11: #{_forward.15} parent=5 // pred_region
      %s95 = ssub.s32 %s8, 1
      // Predicated region
      $region13: #{_forward.15} parent=11 // pred_check
        %p96 = pneg %p55
      $region14: #{_forward.15} parent=11 // pred_check_branch
        %98 = sbr.rel (%p96) target = $region16
      $region15: #{_forward.15} parent=11 // pred_region
        _
      $region16: #{_forward.15} parent=11 // pred_fallthru
        _
    $region12: #{_forward.15} parent=5 // pred_fallthru
      _
    %p99 = scmp.lt.s32.totalorder %s8, 2
    // Predicated region
    $region17: #{_forward.15} parent=5 // pred_check
      %p100 = pneg %p99
    $region18: #{_forward.15} parent=5 // pred_check_branch
      %102 = sbr.rel (%p100) target = $region20
    $region19: #{_forward.15} parent=5 // pred_region
      // Predicated region
      $region21: #{_forward.15} parent=19 // pred_check
        %p103 = pneg %p28
      $region22: #{_forward.15} parent=19 // pred_check_branch
        %105 = sbr.rel (%p103) target = $region24
      $region23: #{_forward.15} parent=19 // pred_region
        %p106 = scmp.lt.s32.totalorder %s8, 1
        %s107 = scalar_select %p106, %s8, 1
        %s108 = smul.addr %s107, 32
        %s109 = smul.addr %s108, 8
        %s110 = scalar_lea.vmem %s0, %s109
      $region24: #{_forward.15} parent=19 // pred_fallthru
        _
    $region20: #{_forward.15} parent=5 // pred_fallthru
      _
    %p111 = scmp.le.s32.totalorder 1, %s8
    %p112 = scmp.lt.s32.totalorder %s8, 3
    %p113 = pnand %p111, %p112
    %p114 = pneg %p113
    // Predicated region
    $region25: #{_forward.15} parent=5 // pred_check
      _
    $region26: #{_forward.15} parent=5 // pred_check_branch
      %116 = sbr.rel (%p113) target = $region28
    $region27: #{_forward.15} parent=5 // pred_region
      %s117 = ssub.s32 %s8, 1
      %p118 = scmp.lt.s32.totalorder %s13, 1
      %s119 = scalar_select %p118, %s13, 1
      %s120 = smul.addr %s119, 32
      %s121 = smul.addr %s120, 8
      %s122 = scalar_lea.vmem %s0, %s121
      %p123 = pneg %p34
      %p124 = pneg %p31
      %p125 = pneg %p55
      %p126 = pneg %p52
      %p127 = pneg %p81
      %p128 = pneg %p78
      %p129 = scmp.lt.s32.totalorder %s13, 1
      %s130 = scalar_select %p129, %s13, 1
      %s131 = smul.addr %s130, 32
      %s132 = smul.addr %s131, 8
      %s133 = scalar_lea.vmem %s2, %s132
      %p134 = scmp.lt.s32.totalorder %s13, 1
      %s135 = scalar_select %p134, %s13, 1
      %s136 = smul.addr %s135, 32
      %s137 = smul.addr %s136, 8
      %s138 = scalar_lea.vmem %s0, %s137
      %p139 = scmp.lt.s32.totalorder %s13, 1
      %s140 = scalar_select %p139, %s13, 1
      %s141 = smul.addr %s140, 32
      %s142 = smul.addr %s141, 8
      %s143 = scalar_lea.vmem %s2, %s142
      %v144 = vld [vmem:[%s138] sm:$0xff]
      %v145 = vld [vmem:[%s138 + $0x8] sm:$0xff]
      %v146 = vld [vmem:[%s138 + $0x10] sm:$0xff]
      %v147 = vld [vmem:[%s138 + $0x18] sm:$0xff]
      %v148 = vld [vmem:[%s138 + $0x20] sm:$0xff]
      %v149 = vld [vmem:[%s138 + $0x28] sm:$0xff]
      %v150 = vld [vmem:[%s138 + $0x30] sm:$0xff]
      %v151 = vld [vmem:[%s138 + $0x38] sm:$0xff]
      %v152 = vld [vmem:[%s138 + $0x40] sm:$0xff]
      %v153 = vld [vmem:[%s138 + $0x48] sm:$0xff]
      %v154 = vld [vmem:[%s138 + $0x50] sm:$0xff]
      %v155 = vld [vmem:[%s138 + $0x58] sm:$0xff]
      %v156 = vld [vmem:[%s138 + $0x60] sm:$0xff]
      %v157 = vld [vmem:[%s138 + $0x68] sm:$0xff]
      %v158 = vld [vmem:[%s138 + $0x70] sm:$0xff]
      %v159 = vld [vmem:[%s138 + $0x78] sm:$0xff]
      %v160 = vld [vmem:[%s138 + $0x80] sm:$0xff]
      %v161 = vld [vmem:[%s138 + $0x88] sm:$0xff]
      %v162 = vld [vmem:[%s138 + $0x90] sm:$0xff]
      %v163 = vld [vmem:[%s138 + $0x98] sm:$0xff]
      %v164 = vld [vmem:[%s138 + $0xa0] sm:$0xff]
      %v165 = vld [vmem:[%s138 + $0xa8] sm:$0xff]
      %v166 = vld [vmem:[%s138 + $0xb0] sm:$0xff]
      %v167 = vld [vmem:[%s138 + $0xb8] sm:$0xff]
      %v168 = vld [vmem:[%s138 + $0xc0] sm:$0xff]
      %v169 = vld [vmem:[%s138 + $0xc8] sm:$0xff]
      %v170 = vld [vmem:[%s138 + $0xd0] sm:$0xff]
      %v171 = vld [vmem:[%s138 + $0xd8] sm:$0xff]
      %v172 = vld [vmem:[%s138 + $0xe0] sm:$0xff]
      %v173 = vld [vmem:[%s138 + $0xe8] sm:$0xff]
      %v174 = vld [vmem:[%s138 + $0xf0] sm:$0xff]
      %v175 = vld [vmem:[%s138 + $0xf8] sm:$0xff]
      %v176 = vld [vmem:[%s1] sm:$0x1]
      %v177 = vld [vmem:[%s1 + $0x1] sm:$0x1]
      %v178 = vcvt.s32.f32 0
      %v179 = vcvt.s32.f32 1
      %v180 = vcvt.s32.f32 2
      %v181 = vcvt.s32.f32 3
      %v182 = vcvt.s32.f32 4
      %v183 = vcvt.s32.f32 5
      %v184 = vcvt.s32.f32 6
      %v185 = vcvt.s32.f32 7
      %v186 = vcvt.s32.f32 8
      %v187 = vcvt.s32.f32 9
      %v188 = vcvt.s32.f32 10
      %v189 = vcvt.s32.f32 11
      %v190 = vcvt.s32.f32 12
      %v191 = vcvt.s32.f32 13
      %v192 = vcvt.s32.f32 14
      %v193 = vcvt.s32.f32 15
      %v194 = vlaneseq
      %v195 = vshrl.u32 %v194, 7
      %v196 = vadd.s32 %v195, 8
      %v197 = vcvt.s32.f32 %v195
      %v198 = vcvt.s32.f32 %v196
      %v199 = vxor.u32 %v144, 2147483648
      %v200 = vxor.u32 %v145, 2147483648
      %v201 = vxor.u32 %v146, 2147483648
      %v202 = vxor.u32 %v147, 2147483648
      %v203 = vxor.u32 %v148, 2147483648
      %v204 = vxor.u32 %v149, 2147483648
      %v205 = vxor.u32 %v150, 2147483648
      %v206 = vxor.u32 %v151, 2147483648
      %v207 = vxor.u32 %v152, 2147483648
      %v208 = vxor.u32 %v153, 2147483648
      %v209 = vxor.u32 %v154, 2147483648
      %v210 = vxor.u32 %v155, 2147483648
      %v211 = vxor.u32 %v156, 2147483648
      %v212 = vxor.u32 %v157, 2147483648
      %v213 = vxor.u32 %v158, 2147483648
      %v214 = vxor.u32 %v159, 2147483648
      %v215 = vxor.u32 %v160, 2147483648
      %v216 = vxor.u32 %v161, 2147483648
      %v217 = vxor.u32 %v162, 2147483648
      %v218 = vxor.u32 %v163, 2147483648
      %v219 = vxor.u32 %v164, 2147483648
      %v220 = vxor.u32 %v165, 2147483648
      %v221 = vxor.u32 %v166, 2147483648
      %v222 = vxor.u32 %v167, 2147483648
      %v223 = vxor.u32 %v168, 2147483648
      %v224 = vxor.u32 %v169, 2147483648
      %v225 = vxor.u32 %v170, 2147483648
      %v226 = vxor.u32 %v171, 2147483648
      %v227 = vxor.u32 %v172, 2147483648
      %v228 = vxor.u32 %v173, 2147483648
      %v229 = vxor.u32 %v174, 2147483648
      %v230 = vxor.u32 %v175, 2147483648
      %v231 = vmul.f32 %v199, 1.442695
      %v232 = vpow.pop %v231
      %v233 = vmul.f32 %v200, 1.442695
      %v234 = vpow.pop %v233
      %v235 = vmul.f32 %v201, 1.442695
      %v236 = vpow.pop %v235
      %v237 = vmul.f32 %v202, 1.442695
      %v238 = vpow.pop %v237
      %v239 = vmul.f32 %v203, 1.442695
      %v240 = vpow.pop %v239
      %v241 = vmul.f32 %v204, 1.442695
      %v242 = vpow.pop %v241
      %v243 = vmul.f32 %v205, 1.442695
      %v244 = vpow.pop %v243
      %v245 = vmul.f32 %v206, 1.442695
      %v246 = vpow.pop %v245
      %v247 = vmul.f32 %v207, 1.442695
      %v248 = vpow.pop %v247
      %v249 = vmul.f32 %v208, 1.442695
      %v250 = vpow.pop %v249
      %v251 = vmul.f32 %v209, 1.442695
      %v252 = vpow.pop %v251
      %v253 = vmul.f32 %v210, 1.442695
      %v254 = vpow.pop %v253
      %v255 = vmul.f32 %v211, 1.442695
      %v256 = vpow.pop %v255
      %v257 = vmul.f32 %v212, 1.442695
      %v258 = vpow.pop %v257
      %v259 = vmul.f32 %v213, 1.442695
      %v260 = vpow.pop %v259
      %v261 = vmul.f32 %v214, 1.442695
      %v262 = vpow.pop %v261
      %v263 = vmul.f32 %v215, 1.442695
      %v264 = vpow.pop %v263
      %v265 = vmul.f32 %v216, 1.442695
      %v266 = vpow.pop %v265
      %v267 = vmul.f32 %v217, 1.442695
      %v268 = vpow.pop %v267
      %v269 = vmul.f32 %v218, 1.442695
      %v270 = vpow.pop %v269
      %v271 = vmul.f32 %v219, 1.442695
      %v272 = vpow.pop %v271
      %v273 = vmul.f32 %v220, 1.442695
      %v274 = vpow.pop %v273
      %v275 = vmul.f32 %v221, 1.442695
      %v276 = vpow.pop %v275
      %v277 = vmul.f32 %v222, 1.442695
      %v278 = vpow.pop %v277
      %v279 = vmul.f32 %v223, 1.442695
      %v280 = vpow.pop %v279
      %v281 = vmul.f32 %v224, 1.442695
      %v282 = vpow.pop %v281
      %v283 = vmul.f32 %v225, 1.442695
      %v284 = vpow.pop %v283
      %v285 = vmul.f32 %v226, 1.442695
      %v286 = vpow.pop %v285
      %v287 = vmul.f32 %v227, 1.442695
      %v288 = vpow.pop %v287
      %v289 = vmul.f32 %v228, 1.442695
      %v290 = vpow.pop %v289
      %v291 = vmul.f32 %v229, 1.442695
      %v292 = vpow.pop %v291
      %v293 = vmul.f32 %v230, 1.442695
      %v294 = vpow.pop %v293
      %v295 = vadd.f32 %v232, 1.0
      %v296 = vadd.f32 %v234, 1.0
      %v297 = vadd.f32 %v236, 1.0
      %v298 = vadd.f32 %v238, 1.0
      %v299 = vadd.f32 %v240, 1.0
      %v300 = vadd.f32 %v242, 1.0
      %v301 = vadd.f32 %v244, 1.0
      %v302 = vadd.f32 %v246, 1.0
      %v303 = vadd.f32 %v248, 1.0
      %v304 = vadd.f32 %v250, 1.0
      %v305 = vadd.f32 %v252, 1.0
      %v306 = vadd.f32 %v254, 1.0
      %v307 = vadd.f32 %v256, 1.0
      %v308 = vadd.f32 %v258, 1.0
      %v309 = vadd.f32 %v260, 1.0
      %v310 = vadd.f32 %v262, 1.0
      %v311 = vadd.f32 %v264, 1.0
      %v312 = vadd.f32 %v266, 1.0
      %v313 = vadd.f32 %v268, 1.0
      %v314 = vadd.f32 %v270, 1.0
      %v315 = vadd.f32 %v272, 1.0
      %v316 = vadd.f32 %v274, 1.0
      %v317 = vadd.f32 %v276, 1.0
      %v318 = vadd.f32 %v278, 1.0
      %v319 = vadd.f32 %v280, 1.0
      %v320 = vadd.f32 %v282, 1.0
      %v321 = vadd.f32 %v284, 1.0
      %v322 = vadd.f32 %v286, 1.0
      %v323 = vadd.f32 %v288, 1.0
      %v324 = vadd.f32 %v290, 1.0
      %v325 = vadd.f32 %v292, 1.0
      %v326 = vadd.f32 %v294, 1.0
      %v327 = vrcp.pop %v295
      %v328 = vmul.f32 1.0, %v327
      %v329 = vrcp.pop %v296
      %v330 = vmul.f32 1.0, %v329
      %v331 = vrcp.pop %v297
      %v332 = vmul.f32 1.0, %v331
      %v333 = vrcp.pop %v298
      %v334 = vmul.f32 1.0, %v333
      %v335 = vrcp.pop %v299
      %v336 = vmul.f32 1.0, %v335
      %v337 = vrcp.pop %v300
      %v338 = vmul.f32 1.0, %v337
      %v339 = vrcp.pop %v301
      %v340 = vmul.f32 1.0, %v339
      %v341 = vrcp.pop %v302
      %v342 = vmul.f32 1.0, %v341
      %v343 = vrcp.pop %v303
      %v344 = vmul.f32 1.0, %v343
      %v345 = vrcp.pop %v304
      %v346 = vmul.f32 1.0, %v345
      %v347 = vrcp.pop %v305
      %v348 = vmul.f32 1.0, %v347
      %v349 = vrcp.pop %v306
      %v350 = vmul.f32 1.0, %v349
      %v351 = vrcp.pop %v307
      %v352 = vmul.f32 1.0, %v351
      %v353 = vrcp.pop %v308
      %v354 = vmul.f32 1.0, %v353
      %v355 = vrcp.pop %v309
      %v356 = vmul.f32 1.0, %v355
      %v357 = vrcp.pop %v310
      %v358 = vmul.f32 1.0, %v357
      %v359 = vrcp.pop %v311
      %v360 = vmul.f32 1.0, %v359
      %v361 = vrcp.pop %v312
      %v362 = vmul.f32 1.0, %v361
      %v363 = vrcp.pop %v313
      %v364 = vmul.f32 1.0, %v363
      %v365 = vrcp.pop %v314
      %v366 = vmul.f32 1.0, %v365
      %v367 = vrcp.pop %v315
      %v368 = vmul.f32 1.0, %v367
      %v369 = vrcp.pop %v316
      %v370 = vmul.f32 1.0, %v369
      %v371 = vrcp.pop %v317
      %v372 = vmul.f32 1.0, %v371
      %v373 = vrcp.pop %v318
      %v374 = vmul.f32 1.0, %v373
      %v375 = vrcp.pop %v319
      %v376 = vmul.f32 1.0, %v375
      %v377 = vrcp.pop %v320
      %v378 = vmul.f32 1.0, %v377
      %v379 = vrcp.pop %v321
      %v380 = vmul.f32 1.0, %v379
      %v381 = vrcp.pop %v322
      %v382 = vmul.f32 1.0, %v381
      %v383 = vrcp.pop %v323
      %v384 = vmul.f32 1.0, %v383
      %v385 = vrcp.pop %v324
      %v386 = vmul.f32 1.0, %v385
      %v387 = vrcp.pop %v325
      %v388 = vmul.f32 1.0, %v387
      %v389 = vrcp.pop %v326
      %v390 = vmul.f32 1.0, %v389
      %vm391 = vcmp.eq.f32.partialorder %v176, 0.0
      %v392 = vsel %vm391, 1, 0
      %v393 = vlaneseq
      %v394 = vshrl.u32 %v393, 7
      %v395 = vsub.s32 0, %v394
      %v396 = vrot.slane %v392, %v395
      %vm397 = vcmp.eq.s32.totalorder %v396, 1
      %v398 = vsel %vm397, %v197, 0.0
      %v399 = vsel %vm397, %v198, 0.0
      %vm400 = vcmp.eq.f32.partialorder %v176, 1.0
      %v401 = vsel %vm400, 1, 0
      %v402 = vlaneseq
      %v403 = vshrl.u32 %v402, 7
      %v404 = vsub.s32 0, %v403
      %v405 = vrot.slane %v401, %v404
      %vm406 = vcmp.eq.s32.totalorder %v405, 1
      %v407 = vsel %vm406, %v178, 0.0
      %v408 = vsel %vm406, %v179, 0.0
      %v409 = vsel %vm406, %v180, 0.0
      %v410 = vsel %vm406, %v181, 0.0
      %v411 = vsel %vm406, %v182, 0.0
      %v412 = vsel %vm406, %v183, 0.0
      %v413 = vsel %vm406, %v184, 0.0
      %v414 = vsel %vm406, %v185, 0.0
      %v415 = vsel %vm406, %v186, 0.0
      %v416 = vsel %vm406, %v187, 0.0
      %v417 = vsel %vm406, %v188, 0.0
      %v418 = vsel %vm406, %v189, 0.0
      %v419 = vsel %vm406, %v190, 0.0
      %v420 = vsel %vm406, %v191, 0.0
      %v421 = vsel %vm406, %v192, 0.0
      %v422 = vsel %vm406, %v193, 0.0
      %v423 = vadd.f32 %v398, %v407
      %v424 = vadd.f32 %v399, %v407
      %v425 = vadd.f32 %v398, %v408
      %v426 = vadd.f32 %v399, %v408
      %v427 = vadd.f32 %v398, %v409
      %v428 = vadd.f32 %v399, %v409
      %v429 = vadd.f32 %v398, %v410
      %v430 = vadd.f32 %v399, %v410
      %v431 = vadd.f32 %v398, %v411
      %v432 = vadd.f32 %v399, %v411
      %v433 = vadd.f32 %v398, %v412
      %v434 = vadd.f32 %v399, %v412
      %v435 = vadd.f32 %v398, %v413
      %v436 = vadd.f32 %v399, %v413
      %v437 = vadd.f32 %v398, %v414
      %v438 = vadd.f32 %v399, %v414
      %v439 = vadd.f32 %v398, %v415
      %v440 = vadd.f32 %v399, %v415
      %v441 = vadd.f32 %v398, %v416
      %v442 = vadd.f32 %v399, %v416
      %v443 = vadd.f32 %v398, %v417
      %v444 = vadd.f32 %v399, %v417
      %v445 = vadd.f32 %v398, %v418
      %v446 = vadd.f32 %v399, %v418
      %v447 = vadd.f32 %v398, %v419
      %v448 = vadd.f32 %v399, %v419
      %v449 = vadd.f32 %v398, %v420
      %v450 = vadd.f32 %v399, %v420
      %v451 = vadd.f32 %v398, %v421
      %v452 = vadd.f32 %v399, %v421
      %v453 = vadd.f32 %v398, %v422
      %v454 = vadd.f32 %v399, %v422
      %v455 = vadd.f32 %v328, %v423
      %v456 = vadd.f32 %v330, %v424
      %v457 = vadd.f32 %v332, %v425
      %v458 = vadd.f32 %v334, %v426
      %v459 = vadd.f32 %v336, %v427
      %v460 = vadd.f32 %v338, %v428
      %v461 = vadd.f32 %v340, %v429
      %v462 = vadd.f32 %v342, %v430
      %v463 = vadd.f32 %v344, %v431
      %v464 = vadd.f32 %v346, %v432
      %v465 = vadd.f32 %v348, %v433
      %v466 = vadd.f32 %v350, %v434
      %v467 = vadd.f32 %v352, %v435
      %v468 = vadd.f32 %v354, %v436
      %v469 = vadd.f32 %v356, %v437
      %v470 = vadd.f32 %v358, %v438
      %v471 = vadd.f32 %v360, %v439
      %v472 = vadd.f32 %v362, %v440
      %v473 = vadd.f32 %v364, %v441
      %v474 = vadd.f32 %v366, %v442
      %v475 = vadd.f32 %v368, %v443
      %v476 = vadd.f32 %v370, %v444
      %v477 = vadd.f32 %v372, %v445
      %v478 = vadd.f32 %v374, %v446
      %v479 = vadd.f32 %v376, %v447
      %v480 = vadd.f32 %v378, %v448
      %v481 = vadd.f32 %v380, %v449
      %v482 = vadd.f32 %v382, %v450
      %v483 = vadd.f32 %v384, %v451
      %v484 = vadd.f32 %v386, %v452
      %v485 = vadd.f32 %v388, %v453
      %v486 = vadd.f32 %v390, %v454
      %vm487 = vcmp.eq.f32.partialorder %v176, 2.0
      %v488 = vsel %vm487, 1, 0
      %v489 = vlaneseq
      %v490 = vshrl.u32 %v489, 7
      %v491 = vsub.s32 0, %v490
      %v492 = vrot.slane %v488, %v491
      %vm493 = vcmp.eq.s32.totalorder %v492, 1
      %v494 = vsel %vm493, %v144, 0.0
      %v495 = vsel %vm493, %v145, 0.0
      %v496 = vsel %vm493, %v146, 0.0
      %v497 = vsel %vm493, %v147, 0.0
      %v498 = vsel %vm493, %v148, 0.0
      %v499 = vsel %vm493, %v149, 0.0
      %v500 = vsel %vm493, %v150, 0.0
      %v501 = vsel %vm493, %v151, 0.0
      %v502 = vsel %vm493, %v152, 0.0
      %v503 = vsel %vm493, %v153, 0.0
      %v504 = vsel %vm493, %v154, 0.0
      %v505 = vsel %vm493, %v155, 0.0
      %v506 = vsel %vm493, %v156, 0.0
      %v507 = vsel %vm493, %v157, 0.0
      %v508 = vsel %vm493, %v158, 0.0
      %v509 = vsel %vm493, %v159, 0.0
      %v510 = vsel %vm493, %v160, 0.0
      %v511 = vsel %vm493, %v161, 0.0
      %v512 = vsel %vm493, %v162, 0.0
      %v513 = vsel %vm493, %v163, 0.0
      %v514 = vsel %vm493, %v164, 0.0
      %v515 = vsel %vm493, %v165, 0.0
      %v516 = vsel %vm493, %v166, 0.0
      %v517 = vsel %vm493, %v167, 0.0
      %v518 = vsel %vm493, %v168, 0.0
      %v519 = vsel %vm493, %v169, 0.0
      %v520 = vsel %vm493, %v170, 0.0
      %v521 = vsel %vm493, %v171, 0.0
      %v522 = vsel %vm493, %v172, 0.0
      %v523 = vsel %vm493, %v173, 0.0
      %v524 = vsel %vm493, %v174, 0.0
      %v525 = vsel %vm493, %v175, 0.0
      %v526 = vmul.f32 %v494, 1.442695
      %v527 = vpow.pop %v526
      %v528 = vmul.f32 %v495, 1.442695
      %v529 = vpow.pop %v528
      %v530 = vmul.f32 %v496, 1.442695
      %v531 = vpow.pop %v530
      %v532 = vmul.f32 %v497, 1.442695
      %v533 = vpow.pop %v532
      %v534 = vmul.f32 %v498, 1.442695
      %v535 = vpow.pop %v534
      %v536 = vmul.f32 %v499, 1.442695
      %v537 = vpow.pop %v536
      %v538 = vmul.f32 %v500, 1.442695
      %v539 = vpow.pop %v538
      %v540 = vmul.f32 %v501, 1.442695
      %v541 = vpow.pop %v540
      %v542 = vmul.f32 %v502, 1.442695
      %v543 = vpow.pop %v542
      %v544 = vmul.f32 %v503, 1.442695
      %v545 = vpow.pop %v544
      %v546 = vmul.f32 %v504, 1.442695
      %v547 = vpow.pop %v546
      %v548 = vmul.f32 %v505, 1.442695
      %v549 = vpow.pop %v548
      %v550 = vmul.f32 %v506, 1.442695
      %v551 = vpow.pop %v550
      %v552 = vmul.f32 %v507, 1.442695
      %v553 = vpow.pop %v552
      %v554 = vmul.f32 %v508, 1.442695
      %v555 = vpow.pop %v554
      %v556 = vmul.f32 %v509, 1.442695
      %v557 = vpow.pop %v556
      %v558 = vmul.f32 %v510, 1.442695
      %v559 = vpow.pop %v558
      %v560 = vmul.f32 %v511, 1.442695
      %v561 = vpow.pop %v560
      %v562 = vmul.f32 %v512, 1.442695
      %v563 = vpow.pop %v562
      %v564 = vmul.f32 %v513, 1.442695
      %v565 = vpow.pop %v564
      %v566 = vmul.f32 %v514, 1.442695
      %v567 = vpow.pop %v566
      %v568 = vmul.f32 %v515, 1.442695
      %v569 = vpow.pop %v568
      %v570 = vmul.f32 %v516, 1.442695
      %v571 = vpow.pop %v570
      %v572 = vmul.f32 %v517, 1.442695
      %v573 = vpow.pop %v572
      %v574 = vmul.f32 %v518, 1.442695
      %v575 = vpow.pop %v574
      %v576 = vmul.f32 %v519, 1.442695
      %v577 = vpow.pop %v576
      %v578 = vmul.f32 %v520, 1.442695
      %v579 = vpow.pop %v578
      %v580 = vmul.f32 %v521, 1.442695
      %v581 = vpow.pop %v580
      %v582 = vmul.f32 %v522, 1.442695
      %v583 = vpow.pop %v582
      %v584 = vmul.f32 %v523, 1.442695
      %v585 = vpow.pop %v584
      %v586 = vmul.f32 %v524, 1.442695
      %v587 = vpow.pop %v586
      %v588 = vmul.f32 %v525, 1.442695
      %v589 = vpow.pop %v588
      %v590 = vlaneseq
      %v591 = vshrl.u32 %v590, 7
      %v592 = vsub.s32 0, %v591
      %v593 = vrot.slane %v177, %v592
      %v594 = vmul.f32 %v527, %v593
      %v595 = vmul.f32 %v529, %v593
      %v596 = vmul.f32 %v531, %v593
      %v597 = vmul.f32 %v533, %v593
      %v598 = vmul.f32 %v535, %v593
      %v599 = vmul.f32 %v537, %v593
      %v600 = vmul.f32 %v539, %v593
      %v601 = vmul.f32 %v541, %v593
      %v602 = vmul.f32 %v543, %v593
      %v603 = vmul.f32 %v545, %v593
      %v604 = vmul.f32 %v547, %v593
      %v605 = vmul.f32 %v549, %v593
      %v606 = vmul.f32 %v551, %v593
      %v607 = vmul.f32 %v553, %v593
      %v608 = vmul.f32 %v555, %v593
      %v609 = vmul.f32 %v557, %v593
      %v610 = vmul.f32 %v559, %v593
      %v611 = vmul.f32 %v561, %v593
      %v612 = vmul.f32 %v563, %v593
      %v613 = vmul.f32 %v565, %v593
      %v614 = vmul.f32 %v567, %v593
      %v615 = vmul.f32 %v569, %v593
      %v616 = vmul.f32 %v571, %v593
      %v617 = vmul.f32 %v573, %v593
      %v618 = vmul.f32 %v575, %v593
      %v619 = vmul.f32 %v577, %v593
      %v620 = vmul.f32 %v579, %v593
      %v621 = vmul.f32 %v581, %v593
      %v622 = vmul.f32 %v583, %v593
      %v623 = vmul.f32 %v585, %v593
      %v624 = vmul.f32 %v587, %v593
      %v625 = vmul.f32 %v589, %v593
      %vm626 = vcmp.le.f32.partialorder %v176, 1.0
      %v627 = vsel %vm493, %v594, %v328
      %v628 = vsel %vm493, %v595, %v330
      %v629 = vsel %vm493, %v596, %v332
      %v630 = vsel %vm493, %v597, %v334
      %v631 = vsel %vm493, %v598, %v336
      %v632 = vsel %vm493, %v599, %v338
      %v633 = vsel %vm493, %v600, %v340
      %v634 = vsel %vm493, %v601, %v342
      %v635 = vsel %vm493, %v602, %v344
      %v636 = vsel %vm493, %v603, %v346
      %v637 = vsel %vm493, %v604, %v348
      %v638 = vsel %vm493, %v605, %v350
      %v639 = vsel %vm493, %v606, %v352
      %v640 = vsel %vm493, %v607, %v354
      %v641 = vsel %vm493, %v608, %v356
      %v642 = vsel %vm493, %v609, %v358
      %v643 = vsel %vm493, %v610, %v360
      %v644 = vsel %vm493, %v611, %v362
      %v645 = vsel %vm493, %v612, %v364
      %v646 = vsel %vm493, %v613, %v366
      %v647 = vsel %vm493, %v614, %v368
      %v648 = vsel %vm493, %v615, %v370
      %v649 = vsel %vm493, %v616, %v372
      %v650 = vsel %vm493, %v617, %v374
      %v651 = vsel %vm493, %v618, %v376
      %v652 = vsel %vm493, %v619, %v378
      %v653 = vsel %vm493, %v620, %v380
      %v654 = vsel %vm493, %v621, %v382
      %v655 = vsel %vm493, %v622, %v384
      %v656 = vsel %vm493, %v623, %v386
      %v657 = vsel %vm493, %v624, %v388
      %v658 = vsel %vm493, %v625, %v390
      %v659 = vsel %vm626, 1, 0
      %v660 = vlaneseq
      %v661 = vshrl.u32 %v660, 7
      %v662 = vsub.s32 0, %v661
      %v663 = vrot.slane %v659, %v662
      %vm664 = vcmp.eq.s32.totalorder %v663, 1
      %v665 = vsel %vm664, %v455, %v627
      %v666 = vsel %vm664, %v456, %v628
      %v667 = vsel %vm664, %v457, %v629
      %v668 = vsel %vm664, %v458, %v630
      %v669 = vsel %vm664, %v459, %v631
      %v670 = vsel %vm664, %v460, %v632
      %v671 = vsel %vm664, %v461, %v633
      %v672 = vsel %vm664, %v462, %v634
      %v673 = vsel %vm664, %v463, %v635
      %v674 = vsel %vm664, %v464, %v636
      %v675 = vsel %vm664, %v465, %v637
      %v676 = vsel %vm664, %v466, %v638
      %v677 = vsel %vm664, %v467, %v639
      %v678 = vsel %vm664, %v468, %v640
      %v679 = vsel %vm664, %v469, %v641
      %v680 = vsel %vm664, %v470, %v642
      %v681 = vsel %vm664, %v471, %v643
      %v682 = vsel %vm664, %v472, %v644
      %v683 = vsel %vm664, %v473, %v645
      %v684 = vsel %vm664, %v474, %v646
      %v685 = vsel %vm664, %v475, %v647
      %v686 = vsel %vm664, %v476, %v648
      %v687 = vsel %vm664, %v477, %v649
      %v688 = vsel %vm664, %v478, %v650
      %v689 = vsel %vm664, %v479, %v651
      %v690 = vsel %vm664, %v480, %v652
      %v691 = vsel %vm664, %v481, %v653
      %v692 = vsel %vm664, %v482, %v654
      %v693 = vsel %vm664, %v483, %v655
      %v694 = vsel %vm664, %v484, %v656
      %v695 = vsel %vm664, %v485, %v657
      %v696 = vsel %vm664, %v486, %v658
      %697 = vst [vmem:[%s143] sm:$0xff] %v665
      %698 = vst [vmem:[%s143 + $0x8] sm:$0xff] %v666
      %699 = vst [vmem:[%s143 + $0x10] sm:$0xff] %v667
      %700 = vst [vmem:[%s143 + $0x18] sm:$0xff] %v668
      %701 = vst [vmem:[%s143 + $0x20] sm:$0xff] %v669
      %702 = vst [vmem:[%s143 + $0x28] sm:$0xff] %v670
      %703 = vst [vmem:[%s143 + $0x30] sm:$0xff] %v671
      %704 = vst [vmem:[%s143 + $0x38] sm:$0xff] %v672
      %705 = vst [vmem:[%s143 + $0x40] sm:$0xff] %v673
      %706 = vst [vmem:[%s143 + $0x48] sm:$0xff] %v674
      %707 = vst [vmem:[%s143 + $0x50] sm:$0xff] %v675
      %708 = vst [vmem:[%s143 + $0x58] sm:$0xff] %v676
      %709 = vst [vmem:[%s143 + $0x60] sm:$0xff] %v677
      %710 = vst [vmem:[%s143 + $0x68] sm:$0xff] %v678
      %711 = vst [vmem:[%s143 + $0x70] sm:$0xff] %v679
      %712 = vst [vmem:[%s143 + $0x78] sm:$0xff] %v680
      %713 = vst [vmem:[%s143 + $0x80] sm:$0xff] %v681
      %714 = vst [vmem:[%s143 + $0x88] sm:$0xff] %v682
      %715 = vst [vmem:[%s143 + $0x90] sm:$0xff] %v683
      %716 = vst [vmem:[%s143 + $0x98] sm:$0xff] %v684
      %717 = vst [vmem:[%s143 + $0xa0] sm:$0xff] %v685
      %718 = vst [vmem:[%s143 + $0xa8] sm:$0xff] %v686
      %719 = vst [vmem:[%s143 + $0xb0] sm:$0xff] %v687
      %720 = vst [vmem:[%s143 + $0xb8] sm:$0xff] %v688
      %721 = vst [vmem:[%s143 + $0xc0] sm:$0xff] %v689
      %722 = vst [vmem:[%s143 + $0xc8] sm:$0xff] %v690
      %723 = vst [vmem:[%s143 + $0xd0] sm:$0xff] %v691
      %724 = vst [vmem:[%s143 + $0xd8] sm:$0xff] %v692
      %725 = vst [vmem:[%s143 + $0xe0] sm:$0xff] %v693
      %726 = vst [vmem:[%s143 + $0xe8] sm:$0xff] %v694
      %727 = vst [vmem:[%s143 + $0xf0] sm:$0xff] %v695
      %728 = vst [vmem:[%s143 + $0xf8] sm:$0xff] %v696
      %p729 = scmp.lt.s32.totalorder %s13, 1
      %s730 = scalar_select %p729, %s13, 1
      %s731 = smul.addr %s730, 32
      %s732 = smul.addr %s731, 8
      %s733 = scalar_lea.vmem %s2, %s732
      // Predicated region
      $region29: #{_forward.15} parent=27 // pred_check
        %p734 = pneg %p78
      $region30: #{_forward.15} parent=27 // pred_check_branch
        %736 = sbr.rel (%p734) target = $region32
      $region31: #{_forward.15} parent=27 // pred_region
        _
      $region32: #{_forward.15} parent=27 // pred_fallthru
        _
    $region28: #{_forward.15} parent=5 // pred_fallthru
      _
    %p737 = scmp.le.s32.totalorder 2, %s8
    // Predicated region
    $region33: #{_forward.15} parent=5 // pred_check
      %p738 = pneg %p737
    $region34: #{_forward.15} parent=5 // pred_check_branch
      %740 = sbr.rel (%p738) target = $region36
    $region35: #{_forward.15} parent=5 // pred_region
      %s741 = ssub.s32 %s8, 2
      // Predicated region
      $region37: #{_forward.15} parent=35 // pred_check
        %p742 = pneg %p84
      $region38: #{_forward.15} parent=35 // pred_check_branch
        %744 = sbr.rel (%p742) target = $region40
      $region39: #{_forward.15} parent=35 // pred_region
        %p745 = scmp.lt.s32.totalorder %s14, 1
        %s746 = scalar_select %p745, %s14, 1
        %s747 = smul.addr %s746, 32
        %s748 = smul.addr %s747, 8
        %s749 = scalar_lea.vmem %s2, %s748
      $region40: #{_forward.15} parent=35 // pred_fallthru
        _
    $region36: #{_forward.15} parent=5 // pred_fallthru
      _
  $region6: #{_forward.15} parent=0 // loop_footer
    %s12 = sadd.s32 1, %s8
  $region7: #{_forward.15} parent=0 // loop_footer_branch
    %7 = sbr.rel target = $region3
  $region8: #{_forward.15} parent=0 // loop_exit
    _

</llo_original>
